<compile_context>
chip_gen: v6e
topology: v6e:2x2x1
jax: 0.10.0
libtpu: 0.0.40
codegen_flags: <defaults>
</compile_context>

<pallas_src>
import numpy as np
import jax
import jax.numpy as jnp
from jax import lax
from jax.experimental import pallas as pl
from jax.experimental.pallas import tpu as pltpu

# ----------------------------- problem sizes ---------------------------------
B       = 2          # batch
COILS   = 4          # MRI receive coils
H = W   = 16         # image size (square -> one DFT matrix serves both axes)
HW      = H * W      # 256
NLANES  = B * HW     # 512 (denoiser lane axis: batch-major flattened pixels)
NF      = 4          # denoiser conv filters (small synthetic ResNet5Block)
CPAD    = 8          # channel padding to one full sublane tile
KSIZE   = 3          # conv filter size
L2LAM   = 0.05       # MoDL l2lam
CG_MAX_ITER = 6      # args.cg_max_iter
CG_EPS      = 1e-5   # args.cg_eps

F32 = jnp.float32
TAPS = [(dh, dw) for dh in (-1, 0, 1) for dw in (-1, 0, 1)]   # t = (dh+1)*3 + (dw+1)


# ----------------------------- fused Pallas kernel ----------------------------
def _modl_fused_kernel(x_ref, xdn_ref, xa_ref, tmask_ref, gram_ref,
                       warr_ref, barr_ref, out_ref):
    x = x_ref[...]                    # [B, 2*HW]   CG init (re | im per batch row)
    xa = xa_ref[...]                  # [B, 2*HW]   x_adj
    x_dn = xdn_ref[...]               # [CPAD, B*HW] denoiser layout (row0=re, row1=im)
    tm = tmask_ref[...]               # [9, B*HW]   per-tap zero-padding validity masks

    # per-batch Gram matrices (A^H A + l2lam I as a right-multiply), loaded once and
    # reused across all 7 CG operator applications
    grams = [gram_ref[b] for b in range(B)]          # each [2*HW, 2*HW]

    def onehot_col(n, j):             # [n, 1] one-hot column (sublane row-select)
        return (lax.broadcasted_iota(jnp.int32, (n, 1), 0) == j).astype(F32)
    bsel = [onehot_col(B, b) for b in range(B)]

    # ---- ResNet5Block denoiser: 9 rolls (XLU) + ONE [8,72]@[72,512] matmul per layer ---
    def conv3x3(a, l):
        parts = []
        for t, (dh, dw) in enumerate(TAPS):
            d = dh * W + dw
            if d == 0:
                parts.append(a)                       # center tap: mask is all-ones
            else:
                # out[q] = a[q + d], zero-filled at image borders (mask kills the wrap,
                # image borders coincide with batch borders on the flattened lane axis)
                parts.append(pltpu.roll(a, (-d) % NLANES, axis=1) * tm[t:t + 1, :])
        big = jnp.concatenate(parts, axis=0)          # [9*CPAD, B*HW], tile-aligned concat
        return jnp.dot(warr_ref[l], big, preferred_element_type=F32) + barr_ref[l]

    a = x_dn
    for l in range(4):
        a = jnp.maximum(conv3x3(a, l), 0.0)
    r_dn = x_dn + conv3x3(a, 4)                       # residual skip; rows >=2 stay zero

    # denoiser layout [CPAD, B*HW] (rows 0/1 = re/im) -> CG layout [B, 2*HW]
    r = None
    for b in range(B):
        row = jnp.concatenate(
            [r_dn[c:c + 1, b * HW:(b + 1) * HW] for c in range(2)], axis=1)
        term = bsel[b] * row
        r = term if r is None else r + term

    # ---- CG solve of (A^H A + l2lam I) x = x_adj + l2lam * r --------------------------
    def aop(v):                        # v: [B, 2*HW]; Gram already includes + l2lam*I
        out = None
        for b in range(B):
            term = bsel[b] * jnp.dot(v, grams[b], preferred_element_type=F32)
            out = term if out is None else out + term
        return out

    def zdot(u, v):                    # per-batch real <u, v> (re|im concatenated)
        return jnp.sum(u * v, axis=1, keepdims=True)             # [B, 1]

    b_rhs = xa + L2LAM * r
    x0 = x
    res0 = b_rhs - aop(x0)
    rs0 = zdot(res0, res0)
    eps_sq = CG_EPS * CG_EPS

    def body(_, carry):
        xk, rk, pk, rsold, rsnew = carry
        # emulate reference `if rsnew.max() < eps**2: break` by gating the updates
        active = jnp.max(rsnew, keepdims=True) >= eps_sq         # [1, 1] bool
        ap = aop(pk)
        pap = zdot(pk, ap)
        alpha = rsold / jnp.where(active, pap, 1.0)              # guarded denominator
        x_n = xk + alpha * pk
        r_n = rk - alpha * ap
        rs_n = zdot(r_n, r_n)
        beta = rs_n / jnp.where(active, rsold, 1.0)              # guarded denominator
        p_n = beta * pk + r_n
        sel = lambda new, old: jnp.where(active, new, old)
        return (sel(x_n, xk), sel(r_n, rk), sel(p_n, pk),
                sel(rs_n, rsold), sel(rs_n, rsnew))

    xk, _, _, _, _ = lax.fori_loop(0, CG_MAX_ITER, body,
                                   (x0, res0, res0, rs0, rs0), unroll=True)
    # TODO(synk): num_cg / get_metadata() iteration-count bookkeeping is not part of the
    # forward output tensor and is omitted.
    out_ref[...] = xk


# ----------------------------- pallas_call wrapper -----------------------------
def _full_spec(shape):
    nd = len(shape)
    return pl.BlockSpec(shape, lambda i, _nd=nd: (0,) * _nd)


def run_modl_fused(x, x_dn, xa, tmask, gram, warr, barr):
    args = [x, x_dn, xa, tmask, gram, warr, barr]
    return pl.pallas_call(
        _modl_fused_kernel,
        out_shape=jax.ShapeDtypeStruct((B, 2 * HW), F32),
        grid=(1,),
        in_specs=[_full_spec(a.shape) for a in args],
        out_specs=_full_spec((B, 2 * HW)),
        compiler_params=pltpu.CompilerParams(
            dimension_semantics=("arbitrary",)),
    )(*args)


# -------------------- wrapper-side operator fusion (XLA, outside kernel) --------------
def build_gram(mp_r, mp_i, msk, wfft, wifft):
    """Per-batch real Gram matrices N_b with  v_row @ N_b == (A^H A + l2lam I) v.

    N_b = sum_c DS_c @ wfft @ diag(m^2, m^2) @ wifft @ DSconj_c + l2lam*I, where DS_c /
    DSconj_c are the 2x2 real block forms of elementwise multiplication by S_c / conj(S_c)
    (diagonal scalings -> pure row/column scaling of the [256,256] blocks; only one
    512x512x512 GEMM per batch is needed, done here in XLA).
    """
    eye = jnp.eye(2 * HW, dtype=F32)

    def per_batch(sr, si, m):
        m2 = m * m                                   # mask applied in both A and A^H
        m2f = jnp.concatenate([m2, m2])
        wb = jnp.dot(wfft * m2f[None, :], wifft)     # wfft @ diag(m2) @ wifft
        w11, w12 = wb[:HW, :HW], wb[:HW, HW:]
        w21, w22 = wb[HW:, :HW], wb[HW:, HW:]

        def per_coil(cr, ci):
            # left-multiply by [[Dr, Di], [-Di, Dr]] (S_c), right-multiply by
            # [[Dr, -Di], [Di, Dr]] (conj(S_c)); Dr/Di diagonal -> row/col scalings.
            a11 = cr[:, None] * w11 + ci[:, None] * w21
            a12 = cr[:, None] * w12 + ci[:, None] * w22
            a21 = -ci[:, None] * w11 + cr[:, None] * w21
            a22 = -ci[:, None] * w12 + cr[:, None] * w22
            b11 = a11 * cr[None, :] + a12 * ci[None, :]
            b12 = -a11 * ci[None, :] + a12 * cr[None, :]
            b21 = a21 * cr[None, :] + a22 * ci[None, :]
            b22 = -a21 * ci[None, :] + a22 * cr[None, :]
            return jnp.concatenate(
                [jnp.concatenate([b11, b12], axis=1),
                 jnp.concatenate([b21, b22], axis=1)], axis=0)

        n = jnp.sum(jax.vmap(per_coil)(sr, si), axis=0)
        return n + L2LAM * eye

    return jax.vmap(per_batch)(mp_r, mp_i, msk)      # [B, 2*HW, 2*HW]


@jax.jit
def modl_recon_one_unroll(x_r, x_i, xa_r, xa_i, mp_r, mp_i, msk, wfft, wifft,
                          warr, barr, tmask):
    x = jnp.concatenate([x_r.reshape(B, HW), x_i.reshape(B, HW)], axis=1)
    xa = jnp.concatenate([xa_r.reshape(B, HW), xa_i.reshape(B, HW)], axis=1)
    # denoiser-layout input, channel rows padded to a full 8-sublane tile (rows >=2 zero)
    x_dn = jnp.zeros((CPAD, NLANES), F32)
    x_dn = x_dn.at[0].set(x_r.reshape(NLANES)).at[1].set(x_i.reshape(NLANES))
    gram = build_gram(mp_r.reshape(B, COILS, HW), mp_i.reshape(B, COILS, HW),
                      msk.reshape(B, HW), wfft, wifft)
    out = run_modl_fused(x, x_dn, xa, tmask, gram, warr, barr)
    return out[:, :HW].reshape(B, H, W), out[:, HW:].reshape(B, H, W)


# ----------------------------- parameter / operator setup ---------------------
def make_denoiser_params(key):
    """ResNet5Block conv weights packed as [5, CPAD, 9*CPAD] (one stacked-tap matmul per
    layer) plus [5, CPAD, 1] biases; unused channel rows/cols are zero."""
    chans = [2, NF, NF, NF, NF, 2]
    keys = jax.random.split(key, 10)
    warr = np.zeros((5, CPAD, 9 * CPAD), np.float32)
    barr = np.zeros((5, CPAD, 1), np.float32)
    for l in range(5):
        cin, cout = chans[l], chans[l + 1]
        fan_in = cin * KSIZE * KSIZE
        w = np.asarray(jax.random.normal(keys[2 * l], (cout, cin, KSIZE, KSIZE),
                                         dtype=F32)) / np.sqrt(fan_in)
        bias = np.asarray(jax.random.normal(keys[2 * l + 1], (cout,), dtype=F32)) * 0.01
        for t in range(9):                    # t = kh*3 + kw = (dh+1)*3 + (dw+1)
            kh, kw = t // 3, t % 3
            warr[l, :cout, t * CPAD:t * CPAD + cin] = w[:, :, kh, kw]
        barr[l, :cout, 0] = bias
    return jnp.asarray(warr), jnp.asarray(barr)


def make_tap_masks():
    """Per-tap zero-padding validity masks on flattened lane index q = b*HW + y*W + x."""
    q = np.arange(NLANES)
    px = q % W
    py = (q // W) % H
    masks = np.zeros((9, NLANES), np.float32)
    for t, (dh, dw) in enumerate(TAPS):
        ok = (py + dh >= 0) & (py + dh < H) & (px + dw >= 0) & (px + dw < W)
        masks[t] = ok.astype(np.float32)
    return jnp.asarray(masks)


def make_dft_block_mats():
    """2-D centered unitary DFT on row-major flattened images as real block matrices.

    For a stack V=[vr|vi] of flattened complex images (rows), FFT(V) = V @ Wfft and
    adjoint/inverse FFT(V) = V @ Wifft, with Wfft/Wifft the 2x2 real block packing of
    kron(F, F) and conj(kron(F, F)) (F = symmetric centered unitary DFT).
    """
    c = H // 2
    idx = np.arange(H) - c
    ang = -2.0 * np.pi * np.outer(idx, idx) / H
    f = np.exp(1j * ang) / np.sqrt(H)          # [16,16] symmetric, unitary, centered
    f2 = np.kron(f, f)                         # [256,256] 2-D DFT (row-major vec)
    gr = f2.real.astype(np.float32)
    gi = f2.imag.astype(np.float32)
    wfft = np.block([[gr, gi], [-gi, gr]])     # right-multiply forward FFT
    wifft = np.block([[gr, -gi], [gi, gr]])    # right-multiply adjoint FFT (conj)
    return jnp.asarray(wfft), jnp.asarray(wifft)


# ----------------------------- main -------------------------------------------
if __name__ == "__main__":
    key = jax.random.PRNGKey(0)
    k_inp, k_par = jax.random.split(key)
    ks = jax.random.split(k_inp, 8)

    # forward-pass input x and the precomputed x_adj (complex, as real/imag planes)
    x_r = 0.5 * jax.random.normal(ks[0], (B, H, W), F32)
    x_i = 0.5 * jax.random.normal(ks[1], (B, H, W), F32)
    xa_r = 0.5 * jax.random.normal(ks[2], (B, H, W), F32)
    xa_i = 0.5 * jax.random.normal(ks[3], (B, H, W), F32)

    # coil sensitivity maps, normalized so sum_c |S_c|^2 = 1
    mr = jax.random.normal(ks[4], (B, COILS, H, W), F32)
    mi = jax.random.normal(ks[5], (B, COILS, H, W), F32)
    nrm = jnp.sqrt(jnp.sum(mr * mr + mi * mi, axis=1, keepdims=True)) + 1e-6
    mp_r = mr / nrm
    mp_i = mi / nrm

    # binary k-space sampling mask
    msk = (jax.random.uniform(ks[6], (B, H, W)) < 0.5).astype(F32)

    wfft, wifft = make_dft_block_mats()
    warr, barr = make_denoiser_params(k_par)
    tmask = make_tap_masks()

    out_r, out_i = modl_recon_one_unroll(x_r, x_i, xa_r, xa_i, mp_r, mp_i, msk,
                                         wfft, wifft, warr, barr, tmask)
    jax.block_until_ready((out_r, out_i))

    assert out_r.shape == (B, H, W) and out_i.shape == (B, H, W)
    assert bool(jnp.all(jnp.isfinite(out_r))) and bool(jnp.all(jnp.isfinite(out_i)))
    print("KERNEL_OK")
</pallas_src>

<mosaic_0001>
module attributes {stable_mosaic.version = 11 : i64} {
  func.func @_modl_fused_kernel(%arg0: i32, %arg1: memref<2x512xf32, #tpu.memory_space<vmem>>, %arg2: memref<8x512xf32, #tpu.memory_space<vmem>>, %arg3: memref<2x512xf32, #tpu.memory_space<vmem>>, %arg4: memref<9x512xf32, #tpu.memory_space<vmem>>, %arg5: memref<2x512x512xf32, #tpu.memory_space<vmem>>, %arg6: memref<5x8x72xf32, #tpu.memory_space<vmem>>, %arg7: memref<5x8x1xf32, #tpu.memory_space<vmem>>, %arg8: memref<2x512xf32, #tpu.memory_space<vmem>>) attributes {dimension_semantics = [#tpu.dimension_semantics<arbitrary>], iteration_bounds = array<i64: 1>, scalar_prefetch = 0 : i64, scratch_operands = 0 : i64, tpu.core_type = #tpu.core_type<tc>, window_params = [{pipeline_mode = #tpu.pipeline_mode<synchronous>, transform_indices = @transform_0, window_bounds = array<i64: 2, 512>}, {pipeline_mode = #tpu.pipeline_mode<synchronous>, transform_indices = @transform_1, window_bounds = array<i64: 8, 512>}, {pipeline_mode = #tpu.pipeline_mode<synchronous>, transform_indices = @transform_2, window_bounds = array<i64: 2, 512>}, {pipeline_mode = #tpu.pipeline_mode<synchronous>, transform_indices = @transform_3, window_bounds = array<i64: 9, 512>}, {pipeline_mode = #tpu.pipeline_mode<synchronous>, transform_indices = @transform_4, window_bounds = array<i64: 2, 512, 512>}, {pipeline_mode = #tpu.pipeline_mode<synchronous>, transform_indices = @transform_5, window_bounds = array<i64: 5, 8, 72>}, {pipeline_mode = #tpu.pipeline_mode<synchronous>, transform_indices = @transform_6, window_bounds = array<i64: 5, 8, 1>}, {pipeline_mode = #tpu.pipeline_mode<synchronous>, transform_indices = @transform_7, window_bounds = array<i64: 2, 512>}]} {
    %c0 = arith.constant 0 : index
    %c0_0 = arith.constant 0 : index
    %0 = vector.load %arg1[%c0, %c0_0] : memref<2x512xf32, #tpu.memory_space<vmem>>, vector<2x512xf32>
    %c0_1 = arith.constant 0 : index
    %c0_2 = arith.constant 0 : index
    %1 = vector.load %arg3[%c0_1, %c0_2] : memref<2x512xf32, #tpu.memory_space<vmem>>, vector<2x512xf32>
    %c0_3 = arith.constant 0 : index
    %c0_4 = arith.constant 0 : index
    %2 = vector.load %arg2[%c0_3, %c0_4] : memref<8x512xf32, #tpu.memory_space<vmem>>, vector<8x512xf32>
    %c0_5 = arith.constant 0 : index
    %c0_6 = arith.constant 0 : index
    %3 = vector.load %arg4[%c0_5, %c0_6] : memref<9x512xf32, #tpu.memory_space<vmem>>, vector<9x512xf32>
    %c0_7 = arith.constant 0 : index
    %c0_8 = arith.constant 0 : index
    %c0_9 = arith.constant 0 : index
    %4 = vector.load %arg5[%c0_7, %c0_8, %c0_9] : memref<2x512x512xf32, #tpu.memory_space<vmem>>, vector<1x512x512xf32>
    %5 = vector.shape_cast %4 : vector<1x512x512xf32> to vector<512x512xf32>
    %c1 = arith.constant 1 : index
    %c0_10 = arith.constant 0 : index
    %c0_11 = arith.constant 0 : index
    %6 = vector.load %arg5[%c1, %c0_10, %c0_11] : memref<2x512x512xf32, #tpu.memory_space<vmem>>, vector<1x512x512xf32>
    %7 = vector.shape_cast %6 : vector<1x512x512xf32> to vector<512x512xf32>
    %8 = tpu.iota {dimensions = array<i32: 0>} : vector<2x1xi32>
    %c0_i32 = arith.constant 0 : i32
    %9 = vector.broadcast %c0_i32 : i32 to vector<2x1xi32>
    %10 = arith.cmpi eq, %8, %9 : vector<2x1xi32>
    %11 = arith.extui %10 : vector<2x1xi1> to vector<2x1xi32>
    %12 = arith.sitofp %11 : vector<2x1xi32> to vector<2x1xf32>
    %13 = tpu.iota {dimensions = array<i32: 0>} : vector<2x1xi32>
    %c1_i32 = arith.constant 1 : i32
    %14 = vector.broadcast %c1_i32 : i32 to vector<2x1xi32>
    %15 = arith.cmpi eq, %13, %14 : vector<2x1xi32>
    %16 = arith.extui %15 : vector<2x1xi1> to vector<2x1xi32>
    %17 = arith.sitofp %16 : vector<2x1xi32> to vector<2x1xf32>
    %c17_i32 = arith.constant 17 : i32
    %18 = tpu.dynamic_rotate %2 by %c17_i32 dim 1 : vector<8x512xf32>, i32 -> vector<8x512xf32>
    %19 = vector.extract_strided_slice %3 {offsets = [0, 0], sizes = [1, 512], strides = [1, 1]} : vector<9x512xf32> to vector<1x512xf32>
    %20 = vector.broadcast %19 : vector<1x512xf32> to vector<8x512xf32>
    %21 = arith.mulf %18, %20 : vector<8x512xf32>
    %c16_i32 = arith.constant 16 : i32
    %22 = tpu.dynamic_rotate %2 by %c16_i32 dim 1 : vector<8x512xf32>, i32 -> vector<8x512xf32>
    %23 = vector.extract_strided_slice %3 {offsets = [1, 0], sizes = [1, 512], strides = [1, 1]} : vector<9x512xf32> to vector<1x512xf32>
    %24 = vector.broadcast %23 : vector<1x512xf32> to vector<8x512xf32>
    %25 = arith.mulf %22, %24 : vector<8x512xf32>
    %c15_i32 = arith.constant 15 : i32
    %26 = tpu.dynamic_rotate %2 by %c15_i32 dim 1 : vector<8x512xf32>, i32 -> vector<8x512xf32>
    %27 = vector.extract_strided_slice %3 {offsets = [2, 0], sizes = [1, 512], strides = [1, 1]} : vector<9x512xf32> to vector<1x512xf32>
    %28 = vector.broadcast %27 : vector<1x512xf32> to vector<8x512xf32>
    %29 = arith.mulf %26, %28 : vector<8x512xf32>
    %c1_i32_12 = arith.constant 1 : i32
    %30 = tpu.dynamic_rotate %2 by %c1_i32_12 dim 1 : vector<8x512xf32>, i32 -> vector<8x512xf32>
    %31 = vector.extract_strided_slice %3 {offsets = [3, 0], sizes = [1, 512], strides = [1, 1]} : vector<9x512xf32> to vector<1x512xf32>
    %32 = vector.broadcast %31 : vector<1x512xf32> to vector<8x512xf32>
    %33 = arith.mulf %30, %32 : vector<8x512xf32>
    %c511_i32 = arith.constant 511 : i32
    %34 = tpu.dynamic_rotate %2 by %c511_i32 dim 1 : vector<8x512xf32>, i32 -> vector<8x512xf32>
    %35 = vector.extract_strided_slice %3 {offsets = [5, 0], sizes = [1, 512], strides = [1, 1]} : vector<9x512xf32> to vector<1x512xf32>
    %36 = vector.broadcast %35 : vector<1x512xf32> to vector<8x512xf32>
    %37 = arith.mulf %34, %36 : vector<8x512xf32>
    %c497_i32 = arith.constant 497 : i32
    %38 = tpu.dynamic_rotate %2 by %c497_i32 dim 1 : vector<8x512xf32>, i32 -> vector<8x512xf32>
    %39 = vector.extract_strided_slice %3 {offsets = [6, 0], sizes = [1, 512], strides = [1, 1]} : vector<9x512xf32> to vector<1x512xf32>
    %40 = vector.broadcast %39 : vector<1x512xf32> to vector<8x512xf32>
    %41 = arith.mulf %38, %40 : vector<8x512xf32>
    %c496_i32 = arith.constant 496 : i32
    %42 = tpu.dynamic_rotate %2 by %c496_i32 dim 1 : vector<8x512xf32>, i32 -> vector<8x512xf32>
    %43 = vector.extract_strided_slice %3 {offsets = [7, 0], sizes = [1, 512], strides = [1, 1]} : vector<9x512xf32> to vector<1x512xf32>
    %44 = vector.broadcast %43 : vector<1x512xf32> to vector<8x512xf32>
    %45 = arith.mulf %42, %44 : vector<8x512xf32>
    %c495_i32 = arith.constant 495 : i32
    %46 = tpu.dynamic_rotate %2 by %c495_i32 dim 1 : vector<8x512xf32>, i32 -> vector<8x512xf32>
    %47 = vector.extract_strided_slice %3 {offsets = [8, 0], sizes = [1, 512], strides = [1, 1]} : vector<9x512xf32> to vector<1x512xf32>
    %48 = vector.broadcast %47 : vector<1x512xf32> to vector<8x512xf32>
    %49 = arith.mulf %46, %48 : vector<8x512xf32>
    %50 = tpu.concatenate %21, %25, %29, %33, %2, %37, %41, %45, %49 in 0 : vector<8x512xf32>, vector<8x512xf32>, vector<8x512xf32>, vector<8x512xf32>, vector<8x512xf32>, vector<8x512xf32>, vector<8x512xf32>, vector<8x512xf32>, vector<8x512xf32> -> vector<72x512xf32>
    %c0_13 = arith.constant 0 : index
    %c0_14 = arith.constant 0 : index
    %c0_15 = arith.constant 0 : index
    %51 = vector.load %arg6[%c0_13, %c0_14, %c0_15] : memref<5x8x72xf32, #tpu.memory_space<vmem>>, vector<1x8x72xf32>
    %52 = vector.shape_cast %51 : vector<1x8x72xf32> to vector<8x72xf32>
    %cst = arith.constant dense<0.000000e+00> : vector<8x512xf32>
    %53 = tpu.matmul %52, %50, %cst {dimension_numbers = #tpu.dot_dimension_numbers<[1], [0], [0], [1], [0, 0, 1, 1], [], []>} : vector<8x72xf32>, vector<72x512xf32>, vector<8x512xf32> -> vector<8x512xf32>
    %c0_16 = arith.constant 0 : index
    %c0_17 = arith.constant 0 : index
    %c0_18 = arith.constant 0 : index
    %54 = vector.load %arg7[%c0_16, %c0_17, %c0_18] : memref<5x8x1xf32, #tpu.memory_space<vmem>>, vector<1x8x1xf32>
    %55 = vector.shape_cast %54 : vector<1x8x1xf32> to vector<8x1xf32>
    %56 = vector.broadcast %55 : vector<8x1xf32> to vector<8x512xf32>
    %57 = arith.addf %53, %56 : vector<8x512xf32>
    %cst_19 = arith.constant 0.000000e+00 : f32
    %58 = vector.broadcast %cst_19 : f32 to vector<8x512xf32>
    %59 = arith.maximumf %57, %58 : vector<8x512xf32>
    %c17_i32_20 = arith.constant 17 : i32
    %60 = tpu.dynamic_rotate %59 by %c17_i32_20 dim 1 : vector<8x512xf32>, i32 -> vector<8x512xf32>
    %61 = vector.extract_strided_slice %3 {offsets = [0, 0], sizes = [1, 512], strides = [1, 1]} : vector<9x512xf32> to vector<1x512xf32>
    %62 = vector.broadcast %61 : vector<1x512xf32> to vector<8x512xf32>
    %63 = arith.mulf %60, %62 : vector<8x512xf32>
    %c16_i32_21 = arith.constant 16 : i32
    %64 = tpu.dynamic_rotate %59 by %c16_i32_21 dim 1 : vector<8x512xf32>, i32 -> vector<8x512xf32>
    %65 = vector.extract_strided_slice %3 {offsets = [1, 0], sizes = [1, 512], strides = [1, 1]} : vector<9x512xf32> to vector<1x512xf32>
    %66 = vector.broadcast %65 : vector<1x512xf32> to vector<8x512xf32>
    %67 = arith.mulf %64, %66 : vector<8x512xf32>
    %c15_i32_22 = arith.constant 15 : i32
    %68 = tpu.dynamic_rotate %59 by %c15_i32_22 dim 1 : vector<8x512xf32>, i32 -> vector<8x512xf32>
    %69 = vector.extract_strided_slice %3 {offsets = [2, 0], sizes = [1, 512], strides = [1, 1]} : vector<9x512xf32> to vector<1x512xf32>
    %70 = vector.broadcast %69 : vector<1x512xf32> to vector<8x512xf32>
    %71 = arith.mulf %68, %70 : vector<8x512xf32>
    %c1_i32_23 = arith.constant 1 : i32
    %72 = tpu.dynamic_rotate %59 by %c1_i32_23 dim 1 : vector<8x512xf32>, i32 -> vector<8x512xf32>
    %73 = vector.extract_strided_slice %3 {offsets = [3, 0], sizes = [1, 512], strides = [1, 1]} : vector<9x512xf32> to vector<1x512xf32>
    %74 = vector.broadcast %73 : vector<1x512xf32> to vector<8x512xf32>
    %75 = arith.mulf %72, %74 : vector<8x512xf32>
    %c511_i32_24 = arith.constant 511 : i32
    %76 = tpu.dynamic_rotate %59 by %c511_i32_24 dim 1 : vector<8x512xf32>, i32 -> vector<8x512xf32>
    %77 = vector.extract_strided_slice %3 {offsets = [5, 0], sizes = [1, 512], strides = [1, 1]} : vector<9x512xf32> to vector<1x512xf32>
    %78 = vector.broadcast %77 : vector<1x512xf32> to vector<8x512xf32>
    %79 = arith.mulf %76, %78 : vector<8x512xf32>
    %c497_i32_25 = arith.constant 497 : i32
    %80 = tpu.dynamic_rotate %59 by %c497_i32_25 dim 1 : vector<8x512xf32>, i32 -> vector<8x512xf32>
    %81 = vector.extract_strided_slice %3 {offsets = [6, 0], sizes = [1, 512], strides = [1, 1]} : vector<9x512xf32> to vector<1x512xf32>
    %82 = vector.broadcast %81 : vector<1x512xf32> to vector<8x512xf32>
    %83 = arith.mulf %80, %82 : vector<8x512xf32>
    %c496_i32_26 = arith.constant 496 : i32
    %84 = tpu.dynamic_rotate %59 by %c496_i32_26 dim 1 : vector<8x512xf32>, i32 -> vector<8x512xf32>
    %85 = vector.extract_strided_slice %3 {offsets = [7, 0], sizes = [1, 512], strides = [1, 1]} : vector<9x512xf32> to vector<1x512xf32>
    %86 = vector.broadcast %85 : vector<1x512xf32> to vector<8x512xf32>
    %87 = arith.mulf %84, %86 : vector<8x512xf32>
    %c495_i32_27 = arith.constant 495 : i32
    %88 = tpu.dynamic_rotate %59 by %c495_i32_27 dim 1 : vector<8x512xf32>, i32 -> vector<8x512xf32>
    %89 = vector.extract_strided_slice %3 {offsets = [8, 0], sizes = [1, 512], strides = [1, 1]} : vector<9x512xf32> to vector<1x512xf32>
    %90 = vector.broadcast %89 : vector<1x512xf32> to vector<8x512xf32>
    %91 = arith.mulf %88, %90 : vector<8x512xf32>
    %92 = tpu.concatenate %63, %67, %71, %75, %59, %79, %83, %87, %91 in 0 : vector<8x512xf32>, vector<8x512xf32>, vector<8x512xf32>, vector<8x512xf32>, vector<8x512xf32>, vector<8x512xf32>, vector<8x512xf32>, vector<8x512xf32>, vector<8x512xf32> -> vector<72x512xf32>
    %c1_28 = arith.constant 1 : index
    %c0_29 = arith.constant 0 : index
    %c0_30 = arith.constant 0 : index
    %93 = vector.load %arg6[%c1_28, %c0_29, %c0_30] : memref<5x8x72xf32, #tpu.memory_space<vmem>>, vector<1x8x72xf32>
    %94 = vector.shape_cast %93 : vector<1x8x72xf32> to vector<8x72xf32>
    %cst_31 = arith.constant dense<0.000000e+00> : vector<8x512xf32>
    %95 = tpu.matmul %94, %92, %cst_31 {dimension_numbers = #tpu.dot_dimension_numbers<[1], [0], [0], [1], [0, 0, 1, 1], [], []>} : vector<8x72xf32>, vector<72x512xf32>, vector<8x512xf32> -> vector<8x512xf32>
    %c1_32 = arith.constant 1 : index
    %c0_33 = arith.constant 0 : index
    %c0_34 = arith.constant 0 : index
    %96 = vector.load %arg7[%c1_32, %c0_33, %c0_34] : memref<5x8x1xf32, #tpu.memory_space<vmem>>, vector<1x8x1xf32>
    %97 = vector.shape_cast %96 : vector<1x8x1xf32> to vector<8x1xf32>
    %98 = vector.broadcast %97 : vector<8x1xf32> to vector<8x512xf32>
    %99 = arith.addf %95, %98 : vector<8x512xf32>
    %cst_35 = arith.constant 0.000000e+00 : f32
    %100 = vector.broadcast %cst_35 : f32 to vector<8x512xf32>
    %101 = arith.maximumf %99, %100 : vector<8x512xf32>
    %c17_i32_36 = arith.constant 17 : i32
    %102 = tpu.dynamic_rotate %101 by %c17_i32_36 dim 1 : vector<8x512xf32>, i32 -> vector<8x512xf32>
    %103 = vector.extract_strided_slice %3 {offsets = [0, 0], sizes = [1, 512], strides = [1, 1]} : vector<9x512xf32> to vector<1x512xf32>
    %104 = vector.broadcast %103 : vector<1x512xf32> to vector<8x512xf32>
    %105 = arith.mulf %102, %104 : vector<8x512xf32>
    %c16_i32_37 = arith.constant 16 : i32
    %106 = tpu.dynamic_rotate %101 by %c16_i32_37 dim 1 : vector<8x512xf32>, i32 -> vector<8x512xf32>
    %107 = vector.extract_strided_slice %3 {offsets = [1, 0], sizes = [1, 512], strides = [1, 1]} : vector<9x512xf32> to vector<1x512xf32>
    %108 = vector.broadcast %107 : vector<1x512xf32> to vector<8x512xf32>
    %109 = arith.mulf %106, %108 : vector<8x512xf32>
    %c15_i32_38 = arith.constant 15 : i32
    %110 = tpu.dynamic_rotate %101 by %c15_i32_38 dim 1 : vector<8x512xf32>, i32 -> vector<8x512xf32>
    %111 = vector.extract_strided_slice %3 {offsets = [2, 0], sizes = [1, 512], strides = [1, 1]} : vector<9x512xf32> to vector<1x512xf32>
    %112 = vector.broadcast %111 : vector<1x512xf32> to vector<8x512xf32>
    %113 = arith.mulf %110, %112 : vector<8x512xf32>
    %c1_i32_39 = arith.constant 1 : i32
    %114 = tpu.dynamic_rotate %101 by %c1_i32_39 dim 1 : vector<8x512xf32>, i32 -> vector<8x512xf32>
    %115 = vector.extract_strided_slice %3 {offsets = [3, 0], sizes = [1, 512], strides = [1, 1]} : vector<9x512xf32> to vector<1x512xf32>
    %116 = vector.broadcast %115 : vector<1x512xf32> to vector<8x512xf32>
    %117 = arith.mulf %114, %116 : vector<8x512xf32>
    %c511_i32_40 = arith.constant 511 : i32
    %118 = tpu.dynamic_rotate %101 by %c511_i32_40 dim 1 : vector<8x512xf32>, i32 -> vector<8x512xf32>
    %119 = vector.extract_strided_slice %3 {offsets = [5, 0], sizes = [1, 512], strides = [1, 1]} : vector<9x512xf32> to vector<1x512xf32>
    %120 = vector.broadcast %119 : vector<1x512xf32> to vector<8x512xf32>
    %121 = arith.mulf %118, %120 : vector<8x512xf32>
    %c497_i32_41 = arith.constant 497 : i32
    %122 = tpu.dynamic_rotate %101 by %c497_i32_41 dim 1 : vector<8x512xf32>, i32 -> vector<8x512xf32>
    %123 = vector.extract_strided_slice %3 {offsets = [6, 0], sizes = [1, 512], strides = [1, 1]} : vector<9x512xf32> to vector<1x512xf32>
    %124 = vector.broadcast %123 : vector<1x512xf32> to vector<8x512xf32>
    %125 = arith.mulf %122, %124 : vector<8x512xf32>
    %c496_i32_42 = arith.constant 496 : i32
    %126 = tpu.dynamic_rotate %101 by %c496_i32_42 dim 1 : vector<8x512xf32>, i32 -> vector<8x512xf32>
    %127 = vector.extract_strided_slice %3 {offsets = [7, 0], sizes = [1, 512], strides = [1, 1]} : vector<9x512xf32> to vector<1x512xf32>
    %128 = vector.broadcast %127 : vector<1x512xf32> to vector<8x512xf32>
    %129 = arith.mulf %126, %128 : vector<8x512xf32>
    %c495_i32_43 = arith.constant 495 : i32
    %130 = tpu.dynamic_rotate %101 by %c495_i32_43 dim 1 : vector<8x512xf32>, i32 -> vector<8x512xf32>
    %131 = vector.extract_strided_slice %3 {offsets = [8, 0], sizes = [1, 512], strides = [1, 1]} : vector<9x512xf32> to vector<1x512xf32>
    %132 = vector.broadcast %131 : vector<1x512xf32> to vector<8x512xf32>
    %133 = arith.mulf %130, %132 : vector<8x512xf32>
    %134 = tpu.concatenate %105, %109, %113, %117, %101, %121, %125, %129, %133 in 0 : vector<8x512xf32>, vector<8x512xf32>, vector<8x512xf32>, vector<8x512xf32>, vector<8x512xf32>, vector<8x512xf32>, vector<8x512xf32>, vector<8x512xf32>, vector<8x512xf32> -> vector<72x512xf32>
    %c2 = arith.constant 2 : index
    %c0_44 = arith.constant 0 : index
    %c0_45 = arith.constant 0 : index
    %135 = vector.load %arg6[%c2, %c0_44, %c0_45] : memref<5x8x72xf32, #tpu.memory_space<vmem>>, vector<1x8x72xf32>
    %136 = vector.shape_cast %135 : vector<1x8x72xf32> to vector<8x72xf32>
    %cst_46 = arith.constant dense<0.000000e+00> : vector<8x512xf32>
    %137 = tpu.matmul %136, %134, %cst_46 {dimension_numbers = #tpu.dot_dimension_numbers<[1], [0], [0], [1], [0, 0, 1, 1], [], []>} : vector<8x72xf32>, vector<72x512xf32>, vector<8x512xf32> -> vector<8x512xf32>
    %c2_47 = arith.constant 2 : index
    %c0_48 = arith.constant 0 : index
    %c0_49 = arith.constant 0 : index
    %138 = vector.load %arg7[%c2_47, %c0_48, %c0_49] : memref<5x8x1xf32, #tpu.memory_space<vmem>>, vector<1x8x1xf32>
    %139 = vector.shape_cast %138 : vector<1x8x1xf32> to vector<8x1xf32>
    %140 = vector.broadcast %139 : vector<8x1xf32> to vector<8x512xf32>
    %141 = arith.addf %137, %140 : vector<8x512xf32>
    %cst_50 = arith.constant 0.000000e+00 : f32
    %142 = vector.broadcast %cst_50 : f32 to vector<8x512xf32>
    %143 = arith.maximumf %141, %142 : vector<8x512xf32>
    %c17_i32_51 = arith.constant 17 : i32
    %144 = tpu.dynamic_rotate %143 by %c17_i32_51 dim 1 : vector<8x512xf32>, i32 -> vector<8x512xf32>
    %145 = vector.extract_strided_slice %3 {offsets = [0, 0], sizes = [1, 512], strides = [1, 1]} : vector<9x512xf32> to vector<1x512xf32>
    %146 = vector.broadcast %145 : vector<1x512xf32> to vector<8x512xf32>
    %147 = arith.mulf %144, %146 : vector<8x512xf32>
    %c16_i32_52 = arith.constant 16 : i32
    %148 = tpu.dynamic_rotate %143 by %c16_i32_52 dim 1 : vector<8x512xf32>, i32 -> vector<8x512xf32>
    %149 = vector.extract_strided_slice %3 {offsets = [1, 0], sizes = [1, 512], strides = [1, 1]} : vector<9x512xf32> to vector<1x512xf32>
    %150 = vector.broadcast %149 : vector<1x512xf32> to vector<8x512xf32>
    %151 = arith.mulf %148, %150 : vector<8x512xf32>
    %c15_i32_53 = arith.constant 15 : i32
    %152 = tpu.dynamic_rotate %143 by %c15_i32_53 dim 1 : vector<8x512xf32>, i32 -> vector<8x512xf32>
    %153 = vector.extract_strided_slice %3 {offsets = [2, 0], sizes = [1, 512], strides = [1, 1]} : vector<9x512xf32> to vector<1x512xf32>
    %154 = vector.broadcast %153 : vector<1x512xf32> to vector<8x512xf32>
    %155 = arith.mulf %152, %154 : vector<8x512xf32>
    %c1_i32_54 = arith.constant 1 : i32
    %156 = tpu.dynamic_rotate %143 by %c1_i32_54 dim 1 : vector<8x512xf32>, i32 -> vector<8x512xf32>
    %157 = vector.extract_strided_slice %3 {offsets = [3, 0], sizes = [1, 512], strides = [1, 1]} : vector<9x512xf32> to vector<1x512xf32>
    %158 = vector.broadcast %157 : vector<1x512xf32> to vector<8x512xf32>
    %159 = arith.mulf %156, %158 : vector<8x512xf32>
    %c511_i32_55 = arith.constant 511 : i32
    %160 = tpu.dynamic_rotate %143 by %c511_i32_55 dim 1 : vector<8x512xf32>, i32 -> vector<8x512xf32>
    %161 = vector.extract_strided_slice %3 {offsets = [5, 0], sizes = [1, 512], strides = [1, 1]} : vector<9x512xf32> to vector<1x512xf32>
    %162 = vector.broadcast %161 : vector<1x512xf32> to vector<8x512xf32>
    %163 = arith.mulf %160, %162 : vector<8x512xf32>
    %c497_i32_56 = arith.constant 497 : i32
    %164 = tpu.dynamic_rotate %143 by %c497_i32_56 dim 1 : vector<8x512xf32>, i32 -> vector<8x512xf32>
    %165 = vector.extract_strided_slice %3 {offsets = [6, 0], sizes = [1, 512], strides = [1, 1]} : vector<9x512xf32> to vector<1x512xf32>
    %166 = vector.broadcast %165 : vector<1x512xf32> to vector<8x512xf32>
    %167 = arith.mulf %164, %166 : vector<8x512xf32>
    %c496_i32_57 = arith.constant 496 : i32
    %168 = tpu.dynamic_rotate %143 by %c496_i32_57 dim 1 : vector<8x512xf32>, i32 -> vector<8x512xf32>
    %169 = vector.extract_strided_slice %3 {offsets = [7, 0], sizes = [1, 512], strides = [1, 1]} : vector<9x512xf32> to vector<1x512xf32>
    %170 = vector.broadcast %169 : vector<1x512xf32> to vector<8x512xf32>
    %171 = arith.mulf %168, %170 : vector<8x512xf32>
    %c495_i32_58 = arith.constant 495 : i32
    %172 = tpu.dynamic_rotate %143 by %c495_i32_58 dim 1 : vector<8x512xf32>, i32 -> vector<8x512xf32>
    %173 = vector.extract_strided_slice %3 {offsets = [8, 0], sizes = [1, 512], strides = [1, 1]} : vector<9x512xf32> to vector<1x512xf32>
    %174 = vector.broadcast %173 : vector<1x512xf32> to vector<8x512xf32>
    %175 = arith.mulf %172, %174 : vector<8x512xf32>
    %176 = tpu.concatenate %147, %151, %155, %159, %143, %163, %167, %171, %175 in 0 : vector<8x512xf32>, vector<8x512xf32>, vector<8x512xf32>, vector<8x512xf32>, vector<8x512xf32>, vector<8x512xf32>, vector<8x512xf32>, vector<8x512xf32>, vector<8x512xf32> -> vector<72x512xf32>
    %c3 = arith.constant 3 : index
    %c0_59 = arith.constant 0 : index
    %c0_60 = arith.constant 0 : index
    %177 = vector.load %arg6[%c3, %c0_59, %c0_60] : memref<5x8x72xf32, #tpu.memory_space<vmem>>, vector<1x8x72xf32>
    %178 = vector.shape_cast %177 : vector<1x8x72xf32> to vector<8x72xf32>
    %cst_61 = arith.constant dense<0.000000e+00> : vector<8x512xf32>
    %179 = tpu.matmul %178, %176, %cst_61 {dimension_numbers = #tpu.dot_dimension_numbers<[1], [0], [0], [1], [0, 0, 1, 1], [], []>} : vector<8x72xf32>, vector<72x512xf32>, vector<8x512xf32> -> vector<8x512xf32>
    %c3_62 = arith.constant 3 : index
    %c0_63 = arith.constant 0 : index
    %c0_64 = arith.constant 0 : index
    %180 = vector.load %arg7[%c3_62, %c0_63, %c0_64] : memref<5x8x1xf32, #tpu.memory_space<vmem>>, vector<1x8x1xf32>
    %181 = vector.shape_cast %180 : vector<1x8x1xf32> to vector<8x1xf32>
    %182 = vector.broadcast %181 : vector<8x1xf32> to vector<8x512xf32>
    %183 = arith.addf %179, %182 : vector<8x512xf32>
    %cst_65 = arith.constant 0.000000e+00 : f32
    %184 = vector.broadcast %cst_65 : f32 to vector<8x512xf32>
    %185 = arith.maximumf %183, %184 : vector<8x512xf32>
    %c17_i32_66 = arith.constant 17 : i32
    %186 = tpu.dynamic_rotate %185 by %c17_i32_66 dim 1 : vector<8x512xf32>, i32 -> vector<8x512xf32>
    %187 = vector.extract_strided_slice %3 {offsets = [0, 0], sizes = [1, 512], strides = [1, 1]} : vector<9x512xf32> to vector<1x512xf32>
    %188 = vector.broadcast %187 : vector<1x512xf32> to vector<8x512xf32>
    %189 = arith.mulf %186, %188 : vector<8x512xf32>
    %c16_i32_67 = arith.constant 16 : i32
    %190 = tpu.dynamic_rotate %185 by %c16_i32_67 dim 1 : vector<8x512xf32>, i32 -> vector<8x512xf32>
    %191 = vector.extract_strided_slice %3 {offsets = [1, 0], sizes = [1, 512], strides = [1, 1]} : vector<9x512xf32> to vector<1x512xf32>
    %192 = vector.broadcast %191 : vector<1x512xf32> to vector<8x512xf32>
    %193 = arith.mulf %190, %192 : vector<8x512xf32>
    %c15_i32_68 = arith.constant 15 : i32
    %194 = tpu.dynamic_rotate %185 by %c15_i32_68 dim 1 : vector<8x512xf32>, i32 -> vector<8x512xf32>
    %195 = vector.extract_strided_slice %3 {offsets = [2, 0], sizes = [1, 512], strides = [1, 1]} : vector<9x512xf32> to vector<1x512xf32>
    %196 = vector.broadcast %195 : vector<1x512xf32> to vector<8x512xf32>
    %197 = arith.mulf %194, %196 : vector<8x512xf32>
    %c1_i32_69 = arith.constant 1 : i32
    %198 = tpu.dynamic_rotate %185 by %c1_i32_69 dim 1 : vector<8x512xf32>, i32 -> vector<8x512xf32>
    %199 = vector.extract_strided_slice %3 {offsets = [3, 0], sizes = [1, 512], strides = [1, 1]} : vector<9x512xf32> to vector<1x512xf32>
    %200 = vector.broadcast %199 : vector<1x512xf32> to vector<8x512xf32>
    %201 = arith.mulf %198, %200 : vector<8x512xf32>
    %c511_i32_70 = arith.constant 511 : i32
    %202 = tpu.dynamic_rotate %185 by %c511_i32_70 dim 1 : vector<8x512xf32>, i32 -> vector<8x512xf32>
    %203 = vector.extract_strided_slice %3 {offsets = [5, 0], sizes = [1, 512], strides = [1, 1]} : vector<9x512xf32> to vector<1x512xf32>
    %204 = vector.broadcast %203 : vector<1x512xf32> to vector<8x512xf32>
    %205 = arith.mulf %202, %204 : vector<8x512xf32>
    %c497_i32_71 = arith.constant 497 : i32
    %206 = tpu.dynamic_rotate %185 by %c497_i32_71 dim 1 : vector<8x512xf32>, i32 -> vector<8x512xf32>
    %207 = vector.extract_strided_slice %3 {offsets = [6, 0], sizes = [1, 512], strides = [1, 1]} : vector<9x512xf32> to vector<1x512xf32>
    %208 = vector.broadcast %207 : vector<1x512xf32> to vector<8x512xf32>
    %209 = arith.mulf %206, %208 : vector<8x512xf32>
    %c496_i32_72 = arith.constant 496 : i32
    %210 = tpu.dynamic_rotate %185 by %c496_i32_72 dim 1 : vector<8x512xf32>, i32 -> vector<8x512xf32>
    %211 = vector.extract_strided_slice %3 {offsets = [7, 0], sizes = [1, 512], strides = [1, 1]} : vector<9x512xf32> to vector<1x512xf32>
    %212 = vector.broadcast %211 : vector<1x512xf32> to vector<8x512xf32>
    %213 = arith.mulf %210, %212 : vector<8x512xf32>
    %c495_i32_73 = arith.constant 495 : i32
    %214 = tpu.dynamic_rotate %185 by %c495_i32_73 dim 1 : vector<8x512xf32>, i32 -> vector<8x512xf32>
    %215 = vector.extract_strided_slice %3 {offsets = [8, 0], sizes = [1, 512], strides = [1, 1]} : vector<9x512xf32> to vector<1x512xf32>
    %216 = vector.broadcast %215 : vector<1x512xf32> to vector<8x512xf32>
    %217 = arith.mulf %214, %216 : vector<8x512xf32>
    %218 = tpu.concatenate %189, %193, %197, %201, %185, %205, %209, %213, %217 in 0 : vector<8x512xf32>, vector<8x512xf32>, vector<8x512xf32>, vector<8x512xf32>, vector<8x512xf32>, vector<8x512xf32>, vector<8x512xf32>, vector<8x512xf32>, vector<8x512xf32> -> vector<72x512xf32>
    %c4 = arith.constant 4 : index
    %c0_74 = arith.constant 0 : index
    %c0_75 = arith.constant 0 : index
    %219 = vector.load %arg6[%c4, %c0_74, %c0_75] : memref<5x8x72xf32, #tpu.memory_space<vmem>>, vector<1x8x72xf32>
    %220 = vector.shape_cast %219 : vector<1x8x72xf32> to vector<8x72xf32>
    %cst_76 = arith.constant dense<0.000000e+00> : vector<8x512xf32>
    %221 = tpu.matmul %220, %218, %cst_76 {dimension_numbers = #tpu.dot_dimension_numbers<[1], [0], [0], [1], [0, 0, 1, 1], [], []>} : vector<8x72xf32>, vector<72x512xf32>, vector<8x512xf32> -> vector<8x512xf32>
    %c4_77 = arith.constant 4 : index
    %c0_78 = arith.constant 0 : index
    %c0_79 = arith.constant 0 : index
    %222 = vector.load %arg7[%c4_77, %c0_78, %c0_79] : memref<5x8x1xf32, #tpu.memory_space<vmem>>, vector<1x8x1xf32>
    %223 = vector.shape_cast %222 : vector<1x8x1xf32> to vector<8x1xf32>
    %224 = vector.broadcast %223 : vector<8x1xf32> to vector<8x512xf32>
    %225 = arith.addf %221, %224 : vector<8x512xf32>
    %226 = arith.addf %2, %225 : vector<8x512xf32>
    %227 = vector.extract_strided_slice %226 {offsets = [0, 0], sizes = [1, 256], strides = [1, 1]} : vector<8x512xf32> to vector<1x256xf32>
    %228 = vector.extract_strided_slice %226 {offsets = [1, 0], sizes = [1, 256], strides = [1, 1]} : vector<8x512xf32> to vector<1x256xf32>
    %229 = tpu.concatenate %227, %228 in 1 : vector<1x256xf32>, vector<1x256xf32> -> vector<1x512xf32>
    %230 = vector.broadcast %12 : vector<2x1xf32> to vector<2x512xf32>
    %231 = vector.broadcast %229 : vector<1x512xf32> to vector<2x512xf32>
    %232 = arith.mulf %230, %231 : vector<2x512xf32>
    %233 = vector.extract_strided_slice %226 {offsets = [0, 256], sizes = [1, 256], strides = [1, 1]} : vector<8x512xf32> to vector<1x256xf32>
    %234 = vector.extract_strided_slice %226 {offsets = [1, 256], sizes = [1, 256], strides = [1, 1]} : vector<8x512xf32> to vector<1x256xf32>
    %235 = tpu.concatenate %233, %234 in 1 : vector<1x256xf32>, vector<1x256xf32> -> vector<1x512xf32>
    %236 = vector.broadcast %17 : vector<2x1xf32> to vector<2x512xf32>
    %237 = vector.broadcast %235 : vector<1x512xf32> to vector<2x512xf32>
    %238 = arith.mulf %236, %237 : vector<2x512xf32>
    %239 = arith.addf %232, %238 : vector<2x512xf32>
    %cst_80 = arith.constant 5.000000e-02 : f32
    %240 = vector.broadcast %cst_80 : f32 to vector<2x512xf32>
    %241 = arith.mulf %240, %239 : vector<2x512xf32>
    %242 = arith.addf %1, %241 : vector<2x512xf32>
    %cst_81 = arith.constant dense<0.000000e+00> : vector<2x512xf32>
    %243 = tpu.matmul %0, %5, %cst_81 {dimension_numbers = #tpu.dot_dimension_numbers<[1], [0], [0], [1], [0, 0, 1, 1], [], []>} : vector<2x512xf32>, vector<512x512xf32>, vector<2x512xf32> -> vector<2x512xf32>
    %244 = vector.broadcast %12 : vector<2x1xf32> to vector<2x512xf32>
    %245 = arith.mulf %244, %243 : vector<2x512xf32>
    %cst_82 = arith.constant dense<0.000000e+00> : vector<2x512xf32>
    %246 = tpu.matmul %0, %7, %cst_82 {dimension_numbers = #tpu.dot_dimension_numbers<[1], [0], [0], [1], [0, 0, 1, 1], [], []>} : vector<2x512xf32>, vector<512x512xf32>, vector<2x512xf32> -> vector<2x512xf32>
    %247 = vector.broadcast %17 : vector<2x1xf32> to vector<2x512xf32>
    %248 = arith.mulf %247, %246 : vector<2x512xf32>
    %249 = arith.addf %245, %248 : vector<2x512xf32>
    %250 = arith.subf %242, %249 : vector<2x512xf32>
    %251 = arith.mulf %250, %250 : vector<2x512xf32>
    %cst_83 = arith.constant dense<0.000000e+00> : vector<2xf32>
    %252 = vector.multi_reduction <add>, %251, %cst_83 [1] : vector<2x512xf32> to vector<2xf32>
    %253 = vector.shape_cast %252 : vector<2xf32> to vector<2x1xf32>
    %c0_i32_84 = arith.constant 0 : i32
    %254 = vector.shape_cast %253 : vector<2x1xf32> to vector<1x2x1xf32>
    %cst_85 = arith.constant dense<0xFF800000> : vector<1xf32>
    %255 = vector.multi_reduction <maximumf>, %254, %cst_85 [1, 2] : vector<1x2x1xf32> to vector<1xf32>
    %256 = vector.shape_cast %255 : vector<1xf32> to vector<1x1x1xf32>
    %257 = vector.extract %256[0, 0, 0] : f32 from vector<1x1x1xf32>
    %258 = vector.broadcast %257 : f32 to vector<1x1xf32>
    %cst_86 = arith.constant 1.000000e-10 : f32
    %259 = vector.broadcast %cst_86 : f32 to vector<1x1xf32>
    %260 = arith.cmpf oge, %258, %259 : vector<1x1xf32>
    %cst_87 = arith.constant dense<0.000000e+00> : vector<2x512xf32>
    %261 = tpu.matmul %250, %5, %cst_87 {dimension_numbers = #tpu.dot_dimension_numbers<[1], [0], [0], [1], [0, 0, 1, 1], [], []>} : vector<2x512xf32>, vector<512x512xf32>, vector<2x512xf32> -> vector<2x512xf32>
    %262 = vector.broadcast %12 : vector<2x1xf32> to vector<2x512xf32>
    %263 = arith.mulf %262, %261 : vector<2x512xf32>
    %cst_88 = arith.constant dense<0.000000e+00> : vector<2x512xf32>
    %264 = tpu.matmul %250, %7, %cst_88 {dimension_numbers = #tpu.dot_dimension_numbers<[1], [0], [0], [1], [0, 0, 1, 1], [], []>} : vector<2x512xf32>, vector<512x512xf32>, vector<2x512xf32> -> vector<2x512xf32>
    %265 = vector.broadcast %17 : vector<2x1xf32> to vector<2x512xf32>
    %266 = arith.mulf %265, %264 : vector<2x512xf32>
    %267 = arith.addf %263, %266 : vector<2x512xf32>
    %268 = arith.mulf %250, %267 : vector<2x512xf32>
    %cst_89 = arith.constant dense<0.000000e+00> : vector<2xf32>
    %269 = vector.multi_reduction <add>, %268, %cst_89 [1] : vector<2x512xf32> to vector<2xf32>
    %270 = vector.shape_cast %269 : vector<2xf32> to vector<2x1xf32>
    %cst_90 = arith.constant 1.000000e+00 : f32
    %271 = vector.shape_cast %260 : vector<1x1xi1> to vector<1x1xi1>
    %272 = vector.broadcast %271 : vector<1x1xi1> to vector<2x1xi1>
    %273 = vector.broadcast %cst_90 : f32 to vector<2x1xf32>
    %274 = arith.select %272, %270, %273 : vector<2x1xi1>, vector<2x1xf32>
    %275 = arith.divf %253, %274 : vector<2x1xf32>
    %276 = vector.broadcast %275 : vector<2x1xf32> to vector<2x512xf32>
    %277 = arith.mulf %276, %250 : vector<2x512xf32>
    %278 = arith.addf %0, %277 : vector<2x512xf32>
    %279 = vector.broadcast %275 : vector<2x1xf32> to vector<2x512xf32>
    %280 = arith.mulf %279, %267 : vector<2x512xf32>
    %281 = arith.subf %250, %280 : vector<2x512xf32>
    %282 = arith.mulf %281, %281 : vector<2x512xf32>
    %cst_91 = arith.constant dense<0.000000e+00> : vector<2xf32>
    %283 = vector.multi_reduction <add>, %282, %cst_91 [1] : vector<2x512xf32> to vector<2xf32>
    %284 = vector.shape_cast %283 : vector<2xf32> to vector<2x1xf32>
    %cst_92 = arith.constant 1.000000e+00 : f32
    %285 = vector.shape_cast %260 : vector<1x1xi1> to vector<1x1xi1>
    %286 = vector.broadcast %285 : vector<1x1xi1> to vector<2x1xi1>
    %287 = vector.broadcast %cst_92 : f32 to vector<2x1xf32>
    %288 = arith.select %286, %253, %287 : vector<2x1xi1>, vector<2x1xf32>
    %289 = arith.divf %284, %288 : vector<2x1xf32>
    %290 = vector.broadcast %289 : vector<2x1xf32> to vector<2x512xf32>
    %291 = arith.mulf %290, %250 : vector<2x512xf32>
    %292 = arith.addf %291, %281 : vector<2x512xf32>
    %293 = vector.shape_cast %260 : vector<1x1xi1> to vector<1x1xi1>
    %294 = vector.broadcast %293 : vector<1x1xi1> to vector<2x512xi1>
    %295 = arith.select %294, %278, %0 : vector<2x512xi1>, vector<2x512xf32>
    %296 = vector.shape_cast %260 : vector<1x1xi1> to vector<1x1xi1>
    %297 = vector.broadcast %296 : vector<1x1xi1> to vector<2x512xi1>
    %298 = arith.select %297, %281, %250 : vector<2x512xi1>, vector<2x512xf32>
    %299 = vector.shape_cast %260 : vector<1x1xi1> to vector<1x1xi1>
    %300 = vector.broadcast %299 : vector<1x1xi1> to vector<2x512xi1>
    %301 = arith.select %300, %292, %250 : vector<2x512xi1>, vector<2x512xf32>
    %302 = vector.shape_cast %260 : vector<1x1xi1> to vector<1x1xi1>
    %303 = vector.broadcast %302 : vector<1x1xi1> to vector<2x1xi1>
    %304 = arith.select %303, %284, %253 : vector<2x1xi1>, vector<2x1xf32>
    %305 = vector.shape_cast %260 : vector<1x1xi1> to vector<1x1xi1>
    %306 = vector.broadcast %305 : vector<1x1xi1> to vector<2x1xi1>
    %307 = arith.select %306, %284, %253 : vector<2x1xi1>, vector<2x1xf32>
    %c1_i32_93 = arith.constant 1 : i32
    %308 = vector.shape_cast %307 : vector<2x1xf32> to vector<1x2x1xf32>
    %cst_94 = arith.constant dense<0xFF800000> : vector<1xf32>
    %309 = vector.multi_reduction <maximumf>, %308, %cst_94 [1, 2] : vector<1x2x1xf32> to vector<1xf32>
    %310 = vector.shape_cast %309 : vector<1xf32> to vector<1x1x1xf32>
    %311 = vector.extract %310[0, 0, 0] : f32 from vector<1x1x1xf32>
    %312 = vector.broadcast %311 : f32 to vector<1x1xf32>
    %cst_95 = arith.constant 1.000000e-10 : f32
    %313 = vector.broadcast %cst_95 : f32 to vector<1x1xf32>
    %314 = arith.cmpf oge, %312, %313 : vector<1x1xf32>
    %cst_96 = arith.constant dense<0.000000e+00> : vector<2x512xf32>
    %315 = tpu.matmul %301, %5, %cst_96 {dimension_numbers = #tpu.dot_dimension_numbers<[1], [0], [0], [1], [0, 0, 1, 1], [], []>} : vector<2x512xf32>, vector<512x512xf32>, vector<2x512xf32> -> vector<2x512xf32>
    %316 = vector.broadcast %12 : vector<2x1xf32> to vector<2x512xf32>
    %317 = arith.mulf %316, %315 : vector<2x512xf32>
    %cst_97 = arith.constant dense<0.000000e+00> : vector<2x512xf32>
    %318 = tpu.matmul %301, %7, %cst_97 {dimension_numbers = #tpu.dot_dimension_numbers<[1], [0], [0], [1], [0, 0, 1, 1], [], []>} : vector<2x512xf32>, vector<512x512xf32>, vector<2x512xf32> -> vector<2x512xf32>
    %319 = vector.broadcast %17 : vector<2x1xf32> to vector<2x512xf32>
    %320 = arith.mulf %319, %318 : vector<2x512xf32>
    %321 = arith.addf %317, %320 : vector<2x512xf32>
    %322 = arith.mulf %301, %321 : vector<2x512xf32>
    %cst_98 = arith.constant dense<0.000000e+00> : vector<2xf32>
    %323 = vector.multi_reduction <add>, %322, %cst_98 [1] : vector<2x512xf32> to vector<2xf32>
    %324 = vector.shape_cast %323 : vector<2xf32> to vector<2x1xf32>
    %cst_99 = arith.constant 1.000000e+00 : f32
    %325 = vector.shape_cast %314 : vector<1x1xi1> to vector<1x1xi1>
    %326 = vector.broadcast %325 : vector<1x1xi1> to vector<2x1xi1>
    %327 = vector.broadcast %cst_99 : f32 to vector<2x1xf32>
    %328 = arith.select %326, %324, %327 : vector<2x1xi1>, vector<2x1xf32>
    %329 = arith.divf %304, %328 : vector<2x1xf32>
    %330 = vector.broadcast %329 : vector<2x1xf32> to vector<2x512xf32>
    %331 = arith.mulf %330, %301 : vector<2x512xf32>
    %332 = arith.addf %295, %331 : vector<2x512xf32>
    %333 = vector.broadcast %329 : vector<2x1xf32> to vector<2x512xf32>
    %334 = arith.mulf %333, %321 : vector<2x512xf32>
    %335 = arith.subf %298, %334 : vector<2x512xf32>
    %336 = arith.mulf %335, %335 : vector<2x512xf32>
    %cst_100 = arith.constant dense<0.000000e+00> : vector<2xf32>
    %337 = vector.multi_reduction <add>, %336, %cst_100 [1] : vector<2x512xf32> to vector<2xf32>
    %338 = vector.shape_cast %337 : vector<2xf32> to vector<2x1xf32>
    %cst_101 = arith.constant 1.000000e+00 : f32
    %339 = vector.shape_cast %314 : vector<1x1xi1> to vector<1x1xi1>
    %340 = vector.broadcast %339 : vector<1x1xi1> to vector<2x1xi1>
    %341 = vector.broadcast %cst_101 : f32 to vector<2x1xf32>
    %342 = arith.select %340, %304, %341 : vector<2x1xi1>, vector<2x1xf32>
    %343 = arith.divf %338, %342 : vector<2x1xf32>
    %344 = vector.broadcast %343 : vector<2x1xf32> to vector<2x512xf32>
    %345 = arith.mulf %344, %301 : vector<2x512xf32>
    %346 = arith.addf %345, %335 : vector<2x512xf32>
    %347 = vector.shape_cast %314 : vector<1x1xi1> to vector<1x1xi1>
    %348 = vector.broadcast %347 : vector<1x1xi1> to vector<2x512xi1>
    %349 = arith.select %348, %332, %295 : vector<2x512xi1>, vector<2x512xf32>
    %350 = vector.shape_cast %314 : vector<1x1xi1> to vector<1x1xi1>
    %351 = vector.broadcast %350 : vector<1x1xi1> to vector<2x512xi1>
    %352 = arith.select %351, %335, %298 : vector<2x512xi1>, vector<2x512xf32>
    %353 = vector.shape_cast %314 : vector<1x1xi1> to vector<1x1xi1>
    %354 = vector.broadcast %353 : vector<1x1xi1> to vector<2x512xi1>
    %355 = arith.select %354, %346, %301 : vector<2x512xi1>, vector<2x512xf32>
    %356 = vector.shape_cast %314 : vector<1x1xi1> to vector<1x1xi1>
    %357 = vector.broadcast %356 : vector<1x1xi1> to vector<2x1xi1>
    %358 = arith.select %357, %338, %304 : vector<2x1xi1>, vector<2x1xf32>
    %359 = vector.shape_cast %314 : vector<1x1xi1> to vector<1x1xi1>
    %360 = vector.broadcast %359 : vector<1x1xi1> to vector<2x1xi1>
    %361 = arith.select %360, %338, %307 : vector<2x1xi1>, vector<2x1xf32>
    %c2_i32 = arith.constant 2 : i32
    %362 = vector.shape_cast %361 : vector<2x1xf32> to vector<1x2x1xf32>
    %cst_102 = arith.constant dense<0xFF800000> : vector<1xf32>
    %363 = vector.multi_reduction <maximumf>, %362, %cst_102 [1, 2] : vector<1x2x1xf32> to vector<1xf32>
    %364 = vector.shape_cast %363 : vector<1xf32> to vector<1x1x1xf32>
    %365 = vector.extract %364[0, 0, 0] : f32 from vector<1x1x1xf32>
    %366 = vector.broadcast %365 : f32 to vector<1x1xf32>
    %cst_103 = arith.constant 1.000000e-10 : f32
    %367 = vector.broadcast %cst_103 : f32 to vector<1x1xf32>
    %368 = arith.cmpf oge, %366, %367 : vector<1x1xf32>
    %cst_104 = arith.constant dense<0.000000e+00> : vector<2x512xf32>
    %369 = tpu.matmul %355, %5, %cst_104 {dimension_numbers = #tpu.dot_dimension_numbers<[1], [0], [0], [1], [0, 0, 1, 1], [], []>} : vector<2x512xf32>, vector<512x512xf32>, vector<2x512xf32> -> vector<2x512xf32>
    %370 = vector.broadcast %12 : vector<2x1xf32> to vector<2x512xf32>
    %371 = arith.mulf %370, %369 : vector<2x512xf32>
    %cst_105 = arith.constant dense<0.000000e+00> : vector<2x512xf32>
    %372 = tpu.matmul %355, %7, %cst_105 {dimension_numbers = #tpu.dot_dimension_numbers<[1], [0], [0], [1], [0, 0, 1, 1], [], []>} : vector<2x512xf32>, vector<512x512xf32>, vector<2x512xf32> -> vector<2x512xf32>
    %373 = vector.broadcast %17 : vector<2x1xf32> to vector<2x512xf32>
    %374 = arith.mulf %373, %372 : vector<2x512xf32>
    %375 = arith.addf %371, %374 : vector<2x512xf32>
    %376 = arith.mulf %355, %375 : vector<2x512xf32>
    %cst_106 = arith.constant dense<0.000000e+00> : vector<2xf32>
    %377 = vector.multi_reduction <add>, %376, %cst_106 [1] : vector<2x512xf32> to vector<2xf32>
    %378 = vector.shape_cast %377 : vector<2xf32> to vector<2x1xf32>
    %cst_107 = arith.constant 1.000000e+00 : f32
    %379 = vector.shape_cast %368 : vector<1x1xi1> to vector<1x1xi1>
    %380 = vector.broadcast %379 : vector<1x1xi1> to vector<2x1xi1>
    %381 = vector.broadcast %cst_107 : f32 to vector<2x1xf32>
    %382 = arith.select %380, %378, %381 : vector<2x1xi1>, vector<2x1xf32>
    %383 = arith.divf %358, %382 : vector<2x1xf32>
    %384 = vector.broadcast %383 : vector<2x1xf32> to vector<2x512xf32>
    %385 = arith.mulf %384, %355 : vector<2x512xf32>
    %386 = arith.addf %349, %385 : vector<2x512xf32>
    %387 = vector.broadcast %383 : vector<2x1xf32> to vector<2x512xf32>
    %388 = arith.mulf %387, %375 : vector<2x512xf32>
    %389 = arith.subf %352, %388 : vector<2x512xf32>
    %390 = arith.mulf %389, %389 : vector<2x512xf32>
    %cst_108 = arith.constant dense<0.000000e+00> : vector<2xf32>
    %391 = vector.multi_reduction <add>, %390, %cst_108 [1] : vector<2x512xf32> to vector<2xf32>
    %392 = vector.shape_cast %391 : vector<2xf32> to vector<2x1xf32>
    %cst_109 = arith.constant 1.000000e+00 : f32
    %393 = vector.shape_cast %368 : vector<1x1xi1> to vector<1x1xi1>
    %394 = vector.broadcast %393 : vector<1x1xi1> to vector<2x1xi1>
    %395 = vector.broadcast %cst_109 : f32 to vector<2x1xf32>
    %396 = arith.select %394, %358, %395 : vector<2x1xi1>, vector<2x1xf32>
    %397 = arith.divf %392, %396 : vector<2x1xf32>
    %398 = vector.broadcast %397 : vector<2x1xf32> to vector<2x512xf32>
    %399 = arith.mulf %398, %355 : vector<2x512xf32>
    %400 = arith.addf %399, %389 : vector<2x512xf32>
    %401 = vector.shape_cast %368 : vector<1x1xi1> to vector<1x1xi1>
    %402 = vector.broadcast %401 : vector<1x1xi1> to vector<2x512xi1>
    %403 = arith.select %402, %386, %349 : vector<2x512xi1>, vector<2x512xf32>
    %404 = vector.shape_cast %368 : vector<1x1xi1> to vector<1x1xi1>
    %405 = vector.broadcast %404 : vector<1x1xi1> to vector<2x512xi1>
    %406 = arith.select %405, %389, %352 : vector<2x512xi1>, vector<2x512xf32>
    %407 = vector.shape_cast %368 : vector<1x1xi1> to vector<1x1xi1>
    %408 = vector.broadcast %407 : vector<1x1xi1> to vector<2x512xi1>
    %409 = arith.select %408, %400, %355 : vector<2x512xi1>, vector<2x512xf32>
    %410 = vector.shape_cast %368 : vector<1x1xi1> to vector<1x1xi1>
    %411 = vector.broadcast %410 : vector<1x1xi1> to vector<2x1xi1>
    %412 = arith.select %411, %392, %358 : vector<2x1xi1>, vector<2x1xf32>
    %413 = vector.shape_cast %368 : vector<1x1xi1> to vector<1x1xi1>
    %414 = vector.broadcast %413 : vector<1x1xi1> to vector<2x1xi1>
    %415 = arith.select %414, %392, %361 : vector<2x1xi1>, vector<2x1xf32>
    %c3_i32 = arith.constant 3 : i32
    %416 = vector.shape_cast %415 : vector<2x1xf32> to vector<1x2x1xf32>
    %cst_110 = arith.constant dense<0xFF800000> : vector<1xf32>
    %417 = vector.multi_reduction <maximumf>, %416, %cst_110 [1, 2] : vector<1x2x1xf32> to vector<1xf32>
    %418 = vector.shape_cast %417 : vector<1xf32> to vector<1x1x1xf32>
    %419 = vector.extract %418[0, 0, 0] : f32 from vector<1x1x1xf32>
    %420 = vector.broadcast %419 : f32 to vector<1x1xf32>
    %cst_111 = arith.constant 1.000000e-10 : f32
    %421 = vector.broadcast %cst_111 : f32 to vector<1x1xf32>
    %422 = arith.cmpf oge, %420, %421 : vector<1x1xf32>
    %cst_112 = arith.constant dense<0.000000e+00> : vector<2x512xf32>
    %423 = tpu.matmul %409, %5, %cst_112 {dimension_numbers = #tpu.dot_dimension_numbers<[1], [0], [0], [1], [0, 0, 1, 1], [], []>} : vector<2x512xf32>, vector<512x512xf32>, vector<2x512xf32> -> vector<2x512xf32>
    %424 = vector.broadcast %12 : vector<2x1xf32> to vector<2x512xf32>
    %425 = arith.mulf %424, %423 : vector<2x512xf32>
    %cst_113 = arith.constant dense<0.000000e+00> : vector<2x512xf32>
    %426 = tpu.matmul %409, %7, %cst_113 {dimension_numbers = #tpu.dot_dimension_numbers<[1], [0], [0], [1], [0, 0, 1, 1], [], []>} : vector<2x512xf32>, vector<512x512xf32>, vector<2x512xf32> -> vector<2x512xf32>
    %427 = vector.broadcast %17 : vector<2x1xf32> to vector<2x512xf32>
    %428 = arith.mulf %427, %426 : vector<2x512xf32>
    %429 = arith.addf %425, %428 : vector<2x512xf32>
    %430 = arith.mulf %409, %429 : vector<2x512xf32>
    %cst_114 = arith.constant dense<0.000000e+00> : vector<2xf32>
    %431 = vector.multi_reduction <add>, %430, %cst_114 [1] : vector<2x512xf32> to vector<2xf32>
    %432 = vector.shape_cast %431 : vector<2xf32> to vector<2x1xf32>
    %cst_115 = arith.constant 1.000000e+00 : f32
    %433 = vector.shape_cast %422 : vector<1x1xi1> to vector<1x1xi1>
    %434 = vector.broadcast %433 : vector<1x1xi1> to vector<2x1xi1>
    %435 = vector.broadcast %cst_115 : f32 to vector<2x1xf32>
    %436 = arith.select %434, %432, %435 : vector<2x1xi1>, vector<2x1xf32>
    %437 = arith.divf %412, %436 : vector<2x1xf32>
    %438 = vector.broadcast %437 : vector<2x1xf32> to vector<2x512xf32>
    %439 = arith.mulf %438, %409 : vector<2x512xf32>
    %440 = arith.addf %403, %439 : vector<2x512xf32>
    %441 = vector.broadcast %437 : vector<2x1xf32> to vector<2x512xf32>
    %442 = arith.mulf %441, %429 : vector<2x512xf32>
    %443 = arith.subf %406, %442 : vector<2x512xf32>
    %444 = arith.mulf %443, %443 : vector<2x512xf32>
    %cst_116 = arith.constant dense<0.000000e+00> : vector<2xf32>
    %445 = vector.multi_reduction <add>, %444, %cst_116 [1] : vector<2x512xf32> to vector<2xf32>
    %446 = vector.shape_cast %445 : vector<2xf32> to vector<2x1xf32>
    %cst_117 = arith.constant 1.000000e+00 : f32
    %447 = vector.shape_cast %422 : vector<1x1xi1> to vector<1x1xi1>
    %448 = vector.broadcast %447 : vector<1x1xi1> to vector<2x1xi1>
    %449 = vector.broadcast %cst_117 : f32 to vector<2x1xf32>
    %450 = arith.select %448, %412, %449 : vector<2x1xi1>, vector<2x1xf32>
    %451 = arith.divf %446, %450 : vector<2x1xf32>
    %452 = vector.broadcast %451 : vector<2x1xf32> to vector<2x512xf32>
    %453 = arith.mulf %452, %409 : vector<2x512xf32>
    %454 = arith.addf %453, %443 : vector<2x512xf32>
    %455 = vector.shape_cast %422 : vector<1x1xi1> to vector<1x1xi1>
    %456 = vector.broadcast %455 : vector<1x1xi1> to vector<2x512xi1>
    %457 = arith.select %456, %440, %403 : vector<2x512xi1>, vector<2x512xf32>
    %458 = vector.shape_cast %422 : vector<1x1xi1> to vector<1x1xi1>
    %459 = vector.broadcast %458 : vector<1x1xi1> to vector<2x512xi1>
    %460 = arith.select %459, %443, %406 : vector<2x512xi1>, vector<2x512xf32>
    %461 = vector.shape_cast %422 : vector<1x1xi1> to vector<1x1xi1>
    %462 = vector.broadcast %461 : vector<1x1xi1> to vector<2x512xi1>
    %463 = arith.select %462, %454, %409 : vector<2x512xi1>, vector<2x512xf32>
    %464 = vector.shape_cast %422 : vector<1x1xi1> to vector<1x1xi1>
    %465 = vector.broadcast %464 : vector<1x1xi1> to vector<2x1xi1>
    %466 = arith.select %465, %446, %412 : vector<2x1xi1>, vector<2x1xf32>
    %467 = vector.shape_cast %422 : vector<1x1xi1> to vector<1x1xi1>
    %468 = vector.broadcast %467 : vector<1x1xi1> to vector<2x1xi1>
    %469 = arith.select %468, %446, %415 : vector<2x1xi1>, vector<2x1xf32>
    %c4_i32 = arith.constant 4 : i32
    %470 = vector.shape_cast %469 : vector<2x1xf32> to vector<1x2x1xf32>
    %cst_118 = arith.constant dense<0xFF800000> : vector<1xf32>
    %471 = vector.multi_reduction <maximumf>, %470, %cst_118 [1, 2] : vector<1x2x1xf32> to vector<1xf32>
    %472 = vector.shape_cast %471 : vector<1xf32> to vector<1x1x1xf32>
    %473 = vector.extract %472[0, 0, 0] : f32 from vector<1x1x1xf32>
    %474 = vector.broadcast %473 : f32 to vector<1x1xf32>
    %cst_119 = arith.constant 1.000000e-10 : f32
    %475 = vector.broadcast %cst_119 : f32 to vector<1x1xf32>
    %476 = arith.cmpf oge, %474, %475 : vector<1x1xf32>
    %cst_120 = arith.constant dense<0.000000e+00> : vector<2x512xf32>
    %477 = tpu.matmul %463, %5, %cst_120 {dimension_numbers = #tpu.dot_dimension_numbers<[1], [0], [0], [1], [0, 0, 1, 1], [], []>} : vector<2x512xf32>, vector<512x512xf32>, vector<2x512xf32> -> vector<2x512xf32>
    %478 = vector.broadcast %12 : vector<2x1xf32> to vector<2x512xf32>
    %479 = arith.mulf %478, %477 : vector<2x512xf32>
    %cst_121 = arith.constant dense<0.000000e+00> : vector<2x512xf32>
    %480 = tpu.matmul %463, %7, %cst_121 {dimension_numbers = #tpu.dot_dimension_numbers<[1], [0], [0], [1], [0, 0, 1, 1], [], []>} : vector<2x512xf32>, vector<512x512xf32>, vector<2x512xf32> -> vector<2x512xf32>
    %481 = vector.broadcast %17 : vector<2x1xf32> to vector<2x512xf32>
    %482 = arith.mulf %481, %480 : vector<2x512xf32>
    %483 = arith.addf %479, %482 : vector<2x512xf32>
    %484 = arith.mulf %463, %483 : vector<2x512xf32>
    %cst_122 = arith.constant dense<0.000000e+00> : vector<2xf32>
    %485 = vector.multi_reduction <add>, %484, %cst_122 [1] : vector<2x512xf32> to vector<2xf32>
    %486 = vector.shape_cast %485 : vector<2xf32> to vector<2x1xf32>
    %cst_123 = arith.constant 1.000000e+00 : f32
    %487 = vector.shape_cast %476 : vector<1x1xi1> to vector<1x1xi1>
    %488 = vector.broadcast %487 : vector<1x1xi1> to vector<2x1xi1>
    %489 = vector.broadcast %cst_123 : f32 to vector<2x1xf32>
    %490 = arith.select %488, %486, %489 : vector<2x1xi1>, vector<2x1xf32>
    %491 = arith.divf %466, %490 : vector<2x1xf32>
    %492 = vector.broadcast %491 : vector<2x1xf32> to vector<2x512xf32>
    %493 = arith.mulf %492, %463 : vector<2x512xf32>
    %494 = arith.addf %457, %493 : vector<2x512xf32>
    %495 = vector.broadcast %491 : vector<2x1xf32> to vector<2x512xf32>
    %496 = arith.mulf %495, %483 : vector<2x512xf32>
    %497 = arith.subf %460, %496 : vector<2x512xf32>
    %498 = arith.mulf %497, %497 : vector<2x512xf32>
    %cst_124 = arith.constant dense<0.000000e+00> : vector<2xf32>
    %499 = vector.multi_reduction <add>, %498, %cst_124 [1] : vector<2x512xf32> to vector<2xf32>
    %500 = vector.shape_cast %499 : vector<2xf32> to vector<2x1xf32>
    %cst_125 = arith.constant 1.000000e+00 : f32
    %501 = vector.shape_cast %476 : vector<1x1xi1> to vector<1x1xi1>
    %502 = vector.broadcast %501 : vector<1x1xi1> to vector<2x1xi1>
    %503 = vector.broadcast %cst_125 : f32 to vector<2x1xf32>
    %504 = arith.select %502, %466, %503 : vector<2x1xi1>, vector<2x1xf32>
    %505 = arith.divf %500, %504 : vector<2x1xf32>
    %506 = vector.broadcast %505 : vector<2x1xf32> to vector<2x512xf32>
    %507 = arith.mulf %506, %463 : vector<2x512xf32>
    %508 = arith.addf %507, %497 : vector<2x512xf32>
    %509 = vector.shape_cast %476 : vector<1x1xi1> to vector<1x1xi1>
    %510 = vector.broadcast %509 : vector<1x1xi1> to vector<2x512xi1>
    %511 = arith.select %510, %494, %457 : vector<2x512xi1>, vector<2x512xf32>
    %512 = vector.shape_cast %476 : vector<1x1xi1> to vector<1x1xi1>
    %513 = vector.broadcast %512 : vector<1x1xi1> to vector<2x512xi1>
    %514 = arith.select %513, %497, %460 : vector<2x512xi1>, vector<2x512xf32>
    %515 = vector.shape_cast %476 : vector<1x1xi1> to vector<1x1xi1>
    %516 = vector.broadcast %515 : vector<1x1xi1> to vector<2x512xi1>
    %517 = arith.select %516, %508, %463 : vector<2x512xi1>, vector<2x512xf32>
    %518 = vector.shape_cast %476 : vector<1x1xi1> to vector<1x1xi1>
    %519 = vector.broadcast %518 : vector<1x1xi1> to vector<2x1xi1>
    %520 = arith.select %519, %500, %466 : vector<2x1xi1>, vector<2x1xf32>
    %521 = vector.shape_cast %476 : vector<1x1xi1> to vector<1x1xi1>
    %522 = vector.broadcast %521 : vector<1x1xi1> to vector<2x1xi1>
    %523 = arith.select %522, %500, %469 : vector<2x1xi1>, vector<2x1xf32>
    %c5_i32 = arith.constant 5 : i32
    %524 = vector.shape_cast %523 : vector<2x1xf32> to vector<1x2x1xf32>
    %cst_126 = arith.constant dense<0xFF800000> : vector<1xf32>
    %525 = vector.multi_reduction <maximumf>, %524, %cst_126 [1, 2] : vector<1x2x1xf32> to vector<1xf32>
    %526 = vector.shape_cast %525 : vector<1xf32> to vector<1x1x1xf32>
    %527 = vector.extract %526[0, 0, 0] : f32 from vector<1x1x1xf32>
    %528 = vector.broadcast %527 : f32 to vector<1x1xf32>
    %cst_127 = arith.constant 1.000000e-10 : f32
    %529 = vector.broadcast %cst_127 : f32 to vector<1x1xf32>
    %530 = arith.cmpf oge, %528, %529 : vector<1x1xf32>
    %cst_128 = arith.constant dense<0.000000e+00> : vector<2x512xf32>
    %531 = tpu.matmul %517, %5, %cst_128 {dimension_numbers = #tpu.dot_dimension_numbers<[1], [0], [0], [1], [0, 0, 1, 1], [], []>} : vector<2x512xf32>, vector<512x512xf32>, vector<2x512xf32> -> vector<2x512xf32>
    %532 = vector.broadcast %12 : vector<2x1xf32> to vector<2x512xf32>
    %533 = arith.mulf %532, %531 : vector<2x512xf32>
    %cst_129 = arith.constant dense<0.000000e+00> : vector<2x512xf32>
    %534 = tpu.matmul %517, %7, %cst_129 {dimension_numbers = #tpu.dot_dimension_numbers<[1], [0], [0], [1], [0, 0, 1, 1], [], []>} : vector<2x512xf32>, vector<512x512xf32>, vector<2x512xf32> -> vector<2x512xf32>
    %535 = vector.broadcast %17 : vector<2x1xf32> to vector<2x512xf32>
    %536 = arith.mulf %535, %534 : vector<2x512xf32>
    %537 = arith.addf %533, %536 : vector<2x512xf32>
    %538 = arith.mulf %517, %537 : vector<2x512xf32>
    %cst_130 = arith.constant dense<0.000000e+00> : vector<2xf32>
    %539 = vector.multi_reduction <add>, %538, %cst_130 [1] : vector<2x512xf32> to vector<2xf32>
    %540 = vector.shape_cast %539 : vector<2xf32> to vector<2x1xf32>
    %cst_131 = arith.constant 1.000000e+00 : f32
    %541 = vector.shape_cast %530 : vector<1x1xi1> to vector<1x1xi1>
    %542 = vector.broadcast %541 : vector<1x1xi1> to vector<2x1xi1>
    %543 = vector.broadcast %cst_131 : f32 to vector<2x1xf32>
    %544 = arith.select %542, %540, %543 : vector<2x1xi1>, vector<2x1xf32>
    %545 = arith.divf %520, %544 : vector<2x1xf32>
    %546 = vector.broadcast %545 : vector<2x1xf32> to vector<2x512xf32>
    %547 = arith.mulf %546, %517 : vector<2x512xf32>
    %548 = arith.addf %511, %547 : vector<2x512xf32>
    %549 = vector.broadcast %545 : vector<2x1xf32> to vector<2x512xf32>
    %550 = arith.mulf %549, %537 : vector<2x512xf32>
    %551 = arith.subf %514, %550 : vector<2x512xf32>
    %552 = arith.mulf %551, %551 : vector<2x512xf32>
    %cst_132 = arith.constant dense<0.000000e+00> : vector<2xf32>
    %553 = vector.multi_reduction <add>, %552, %cst_132 [1] : vector<2x512xf32> to vector<2xf32>
    %554 = vector.shape_cast %553 : vector<2xf32> to vector<2x1xf32>
    %cst_133 = arith.constant 1.000000e+00 : f32
    %555 = vector.shape_cast %530 : vector<1x1xi1> to vector<1x1xi1>
    %556 = vector.broadcast %555 : vector<1x1xi1> to vector<2x1xi1>
    %557 = vector.broadcast %cst_133 : f32 to vector<2x1xf32>
    %558 = arith.select %556, %520, %557 : vector<2x1xi1>, vector<2x1xf32>
    %559 = arith.divf %554, %558 : vector<2x1xf32>
    %560 = vector.broadcast %559 : vector<2x1xf32> to vector<2x512xf32>
    %561 = arith.mulf %560, %517 : vector<2x512xf32>
    %562 = arith.addf %561, %551 : vector<2x512xf32>
    %563 = vector.shape_cast %530 : vector<1x1xi1> to vector<1x1xi1>
    %564 = vector.broadcast %563 : vector<1x1xi1> to vector<2x512xi1>
    %565 = arith.select %564, %548, %511 : vector<2x512xi1>, vector<2x512xf32>
    %566 = vector.shape_cast %530 : vector<1x1xi1> to vector<1x1xi1>
    %567 = vector.broadcast %566 : vector<1x1xi1> to vector<2x512xi1>
    %568 = arith.select %567, %551, %514 : vector<2x512xi1>, vector<2x512xf32>
    %569 = vector.shape_cast %530 : vector<1x1xi1> to vector<1x1xi1>
    %570 = vector.broadcast %569 : vector<1x1xi1> to vector<2x512xi1>
    %571 = arith.select %570, %562, %517 : vector<2x512xi1>, vector<2x512xf32>
    %572 = vector.shape_cast %530 : vector<1x1xi1> to vector<1x1xi1>
    %573 = vector.broadcast %572 : vector<1x1xi1> to vector<2x1xi1>
    %574 = arith.select %573, %554, %520 : vector<2x1xi1>, vector<2x1xf32>
    %575 = vector.shape_cast %530 : vector<1x1xi1> to vector<1x1xi1>
    %576 = vector.broadcast %575 : vector<1x1xi1> to vector<2x1xi1>
    %577 = arith.select %576, %554, %523 : vector<2x1xi1>, vector<2x1xf32>
    %c0_134 = arith.constant 0 : index
    %c0_135 = arith.constant 0 : index
    %578 = vector.load %arg8[%c0_134, %c0_135] : memref<2x512xf32, #tpu.memory_space<vmem>>, vector<2x512xf32>
    tpu.vector_store %arg8[%c0_134, %c0_135], %565 {strides = array<i32>} : memref<2x512xf32, #tpu.memory_space<vmem>>, vector<2x512xf32>,
    return
  }
  func.func @transform_0(%arg0: i32) -> (i32, i32) {
    %c0_i32 = arith.constant 0 : i32
    %c0_i32_0 = arith.constant 0 : i32
    %c0_i32_1 = arith.constant 0 : i32
    return %c0_i32, %c0_i32_0 : i32, i32
  }
  func.func @transform_1(%arg0: i32) -> (i32, i32) {
    %c0_i32 = arith.constant 0 : i32
    %c0_i32_0 = arith.constant 0 : i32
    %c0_i32_1 = arith.constant 0 : i32
    return %c0_i32, %c0_i32_0 : i32, i32
  }
  func.func @transform_2(%arg0: i32) -> (i32, i32) {
    %c0_i32 = arith.constant 0 : i32
    %c0_i32_0 = arith.constant 0 : i32
    %c0_i32_1 = arith.constant 0 : i32
    return %c0_i32, %c0_i32_0 : i32, i32
  }
  func.func @transform_3(%arg0: i32) -> (i32, i32) {
    %c0_i32 = arith.constant 0 : i32
    %c0_i32_0 = arith.constant 0 : i32
    %c0_i32_1 = arith.constant 0 : i32
    return %c0_i32, %c0_i32_0 : i32, i32
  }
  func.func @transform_4(%arg0: i32) -> (i32, i32, i32) {
    %c0_i32 = arith.constant 0 : i32
    %c0_i32_0 = arith.constant 0 : i32
    %c0_i32_1 = arith.constant 0 : i32
    %c0_i32_2 = arith.constant 0 : i32
    return %c0_i32, %c0_i32_0, %c0_i32_1 : i32, i32, i32
  }
  func.func @transform_5(%arg0: i32) -> (i32, i32, i32) {
    %c0_i32 = arith.constant 0 : i32
    %c0_i32_0 = arith.constant 0 : i32
    %c0_i32_1 = arith.constant 0 : i32
    %c0_i32_2 = arith.constant 0 : i32
    return %c0_i32, %c0_i32_0, %c0_i32_1 : i32, i32, i32
  }
  func.func @transform_6(%arg0: i32) -> (i32, i32, i32) {
    %c0_i32 = arith.constant 0 : i32
    %c0_i32_0 = arith.constant 0 : i32
    %c0_i32_1 = arith.constant 0 : i32
    %c0_i32_2 = arith.constant 0 : i32
    return %c0_i32, %c0_i32_0, %c0_i32_1 : i32, i32, i32
  }
  func.func @transform_7(%arg0: i32) -> (i32, i32) {
    %c0_i32 = arith.constant 0 : i32
    %c0_i32_0 = arith.constant 0 : i32
    %c0_i32_1 = arith.constant 0 : i32
    return %c0_i32, %c0_i32_0 : i32, i32
  }
}

</mosaic_0001>

<llo_original>
// kernel: mul.0
$region0: #{mul.0}
  #allocation4 [shape = 's32[1]{0}', space=sflag, size = 0x4, scoped, tag = 'scoped memory for mul.0']
  %s0 = inlined_call_operand.hbm [shape: f32[2,16,16], index: 0, kind: input, shape index: {}, may-alias: {0,1}]
  %s1 = inlined_call_operand.hbm [shape: f32[2,16,16], index: 1, kind: input, shape index: {}, may-alias: {0,1}]
  %s2 = inlined_call_operand.vmem [shape: f32[2,16,16], index: 2, kind: output, shape index: {}]
  $region1: #{mul.0} parent=0
    #allocation0 [shape = 'u8[16384]{0}', space=vmem, size = 0x4000, scoped, tag = 'operand span for operand 0, may alias with: [0, 1]']
    #allocation1 [shape = 's32[1]{0}', space=sflag, size = 0x4, scoped, tag = 'scoped memory for mul.0']
    #allocation2 [shape = 'u8[16384]{0}', space=vmem, size = 0x4000, scoped, tag = 'operand span for operand 1, may alias with: [0, 1]']
    #allocation3 [shape = 's32[1]{0}', space=sflag, size = 0x4, scoped, tag = 'scoped memory for mul.0']
    %3 = vsyncpa [#allocation1], 0
    %4 = vsyncpa [#allocation3], 0
    %s6 = ssub.s32 512, 512
    %7 = vsyncadd [#allocation1], %s6
    %s8 = sshll.u32 [#allocation0], 4
    %s9 = int_to_ptr.vmem [resolvable:$true] %s8
    %14 = dma.hbm_to_vmem [thread:$0]  %s0, 512, %s9, [#allocation1], 128, 128, 8
    %s16 = ssub.s32 512, 512
    %17 = vsyncadd [#allocation3], %s16
    %s18 = sshll.u32 [#allocation2], 4
    %s19 = int_to_ptr.vmem [resolvable:$true] %s18
    %24 = dma.hbm_to_vmem [thread:$0]  %s1, 512, %s19, [#allocation3], 128, 128, 8
    %25 = dma.done [#allocation1], 512
    %26 = dma.done [#allocation3], 512
    %v27 = vld [vmem:[#allocation0] sm:$0xff]
    %v28 = vld [vmem:[#allocation2] sm:$0xff]
    %29 = xla_tuple %v27, %v28
    %30 = xla_tuple %29
    %v31 = vmul.f32 %v27, %v28
    %32 = xla_tuple %v31
    %33 = vst [vmem:[%s2] sm:$0xff] %v31
    %s34 = scalar_lea.vmem [#allocation0], 16
    %v35 = vld [vmem:[%s34] sm:$0xff]
    %s36 = scalar_lea.vmem [#allocation2], 16
    %v37 = vld [vmem:[%s36] sm:$0xff]
    %38 = xla_tuple %v35, %v37
    %39 = xla_tuple %38
    %v40 = vmul.f32 %v35, %v37
    %41 = xla_tuple %v40
    %s42 = scalar_lea.vmem %s2, 16
    %43 = vst [vmem:[%s42] sm:$0xff] %v40
    %s44 = scalar_lea.vmem [#allocation0], 8
    %v45 = vld [vmem:[%s44] sm:$0xff]
    %s46 = scalar_lea.vmem [#allocation2], 8
    %v47 = vld [vmem:[%s46] sm:$0xff]
    %48 = xla_tuple %v45, %v47
    %49 = xla_tuple %48
    %v50 = vmul.f32 %v45, %v47
    %51 = xla_tuple %v50
    %s52 = scalar_lea.vmem %s2, 8
    %53 = vst [vmem:[%s52] sm:$0xff] %v50
    %s54 = scalar_lea.vmem [#allocation0], 24
    %v55 = vld [vmem:[%s54] sm:$0xff]
    %s56 = scalar_lea.vmem [#allocation2], 24
    %v57 = vld [vmem:[%s56] sm:$0xff]
    %58 = xla_tuple %v55, %v57
    %59 = xla_tuple %58
    %v60 = vmul.f32 %v55, %v57
    %61 = xla_tuple %v60
    %s62 = scalar_lea.vmem %s2, 24
    %63 = vst [vmem:[%s62] sm:$0xff] %v60
    %64 = vsyncpa [#allocation1], 1
    %65 = vsyncpa [#allocation3], 1

// kernel: mul.115
$region0: #{mul.115}
  %s0 = inlined_call_operand.vmem [shape: f32[2,4,16,16], index: 0, kind: input, shape index: {}]
  %s1 = inlined_call_operand.vmem [shape: f32[2,4,256], index: 1, kind: output, shape index: {}]
  $region1: #{mul.115} parent=0
    #allocation0 [shape = 'u8[16384]{0}', space=vmem, size = 0x4000, scoped, tag = 'scoped mem for output reshape']
    %v2 = vld [vmem:[%s0] ss:$8 sm:$0xf]
    %v3 = vld [vmem:[%s0] ss:$8 sm:$0xf0]
    %vm4 = vcmask 1047556
    %v5 = vsel %vm4, %v3, %v2
    %vm6 = vcmask 130048
    %7 = vst.msk [vmem:[#allocation0] ss:$8 sm:$0x3] %vm6, %v5
    %s8 = scalar_lea.vmem [#allocation0], 4294967281
    %9 = vst.msk [vmem:[%s8] ss:$8 sm:$0xc] %vm6, %v5
    %s10 = scalar_lea.vmem [#allocation0], 4294967266
    %11 = vst.msk [vmem:[%s10] ss:$8 sm:$0x30] %vm6, %v5
    %s12 = scalar_lea.vmem [#allocation0], 4294967251
    %13 = vst.msk [vmem:[%s12] ss:$8 sm:$0xc0] %vm6, %v5
    %s14 = scalar_lea.vmem %s0, 64
    %v15 = vld [vmem:[%s14] ss:$8 sm:$0xf]
    %s16 = scalar_lea.vmem %s0, 64
    %v17 = vld [vmem:[%s16] ss:$8 sm:$0xf0]
    %vm18 = vcmask 1047556
    %v19 = vsel %vm18, %v17, %v15
    %vm20 = vcmask 130048
    %s21 = scalar_lea.vmem [#allocation0], 16
    %22 = vst.msk [vmem:[%s21] ss:$8 sm:$0x3] %vm20, %v19
    %s23 = scalar_lea.vmem [#allocation0], 1
    %24 = vst.msk [vmem:[%s23] ss:$8 sm:$0xc] %vm20, %v19
    %s25 = scalar_lea.vmem [#allocation0], 4294967282
    %26 = vst.msk [vmem:[%s25] ss:$8 sm:$0x30] %vm20, %v19
    %s27 = scalar_lea.vmem [#allocation0], 4294967267
    %28 = vst.msk [vmem:[%s27] ss:$8 sm:$0xc0] %vm20, %v19
    %s29 = scalar_lea.vmem %s0, 7
    %s30 = smov 3
    %v31 = vld [vmem:[%s29] ss:$16 sm:%s30]
    %s32 = scalar_lea.vmem %s0, 7
    %s33 = smov 12
    %v34 = vld [vmem:[%s32] ss:$16 sm:%s33]
    %vm35 = vcmask 1043458
    %v36 = vsel %vm35, %v34, %v31
    %s37 = scalar_lea.vmem %s0, 4294967247
    %s38 = smov 48
    %v39 = vld [vmem:[%s37] ss:$16 sm:%s38]
    %vm40 = vcmask 1045508
    %v41 = vsel %vm40, %v39, %v36
    %s42 = scalar_lea.vmem %s0, 4294967247
    %s43 = smov 192
    %v44 = vld [vmem:[%s42] ss:$16 sm:%s43]
    %vm45 = vcmask 1047558
    %v46 = vsel %vm45, %v44, %v41
    %47 = vrot.lane.b32.xlu0 %v46, 112
    %v48 = vpop.permute.xlu0 %47
    %vm49 = vcmask 1048448
    %50 = vst.msk [vmem:[#allocation0] sm:$0xf] %vm49, %v48
    %s51 = scalar_lea.vmem [#allocation0], 4
    %52 = vst.msk [vmem:[%s51] sm:$0xf0] %vm49, %v48
    %s53 = scalar_lea.vmem %s0, 71
    %s54 = smov 3
    %v55 = vld [vmem:[%s53] ss:$16 sm:%s54]
    %s56 = scalar_lea.vmem %s0, 71
    %s57 = smov 12
    %v58 = vld [vmem:[%s56] ss:$16 sm:%s57]
    %vm59 = vcmask 1043458
    %v60 = vsel %vm59, %v58, %v55
    %s61 = scalar_lea.vmem %s0, 15
    %s62 = smov 48
    %v63 = vld [vmem:[%s61] ss:$16 sm:%s62]
    %vm64 = vcmask 1045508
    %v65 = vsel %vm64, %v63, %v60
    %s66 = scalar_lea.vmem %s0, 15
    %s67 = smov 192
    %v68 = vld [vmem:[%s66] ss:$16 sm:%s67]
    %vm69 = vcmask 1047558
    %v70 = vsel %vm69, %v68, %v65
    %71 = vrot.lane.b32.xlu0 %v70, 112
    %v72 = vpop.permute.xlu0 %71
    %vm73 = vcmask 1048448
    %s74 = scalar_lea.vmem [#allocation0], 16
    %75 = vst.msk [vmem:[%s74] sm:$0xf] %vm73, %v72
    %s76 = scalar_lea.vmem [#allocation0], 20
    %77 = vst.msk [vmem:[%s76] sm:$0xf0] %vm73, %v72
    %s78 = scalar_lea.vmem %s0, 6
    %s79 = smov 3
    %v80 = vld [vmem:[%s78] ss:$16 sm:%s79]
    %s81 = scalar_lea.vmem %s0, 6
    %s82 = smov 12
    %v83 = vld [vmem:[%s81] ss:$16 sm:%s82]
    %vm84 = vcmask 1043458
    %v85 = vsel %vm84, %v83, %v80
    %s86 = scalar_lea.vmem %s0, 4294967246
    %s87 = smov 48
    %v88 = vld [vmem:[%s86] ss:$16 sm:%s87]
    %vm89 = vcmask 1045508
    %v90 = vsel %vm89, %v88, %v85
    %s91 = scalar_lea.vmem %s0, 4294967246
    %s92 = smov 192
    %v93 = vld [vmem:[%s91] ss:$16 sm:%s92]
    %vm94 = vcmask 1047558
    %v95 = vsel %vm94, %v93, %v90
    %96 = vrot.lane.b32.xlu0 %v95, 96
    %v97 = vpop.permute.xlu0 %96
    %vm98 = vcmask 917248
    %99 = vst.msk [vmem:[#allocation0] sm:$0xf] %vm98, %v97
    %s100 = scalar_lea.vmem [#allocation0], 4
    %101 = vst.msk [vmem:[%s100] sm:$0xf0] %vm98, %v97
    %s102 = scalar_lea.vmem %s0, 70
    %s103 = smov 3
    %v104 = vld [vmem:[%s102] ss:$16 sm:%s103]
    %s105 = scalar_lea.vmem %s0, 70
    %s106 = smov 12
    %v107 = vld [vmem:[%s105] ss:$16 sm:%s106]
    %vm108 = vcmask 1043458
    %v109 = vsel %vm108, %v107, %v104
    %s110 = scalar_lea.vmem %s0, 14
    %s111 = smov 48
    %v112 = vld [vmem:[%s110] ss:$16 sm:%s111]
    %vm113 = vcmask 1045508
    %v114 = vsel %vm113, %v112, %v109
    %s115 = scalar_lea.vmem %s0, 14
    %s116 = smov 192
    %v117 = vld [vmem:[%s115] ss:$16 sm:%s116]
    %vm118 = vcmask 1047558
    %v119 = vsel %vm118, %v117, %v114
    %120 = vrot.lane.b32.xlu0 %v119, 96
    %v121 = vpop.permute.xlu0 %120
    %vm122 = vcmask 917248
    %s123 = scalar_lea.vmem [#allocation0], 16
    %124 = vst.msk [vmem:[%s123] sm:$0xf] %vm122, %v121
    %s125 = scalar_lea.vmem [#allocation0], 20
    %126 = vst.msk [vmem:[%s125] sm:$0xf0] %vm122, %v121
    %s127 = scalar_lea.vmem %s0, 5
    %s128 = smov 3
    %v129 = vld [vmem:[%s127] ss:$16 sm:%s128]
    %s130 = scalar_lea.vmem %s0, 5
    %s131 = smov 12
    %v132 = vld [vmem:[%s130] ss:$16 sm:%s131]
    %vm133 = vcmask 1043458
    %v134 = vsel %vm133, %v132, %v129
    %s135 = scalar_lea.vmem %s0, 4294967245
    %s136 = smov 48
    %v137 = vld [vmem:[%s135] ss:$16 sm:%s136]
    %vm138 = vcmask 1045508
    %v139 = vsel %vm138, %v137, %v134
    %s140 = scalar_lea.vmem %s0, 4294967245
    %s141 = smov 192
    %v142 = vld [vmem:[%s140] ss:$16 sm:%s141]
    %vm143 = vcmask 1047558
    %v144 = vsel %vm143, %v142, %v139
    %145 = vrot.lane.b32.xlu0 %v144, 80
    %v146 = vpop.permute.xlu0 %145
    %vm147 = vcmask 786048
    %148 = vst.msk [vmem:[#allocation0] sm:$0xf] %vm147, %v146
    %s149 = scalar_lea.vmem [#allocation0], 4
    %150 = vst.msk [vmem:[%s149] sm:$0xf0] %vm147, %v146
    %s151 = scalar_lea.vmem %s0, 69
    %s152 = smov 3
    %v153 = vld [vmem:[%s151] ss:$16 sm:%s152]
    %s154 = scalar_lea.vmem %s0, 69
    %s155 = smov 12
    %v156 = vld [vmem:[%s154] ss:$16 sm:%s155]
    %vm157 = vcmask 1043458
    %v158 = vsel %vm157, %v156, %v153
    %s159 = scalar_lea.vmem %s0, 13
    %s160 = smov 48
    %v161 = vld [vmem:[%s159] ss:$16 sm:%s160]
    %vm162 = vcmask 1045508
    %v163 = vsel %vm162, %v161, %v158
    %s164 = scalar_lea.vmem %s0, 13
    %s165 = smov 192
    %v166 = vld [vmem:[%s164] ss:$16 sm:%s165]
    %vm167 = vcmask 1047558
    %v168 = vsel %vm167, %v166, %v163
    %169 = vrot.lane.b32.xlu0 %v168, 80
    %v170 = vpop.permute.xlu0 %169
    %vm171 = vcmask 786048
    %s172 = scalar_lea.vmem [#allocation0], 16
    %173 = vst.msk [vmem:[%s172] sm:$0xf] %vm171, %v170
    %s174 = scalar_lea.vmem [#allocation0], 20
    %175 = vst.msk [vmem:[%s174] sm:$0xf0] %vm171, %v170
    %s176 = scalar_lea.vmem %s0, 4
    %s177 = smov 3
    %v178 = vld [vmem:[%s176] ss:$16 sm:%s177]
    %s179 = scalar_lea.vmem %s0, 4
    %s180 = smov 12
    %v181 = vld [vmem:[%s179] ss:$16 sm:%s180]
    %vm182 = vcmask 1043458
    %v183 = vsel %vm182, %v181, %v178
    %s184 = scalar_lea.vmem %s0, 4294967244
    %s185 = smov 48
    %v186 = vld [vmem:[%s184] ss:$16 sm:%s185]
    %vm187 = vcmask 1045508
    %v188 = vsel %vm187, %v186, %v183
    %s189 = scalar_lea.vmem %s0, 4294967244
    %s190 = smov 192
    %v191 = vld [vmem:[%s189] ss:$16 sm:%s190]
    %vm192 = vcmask 1047558
    %v193 = vsel %vm192, %v191, %v188
    %194 = vrot.lane.b32.xlu0 %v193, 64
    %v195 = vpop.permute.xlu0 %194
    %vm196 = vcmask 654848
    %197 = vst.msk [vmem:[#allocation0] sm:$0xf] %vm196, %v195
    %s198 = scalar_lea.vmem [#allocation0], 4
    %199 = vst.msk [vmem:[%s198] sm:$0xf0] %vm196, %v195
    %s200 = scalar_lea.vmem %s0, 68
    %s201 = smov 3
    %v202 = vld [vmem:[%s200] ss:$16 sm:%s201]
    %s203 = scalar_lea.vmem %s0, 68
    %s204 = smov 12
    %v205 = vld [vmem:[%s203] ss:$16 sm:%s204]
    %vm206 = vcmask 1043458
    %v207 = vsel %vm206, %v205, %v202
    %s208 = scalar_lea.vmem %s0, 12
    %s209 = smov 48
    %v210 = vld [vmem:[%s208] ss:$16 sm:%s209]
    %vm211 = vcmask 1045508
    %v212 = vsel %vm211, %v210, %v207
    %s213 = scalar_lea.vmem %s0, 12
    %s214 = smov 192
    %v215 = vld [vmem:[%s213] ss:$16 sm:%s214]
    %vm216 = vcmask 1047558
    %v217 = vsel %vm216, %v215, %v212
    %218 = vrot.lane.b32.xlu0 %v217, 64
    %v219 = vpop.permute.xlu0 %218
    %vm220 = vcmask 654848
    %s221 = scalar_lea.vmem [#allocation0], 16
    %222 = vst.msk [vmem:[%s221] sm:$0xf] %vm220, %v219
    %s223 = scalar_lea.vmem [#allocation0], 20
    %224 = vst.msk [vmem:[%s223] sm:$0xf0] %vm220, %v219
    %s225 = scalar_lea.vmem %s0, 3
    %s226 = smov 3
    %v227 = vld [vmem:[%s225] ss:$16 sm:%s226]
    %s228 = scalar_lea.vmem %s0, 3
    %s229 = smov 12
    %v230 = vld [vmem:[%s228] ss:$16 sm:%s229]
    %vm231 = vcmask 1043458
    %v232 = vsel %vm231, %v230, %v227
    %s233 = scalar_lea.vmem %s0, 4294967243
    %s234 = smov 48
    %v235 = vld [vmem:[%s233] ss:$16 sm:%s234]
    %vm236 = vcmask 1045508
    %v237 = vsel %vm236, %v235, %v232
    %s238 = scalar_lea.vmem %s0, 4294967243
    %s239 = smov 192
    %v240 = vld [vmem:[%s238] ss:$16 sm:%s239]
    %vm241 = vcmask 1047558
    %v242 = vsel %vm241, %v240, %v237
    %243 = vrot.lane.b32.xlu0 %v242, 48
    %v244 = vpop.permute.xlu0 %243
    %vm245 = vcmask 523648
    %246 = vst.msk [vmem:[#allocation0] sm:$0xf] %vm245, %v244
    %s247 = scalar_lea.vmem [#allocation0], 4
    %248 = vst.msk [vmem:[%s247] sm:$0xf0] %vm245, %v244
    %s249 = scalar_lea.vmem %s0, 67
    %s250 = smov 3
    %v251 = vld [vmem:[%s249] ss:$16 sm:%s250]
    %s252 = scalar_lea.vmem %s0, 67
    %s253 = smov 12
    %v254 = vld [vmem:[%s252] ss:$16 sm:%s253]
    %vm255 = vcmask 1043458
    %v256 = vsel %vm255, %v254, %v251
    %s257 = scalar_lea.vmem %s0, 11
    %s258 = smov 48
    %v259 = vld [vmem:[%s257] ss:$16 sm:%s258]
    %vm260 = vcmask 1045508
    %v261 = vsel %vm260, %v259, %v256
    %s262 = scalar_lea.vmem %s0, 11
    %s263 = smov 192
    %v264 = vld [vmem:[%s262] ss:$16 sm:%s263]
    %vm265 = vcmask 1047558
    %v266 = vsel %vm265, %v264, %v261
    %267 = vrot.lane.b32.xlu0 %v266, 48
    %v268 = vpop.permute.xlu0 %267
    %vm269 = vcmask 523648
    %s270 = scalar_lea.vmem [#allocation0], 16
    %271 = vst.msk [vmem:[%s270] sm:$0xf] %vm269, %v268
    %s272 = scalar_lea.vmem [#allocation0], 20
    %273 = vst.msk [vmem:[%s272] sm:$0xf0] %vm269, %v268
    %s274 = scalar_lea.vmem %s0, 2
    %s275 = smov 3
    %v276 = vld [vmem:[%s274] ss:$16 sm:%s275]
    %s277 = scalar_lea.vmem %s0, 2
    %s278 = smov 12
    %v279 = vld [vmem:[%s277] ss:$16 sm:%s278]
    %vm280 = vcmask 1043458
    %v281 = vsel %vm280, %v279, %v276
    %s282 = scalar_lea.vmem %s0, 4294967242
    %s283 = smov 48
    %v284 = vld [vmem:[%s282] ss:$16 sm:%s283]
    %vm285 = vcmask 1045508
    %v286 = vsel %vm285, %v284, %v281
    %s287 = scalar_lea.vmem %s0, 4294967242
    %s288 = smov 192
    %v289 = vld [vmem:[%s287] ss:$16 sm:%s288]
    %vm290 = vcmask 1047558
    %v291 = vsel %vm290, %v289, %v286
    %292 = vrot.lane.b32.xlu0 %v291, 32
    %v293 = vpop.permute.xlu0 %292
    %vm294 = vcmask 392448
    %295 = vst.msk [vmem:[#allocation0] sm:$0xf] %vm294, %v293
    %s296 = scalar_lea.vmem [#allocation0], 4
    %297 = vst.msk [vmem:[%s296] sm:$0xf0] %vm294, %v293
    %s298 = scalar_lea.vmem %s0, 66
    %s299 = smov 3
    %v300 = vld [vmem:[%s298] ss:$16 sm:%s299]
    %s301 = scalar_lea.vmem %s0, 66
    %s302 = smov 12
    %v303 = vld [vmem:[%s301] ss:$16 sm:%s302]
    %vm304 = vcmask 1043458
    %v305 = vsel %vm304, %v303, %v300
    %s306 = scalar_lea.vmem %s0, 10
    %s307 = smov 48
    %v308 = vld [vmem:[%s306] ss:$16 sm:%s307]
    %vm309 = vcmask 1045508
    %v310 = vsel %vm309, %v308, %v305
    %s311 = scalar_lea.vmem %s0, 10
    %s312 = smov 192
    %v313 = vld [vmem:[%s311] ss:$16 sm:%s312]
    %vm314 = vcmask 1047558
    %v315 = vsel %vm314, %v313, %v310
    %316 = vrot.lane.b32.xlu0 %v315, 32
    %v317 = vpop.permute.xlu0 %316
    %vm318 = vcmask 392448
    %s319 = scalar_lea.vmem [#allocation0], 16
    %320 = vst.msk [vmem:[%s319] sm:$0xf] %vm318, %v317
    %s321 = scalar_lea.vmem [#allocation0], 20
    %322 = vst.msk [vmem:[%s321] sm:$0xf0] %vm318, %v317
    %s323 = scalar_lea.vmem %s0, 1
    %s324 = smov 3
    %v325 = vld [vmem:[%s323] ss:$16 sm:%s324]
    %s326 = scalar_lea.vmem %s0, 1
    %s327 = smov 12
    %v328 = vld [vmem:[%s326] ss:$16 sm:%s327]
    %vm329 = vcmask 1043458
    %v330 = vsel %vm329, %v328, %v325
    %s331 = scalar_lea.vmem %s0, 4294967241
    %s332 = smov 48
    %v333 = vld [vmem:[%s331] ss:$16 sm:%s332]
    %vm334 = vcmask 1045508
    %v335 = vsel %vm334, %v333, %v330
    %s336 = scalar_lea.vmem %s0, 4294967241
    %s337 = smov 192
    %v338 = vld [vmem:[%s336] ss:$16 sm:%s337]
    %vm339 = vcmask 1047558
    %v340 = vsel %vm339, %v338, %v335
    %341 = vrot.lane.b32.xlu0 %v340, 16
    %v342 = vpop.permute.xlu0 %341
    %vm343 = vcmask 261248
    %344 = vst.msk [vmem:[#allocation0] sm:$0xf] %vm343, %v342
    %s345 = scalar_lea.vmem [#allocation0], 4
    %346 = vst.msk [vmem:[%s345] sm:$0xf0] %vm343, %v342
    %s347 = scalar_lea.vmem %s0, 65
    %s348 = smov 3
    %v349 = vld [vmem:[%s347] ss:$16 sm:%s348]
    %s350 = scalar_lea.vmem %s0, 65
    %s351 = smov 12
    %v352 = vld [vmem:[%s350] ss:$16 sm:%s351]
    %vm353 = vcmask 1043458
    %v354 = vsel %vm353, %v352, %v349
    %s355 = scalar_lea.vmem %s0, 9
    %s356 = smov 48
    %v357 = vld [vmem:[%s355] ss:$16 sm:%s356]
    %vm358 = vcmask 1045508
    %v359 = vsel %vm358, %v357, %v354
    %s360 = scalar_lea.vmem %s0, 9
    %s361 = smov 192
    %v362 = vld [vmem:[%s360] ss:$16 sm:%s361]
    %vm363 = vcmask 1047558
    %v364 = vsel %vm363, %v362, %v359
    %365 = vrot.lane.b32.xlu0 %v364, 16
    %v366 = vpop.permute.xlu0 %365
    %vm367 = vcmask 261248
    %s368 = scalar_lea.vmem [#allocation0], 16
    %369 = vst.msk [vmem:[%s368] sm:$0xf] %vm367, %v366
    %s370 = scalar_lea.vmem [#allocation0], 20
    %371 = vst.msk [vmem:[%s370] sm:$0xf0] %vm367, %v366
    %s373 = sshll.u32 1, 4
    %s374 = ssub.s32 %s373, 1
    %v376 = vld [vmem:[#allocation0] sm:%s374]
    %s377 = sshll.u32 1, 4
    %s378 = ssub.s32 %s377, 1
    %379 = vst [vmem:[%s1] sm:%s378] %v376
    %s380 = scalar_lea.vmem [#allocation0], 8
    %v381 = vld [vmem:[%s380] sm:%s374]
    %s382 = sshll.u32 1, 4
    %s383 = ssub.s32 %s382, 1
    %s384 = scalar_lea.vmem %s1, 4
    %385 = vst [vmem:[%s384] sm:%s383] %v381
    %s386 = scalar_lea.vmem [#allocation0], 16
    %v387 = vld [vmem:[%s386] sm:%s374]
    %s388 = sshll.u32 1, 4
    %s389 = ssub.s32 %s388, 1
    %s390 = smul.addr 4, 2
    %s391 = scalar_lea.vmem %s1, %s390
    %392 = vst [vmem:[%s391] sm:%s389] %v387
    %s393 = scalar_lea.vmem [#allocation0], 24
    %v394 = vld [vmem:[%s393] sm:%s374]
    %s395 = sshll.u32 1, 4
    %s396 = ssub.s32 %s395, 1
    %s397 = smul.addr 4, 3
    %s398 = scalar_lea.vmem %s1, %s397
    %399 = vst [vmem:[%s398] sm:%s396] %v394

// kernel: neg.8
$region0: #{neg.8}
  #allocation0 [shape = 's32[1]{0}', space=sflag, size = 0x4, scoped, tag = 'scoped memory for neg.8']
  %s0 = inlined_call_operand.vmem [shape: f32[2,4,256], index: 0, kind: input, shape index: {}]
  %s1 = inlined_call_operand.vmem [shape: f32[2,4,256], index: 1, kind: output, shape index: {}]
  %v2 = vld [vmem:[%s0] sm:$0xf]
  %3 = xla_tuple %v2
  %4 = xla_tuple %3
  %v5 = vxor.u32 %v2, 2147483648
  %6 = xla_tuple %v5
  %7 = vst [vmem:[%s1] sm:$0xf] %v5
  %s8 = scalar_lea.vmem %s0, 8
  %v9 = vld [vmem:[%s8] sm:$0xf]
  %10 = xla_tuple %v9
  %11 = xla_tuple %10
  %v12 = vxor.u32 %v9, 2147483648
  %13 = xla_tuple %v12
  %s14 = scalar_lea.vmem %s1, 8
  %15 = vst [vmem:[%s14] sm:$0xf] %v12
  %s16 = scalar_lea.vmem %s0, 4
  %v17 = vld [vmem:[%s16] sm:$0xf]
  %18 = xla_tuple %v17
  %19 = xla_tuple %18
  %v20 = vxor.u32 %v17, 2147483648
  %21 = xla_tuple %v20
  %s22 = scalar_lea.vmem %s1, 4
  %23 = vst [vmem:[%s22] sm:$0xf] %v20
  %s24 = scalar_lea.vmem %s0, 12
  %v25 = vld [vmem:[%s24] sm:$0xf]
  %26 = xla_tuple %v25
  %27 = xla_tuple %26
  %v28 = vxor.u32 %v25, 2147483648
  %29 = xla_tuple %v28
  %s30 = scalar_lea.vmem %s1, 12
  %31 = vst [vmem:[%s30] sm:$0xf] %v28

// kernel: modl_recon_one_unroll.1
$region0: #{modl_recon_one_unroll.1}
  #allocation0 [shape = 'u32[]', space=smem, size = 0x4, offset = 0x4, fixed_abs, tag = 'smem constant byte address 0x4 - core index']
  #allocation1 [shape = 'u32[144,128]{1,0:T(1,128)}', space=vmem, size = 0x12000, scoped, tag = 'internal scratch']
  %s0 = inlined_call_operand.vmem [shape: f32[2,512], index: 0, kind: input, shape index: {}]
  %s1 = inlined_call_operand.vmem [shape: f32[8,512], index: 1, kind: input, shape index: {}]
  %s2 = inlined_call_operand.vmem [shape: f32[2,512], index: 2, kind: input, shape index: {}]
  %s3 = inlined_call_operand.vmem [shape: f32[9,512], index: 3, kind: input, shape index: {}]
  %s4 = inlined_call_operand.vmem [shape: f32[2,512,512], index: 4, kind: input, shape index: {}]
  %s5 = inlined_call_operand.vmem [shape: f32[5,8,72], index: 5, kind: input, shape index: {}]
  %s6 = inlined_call_operand.vmem [shape: f32[5,8,1], index: 6, kind: input, shape index: {}]
  %s7 = inlined_call_operand.vmem [shape: f32[2,512], index: 7, kind: output, shape index: {}]
  %s8 = sld [smem:[#allocation0]]
  $region38: #{modl_recon_one_unroll.1} parent=0
    _
  %s10 = ssub.s32 1, %s8
  %s11 = scalar_select 0, %s10, %s8
  // Predicated region
  $region2: #{modl_recon_one_unroll.1} parent=0 // pred_check
    _
  $region3: #{modl_recon_one_unroll.1} parent=0 // pred_check_branch
    %13 = sbr.rel (0) target = $region5
  $region4: #{modl_recon_one_unroll.1} parent=0 // pred_region
    _
  $region5: #{modl_recon_one_unroll.1} parent=0 // pred_fallthru
    _
  // Predicated region
  $region6: #{modl_recon_one_unroll.1} parent=0 // pred_check
    _
  $region7: #{modl_recon_one_unroll.1} parent=0 // pred_check_branch
    %15 = sbr.rel (0) target = $region9
  $region8: #{modl_recon_one_unroll.1} parent=0 // pred_region
    _
  $region9: #{modl_recon_one_unroll.1} parent=0 // pred_fallthru
    _
  // Predicated region
  $region10: #{modl_recon_one_unroll.1} parent=0 // pred_check
    _
  $region11: #{modl_recon_one_unroll.1} parent=0 // pred_check_branch
    %17 = sbr.rel (0) target = $region13
  $region12: #{modl_recon_one_unroll.1} parent=0 // pred_region
    _
  $region13: #{modl_recon_one_unroll.1} parent=0 // pred_fallthru
    _
  // Predicated region
  $region14: #{modl_recon_one_unroll.1} parent=0 // pred_check
    _
  $region15: #{modl_recon_one_unroll.1} parent=0 // pred_check_branch
    %19 = sbr.rel (0) target = $region17
  $region16: #{modl_recon_one_unroll.1} parent=0 // pred_region
    _
  $region17: #{modl_recon_one_unroll.1} parent=0 // pred_fallthru
    _
  // Predicated region
  $region18: #{modl_recon_one_unroll.1} parent=0 // pred_check
    _
  $region19: #{modl_recon_one_unroll.1} parent=0 // pred_check_branch
    %21 = sbr.rel (0) target = $region21
  $region20: #{modl_recon_one_unroll.1} parent=0 // pred_region
    _
  $region21: #{modl_recon_one_unroll.1} parent=0 // pred_fallthru
    _
  // Predicated region
  $region22: #{modl_recon_one_unroll.1} parent=0 // pred_check
    _
  $region23: #{modl_recon_one_unroll.1} parent=0 // pred_check_branch
    %23 = sbr.rel (0) target = $region25
  $region24: #{modl_recon_one_unroll.1} parent=0 // pred_region
    _
  $region25: #{modl_recon_one_unroll.1} parent=0 // pred_fallthru
    _
  // Predicated region
  $region26: #{modl_recon_one_unroll.1} parent=0 // pred_check
    _
  $region27: #{modl_recon_one_unroll.1} parent=0 // pred_check_branch
    %25 = sbr.rel (0) target = $region29
  $region28: #{modl_recon_one_unroll.1} parent=0 // pred_region
    _
  $region29: #{modl_recon_one_unroll.1} parent=0 // pred_fallthru
    _
  %v26 = vld [vmem:[%s0] sm:$0xff]
  %v27 = vld [vmem:[%s2] sm:$0xff]
  %v28 = vld [vmem:[%s1] sm:$0xff]
  %v29 = vld [vmem:[%s1 + $0x8] sm:$0xff]
  %v30 = vld [vmem:[%s1 + $0x10] sm:$0xff]
  %v31 = vld [vmem:[%s1 + $0x18] sm:$0xff]
  %v32 = vld [vmem:[%s3] sm:$0xff]
  %v33 = vld [vmem:[%s3 + $0x8] sm:$0xff]
  %v34 = vld [vmem:[%s3 + $0x10] sm:$0xff]
  %v35 = vld [vmem:[%s3 + $0x18] sm:$0xff]
  %v36 = vld [vmem:[%s3 + $0x20] sm:$0x1]
  %v37 = vld [vmem:[%s3 + $0x28] sm:$0x1]
  %v38 = vld [vmem:[%s3 + $0x30] sm:$0x1]
  %v39 = vld [vmem:[%s3 + $0x38] sm:$0x1]
  %v40 = vld [vmem:[%s4] sm:$0xff]
  %v41 = vld [vmem:[%s4 + $0x8] sm:$0xff]
  %v42 = vld [vmem:[%s4 + $0x10] sm:$0xff]
  %v43 = vld [vmem:[%s4 + $0x18] sm:$0xff]
  %v44 = vld [vmem:[%s4 + $0x20] sm:$0xff]
  %v45 = vld [vmem:[%s4 + $0x28] sm:$0xff]
  %v46 = vld [vmem:[%s4 + $0x30] sm:$0xff]
  %v47 = vld [vmem:[%s4 + $0x38] sm:$0xff]
  %v48 = vld [vmem:[%s4 + $0x40] sm:$0xff]
  %v49 = vld [vmem:[%s4 + $0x48] sm:$0xff]
  %v50 = vld [vmem:[%s4 + $0x50] sm:$0xff]
  %v51 = vld [vmem:[%s4 + $0x58] sm:$0xff]
  %v52 = vld [vmem:[%s4 + $0x60] sm:$0xff]
  %v53 = vld [vmem:[%s4 + $0x68] sm:$0xff]
  %v54 = vld [vmem:[%s4 + $0x70] sm:$0xff]
  %v55 = vld [vmem:[%s4 + $0x78] sm:$0xff]
  %v56 = vld [vmem:[%s4 + $0x80] sm:$0xff]
  %v57 = vld [vmem:[%s4 + $0x88] sm:$0xff]
  %v58 = vld [vmem:[%s4 + $0x90] sm:$0xff]
  %v59 = vld [vmem:[%s4 + $0x98] sm:$0xff]
  %v60 = vld [vmem:[%s4 + $0xa0] sm:$0xff]
  %v61 = vld [vmem:[%s4 + $0xa8] sm:$0xff]
  %v62 = vld [vmem:[%s4 + $0xb0] sm:$0xff]
  %v63 = vld [vmem:[%s4 + $0xb8] sm:$0xff]
  %v64 = vld [vmem:[%s4 + $0xc0] sm:$0xff]
  %v65 = vld [vmem:[%s4 + $0xc8] sm:$0xff]
  %v66 = vld [vmem:[%s4 + $0xd0] sm:$0xff]
  %v67 = vld [vmem:[%s4 + $0xd8] sm:$0xff]
  %v68 = vld [vmem:[%s4 + $0xe0] sm:$0xff]
  %v69 = vld [vmem:[%s4 + $0xe8] sm:$0xff]
  %v70 = vld [vmem:[%s4 + $0xf0] sm:$0xff]
  %v71 = vld [vmem:[%s4 + $0xf8] sm:$0xff]
  %v72 = vld [vmem:[%s4 + $0x100] sm:$0xff]
  %v73 = vld [vmem:[%s4 + $0x108] sm:$0xff]
  %v74 = vld [vmem:[%s4 + $0x110] sm:$0xff]
  %v75 = vld [vmem:[%s4 + $0x118] sm:$0xff]
  %v76 = vld [vmem:[%s4 + $0x120] sm:$0xff]
  %v77 = vld [vmem:[%s4 + $0x128] sm:$0xff]
  %v78 = vld [vmem:[%s4 + $0x130] sm:$0xff]
  %v79 = vld [vmem:[%s4 + $0x138] sm:$0xff]
  %v80 = vld [vmem:[%s4 + $0x140] sm:$0xff]
  %v81 = vld [vmem:[%s4 + $0x148] sm:$0xff]
  %v82 = vld [vmem:[%s4 + $0x150] sm:$0xff]
  %v83 = vld [vmem:[%s4 + $0x158] sm:$0xff]
  %v84 = vld [vmem:[%s4 + $0x160] sm:$0xff]
  %v85 = vld [vmem:[%s4 + $0x168] sm:$0xff]
  %v86 = vld [vmem:[%s4 + $0x170] sm:$0xff]
  %v87 = vld [vmem:[%s4 + $0x178] sm:$0xff]
  %v88 = vld [vmem:[%s4 + $0x180] sm:$0xff]
  %v89 = vld [vmem:[%s4 + $0x188] sm:$0xff]
  %v90 = vld [vmem:[%s4 + $0x190] sm:$0xff]
  %v91 = vld [vmem:[%s4 + $0x198] sm:$0xff]
  %v92 = vld [vmem:[%s4 + $0x1a0] sm:$0xff]
  %v93 = vld [vmem:[%s4 + $0x1a8] sm:$0xff]
  %v94 = vld [vmem:[%s4 + $0x1b0] sm:$0xff]
  %v95 = vld [vmem:[%s4 + $0x1b8] sm:$0xff]
  %v96 = vld [vmem:[%s4 + $0x1c0] sm:$0xff]
  %v97 = vld [vmem:[%s4 + $0x1c8] sm:$0xff]
  %v98 = vld [vmem:[%s4 + $0x1d0] sm:$0xff]
  %v99 = vld [vmem:[%s4 + $0x1d8] sm:$0xff]
  %v100 = vld [vmem:[%s4 + $0x1e0] sm:$0xff]
  %v101 = vld [vmem:[%s4 + $0x1e8] sm:$0xff]
  %v102 = vld [vmem:[%s4 + $0x1f0] sm:$0xff]
  %v103 = vld [vmem:[%s4 + $0x1f8] sm:$0xff]
  %v104 = vld [vmem:[%s4 + $0x200] sm:$0xff]
  %v105 = vld [vmem:[%s4 + $0x208] sm:$0xff]
  %v106 = vld [vmem:[%s4 + $0x210] sm:$0xff]
  %v107 = vld [vmem:[%s4 + $0x218] sm:$0xff]
  %v108 = vld [vmem:[%s4 + $0x220] sm:$0xff]
  %v109 = vld [vmem:[%s4 + $0x228] sm:$0xff]
  %v110 = vld [vmem:[%s4 + $0x230] sm:$0xff]
  %v111 = vld [vmem:[%s4 + $0x238] sm:$0xff]
  %v112 = vld [vmem:[%s4 + $0x240] sm:$0xff]
  %v113 = vld [vmem:[%s4 + $0x248] sm:$0xff]
  %v114 = vld [vmem:[%s4 + $0x250] sm:$0xff]
  %v115 = vld [vmem:[%s4 + $0x258] sm:$0xff]
  %v116 = vld [vmem:[%s4 + $0x260] sm:$0xff]
  %v117 = vld [vmem:[%s4 + $0x268] sm:$0xff]
  %v118 = vld [vmem:[%s4 + $0x270] sm:$0xff]
  %v119 = vld [vmem:[%s4 + $0x278] sm:$0xff]
  %v120 = vld [vmem:[%s4 + $0x280] sm:$0xff]
  %v121 = vld [vmem:[%s4 + $0x288] sm:$0xff]
  %v122 = vld [vmem:[%s4 + $0x290] sm:$0xff]
  %v123 = vld [vmem:[%s4 + $0x298] sm:$0xff]
  %v124 = vld [vmem:[%s4 + $0x2a0] sm:$0xff]
  %v125 = vld [vmem:[%s4 + $0x2a8] sm:$0xff]
  %v126 = vld [vmem:[%s4 + $0x2b0] sm:$0xff]
  %v127 = vld [vmem:[%s4 + $0x2b8] sm:$0xff]
  %v128 = vld [vmem:[%s4 + $0x2c0] sm:$0xff]
  %v129 = vld [vmem:[%s4 + $0x2c8] sm:$0xff]
  %v130 = vld [vmem:[%s4 + $0x2d0] sm:$0xff]
  %v131 = vld [vmem:[%s4 + $0x2d8] sm:$0xff]
  %v132 = vld [vmem:[%s4 + $0x2e0] sm:$0xff]
  %v133 = vld [vmem:[%s4 + $0x2e8] sm:$0xff]
  %v134 = vld [vmem:[%s4 + $0x2f0] sm:$0xff]
  %v135 = vld [vmem:[%s4 + $0x2f8] sm:$0xff]
  %v136 = vld [vmem:[%s4 + $0x300] sm:$0xff]
  %v137 = vld [vmem:[%s4 + $0x308] sm:$0xff]
  %v138 = vld [vmem:[%s4 + $0x310] sm:$0xff]
  %v139 = vld [vmem:[%s4 + $0x318] sm:$0xff]
  %v140 = vld [vmem:[%s4 + $0x320] sm:$0xff]
  %v141 = vld [vmem:[%s4 + $0x328] sm:$0xff]
  %v142 = vld [vmem:[%s4 + $0x330] sm:$0xff]
  %v143 = vld [vmem:[%s4 + $0x338] sm:$0xff]
  %v144 = vld [vmem:[%s4 + $0x340] sm:$0xff]
  %v145 = vld [vmem:[%s4 + $0x348] sm:$0xff]
  %v146 = vld [vmem:[%s4 + $0x350] sm:$0xff]
  %v147 = vld [vmem:[%s4 + $0x358] sm:$0xff]
  %v148 = vld [vmem:[%s4 + $0x360] sm:$0xff]
  %v149 = vld [vmem:[%s4 + $0x368] sm:$0xff]
  %v150 = vld [vmem:[%s4 + $0x370] sm:$0xff]
  %v151 = vld [vmem:[%s4 + $0x378] sm:$0xff]
  %v152 = vld [vmem:[%s4 + $0x380] sm:$0xff]
  %v153 = vld [vmem:[%s4 + $0x388] sm:$0xff]
  %v154 = vld [vmem:[%s4 + $0x390] sm:$0xff]
  %v155 = vld [vmem:[%s4 + $0x398] sm:$0xff]
  %v156 = vld [vmem:[%s4 + $0x3a0] sm:$0xff]
  %v157 = vld [vmem:[%s4 + $0x3a8] sm:$0xff]
  %v158 = vld [vmem:[%s4 + $0x3b0] sm:$0xff]
  %v159 = vld [vmem:[%s4 + $0x3b8] sm:$0xff]
  %v160 = vld [vmem:[%s4 + $0x3c0] sm:$0xff]
  %v161 = vld [vmem:[%s4 + $0x3c8] sm:$0xff]
  %v162 = vld [vmem:[%s4 + $0x3d0] sm:$0xff]
  %v163 = vld [vmem:[%s4 + $0x3d8] sm:$0xff]
  %v164 = vld [vmem:[%s4 + $0x3e0] sm:$0xff]
  %v165 = vld [vmem:[%s4 + $0x3e8] sm:$0xff]
  %v166 = vld [vmem:[%s4 + $0x3f0] sm:$0xff]
  %v167 = vld [vmem:[%s4 + $0x3f8] sm:$0xff]
  %v168 = vld [vmem:[%s4 + $0x400] sm:$0xff]
  %v169 = vld [vmem:[%s4 + $0x408] sm:$0xff]
  %v170 = vld [vmem:[%s4 + $0x410] sm:$0xff]
  %v171 = vld [vmem:[%s4 + $0x418] sm:$0xff]
  %v172 = vld [vmem:[%s4 + $0x420] sm:$0xff]
  %v173 = vld [vmem:[%s4 + $0x428] sm:$0xff]
  %v174 = vld [vmem:[%s4 + $0x430] sm:$0xff]
  %v175 = vld [vmem:[%s4 + $0x438] sm:$0xff]
  %v176 = vld [vmem:[%s4 + $0x440] sm:$0xff]
  %v177 = vld [vmem:[%s4 + $0x448] sm:$0xff]
  %v178 = vld [vmem:[%s4 + $0x450] sm:$0xff]
  %v179 = vld [vmem:[%s4 + $0x458] sm:$0xff]
  %v180 = vld [vmem:[%s4 + $0x460] sm:$0xff]
  %v181 = vld [vmem:[%s4 + $0x468] sm:$0xff]
  %v182 = vld [vmem:[%s4 + $0x470] sm:$0xff]
  %v183 = vld [vmem:[%s4 + $0x478] sm:$0xff]
  %v184 = vld [vmem:[%s4 + $0x480] sm:$0xff]
  %v185 = vld [vmem:[%s4 + $0x488] sm:$0xff]
  %v186 = vld [vmem:[%s4 + $0x490] sm:$0xff]
  %v187 = vld [vmem:[%s4 + $0x498] sm:$0xff]
  %v188 = vld [vmem:[%s4 + $0x4a0] sm:$0xff]
  %v189 = vld [vmem:[%s4 + $0x4a8] sm:$0xff]
  %v190 = vld [vmem:[%s4 + $0x4b0] sm:$0xff]
  %v191 = vld [vmem:[%s4 + $0x4b8] sm:$0xff]
  %v192 = vld [vmem:[%s4 + $0x4c0] sm:$0xff]
  %v193 = vld [vmem:[%s4 + $0x4c8] sm:$0xff]
  %v194 = vld [vmem:[%s4 + $0x4d0] sm:$0xff]
  %v195 = vld [vmem:[%s4 + $0x4d8] sm:$0xff]
  %v196 = vld [vmem:[%s4 + $0x4e0] sm:$0xff]
  %v197 = vld [vmem:[%s4 + $0x4e8] sm:$0xff]
  %v198 = vld [vmem:[%s4 + $0x4f0] sm:$0xff]
  %v199 = vld [vmem:[%s4 + $0x4f8] sm:$0xff]
  %v200 = vld [vmem:[%s4 + $0x500] sm:$0xff]
  %v201 = vld [vmem:[%s4 + $0x508] sm:$0xff]
  %v202 = vld [vmem:[%s4 + $0x510] sm:$0xff]
  %v203 = vld [vmem:[%s4 + $0x518] sm:$0xff]
  %v204 = vld [vmem:[%s4 + $0x520] sm:$0xff]
  %v205 = vld [vmem:[%s4 + $0x528] sm:$0xff]
  %v206 = vld [vmem:[%s4 + $0x530] sm:$0xff]
  %v207 = vld [vmem:[%s4 + $0x538] sm:$0xff]
  %v208 = vld [vmem:[%s4 + $0x540] sm:$0xff]
  %v209 = vld [vmem:[%s4 + $0x548] sm:$0xff]
  %v210 = vld [vmem:[%s4 + $0x550] sm:$0xff]
  %v211 = vld [vmem:[%s4 + $0x558] sm:$0xff]
  %v212 = vld [vmem:[%s4 + $0x560] sm:$0xff]
  %v213 = vld [vmem:[%s4 + $0x568] sm:$0xff]
  %v214 = vld [vmem:[%s4 + $0x570] sm:$0xff]
  %v215 = vld [vmem:[%s4 + $0x578] sm:$0xff]
  %v216 = vld [vmem:[%s4 + $0x580] sm:$0xff]
  %v217 = vld [vmem:[%s4 + $0x588] sm:$0xff]
  %v218 = vld [vmem:[%s4 + $0x590] sm:$0xff]
  %v219 = vld [vmem:[%s4 + $0x598] sm:$0xff]
  %v220 = vld [vmem:[%s4 + $0x5a0] sm:$0xff]
  %v221 = vld [vmem:[%s4 + $0x5a8] sm:$0xff]
  %v222 = vld [vmem:[%s4 + $0x5b0] sm:$0xff]
  %v223 = vld [vmem:[%s4 + $0x5b8] sm:$0xff]
  %v224 = vld [vmem:[%s4 + $0x5c0] sm:$0xff]
  %v225 = vld [vmem:[%s4 + $0x5c8] sm:$0xff]
  %v226 = vld [vmem:[%s4 + $0x5d0] sm:$0xff]
  %v227 = vld [vmem:[%s4 + $0x5d8] sm:$0xff]
  %v228 = vld [vmem:[%s4 + $0x5e0] sm:$0xff]
  %v229 = vld [vmem:[%s4 + $0x5e8] sm:$0xff]
  %v230 = vld [vmem:[%s4 + $0x5f0] sm:$0xff]
  %v231 = vld [vmem:[%s4 + $0x5f8] sm:$0xff]
  %v232 = vld [vmem:[%s4 + $0x600] sm:$0xff]
  %v233 = vld [vmem:[%s4 + $0x608] sm:$0xff]
  %v234 = vld [vmem:[%s4 + $0x610] sm:$0xff]
  %v235 = vld [vmem:[%s4 + $0x618] sm:$0xff]
  %v236 = vld [vmem:[%s4 + $0x620] sm:$0xff]
  %v237 = vld [vmem:[%s4 + $0x628] sm:$0xff]
  %v238 = vld [vmem:[%s4 + $0x630] sm:$0xff]
  %v239 = vld [vmem:[%s4 + $0x638] sm:$0xff]
  %v240 = vld [vmem:[%s4 + $0x640] sm:$0xff]
  %v241 = vld [vmem:[%s4 + $0x648] sm:$0xff]
  %v242 = vld [vmem:[%s4 + $0x650] sm:$0xff]
  %v243 = vld [vmem:[%s4 + $0x658] sm:$0xff]
  %v244 = vld [vmem:[%s4 + $0x660] sm:$0xff]
  %v245 = vld [vmem:[%s4 + $0x668] sm:$0xff]
  %v246 = vld [vmem:[%s4 + $0x670] sm:$0xff]
  %v247 = vld [vmem:[%s4 + $0x678] sm:$0xff]
  %v248 = vld [vmem:[%s4 + $0x680] sm:$0xff]
  %v249 = vld [vmem:[%s4 + $0x688] sm:$0xff]
  %v250 = vld [vmem:[%s4 + $0x690] sm:$0xff]
  %v251 = vld [vmem:[%s4 + $0x698] sm:$0xff]
  %v252 = vld [vmem:[%s4 + $0x6a0] sm:$0xff]
  %v253 = vld [vmem:[%s4 + $0x6a8] sm:$0xff]
  %v254 = vld [vmem:[%s4 + $0x6b0] sm:$0xff]
  %v255 = vld [vmem:[%s4 + $0x6b8] sm:$0xff]
  %v256 = vld [vmem:[%s4 + $0x6c0] sm:$0xff]
  %v257 = vld [vmem:[%s4 + $0x6c8] sm:$0xff]
  %v258 = vld [vmem:[%s4 + $0x6d0] sm:$0xff]
  %v259 = vld [vmem:[%s4 + $0x6d8] sm:$0xff]
  %v260 = vld [vmem:[%s4 + $0x6e0] sm:$0xff]
  %v261 = vld [vmem:[%s4 + $0x6e8] sm:$0xff]
  %v262 = vld [vmem:[%s4 + $0x6f0] sm:$0xff]
  %v263 = vld [vmem:[%s4 + $0x6f8] sm:$0xff]
  %v264 = vld [vmem:[%s4 + $0x700] sm:$0xff]
  %v265 = vld [vmem:[%s4 + $0x708] sm:$0xff]
  %v266 = vld [vmem:[%s4 + $0x710] sm:$0xff]
  %v267 = vld [vmem:[%s4 + $0x718] sm:$0xff]
  %v268 = vld [vmem:[%s4 + $0x720] sm:$0xff]
  %v269 = vld [vmem:[%s4 + $0x728] sm:$0xff]
  %v270 = vld [vmem:[%s4 + $0x730] sm:$0xff]
  %v271 = vld [vmem:[%s4 + $0x738] sm:$0xff]
  %v272 = vld [vmem:[%s4 + $0x740] sm:$0xff]
  %v273 = vld [vmem:[%s4 + $0x748] sm:$0xff]
  %v274 = vld [vmem:[%s4 + $0x750] sm:$0xff]
  %v275 = vld [vmem:[%s4 + $0x758] sm:$0xff]
  %v276 = vld [vmem:[%s4 + $0x760] sm:$0xff]
  %v277 = vld [vmem:[%s4 + $0x768] sm:$0xff]
  %v278 = vld [vmem:[%s4 + $0x770] sm:$0xff]
  %v279 = vld [vmem:[%s4 + $0x778] sm:$0xff]
  %v280 = vld [vmem:[%s4 + $0x780] sm:$0xff]
  %v281 = vld [vmem:[%s4 + $0x788] sm:$0xff]
  %v282 = vld [vmem:[%s4 + $0x790] sm:$0xff]
  %v283 = vld [vmem:[%s4 + $0x798] sm:$0xff]
  %v284 = vld [vmem:[%s4 + $0x7a0] sm:$0xff]
  %v285 = vld [vmem:[%s4 + $0x7a8] sm:$0xff]
  %v286 = vld [vmem:[%s4 + $0x7b0] sm:$0xff]
  %v287 = vld [vmem:[%s4 + $0x7b8] sm:$0xff]
  %v288 = vld [vmem:[%s4 + $0x7c0] sm:$0xff]
  %v289 = vld [vmem:[%s4 + $0x7c8] sm:$0xff]
  %v290 = vld [vmem:[%s4 + $0x7d0] sm:$0xff]
  %v291 = vld [vmem:[%s4 + $0x7d8] sm:$0xff]
  %v292 = vld [vmem:[%s4 + $0x7e0] sm:$0xff]
  %v293 = vld [vmem:[%s4 + $0x7e8] sm:$0xff]
  %v294 = vld [vmem:[%s4 + $0x7f0] sm:$0xff]
  %v295 = vld [vmem:[%s4 + $0x7f8] sm:$0xff]
  %s296 = scalar_lea.vmem %s4, 2048
  %v297 = vld [vmem:[%s296] sm:$0xff]
  %v298 = vld [vmem:[%s296 + $0x8] sm:$0xff]
  %v299 = vld [vmem:[%s296 + $0x10] sm:$0xff]
  %v300 = vld [vmem:[%s296 + $0x18] sm:$0xff]
  %v301 = vld [vmem:[%s296 + $0x20] sm:$0xff]
  %v302 = vld [vmem:[%s296 + $0x28] sm:$0xff]
  %v303 = vld [vmem:[%s296 + $0x30] sm:$0xff]
  %v304 = vld [vmem:[%s296 + $0x38] sm:$0xff]
  %v305 = vld [vmem:[%s296 + $0x40] sm:$0xff]
  %v306 = vld [vmem:[%s296 + $0x48] sm:$0xff]
  %v307 = vld [vmem:[%s296 + $0x50] sm:$0xff]
  %v308 = vld [vmem:[%s296 + $0x58] sm:$0xff]
  %v309 = vld [vmem:[%s296 + $0x60] sm:$0xff]
  %v310 = vld [vmem:[%s296 + $0x68] sm:$0xff]
  %v311 = vld [vmem:[%s296 + $0x70] sm:$0xff]
  %v312 = vld [vmem:[%s296 + $0x78] sm:$0xff]
  %v313 = vld [vmem:[%s296 + $0x80] sm:$0xff]
  %v314 = vld [vmem:[%s296 + $0x88] sm:$0xff]
  %v315 = vld [vmem:[%s296 + $0x90] sm:$0xff]
  %v316 = vld [vmem:[%s296 + $0x98] sm:$0xff]
  %v317 = vld [vmem:[%s296 + $0xa0] sm:$0xff]
  %v318 = vld [vmem:[%s296 + $0xa8] sm:$0xff]
  %v319 = vld [vmem:[%s296 + $0xb0] sm:$0xff]
  %v320 = vld [vmem:[%s296 + $0xb8] sm:$0xff]
  %v321 = vld [vmem:[%s296 + $0xc0] sm:$0xff]
  %v322 = vld [vmem:[%s296 + $0xc8] sm:$0xff]
  %v323 = vld [vmem:[%s296 + $0xd0] sm:$0xff]
  %v324 = vld [vmem:[%s296 + $0xd8] sm:$0xff]
  %v325 = vld [vmem:[%s296 + $0xe0] sm:$0xff]
  %v326 = vld [vmem:[%s296 + $0xe8] sm:$0xff]
  %v327 = vld [vmem:[%s296 + $0xf0] sm:$0xff]
  %v328 = vld [vmem:[%s296 + $0xf8] sm:$0xff]
  %v329 = vld [vmem:[%s296 + $0x100] sm:$0xff]
  %v330 = vld [vmem:[%s296 + $0x108] sm:$0xff]
  %v331 = vld [vmem:[%s296 + $0x110] sm:$0xff]
  %v332 = vld [vmem:[%s296 + $0x118] sm:$0xff]
  %v333 = vld [vmem:[%s296 + $0x120] sm:$0xff]
  %v334 = vld [vmem:[%s296 + $0x128] sm:$0xff]
  %v335 = vld [vmem:[%s296 + $0x130] sm:$0xff]
  %v336 = vld [vmem:[%s296 + $0x138] sm:$0xff]
  %v337 = vld [vmem:[%s296 + $0x140] sm:$0xff]
  %v338 = vld [vmem:[%s296 + $0x148] sm:$0xff]
  %v339 = vld [vmem:[%s296 + $0x150] sm:$0xff]
  %v340 = vld [vmem:[%s296 + $0x158] sm:$0xff]
  %v341 = vld [vmem:[%s296 + $0x160] sm:$0xff]
  %v342 = vld [vmem:[%s296 + $0x168] sm:$0xff]
  %v343 = vld [vmem:[%s296 + $0x170] sm:$0xff]
  %v344 = vld [vmem:[%s296 + $0x178] sm:$0xff]
  %v345 = vld [vmem:[%s296 + $0x180] sm:$0xff]
  %v346 = vld [vmem:[%s296 + $0x188] sm:$0xff]
  %v347 = vld [vmem:[%s296 + $0x190] sm:$0xff]
  %v348 = vld [vmem:[%s296 + $0x198] sm:$0xff]
  %v349 = vld [vmem:[%s296 + $0x1a0] sm:$0xff]
  %v350 = vld [vmem:[%s296 + $0x1a8] sm:$0xff]
  %v351 = vld [vmem:[%s296 + $0x1b0] sm:$0xff]
  %v352 = vld [vmem:[%s296 + $0x1b8] sm:$0xff]
  %v353 = vld [vmem:[%s296 + $0x1c0] sm:$0xff]
  %v354 = vld [vmem:[%s296 + $0x1c8] sm:$0xff]
  %v355 = vld [vmem:[%s296 + $0x1d0] sm:$0xff]
  %v356 = vld [vmem:[%s296 + $0x1d8] sm:$0xff]
  %v357 = vld [vmem:[%s296 + $0x1e0] sm:$0xff]
  %v358 = vld [vmem:[%s296 + $0x1e8] sm:$0xff]
  %v359 = vld [vmem:[%s296 + $0x1f0] sm:$0xff]
  %v360 = vld [vmem:[%s296 + $0x1f8] sm:$0xff]
  %v361 = vld [vmem:[%s296 + $0x200] sm:$0xff]
  %v362 = vld [vmem:[%s296 + $0x208] sm:$0xff]
  %v363 = vld [vmem:[%s296 + $0x210] sm:$0xff]
  %v364 = vld [vmem:[%s296 + $0x218] sm:$0xff]
  %v365 = vld [vmem:[%s296 + $0x220] sm:$0xff]
  %v366 = vld [vmem:[%s296 + $0x228] sm:$0xff]
  %v367 = vld [vmem:[%s296 + $0x230] sm:$0xff]
  %v368 = vld [vmem:[%s296 + $0x238] sm:$0xff]
  %v369 = vld [vmem:[%s296 + $0x240] sm:$0xff]
  %v370 = vld [vmem:[%s296 + $0x248] sm:$0xff]
  %v371 = vld [vmem:[%s296 + $0x250] sm:$0xff]
  %v372 = vld [vmem:[%s296 + $0x258] sm:$0xff]
  %v373 = vld [vmem:[%s296 + $0x260] sm:$0xff]
  %v374 = vld [vmem:[%s296 + $0x268] sm:$0xff]
  %v375 = vld [vmem:[%s296 + $0x270] sm:$0xff]
  %v376 = vld [vmem:[%s296 + $0x278] sm:$0xff]
  %v377 = vld [vmem:[%s296 + $0x280] sm:$0xff]
  %v378 = vld [vmem:[%s296 + $0x288] sm:$0xff]
  %v379 = vld [vmem:[%s296 + $0x290] sm:$0xff]
  %v380 = vld [vmem:[%s296 + $0x298] sm:$0xff]
  %v381 = vld [vmem:[%s296 + $0x2a0] sm:$0xff]
  %v382 = vld [vmem:[%s296 + $0x2a8] sm:$0xff]
  %v383 = vld [vmem:[%s296 + $0x2b0] sm:$0xff]
  %v384 = vld [vmem:[%s296 + $0x2b8] sm:$0xff]
  %v385 = vld [vmem:[%s296 + $0x2c0] sm:$0xff]
  %v386 = vld [vmem:[%s296 + $0x2c8] sm:$0xff]
  %v387 = vld [vmem:[%s296 + $0x2d0] sm:$0xff]
  %v388 = vld [vmem:[%s296 + $0x2d8] sm:$0xff]
  %v389 = vld [vmem:[%s296 + $0x2e0] sm:$0xff]
  %v390 = vld [vmem:[%s296 + $0x2e8] sm:$0xff]
  %v391 = vld [vmem:[%s296 + $0x2f0] sm:$0xff]
  %v392 = vld [vmem:[%s296 + $0x2f8] sm:$0xff]
  %v393 = vld [vmem:[%s296 + $0x300] sm:$0xff]
  %v394 = vld [vmem:[%s296 + $0x308] sm:$0xff]
  %v395 = vld [vmem:[%s296 + $0x310] sm:$0xff]
  %v396 = vld [vmem:[%s296 + $0x318] sm:$0xff]
  %v397 = vld [vmem:[%s296 + $0x320] sm:$0xff]
  %v398 = vld [vmem:[%s296 + $0x328] sm:$0xff]
  %v399 = vld [vmem:[%s296 + $0x330] sm:$0xff]
  %v400 = vld [vmem:[%s296 + $0x338] sm:$0xff]
  %v401 = vld [vmem:[%s296 + $0x340] sm:$0xff]
  %v402 = vld [vmem:[%s296 + $0x348] sm:$0xff]
  %v403 = vld [vmem:[%s296 + $0x350] sm:$0xff]
  %v404 = vld [vmem:[%s296 + $0x358] sm:$0xff]
  %v405 = vld [vmem:[%s296 + $0x360] sm:$0xff]
  %v406 = vld [vmem:[%s296 + $0x368] sm:$0xff]
  %v407 = vld [vmem:[%s296 + $0x370] sm:$0xff]
  %v408 = vld [vmem:[%s296 + $0x378] sm:$0xff]
  %v409 = vld [vmem:[%s296 + $0x380] sm:$0xff]
  %v410 = vld [vmem:[%s296 + $0x388] sm:$0xff]
  %v411 = vld [vmem:[%s296 + $0x390] sm:$0xff]
  %v412 = vld [vmem:[%s296 + $0x398] sm:$0xff]
  %v413 = vld [vmem:[%s296 + $0x3a0] sm:$0xff]
  %v414 = vld [vmem:[%s296 + $0x3a8] sm:$0xff]
  %v415 = vld [vmem:[%s296 + $0x3b0] sm:$0xff]
  %v416 = vld [vmem:[%s296 + $0x3b8] sm:$0xff]
  %v417 = vld [vmem:[%s296 + $0x3c0] sm:$0xff]
  %v418 = vld [vmem:[%s296 + $0x3c8] sm:$0xff]
  %v419 = vld [vmem:[%s296 + $0x3d0] sm:$0xff]
  %v420 = vld [vmem:[%s296 + $0x3d8] sm:$0xff]
  %v421 = vld [vmem:[%s296 + $0x3e0] sm:$0xff]
  %v422 = vld [vmem:[%s296 + $0x3e8] sm:$0xff]
  %v423 = vld [vmem:[%s296 + $0x3f0] sm:$0xff]
  %v424 = vld [vmem:[%s296 + $0x3f8] sm:$0xff]
  %v425 = vld [vmem:[%s296 + $0x400] sm:$0xff]
  %v426 = vld [vmem:[%s296 + $0x408] sm:$0xff]
  %v427 = vld [vmem:[%s296 + $0x410] sm:$0xff]
  %v428 = vld [vmem:[%s296 + $0x418] sm:$0xff]
  %v429 = vld [vmem:[%s296 + $0x420] sm:$0xff]
  %v430 = vld [vmem:[%s296 + $0x428] sm:$0xff]
  %v431 = vld [vmem:[%s296 + $0x430] sm:$0xff]
  %v432 = vld [vmem:[%s296 + $0x438] sm:$0xff]
  %v433 = vld [vmem:[%s296 + $0x440] sm:$0xff]
  %v434 = vld [vmem:[%s296 + $0x448] sm:$0xff]
  %v435 = vld [vmem:[%s296 + $0x450] sm:$0xff]
  %v436 = vld [vmem:[%s296 + $0x458] sm:$0xff]
  %v437 = vld [vmem:[%s296 + $0x460] sm:$0xff]
  %v438 = vld [vmem:[%s296 + $0x468] sm:$0xff]
  %v439 = vld [vmem:[%s296 + $0x470] sm:$0xff]
  %v440 = vld [vmem:[%s296 + $0x478] sm:$0xff]
  %v441 = vld [vmem:[%s296 + $0x480] sm:$0xff]
  %v442 = vld [vmem:[%s296 + $0x488] sm:$0xff]
  %v443 = vld [vmem:[%s296 + $0x490] sm:$0xff]
  %v444 = vld [vmem:[%s296 + $0x498] sm:$0xff]
  %v445 = vld [vmem:[%s296 + $0x4a0] sm:$0xff]
  %v446 = vld [vmem:[%s296 + $0x4a8] sm:$0xff]
  %v447 = vld [vmem:[%s296 + $0x4b0] sm:$0xff]
  %v448 = vld [vmem:[%s296 + $0x4b8] sm:$0xff]
  %v449 = vld [vmem:[%s296 + $0x4c0] sm:$0xff]
  %v450 = vld [vmem:[%s296 + $0x4c8] sm:$0xff]
  %v451 = vld [vmem:[%s296 + $0x4d0] sm:$0xff]
  %v452 = vld [vmem:[%s296 + $0x4d8] sm:$0xff]
  %v453 = vld [vmem:[%s296 + $0x4e0] sm:$0xff]
  %v454 = vld [vmem:[%s296 + $0x4e8] sm:$0xff]
  %v455 = vld [vmem:[%s296 + $0x4f0] sm:$0xff]
  %v456 = vld [vmem:[%s296 + $0x4f8] sm:$0xff]
  %v457 = vld [vmem:[%s296 + $0x500] sm:$0xff]
  %v458 = vld [vmem:[%s296 + $0x508] sm:$0xff]
  %v459 = vld [vmem:[%s296 + $0x510] sm:$0xff]
  %v460 = vld [vmem:[%s296 + $0x518] sm:$0xff]
  %v461 = vld [vmem:[%s296 + $0x520] sm:$0xff]
  %v462 = vld [vmem:[%s296 + $0x528] sm:$0xff]
  %v463 = vld [vmem:[%s296 + $0x530] sm:$0xff]
  %v464 = vld [vmem:[%s296 + $0x538] sm:$0xff]
  %v465 = vld [vmem:[%s296 + $0x540] sm:$0xff]
  %v466 = vld [vmem:[%s296 + $0x548] sm:$0xff]
  %v467 = vld [vmem:[%s296 + $0x550] sm:$0xff]
  %v468 = vld [vmem:[%s296 + $0x558] sm:$0xff]
  %v469 = vld [vmem:[%s296 + $0x560] sm:$0xff]
  %v470 = vld [vmem:[%s296 + $0x568] sm:$0xff]
  %v471 = vld [vmem:[%s296 + $0x570] sm:$0xff]
  %v472 = vld [vmem:[%s296 + $0x578] sm:$0xff]
  %v473 = vld [vmem:[%s296 + $0x580] sm:$0xff]
  %v474 = vld [vmem:[%s296 + $0x588] sm:$0xff]
  %v475 = vld [vmem:[%s296 + $0x590] sm:$0xff]
  %v476 = vld [vmem:[%s296 + $0x598] sm:$0xff]
  %v477 = vld [vmem:[%s296 + $0x5a0] sm:$0xff]
  %v478 = vld [vmem:[%s296 + $0x5a8] sm:$0xff]
  %v479 = vld [vmem:[%s296 + $0x5b0] sm:$0xff]
  %v480 = vld [vmem:[%s296 + $0x5b8] sm:$0xff]
  %v481 = vld [vmem:[%s296 + $0x5c0] sm:$0xff]
  %v482 = vld [vmem:[%s296 + $0x5c8] sm:$0xff]
  %v483 = vld [vmem:[%s296 + $0x5d0] sm:$0xff]
  %v484 = vld [vmem:[%s296 + $0x5d8] sm:$0xff]
  %v485 = vld [vmem:[%s296 + $0x5e0] sm:$0xff]
  %v486 = vld [vmem:[%s296 + $0x5e8] sm:$0xff]
  %v487 = vld [vmem:[%s296 + $0x5f0] sm:$0xff]
  %v488 = vld [vmem:[%s296 + $0x5f8] sm:$0xff]
  %v489 = vld [vmem:[%s296 + $0x600] sm:$0xff]
  %v490 = vld [vmem:[%s296 + $0x608] sm:$0xff]
  %v491 = vld [vmem:[%s296 + $0x610] sm:$0xff]
  %v492 = vld [vmem:[%s296 + $0x618] sm:$0xff]
  %v493 = vld [vmem:[%s296 + $0x620] sm:$0xff]
  %v494 = vld [vmem:[%s296 + $0x628] sm:$0xff]
  %v495 = vld [vmem:[%s296 + $0x630] sm:$0xff]
  %v496 = vld [vmem:[%s296 + $0x638] sm:$0xff]
  %v497 = vld [vmem:[%s296 + $0x640] sm:$0xff]
  %v498 = vld [vmem:[%s296 + $0x648] sm:$0xff]
  %v499 = vld [vmem:[%s296 + $0x650] sm:$0xff]
  %v500 = vld [vmem:[%s296 + $0x658] sm:$0xff]
  %v501 = vld [vmem:[%s296 + $0x660] sm:$0xff]
  %v502 = vld [vmem:[%s296 + $0x668] sm:$0xff]
  %v503 = vld [vmem:[%s296 + $0x670] sm:$0xff]
  %v504 = vld [vmem:[%s296 + $0x678] sm:$0xff]
  %v505 = vld [vmem:[%s296 + $0x680] sm:$0xff]
  %v506 = vld [vmem:[%s296 + $0x688] sm:$0xff]
  %v507 = vld [vmem:[%s296 + $0x690] sm:$0xff]
  %v508 = vld [vmem:[%s296 + $0x698] sm:$0xff]
  %v509 = vld [vmem:[%s296 + $0x6a0] sm:$0xff]
  %v510 = vld [vmem:[%s296 + $0x6a8] sm:$0xff]
  %v511 = vld [vmem:[%s296 + $0x6b0] sm:$0xff]
  %v512 = vld [vmem:[%s296 + $0x6b8] sm:$0xff]
  %v513 = vld [vmem:[%s296 + $0x6c0] sm:$0xff]
  %v514 = vld [vmem:[%s296 + $0x6c8] sm:$0xff]
  %v515 = vld [vmem:[%s296 + $0x6d0] sm:$0xff]
  %v516 = vld [vmem:[%s296 + $0x6d8] sm:$0xff]
  %v517 = vld [vmem:[%s296 + $0x6e0] sm:$0xff]
  %v518 = vld [vmem:[%s296 + $0x6e8] sm:$0xff]
  %v519 = vld [vmem:[%s296 + $0x6f0] sm:$0xff]
  %v520 = vld [vmem:[%s296 + $0x6f8] sm:$0xff]
  %v521 = vld [vmem:[%s296 + $0x700] sm:$0xff]
  %v522 = vld [vmem:[%s296 + $0x708] sm:$0xff]
  %v523 = vld [vmem:[%s296 + $0x710] sm:$0xff]
  %v524 = vld [vmem:[%s296 + $0x718] sm:$0xff]
  %v525 = vld [vmem:[%s296 + $0x720] sm:$0xff]
  %v526 = vld [vmem:[%s296 + $0x728] sm:$0xff]
  %v527 = vld [vmem:[%s296 + $0x730] sm:$0xff]
  %v528 = vld [vmem:[%s296 + $0x738] sm:$0xff]
  %v529 = vld [vmem:[%s296 + $0x740] sm:$0xff]
  %v530 = vld [vmem:[%s296 + $0x748] sm:$0xff]
  %v531 = vld [vmem:[%s296 + $0x750] sm:$0xff]
  %v532 = vld [vmem:[%s296 + $0x758] sm:$0xff]
  %v533 = vld [vmem:[%s296 + $0x760] sm:$0xff]
  %v534 = vld [vmem:[%s296 + $0x768] sm:$0xff]
  %v535 = vld [vmem:[%s296 + $0x770] sm:$0xff]
  %v536 = vld [vmem:[%s296 + $0x778] sm:$0xff]
  %v537 = vld [vmem:[%s296 + $0x780] sm:$0xff]
  %v538 = vld [vmem:[%s296 + $0x788] sm:$0xff]
  %v539 = vld [vmem:[%s296 + $0x790] sm:$0xff]
  %v540 = vld [vmem:[%s296 + $0x798] sm:$0xff]
  %v541 = vld [vmem:[%s296 + $0x7a0] sm:$0xff]
  %v542 = vld [vmem:[%s296 + $0x7a8] sm:$0xff]
  %v543 = vld [vmem:[%s296 + $0x7b0] sm:$0xff]
  %v544 = vld [vmem:[%s296 + $0x7b8] sm:$0xff]
  %v545 = vld [vmem:[%s296 + $0x7c0] sm:$0xff]
  %v546 = vld [vmem:[%s296 + $0x7c8] sm:$0xff]
  %v547 = vld [vmem:[%s296 + $0x7d0] sm:$0xff]
  %v548 = vld [vmem:[%s296 + $0x7d8] sm:$0xff]
  %v549 = vld [vmem:[%s296 + $0x7e0] sm:$0xff]
  %v550 = vld [vmem:[%s296 + $0x7e8] sm:$0xff]
  %v551 = vld [vmem:[%s296 + $0x7f0] sm:$0xff]
  %v552 = vld [vmem:[%s296 + $0x7f8] sm:$0xff]
  %v553 = vlaneseq
  %v554 = vshrl.u32 %v553, 7
  %vm555 = vcmp.eq.s32.totalorder %v554, 0
  %v556 = vsel %vm555, 1, 0
  %v557 = vcvt.s32.f32 %v556
  %vm558 = vcmp.eq.s32.totalorder %v554, 1
  %v559 = vsel %vm558, 1, 0
  %v560 = vcvt.s32.f32 %v559
  %561 = vrot.lane.b32.xlu0 %v28, 17
  %v562 = vpop.permute.xlu0 %561
  %563 = vrot.lane.b32.xlu0 %v29, 17
  %v564 = vpop.permute.xlu0 %563
  %565 = vrot.lane.b32.xlu0 %v30, 17
  %v566 = vpop.permute.xlu0 %565
  %567 = vrot.lane.b32.xlu0 %v31, 17
  %v568 = vpop.permute.xlu0 %567
  %v569 = vlaneseq
  %v570 = vand.u32 %v569, 127
  %vm571 = vcmp.lt.s32.totalorder %v570, 17
  %v572 = vsel %vm571, %v566, %v568
  %v573 = vsel %vm571, %v564, %v566
  %v574 = vsel %vm571, %v562, %v564
  %v575 = vsel %vm571, %v568, %v562
  %v576 = vlaneseq
  %v577 = vshrl.u32 %v576, 7
  %v578 = vsub.s32 0, %v577
  %v579 = vrot.slane %v32, %v578
  %v580 = vlaneseq
  %v581 = vshrl.u32 %v580, 7
  %v582 = vsub.s32 0, %v581
  %v583 = vrot.slane %v33, %v582
  %v584 = vlaneseq
  %v585 = vshrl.u32 %v584, 7
  %v586 = vsub.s32 0, %v585
  %v587 = vrot.slane %v34, %v586
  %v588 = vlaneseq
  %v589 = vshrl.u32 %v588, 7
  %v590 = vsub.s32 0, %v589
  %v591 = vrot.slane %v35, %v590
  %v592 = vmul.f32 %v575, %v579
  %v593 = vmul.f32 %v574, %v583
  %v594 = vmul.f32 %v573, %v587
  %v595 = vmul.f32 %v572, %v591
  %596 = vrot.lane.b32.xlu0 %v28, 16
  %v597 = vpop.permute.xlu0 %596
  %598 = vrot.lane.b32.xlu0 %v29, 16
  %v599 = vpop.permute.xlu0 %598
  %600 = vrot.lane.b32.xlu0 %v30, 16
  %v601 = vpop.permute.xlu0 %600
  %602 = vrot.lane.b32.xlu0 %v31, 16
  %v603 = vpop.permute.xlu0 %602
  %vm604 = vcmp.lt.s32.totalorder %v570, 16
  %v605 = vsel %vm604, %v601, %v603
  %v606 = vsel %vm604, %v599, %v601
  %v607 = vsel %vm604, %v597, %v599
  %v608 = vsel %vm604, %v603, %v597
  %v609 = vlaneseq
  %v610 = vshrl.u32 %v609, 7
  %v611 = vsub.s32 1, %v610
  %v612 = vrot.slane %v32, %v611
  %v613 = vlaneseq
  %v614 = vshrl.u32 %v613, 7
  %v615 = vsub.s32 1, %v614
  %v616 = vrot.slane %v33, %v615
  %v617 = vlaneseq
  %v618 = vshrl.u32 %v617, 7
  %v619 = vsub.s32 1, %v618
  %v620 = vrot.slane %v34, %v619
  %v621 = vlaneseq
  %v622 = vshrl.u32 %v621, 7
  %v623 = vsub.s32 1, %v622
  %v624 = vrot.slane %v35, %v623
  %v625 = vmul.f32 %v608, %v612
  %v626 = vmul.f32 %v607, %v616
  %v627 = vmul.f32 %v606, %v620
  %v628 = vmul.f32 %v605, %v624
  %629 = vrot.lane.b32.xlu0 %v28, 15
  %v630 = vpop.permute.xlu0 %629
  %631 = vrot.lane.b32.xlu0 %v29, 15
  %v632 = vpop.permute.xlu0 %631
  %633 = vrot.lane.b32.xlu0 %v30, 15
  %v634 = vpop.permute.xlu0 %633
  %635 = vrot.lane.b32.xlu0 %v31, 15
  %v636 = vpop.permute.xlu0 %635
  %vm637 = vcmp.lt.s32.totalorder %v570, 15
  %v638 = vsel %vm637, %v634, %v636
  %v639 = vsel %vm637, %v632, %v634
  %v640 = vsel %vm637, %v630, %v632
  %v641 = vsel %vm637, %v636, %v630
  %v642 = vlaneseq
  %v643 = vshrl.u32 %v642, 7
  %v644 = vsub.s32 2, %v643
  %v645 = vrot.slane %v32, %v644
  %v646 = vlaneseq
  %v647 = vshrl.u32 %v646, 7
  %v648 = vsub.s32 2, %v647
  %v649 = vrot.slane %v33, %v648
  %v650 = vlaneseq
  %v651 = vshrl.u32 %v650, 7
  %v652 = vsub.s32 2, %v651
  %v653 = vrot.slane %v34, %v652
  %v654 = vlaneseq
  %v655 = vshrl.u32 %v654, 7
  %v656 = vsub.s32 2, %v655
  %v657 = vrot.slane %v35, %v656
  %v658 = vmul.f32 %v641, %v645
  %v659 = vmul.f32 %v640, %v649
  %v660 = vmul.f32 %v639, %v653
  %v661 = vmul.f32 %v638, %v657
  %662 = vrot.lane.b32.xlu0 %v28, 1
  %v663 = vpop.permute.xlu0 %662
  %664 = vrot.lane.b32.xlu0 %v29, 1
  %v665 = vpop.permute.xlu0 %664
  %666 = vrot.lane.b32.xlu0 %v30, 1
  %v667 = vpop.permute.xlu0 %666
  %668 = vrot.lane.b32.xlu0 %v31, 1
  %v669 = vpop.permute.xlu0 %668
  %vm670 = vcmp.lt.s32.totalorder %v570, 1
  %v671 = vsel %vm670, %v667, %v669
  %v672 = vsel %vm670, %v665, %v667
  %v673 = vsel %vm670, %v663, %v665
  %v674 = vsel %vm670, %v669, %v663
  %v675 = vlaneseq
  %v676 = vshrl.u32 %v675, 7
  %v677 = vsub.s32 3, %v676
  %v678 = vrot.slane %v32, %v677
  %v679 = vlaneseq
  %v680 = vshrl.u32 %v679, 7
  %v681 = vsub.s32 3, %v680
  %v682 = vrot.slane %v33, %v681
  %v683 = vlaneseq
  %v684 = vshrl.u32 %v683, 7
  %v685 = vsub.s32 3, %v684
  %v686 = vrot.slane %v34, %v685
  %v687 = vlaneseq
  %v688 = vshrl.u32 %v687, 7
  %v689 = vsub.s32 3, %v688
  %v690 = vrot.slane %v35, %v689
  %v691 = vmul.f32 %v674, %v678
  %v692 = vmul.f32 %v673, %v682
  %v693 = vmul.f32 %v672, %v686
  %v694 = vmul.f32 %v671, %v690
  %695 = vrot.lane.b32.xlu0 %v28, 127
  %v696 = vpop.permute.xlu0 %695
  %697 = vrot.lane.b32.xlu0 %v29, 127
  %v698 = vpop.permute.xlu0 %697
  %699 = vrot.lane.b32.xlu0 %v30, 127
  %v700 = vpop.permute.xlu0 %699
  %701 = vrot.lane.b32.xlu0 %v31, 127
  %v702 = vpop.permute.xlu0 %701
  %vm703 = vcmp.lt.s32.totalorder %v570, 127
  %v704 = vsel %vm703, %v700, %v702
  %v705 = vsel %vm703, %v698, %v700
  %v706 = vsel %vm703, %v696, %v698
  %v707 = vsel %vm703, %v702, %v696
  %v708 = vlaneseq
  %v709 = vshrl.u32 %v708, 7
  %v710 = vsub.s32 5, %v709
  %v711 = vrot.slane %v32, %v710
  %v712 = vlaneseq
  %v713 = vshrl.u32 %v712, 7
  %v714 = vsub.s32 5, %v713
  %v715 = vrot.slane %v33, %v714
  %v716 = vlaneseq
  %v717 = vshrl.u32 %v716, 7
  %v718 = vsub.s32 5, %v717
  %v719 = vrot.slane %v34, %v718
  %v720 = vlaneseq
  %v721 = vshrl.u32 %v720, 7
  %v722 = vsub.s32 5, %v721
  %v723 = vrot.slane %v35, %v722
  %v724 = vmul.f32 %v706, %v711
  %v725 = vmul.f32 %v705, %v715
  %v726 = vmul.f32 %v704, %v719
  %v727 = vmul.f32 %v707, %v723
  %728 = vrot.lane.b32.xlu0 %v28, 113
  %v729 = vpop.permute.xlu0 %728
  %730 = vrot.lane.b32.xlu0 %v29, 113
  %v731 = vpop.permute.xlu0 %730
  %732 = vrot.lane.b32.xlu0 %v30, 113
  %v733 = vpop.permute.xlu0 %732
  %734 = vrot.lane.b32.xlu0 %v31, 113
  %v735 = vpop.permute.xlu0 %734
  %vm736 = vcmp.lt.s32.totalorder %v570, 113
  %v737 = vsel %vm736, %v733, %v735
  %v738 = vsel %vm736, %v731, %v733
  %v739 = vsel %vm736, %v729, %v731
  %v740 = vsel %vm736, %v735, %v729
  %v741 = vlaneseq
  %v742 = vshrl.u32 %v741, 7
  %v743 = vsub.s32 6, %v742
  %v744 = vrot.slane %v32, %v743
  %v745 = vlaneseq
  %v746 = vshrl.u32 %v745, 7
  %v747 = vsub.s32 6, %v746
  %v748 = vrot.slane %v33, %v747
  %v749 = vlaneseq
  %v750 = vshrl.u32 %v749, 7
  %v751 = vsub.s32 6, %v750
  %v752 = vrot.slane %v34, %v751
  %v753 = vlaneseq
  %v754 = vshrl.u32 %v753, 7
  %v755 = vsub.s32 6, %v754
  %v756 = vrot.slane %v35, %v755
  %v757 = vmul.f32 %v739, %v744
  %v758 = vmul.f32 %v738, %v748
  %v759 = vmul.f32 %v737, %v752
  %v760 = vmul.f32 %v740, %v756
  %761 = vrot.lane.b32.xlu0 %v28, 112
  %v762 = vpop.permute.xlu0 %761
  %763 = vrot.lane.b32.xlu0 %v29, 112
  %v764 = vpop.permute.xlu0 %763
  %765 = vrot.lane.b32.xlu0 %v30, 112
  %v766 = vpop.permute.xlu0 %765
  %767 = vrot.lane.b32.xlu0 %v31, 112
  %v768 = vpop.permute.xlu0 %767
  %vm769 = vcmp.lt.s32.totalorder %v570, 112
  %v770 = vsel %vm769, %v766, %v768
  %v771 = vsel %vm769, %v764, %v766
  %v772 = vsel %vm769, %v762, %v764
  %v773 = vsel %vm769, %v768, %v762
  %v774 = vlaneseq
  %v775 = vshrl.u32 %v774, 7
  %v776 = vsub.s32 7, %v775
  %v777 = vrot.slane %v32, %v776
  %v778 = vlaneseq
  %v779 = vshrl.u32 %v778, 7
  %v780 = vsub.s32 7, %v779
  %v781 = vrot.slane %v33, %v780
  %v782 = vlaneseq
  %v783 = vshrl.u32 %v782, 7
  %v784 = vsub.s32 7, %v783
  %v785 = vrot.slane %v34, %v784
  %v786 = vlaneseq
  %v787 = vshrl.u32 %v786, 7
  %v788 = vsub.s32 7, %v787
  %v789 = vrot.slane %v35, %v788
  %v790 = vmul.f32 %v772, %v777
  %v791 = vmul.f32 %v771, %v781
  %v792 = vmul.f32 %v770, %v785
  %v793 = vmul.f32 %v773, %v789
  %794 = vrot.lane.b32.xlu0 %v28, 111
  %v795 = vpop.permute.xlu0 %794
  %796 = vrot.lane.b32.xlu0 %v29, 111
  %v797 = vpop.permute.xlu0 %796
  %798 = vrot.lane.b32.xlu0 %v30, 111
  %v799 = vpop.permute.xlu0 %798
  %800 = vrot.lane.b32.xlu0 %v31, 111
  %v801 = vpop.permute.xlu0 %800
  %vm802 = vcmp.lt.s32.totalorder %v570, 111
  %v803 = vsel %vm802, %v799, %v801
  %v804 = vsel %vm802, %v797, %v799
  %v805 = vsel %vm802, %v795, %v797
  %v806 = vsel %vm802, %v801, %v795
  %v807 = vlaneseq
  %v808 = vshrl.u32 %v807, 7
  %v809 = vsub.s32 0, %v808
  %v810 = vrot.slane %v36, %v809
  %v811 = vlaneseq
  %v812 = vshrl.u32 %v811, 7
  %v813 = vsub.s32 0, %v812
  %v814 = vrot.slane %v37, %v813
  %v815 = vlaneseq
  %v816 = vshrl.u32 %v815, 7
  %v817 = vsub.s32 0, %v816
  %v818 = vrot.slane %v38, %v817
  %v819 = vlaneseq
  %v820 = vshrl.u32 %v819, 7
  %v821 = vsub.s32 0, %v820
  %v822 = vrot.slane %v39, %v821
  %v823 = vmul.f32 %v805, %v810
  %v824 = vmul.f32 %v804, %v814
  %v825 = vmul.f32 %v803, %v818
  %v826 = vmul.f32 %v806, %v822
  %v827 = vld [vmem:[%s5] sm:$0xff]
  %v828 = vld [vmem:[%s6] sm:$0xff]
  %830 = vset.pattern.permute.xlu0 0
  %831 = vperm.xlu0 %830, %v828
  %v832 = vpop.permute.xlu0 %831
  %vm834 = vcmask 588800
  %v836 = vsel %vm834, %v827, 0
  %838 = vmatprep.subr.mxu0 0.0
  %839 = vmatpush1.msra.mxu0 0.0
  %840 = vmatprep.subr.mxu0 0.0
  %841 = vmatpush1.msra.mxu0 0.0
  %842 = vmatprep.subr.mxu0 0.0
  %843 = vmatpush1.msra.mxu0 0.0
  %844 = vmatprep.subr.mxu0 0.0
  %845 = vmatpush1.msra.mxu0 0.0
  %846 = vmatprep.subr.mxu0 0.0
  %847 = vmatpush1.msra.mxu0 0.0
  %848 = vmatprep.subr.mxu0 0.0
  %849 = vmatpush1.msra.mxu0 0.0
  %850 = vmatprep.subr.mxu0 0.0
  %851 = vmatpush1.msra.mxu0 0.0
  %852 = vmatprep.subr.mxu0 %v824
  %853 = vmatpush1.msra.mxu0 %v823
  %854 = vmatprep.subr.mxu0 %v791
  %855 = vmatpush1.msra.mxu0 %v790
  %856 = vmatprep.subr.mxu0 %v758
  %857 = vmatpush1.msra.mxu0 %v757
  %858 = vmatprep.subr.mxu0 %v725
  %859 = vmatpush1.msra.mxu0 %v724
  %860 = vmatprep.subr.mxu0 %v29
  %861 = vmatpush1.msra.mxu0 %v28
  %862 = vmatprep.subr.mxu0 %v692
  %863 = vmatpush1.msra.mxu0 %v691
  %864 = vmatprep.subr.mxu0 %v659
  %865 = vmatpush1.msra.mxu0 %v658
  %866 = vmatprep.subr.mxu0 %v626
  %867 = vmatpush1.msra.mxu0 %v625
  %868 = vmatprep.subr.mxu0 %v593
  %869 = vmatpush1.msra.mxu0 %v592
  %870 = vmatprep.subr.mxu0 0.0
  %871 = vmatpush2.msra.mxu0 0.0
  %872 = vmatprep.subr.mxu0 0.0
  %873 = vmatpush2.msra.mxu0 0.0
  %874 = vmatprep.subr.mxu0 0.0
  %875 = vmatpush2.msra.mxu0 0.0
  %876 = vmatprep.subr.mxu0 0.0
  %877 = vmatpush2.msra.mxu0 0.0
  %878 = vmatprep.subr.mxu0 0.0
  %879 = vmatpush2.msra.mxu0 0.0
  %880 = vmatprep.subr.mxu0 0.0
  %881 = vmatpush2.msra.mxu0 0.0
  %882 = vmatprep.subr.mxu0 0.0
  %883 = vmatpush2.msra.mxu0 0.0
  %884 = vmatprep.subr.mxu0 0.0
  %885 = vmatpush2.msra.mxu0 0.0
  %886 = vmatprep.subr.mxu0 0.0
  %887 = vmatpush2.msra.mxu0 0.0
  %888 = vmatprep.subr.mxu0 0.0
  %889 = vmatpush2.msra.mxu0 0.0
  %890 = vmatprep.subr.mxu0 0.0
  %891 = vmatpush2.msra.mxu0 0.0
  %892 = vmatprep.subr.mxu0 0.0
  %893 = vmatpush2.msra.mxu0 0.0
  %894 = vmatprep.subr.mxu0 0.0
  %895 = vmatpush2.msra.mxu0 0.0
  %896 = vmatprep.subr.mxu0 0.0
  %897 = vmatpush2.msra.mxu0 0.0
  %898 = vmatprep.subr.mxu0 0.0
  %899 = vmatpush2.msra.mxu0 0.0
  %900 = vmatprep.subr.mxu0 0.0
  %901 = vmatpush2.msra.mxu0 0.0
  %902 = vmatprep.mubr.f32.mxu0 0.0
  %903 = vmatmul.mubr.f32.gmra.mxu0 %v836
  %v904 = vpop.f32.mrf.mxu0
  %v905 = vadd.f32 %v832, %v904
  %v906 = vpop.f32.mrf.mxu0
  %v907 = vadd.f32 %v832, %v906
  %908 = vdwg.mxu0
  %909 = vmatprep.subr.mxu0 0.0
  %910 = vmatpush1.msra.mxu0 0.0
  %911 = vmatprep.subr.mxu0 0.0
  %912 = vmatpush1.msra.mxu0 0.0
  %913 = vmatprep.subr.mxu0 0.0
  %914 = vmatpush1.msra.mxu0 0.0
  %915 = vmatprep.subr.mxu0 0.0
  %916 = vmatpush1.msra.mxu0 0.0
  %917 = vmatprep.subr.mxu0 0.0
  %918 = vmatpush1.msra.mxu0 0.0
  %919 = vmatprep.subr.mxu0 0.0
  %920 = vmatpush1.msra.mxu0 0.0
  %921 = vmatprep.subr.mxu0 0.0
  %922 = vmatpush1.msra.mxu0 0.0
  %923 = vmatprep.subr.mxu0 %v826
  %924 = vmatpush1.msra.mxu0 %v825
  %925 = vmatprep.subr.mxu0 %v793
  %926 = vmatpush1.msra.mxu0 %v792
  %927 = vmatprep.subr.mxu0 %v760
  %928 = vmatpush1.msra.mxu0 %v759
  %929 = vmatprep.subr.mxu0 %v727
  %930 = vmatpush1.msra.mxu0 %v726
  %931 = vmatprep.subr.mxu0 %v31
  %932 = vmatpush1.msra.mxu0 %v30
  %933 = vmatprep.subr.mxu0 %v694
  %934 = vmatpush1.msra.mxu0 %v693
  %935 = vmatprep.subr.mxu0 %v661
  %936 = vmatpush1.msra.mxu0 %v660
  %937 = vmatprep.subr.mxu0 %v628
  %938 = vmatpush1.msra.mxu0 %v627
  %939 = vmatprep.subr.mxu0 %v595
  %940 = vmatpush1.msra.mxu0 %v594
  %941 = vmatprep.subr.mxu0 0.0
  %942 = vmatpush2.msra.mxu0 0.0
  %943 = vmatprep.subr.mxu0 0.0
  %944 = vmatpush2.msra.mxu0 0.0
  %945 = vmatprep.subr.mxu0 0.0
  %946 = vmatpush2.msra.mxu0 0.0
  %947 = vmatprep.subr.mxu0 0.0
  %948 = vmatpush2.msra.mxu0 0.0
  %949 = vmatprep.subr.mxu0 0.0
  %950 = vmatpush2.msra.mxu0 0.0
  %951 = vmatprep.subr.mxu0 0.0
  %952 = vmatpush2.msra.mxu0 0.0
  %953 = vmatprep.subr.mxu0 0.0
  %954 = vmatpush2.msra.mxu0 0.0
  %955 = vmatprep.subr.mxu0 0.0
  %956 = vmatpush2.msra.mxu0 0.0
  %957 = vmatprep.subr.mxu0 0.0
  %958 = vmatpush2.msra.mxu0 0.0
  %959 = vmatprep.subr.mxu0 0.0
  %960 = vmatpush2.msra.mxu0 0.0
  %961 = vmatprep.subr.mxu0 0.0
  %962 = vmatpush2.msra.mxu0 0.0
  %963 = vmatprep.subr.mxu0 0.0
  %964 = vmatpush2.msra.mxu0 0.0
  %965 = vmatprep.subr.mxu0 0.0
  %966 = vmatpush2.msra.mxu0 0.0
  %967 = vmatprep.subr.mxu0 0.0
  %968 = vmatpush2.msra.mxu0 0.0
  %969 = vmatprep.subr.mxu0 0.0
  %970 = vmatpush2.msra.mxu0 0.0
  %971 = vmatprep.subr.mxu0 0.0
  %972 = vmatpush2.msra.mxu0 0.0
  %973 = vmatprep.mubr.f32.mxu0 0.0
  %974 = vmatmul.mubr.f32.gmra.mxu0 %v836
  %v975 = vpop.f32.mrf.mxu0
  %v976 = vadd.f32 %v832, %v975
  %v977 = vpop.f32.mrf.mxu0
  %v978 = vadd.f32 %v832, %v977
  %979 = vdwg.mxu0
  %v980 = vmax.f32 %v905, 0.0
  %v981 = vmax.f32 %v907, 0.0
  %v982 = vmax.f32 %v976, 0.0
  %v983 = vmax.f32 %v978, 0.0
  %984 = vrot.lane.b32.xlu0 %v980, 17
  %v985 = vpop.permute.xlu0 %984
  %986 = vrot.lane.b32.xlu0 %v981, 17
  %v987 = vpop.permute.xlu0 %986
  %988 = vrot.lane.b32.xlu0 %v982, 17
  %v989 = vpop.permute.xlu0 %988
  %990 = vrot.lane.b32.xlu0 %v983, 17
  %v991 = vpop.permute.xlu0 %990
  %v992 = vsel %vm571, %v989, %v991
  %v993 = vsel %vm571, %v987, %v989
  %v994 = vsel %vm571, %v985, %v987
  %v995 = vsel %vm571, %v991, %v985
  %v996 = vmul.f32 %v995, %v579
  %v997 = vmul.f32 %v994, %v583
  %v998 = vmul.f32 %v993, %v587
  %v999 = vmul.f32 %v992, %v591
  %1000 = vrot.lane.b32.xlu0 %v980, 16
  %v1001 = vpop.permute.xlu0 %1000
  %1002 = vrot.lane.b32.xlu0 %v981, 16
  %v1003 = vpop.permute.xlu0 %1002
  %1004 = vrot.lane.b32.xlu0 %v982, 16
  %v1005 = vpop.permute.xlu0 %1004
  %1006 = vrot.lane.b32.xlu0 %v983, 16
  %v1007 = vpop.permute.xlu0 %1006
  %v1008 = vsel %vm604, %v1005, %v1007
  %v1009 = vsel %vm604, %v1003, %v1005
  %v1010 = vsel %vm604, %v1001, %v1003
  %v1011 = vsel %vm604, %v1007, %v1001
  %v1012 = vmul.f32 %v1011, %v612
  %v1013 = vmul.f32 %v1010, %v616
  %v1014 = vmul.f32 %v1009, %v620
  %v1015 = vmul.f32 %v1008, %v624
  %1016 = vrot.lane.b32.xlu0 %v980, 15
  %v1017 = vpop.permute.xlu0 %1016
  %1018 = vrot.lane.b32.xlu0 %v981, 15
  %v1019 = vpop.permute.xlu0 %1018
  %1020 = vrot.lane.b32.xlu0 %v982, 15
  %v1021 = vpop.permute.xlu0 %1020
  %1022 = vrot.lane.b32.xlu0 %v983, 15
  %v1023 = vpop.permute.xlu0 %1022
  %v1024 = vsel %vm637, %v1021, %v1023
  %v1025 = vsel %vm637, %v1019, %v1021
  %v1026 = vsel %vm637, %v1017, %v1019
  %v1027 = vsel %vm637, %v1023, %v1017
  %v1028 = vmul.f32 %v1027, %v645
  %v1029 = vmul.f32 %v1026, %v649
  %v1030 = vmul.f32 %v1025, %v653
  %v1031 = vmul.f32 %v1024, %v657
  %1032 = vrot.lane.b32.xlu0 %v980, 1
  %v1033 = vpop.permute.xlu0 %1032
  %1034 = vrot.lane.b32.xlu0 %v981, 1
  %v1035 = vpop.permute.xlu0 %1034
  %1036 = vrot.lane.b32.xlu0 %v982, 1
  %v1037 = vpop.permute.xlu0 %1036
  %1038 = vrot.lane.b32.xlu0 %v983, 1
  %v1039 = vpop.permute.xlu0 %1038
  %v1040 = vsel %vm670, %v1037, %v1039
  %v1041 = vsel %vm670, %v1035, %v1037
  %v1042 = vsel %vm670, %v1033, %v1035
  %v1043 = vsel %vm670, %v1039, %v1033
  %v1044 = vmul.f32 %v1043, %v678
  %v1045 = vmul.f32 %v1042, %v682
  %v1046 = vmul.f32 %v1041, %v686
  %v1047 = vmul.f32 %v1040, %v690
  %1048 = vrot.lane.b32.xlu0 %v980, 127
  %v1049 = vpop.permute.xlu0 %1048
  %1050 = vrot.lane.b32.xlu0 %v981, 127
  %v1051 = vpop.permute.xlu0 %1050
  %1052 = vrot.lane.b32.xlu0 %v982, 127
  %v1053 = vpop.permute.xlu0 %1052
  %1054 = vrot.lane.b32.xlu0 %v983, 127
  %v1055 = vpop.permute.xlu0 %1054
  %v1056 = vsel %vm703, %v1053, %v1055
  %v1057 = vsel %vm703, %v1051, %v1053
  %v1058 = vsel %vm703, %v1049, %v1051
  %v1059 = vsel %vm703, %v1055, %v1049
  %v1060 = vmul.f32 %v1058, %v711
  %v1061 = vmul.f32 %v1057, %v715
  %v1062 = vmul.f32 %v1056, %v719
  %v1063 = vmul.f32 %v1059, %v723
  %1064 = vrot.lane.b32.xlu0 %v980, 113
  %v1065 = vpop.permute.xlu0 %1064
  %1066 = vrot.lane.b32.xlu0 %v981, 113
  %v1067 = vpop.permute.xlu0 %1066
  %1068 = vrot.lane.b32.xlu0 %v982, 113
  %v1069 = vpop.permute.xlu0 %1068
  %1070 = vrot.lane.b32.xlu0 %v983, 113
  %v1071 = vpop.permute.xlu0 %1070
  %v1072 = vsel %vm736, %v1069, %v1071
  %v1073 = vsel %vm736, %v1067, %v1069
  %v1074 = vsel %vm736, %v1065, %v1067
  %v1075 = vsel %vm736, %v1071, %v1065
  %v1076 = vmul.f32 %v1074, %v744
  %v1077 = vmul.f32 %v1073, %v748
  %v1078 = vmul.f32 %v1072, %v752
  %v1079 = vmul.f32 %v1075, %v756
  %1080 = vrot.lane.b32.xlu0 %v980, 112
  %v1081 = vpop.permute.xlu0 %1080
  %1082 = vrot.lane.b32.xlu0 %v981, 112
  %v1083 = vpop.permute.xlu0 %1082
  %1084 = vrot.lane.b32.xlu0 %v982, 112
  %v1085 = vpop.permute.xlu0 %1084
  %1086 = vrot.lane.b32.xlu0 %v983, 112
  %v1087 = vpop.permute.xlu0 %1086
  %v1088 = vsel %vm769, %v1085, %v1087
  %v1089 = vsel %vm769, %v1083, %v1085
  %v1090 = vsel %vm769, %v1081, %v1083
  %v1091 = vsel %vm769, %v1087, %v1081
  %v1092 = vmul.f32 %v1090, %v777
  %v1093 = vmul.f32 %v1089, %v781
  %v1094 = vmul.f32 %v1088, %v785
  %v1095 = vmul.f32 %v1091, %v789
  %1096 = vrot.lane.b32.xlu0 %v980, 111
  %v1097 = vpop.permute.xlu0 %1096
  %1098 = vrot.lane.b32.xlu0 %v981, 111
  %v1099 = vpop.permute.xlu0 %1098
  %1100 = vrot.lane.b32.xlu0 %v982, 111
  %v1101 = vpop.permute.xlu0 %1100
  %1102 = vrot.lane.b32.xlu0 %v983, 111
  %v1103 = vpop.permute.xlu0 %1102
  %v1104 = vsel %vm802, %v1101, %v1103
  %v1105 = vsel %vm802, %v1099, %v1101
  %v1106 = vsel %vm802, %v1097, %v1099
  %v1107 = vsel %vm802, %v1103, %v1097
  %v1108 = vmul.f32 %v1106, %v810
  %v1109 = vmul.f32 %v1105, %v814
  %v1110 = vmul.f32 %v1104, %v818
  %v1111 = vmul.f32 %v1107, %v822
  %s1112 = scalar_lea.vmem %s5, 8
  %v1113 = vld [vmem:[%s1112] sm:$0xff]
  %s1114 = scalar_lea.vmem %s6, 8
  %v1115 = vld [vmem:[%s1114] sm:$0xff]
  %1117 = vset.pattern.permute.xlu0 0
  %1118 = vperm.xlu0 %1117, %v1115
  %v1119 = vpop.permute.xlu0 %1118
  %v1122 = vsel %vm834, %v1113, 0
  %1124 = vmatprep.subr.mxu0 0.0
  %1125 = vmatpush1.msra.mxu0 0.0
  %1126 = vmatprep.subr.mxu0 0.0
  %1127 = vmatpush1.msra.mxu0 0.0
  %1128 = vmatprep.subr.mxu0 0.0
  %1129 = vmatpush1.msra.mxu0 0.0
  %1130 = vmatprep.subr.mxu0 0.0
  %1131 = vmatpush1.msra.mxu0 0.0
  %1132 = vmatprep.subr.mxu0 0.0
  %1133 = vmatpush1.msra.mxu0 0.0
  %1134 = vmatprep.subr.mxu0 0.0
  %1135 = vmatpush1.msra.mxu0 0.0
  %1136 = vmatprep.subr.mxu0 0.0
  %1137 = vmatpush1.msra.mxu0 0.0
  %1138 = vmatprep.subr.mxu0 %v1109
  %1139 = vmatpush1.msra.mxu0 %v1108
  %1140 = vmatprep.subr.mxu0 %v1093
  %1141 = vmatpush1.msra.mxu0 %v1092
  %1142 = vmatprep.subr.mxu0 %v1077
  %1143 = vmatpush1.msra.mxu0 %v1076
  %1144 = vmatprep.subr.mxu0 %v1061
  %1145 = vmatpush1.msra.mxu0 %v1060
  %1146 = vmatprep.subr.mxu0 %v981
  %1147 = vmatpush1.msra.mxu0 %v980
  %1148 = vmatprep.subr.mxu0 %v1045
  %1149 = vmatpush1.msra.mxu0 %v1044
  %1150 = vmatprep.subr.mxu0 %v1029
  %1151 = vmatpush1.msra.mxu0 %v1028
  %1152 = vmatprep.subr.mxu0 %v1013
  %1153 = vmatpush1.msra.mxu0 %v1012
  %1154 = vmatprep.subr.mxu0 %v997
  %1155 = vmatpush1.msra.mxu0 %v996
  %1156 = vmatprep.subr.mxu0 0.0
  %1157 = vmatpush2.msra.mxu0 0.0
  %1158 = vmatprep.subr.mxu0 0.0
  %1159 = vmatpush2.msra.mxu0 0.0
  %1160 = vmatprep.subr.mxu0 0.0
  %1161 = vmatpush2.msra.mxu0 0.0
  %1162 = vmatprep.subr.mxu0 0.0
  %1163 = vmatpush2.msra.mxu0 0.0
  %1164 = vmatprep.subr.mxu0 0.0
  %1165 = vmatpush2.msra.mxu0 0.0
  %1166 = vmatprep.subr.mxu0 0.0
  %1167 = vmatpush2.msra.mxu0 0.0
  %1168 = vmatprep.subr.mxu0 0.0
  %1169 = vmatpush2.msra.mxu0 0.0
  %1170 = vmatprep.subr.mxu0 0.0
  %1171 = vmatpush2.msra.mxu0 0.0
  %1172 = vmatprep.subr.mxu0 0.0
  %1173 = vmatpush2.msra.mxu0 0.0
  %1174 = vmatprep.subr.mxu0 0.0
  %1175 = vmatpush2.msra.mxu0 0.0
  %1176 = vmatprep.subr.mxu0 0.0
  %1177 = vmatpush2.msra.mxu0 0.0
  %1178 = vmatprep.subr.mxu0 0.0
  %1179 = vmatpush2.msra.mxu0 0.0
  %1180 = vmatprep.subr.mxu0 0.0
  %1181 = vmatpush2.msra.mxu0 0.0
  %1182 = vmatprep.subr.mxu0 0.0
  %1183 = vmatpush2.msra.mxu0 0.0
  %1184 = vmatprep.subr.mxu0 0.0
  %1185 = vmatpush2.msra.mxu0 0.0
  %1186 = vmatprep.subr.mxu0 0.0
  %1187 = vmatpush2.msra.mxu0 0.0
  %1188 = vmatprep.mubr.f32.mxu0 0.0
  %1189 = vmatmul.mubr.f32.gmra.mxu0 %v1122
  %v1190 = vpop.f32.mrf.mxu0
  %v1191 = vadd.f32 %v1119, %v1190
  %v1192 = vpop.f32.mrf.mxu0
  %v1193 = vadd.f32 %v1119, %v1192
  %1194 = vdwg.mxu0
  %1195 = vmatprep.subr.mxu0 0.0
  %1196 = vmatpush1.msra.mxu0 0.0
  %1197 = vmatprep.subr.mxu0 0.0
  %1198 = vmatpush1.msra.mxu0 0.0
  %1199 = vmatprep.subr.mxu0 0.0
  %1200 = vmatpush1.msra.mxu0 0.0
  %1201 = vmatprep.subr.mxu0 0.0
  %1202 = vmatpush1.msra.mxu0 0.0
  %1203 = vmatprep.subr.mxu0 0.0
  %1204 = vmatpush1.msra.mxu0 0.0
  %1205 = vmatprep.subr.mxu0 0.0
  %1206 = vmatpush1.msra.mxu0 0.0
  %1207 = vmatprep.subr.mxu0 0.0
  %1208 = vmatpush1.msra.mxu0 0.0
  %1209 = vmatprep.subr.mxu0 %v1111
  %1210 = vmatpush1.msra.mxu0 %v1110
  %1211 = vmatprep.subr.mxu0 %v1095
  %1212 = vmatpush1.msra.mxu0 %v1094
  %1213 = vmatprep.subr.mxu0 %v1079
  %1214 = vmatpush1.msra.mxu0 %v1078
  %1215 = vmatprep.subr.mxu0 %v1063
  %1216 = vmatpush1.msra.mxu0 %v1062
  %1217 = vmatprep.subr.mxu0 %v983
  %1218 = vmatpush1.msra.mxu0 %v982
  %1219 = vmatprep.subr.mxu0 %v1047
  %1220 = vmatpush1.msra.mxu0 %v1046
  %1221 = vmatprep.subr.mxu0 %v1031
  %1222 = vmatpush1.msra.mxu0 %v1030
  %1223 = vmatprep.subr.mxu0 %v1015
  %1224 = vmatpush1.msra.mxu0 %v1014
  %1225 = vmatprep.subr.mxu0 %v999
  %1226 = vmatpush1.msra.mxu0 %v998
  %1227 = vmatprep.subr.mxu0 0.0
  %1228 = vmatpush2.msra.mxu0 0.0
  %1229 = vmatprep.subr.mxu0 0.0
  %1230 = vmatpush2.msra.mxu0 0.0
  %1231 = vmatprep.subr.mxu0 0.0
  %1232 = vmatpush2.msra.mxu0 0.0
  %1233 = vmatprep.subr.mxu0 0.0
  %1234 = vmatpush2.msra.mxu0 0.0
  %1235 = vmatprep.subr.mxu0 0.0
  %1236 = vmatpush2.msra.mxu0 0.0
  %1237 = vmatprep.subr.mxu0 0.0
  %1238 = vmatpush2.msra.mxu0 0.0
  %1239 = vmatprep.subr.mxu0 0.0
  %1240 = vmatpush2.msra.mxu0 0.0
  %1241 = vmatprep.subr.mxu0 0.0
  %1242 = vmatpush2.msra.mxu0 0.0
  %1243 = vmatprep.subr.mxu0 0.0
  %1244 = vmatpush2.msra.mxu0 0.0
  %1245 = vmatprep.subr.mxu0 0.0
  %1246 = vmatpush2.msra.mxu0 0.0
  %1247 = vmatprep.subr.mxu0 0.0
  %1248 = vmatpush2.msra.mxu0 0.0
  %1249 = vmatprep.subr.mxu0 0.0
  %1250 = vmatpush2.msra.mxu0 0.0
  %1251 = vmatprep.subr.mxu0 0.0
  %1252 = vmatpush2.msra.mxu0 0.0
  %1253 = vmatprep.subr.mxu0 0.0
  %1254 = vmatpush2.msra.mxu0 0.0
  %1255 = vmatprep.subr.mxu0 0.0
  %1256 = vmatpush2.msra.mxu0 0.0
  %1257 = vmatprep.subr.mxu0 0.0
  %1258 = vmatpush2.msra.mxu0 0.0
  %1259 = vmatprep.mubr.f32.mxu0 0.0
  %1260 = vmatmul.mubr.f32.gmra.mxu0 %v1122
  %v1261 = vpop.f32.mrf.mxu0
  %v1262 = vadd.f32 %v1119, %v1261
  %v1263 = vpop.f32.mrf.mxu0
  %v1264 = vadd.f32 %v1119, %v1263
  %1265 = vdwg.mxu0
  %v1266 = vmax.f32 %v1191, 0.0
  %v1267 = vmax.f32 %v1193, 0.0
  %v1268 = vmax.f32 %v1262, 0.0
  %v1269 = vmax.f32 %v1264, 0.0
  %1270 = vrot.lane.b32.xlu0 %v1266, 17
  %v1271 = vpop.permute.xlu0 %1270
  %1272 = vrot.lane.b32.xlu0 %v1267, 17
  %v1273 = vpop.permute.xlu0 %1272
  %1274 = vrot.lane.b32.xlu0 %v1268, 17
  %v1275 = vpop.permute.xlu0 %1274
  %1276 = vrot.lane.b32.xlu0 %v1269, 17
  %v1277 = vpop.permute.xlu0 %1276
  %v1278 = vsel %vm571, %v1275, %v1277
  %v1279 = vsel %vm571, %v1273, %v1275
  %v1280 = vsel %vm571, %v1271, %v1273
  %v1281 = vsel %vm571, %v1277, %v1271
  %v1282 = vmul.f32 %v1281, %v579
  %v1283 = vmul.f32 %v1280, %v583
  %v1284 = vmul.f32 %v1279, %v587
  %v1285 = vmul.f32 %v1278, %v591
  %1286 = vrot.lane.b32.xlu0 %v1266, 16
  %v1287 = vpop.permute.xlu0 %1286
  %1288 = vrot.lane.b32.xlu0 %v1267, 16
  %v1289 = vpop.permute.xlu0 %1288
  %1290 = vrot.lane.b32.xlu0 %v1268, 16
  %v1291 = vpop.permute.xlu0 %1290
  %1292 = vrot.lane.b32.xlu0 %v1269, 16
  %v1293 = vpop.permute.xlu0 %1292
  %v1294 = vsel %vm604, %v1291, %v1293
  %v1295 = vsel %vm604, %v1289, %v1291
  %v1296 = vsel %vm604, %v1287, %v1289
  %v1297 = vsel %vm604, %v1293, %v1287
  %v1298 = vmul.f32 %v1297, %v612
  %v1299 = vmul.f32 %v1296, %v616
  %v1300 = vmul.f32 %v1295, %v620
  %v1301 = vmul.f32 %v1294, %v624
  %1302 = vrot.lane.b32.xlu0 %v1266, 15
  %v1303 = vpop.permute.xlu0 %1302
  %1304 = vrot.lane.b32.xlu0 %v1267, 15
  %v1305 = vpop.permute.xlu0 %1304
  %1306 = vrot.lane.b32.xlu0 %v1268, 15
  %v1307 = vpop.permute.xlu0 %1306
  %1308 = vrot.lane.b32.xlu0 %v1269, 15
  %v1309 = vpop.permute.xlu0 %1308
  %v1310 = vsel %vm637, %v1307, %v1309
  %v1311 = vsel %vm637, %v1305, %v1307
  %v1312 = vsel %vm637, %v1303, %v1305
  %v1313 = vsel %vm637, %v1309, %v1303
  %v1314 = vmul.f32 %v1313, %v645
  %v1315 = vmul.f32 %v1312, %v649
  %v1316 = vmul.f32 %v1311, %v653
  %v1317 = vmul.f32 %v1310, %v657
  %1318 = vrot.lane.b32.xlu0 %v1266, 1
  %v1319 = vpop.permute.xlu0 %1318
  %1320 = vrot.lane.b32.xlu0 %v1267, 1
  %v1321 = vpop.permute.xlu0 %1320
  %1322 = vrot.lane.b32.xlu0 %v1268, 1
  %v1323 = vpop.permute.xlu0 %1322
  %1324 = vrot.lane.b32.xlu0 %v1269, 1
  %v1325 = vpop.permute.xlu0 %1324
  %v1326 = vsel %vm670, %v1323, %v1325
  %v1327 = vsel %vm670, %v1321, %v1323
  %v1328 = vsel %vm670, %v1319, %v1321
  %v1329 = vsel %vm670, %v1325, %v1319
  %v1330 = vmul.f32 %v1329, %v678
  %v1331 = vmul.f32 %v1328, %v682
  %v1332 = vmul.f32 %v1327, %v686
  %v1333 = vmul.f32 %v1326, %v690
  %1334 = vrot.lane.b32.xlu0 %v1266, 127
  %v1335 = vpop.permute.xlu0 %1334
  %1336 = vrot.lane.b32.xlu0 %v1267, 127
  %v1337 = vpop.permute.xlu0 %1336
  %1338 = vrot.lane.b32.xlu0 %v1268, 127
  %v1339 = vpop.permute.xlu0 %1338
  %1340 = vrot.lane.b32.xlu0 %v1269, 127
  %v1341 = vpop.permute.xlu0 %1340
  %v1342 = vsel %vm703, %v1339, %v1341
  %v1343 = vsel %vm703, %v1337, %v1339
  %v1344 = vsel %vm703, %v1335, %v1337
  %v1345 = vsel %vm703, %v1341, %v1335
  %v1346 = vmul.f32 %v1344, %v711
  %v1347 = vmul.f32 %v1343, %v715
  %v1348 = vmul.f32 %v1342, %v719
  %v1349 = vmul.f32 %v1345, %v723
  %1350 = vrot.lane.b32.xlu0 %v1266, 113
  %v1351 = vpop.permute.xlu0 %1350
  %1352 = vrot.lane.b32.xlu0 %v1267, 113
  %v1353 = vpop.permute.xlu0 %1352
  %1354 = vrot.lane.b32.xlu0 %v1268, 113
  %v1355 = vpop.permute.xlu0 %1354
  %1356 = vrot.lane.b32.xlu0 %v1269, 113
  %v1357 = vpop.permute.xlu0 %1356
  %v1358 = vsel %vm736, %v1355, %v1357
  %v1359 = vsel %vm736, %v1353, %v1355
  %v1360 = vsel %vm736, %v1351, %v1353
  %v1361 = vsel %vm736, %v1357, %v1351
  %v1362 = vmul.f32 %v1360, %v744
  %v1363 = vmul.f32 %v1359, %v748
  %v1364 = vmul.f32 %v1358, %v752
  %v1365 = vmul.f32 %v1361, %v756
  %1366 = vrot.lane.b32.xlu0 %v1266, 112
  %v1367 = vpop.permute.xlu0 %1366
  %1368 = vrot.lane.b32.xlu0 %v1267, 112
  %v1369 = vpop.permute.xlu0 %1368
  %1370 = vrot.lane.b32.xlu0 %v1268, 112
  %v1371 = vpop.permute.xlu0 %1370
  %1372 = vrot.lane.b32.xlu0 %v1269, 112
  %v1373 = vpop.permute.xlu0 %1372
  %v1374 = vsel %vm769, %v1371, %v1373
  %v1375 = vsel %vm769, %v1369, %v1371
  %v1376 = vsel %vm769, %v1367, %v1369
  %v1377 = vsel %vm769, %v1373, %v1367
  %v1378 = vmul.f32 %v1376, %v777
  %v1379 = vmul.f32 %v1375, %v781
  %v1380 = vmul.f32 %v1374, %v785
  %v1381 = vmul.f32 %v1377, %v789
  %1382 = vrot.lane.b32.xlu0 %v1266, 111
  %v1383 = vpop.permute.xlu0 %1382
  %1384 = vrot.lane.b32.xlu0 %v1267, 111
  %v1385 = vpop.permute.xlu0 %1384
  %1386 = vrot.lane.b32.xlu0 %v1268, 111
  %v1387 = vpop.permute.xlu0 %1386
  %1388 = vrot.lane.b32.xlu0 %v1269, 111
  %v1389 = vpop.permute.xlu0 %1388
  %v1390 = vsel %vm802, %v1387, %v1389
  %v1391 = vsel %vm802, %v1385, %v1387
  %v1392 = vsel %vm802, %v1383, %v1385
  %v1393 = vsel %vm802, %v1389, %v1383
  %v1394 = vmul.f32 %v1392, %v810
  %v1395 = vmul.f32 %v1391, %v814
  %v1396 = vmul.f32 %v1390, %v818
  %v1397 = vmul.f32 %v1393, %v822
  %s1398 = scalar_lea.vmem %s5, 16
  %v1399 = vld [vmem:[%s1398] sm:$0xff]
  %s1400 = scalar_lea.vmem %s6, 16
  %v1401 = vld [vmem:[%s1400] sm:$0xff]
  %1403 = vset.pattern.permute.xlu0 0
  %1404 = vperm.xlu0 %1403, %v1401
  %v1405 = vpop.permute.xlu0 %1404
  %v1408 = vsel %vm834, %v1399, 0
  %1410 = vmatprep.subr.mxu0 0.0
  %1411 = vmatpush1.msra.mxu0 0.0
  %1412 = vmatprep.subr.mxu0 0.0
  %1413 = vmatpush1.msra.mxu0 0.0
  %1414 = vmatprep.subr.mxu0 0.0
  %1415 = vmatpush1.msra.mxu0 0.0
  %1416 = vmatprep.subr.mxu0 0.0
  %1417 = vmatpush1.msra.mxu0 0.0
  %1418 = vmatprep.subr.mxu0 0.0
  %1419 = vmatpush1.msra.mxu0 0.0
  %1420 = vmatprep.subr.mxu0 0.0
  %1421 = vmatpush1.msra.mxu0 0.0
  %1422 = vmatprep.subr.mxu0 0.0
  %1423 = vmatpush1.msra.mxu0 0.0
  %1424 = vmatprep.subr.mxu0 %v1395
  %1425 = vmatpush1.msra.mxu0 %v1394
  %1426 = vmatprep.subr.mxu0 %v1379
  %1427 = vmatpush1.msra.mxu0 %v1378
  %1428 = vmatprep.subr.mxu0 %v1363
  %1429 = vmatpush1.msra.mxu0 %v1362
  %1430 = vmatprep.subr.mxu0 %v1347
  %1431 = vmatpush1.msra.mxu0 %v1346
  %1432 = vmatprep.subr.mxu0 %v1267
  %1433 = vmatpush1.msra.mxu0 %v1266
  %1434 = vmatprep.subr.mxu0 %v1331
  %1435 = vmatpush1.msra.mxu0 %v1330
  %1436 = vmatprep.subr.mxu0 %v1315
  %1437 = vmatpush1.msra.mxu0 %v1314
  %1438 = vmatprep.subr.mxu0 %v1299
  %1439 = vmatpush1.msra.mxu0 %v1298
  %1440 = vmatprep.subr.mxu0 %v1283
  %1441 = vmatpush1.msra.mxu0 %v1282
  %1442 = vmatprep.subr.mxu0 0.0
  %1443 = vmatpush2.msra.mxu0 0.0
  %1444 = vmatprep.subr.mxu0 0.0
  %1445 = vmatpush2.msra.mxu0 0.0
  %1446 = vmatprep.subr.mxu0 0.0
  %1447 = vmatpush2.msra.mxu0 0.0
  %1448 = vmatprep.subr.mxu0 0.0
  %1449 = vmatpush2.msra.mxu0 0.0
  %1450 = vmatprep.subr.mxu0 0.0
  %1451 = vmatpush2.msra.mxu0 0.0
  %1452 = vmatprep.subr.mxu0 0.0
  %1453 = vmatpush2.msra.mxu0 0.0
  %1454 = vmatprep.subr.mxu0 0.0
  %1455 = vmatpush2.msra.mxu0 0.0
  %1456 = vmatprep.subr.mxu0 0.0
  %1457 = vmatpush2.msra.mxu0 0.0
  %1458 = vmatprep.subr.mxu0 0.0
  %1459 = vmatpush2.msra.mxu0 0.0
  %1460 = vmatprep.subr.mxu0 0.0
  %1461 = vmatpush2.msra.mxu0 0.0
  %1462 = vmatprep.subr.mxu0 0.0
  %1463 = vmatpush2.msra.mxu0 0.0
  %1464 = vmatprep.subr.mxu0 0.0
  %1465 = vmatpush2.msra.mxu0 0.0
  %1466 = vmatprep.subr.mxu0 0.0
  %1467 = vmatpush2.msra.mxu0 0.0
  %1468 = vmatprep.subr.mxu0 0.0
  %1469 = vmatpush2.msra.mxu0 0.0
  %1470 = vmatprep.subr.mxu0 0.0
  %1471 = vmatpush2.msra.mxu0 0.0
  %1472 = vmatprep.subr.mxu0 0.0
  %1473 = vmatpush2.msra.mxu0 0.0
  %1474 = vmatprep.mubr.f32.mxu0 0.0
  %1475 = vmatmul.mubr.f32.gmra.mxu0 %v1408
  %v1476 = vpop.f32.mrf.mxu0
  %v1477 = vadd.f32 %v1405, %v1476
  %v1478 = vpop.f32.mrf.mxu0
  %v1479 = vadd.f32 %v1405, %v1478
  %1480 = vdwg.mxu0
  %1481 = vmatprep.subr.mxu0 0.0
  %1482 = vmatpush1.msra.mxu0 0.0
  %1483 = vmatprep.subr.mxu0 0.0
  %1484 = vmatpush1.msra.mxu0 0.0
  %1485 = vmatprep.subr.mxu0 0.0
  %1486 = vmatpush1.msra.mxu0 0.0
  %1487 = vmatprep.subr.mxu0 0.0
  %1488 = vmatpush1.msra.mxu0 0.0
  %1489 = vmatprep.subr.mxu0 0.0
  %1490 = vmatpush1.msra.mxu0 0.0
  %1491 = vmatprep.subr.mxu0 0.0
  %1492 = vmatpush1.msra.mxu0 0.0
  %1493 = vmatprep.subr.mxu0 0.0
  %1494 = vmatpush1.msra.mxu0 0.0
  %1495 = vmatprep.subr.mxu0 %v1397
  %1496 = vmatpush1.msra.mxu0 %v1396
  %1497 = vmatprep.subr.mxu0 %v1381
  %1498 = vmatpush1.msra.mxu0 %v1380
  %1499 = vmatprep.subr.mxu0 %v1365
  %1500 = vmatpush1.msra.mxu0 %v1364
  %1501 = vmatprep.subr.mxu0 %v1349
  %1502 = vmatpush1.msra.mxu0 %v1348
  %1503 = vmatprep.subr.mxu0 %v1269
  %1504 = vmatpush1.msra.mxu0 %v1268
  %1505 = vmatprep.subr.mxu0 %v1333
  %1506 = vmatpush1.msra.mxu0 %v1332
  %1507 = vmatprep.subr.mxu0 %v1317
  %1508 = vmatpush1.msra.mxu0 %v1316
  %1509 = vmatprep.subr.mxu0 %v1301
  %1510 = vmatpush1.msra.mxu0 %v1300
  %1511 = vmatprep.subr.mxu0 %v1285
  %1512 = vmatpush1.msra.mxu0 %v1284
  %1513 = vmatprep.subr.mxu0 0.0
  %1514 = vmatpush2.msra.mxu0 0.0
  %1515 = vmatprep.subr.mxu0 0.0
  %1516 = vmatpush2.msra.mxu0 0.0
  %1517 = vmatprep.subr.mxu0 0.0
  %1518 = vmatpush2.msra.mxu0 0.0
  %1519 = vmatprep.subr.mxu0 0.0
  %1520 = vmatpush2.msra.mxu0 0.0
  %1521 = vmatprep.subr.mxu0 0.0
  %1522 = vmatpush2.msra.mxu0 0.0
  %1523 = vmatprep.subr.mxu0 0.0
  %1524 = vmatpush2.msra.mxu0 0.0
  %1525 = vmatprep.subr.mxu0 0.0
  %1526 = vmatpush2.msra.mxu0 0.0
  %1527 = vmatprep.subr.mxu0 0.0
  %1528 = vmatpush2.msra.mxu0 0.0
  %1529 = vmatprep.subr.mxu0 0.0
  %1530 = vmatpush2.msra.mxu0 0.0
  %1531 = vmatprep.subr.mxu0 0.0
  %1532 = vmatpush2.msra.mxu0 0.0
  %1533 = vmatprep.subr.mxu0 0.0
  %1534 = vmatpush2.msra.mxu0 0.0
  %1535 = vmatprep.subr.mxu0 0.0
  %1536 = vmatpush2.msra.mxu0 0.0
  %1537 = vmatprep.subr.mxu0 0.0
  %1538 = vmatpush2.msra.mxu0 0.0
  %1539 = vmatprep.subr.mxu0 0.0
  %1540 = vmatpush2.msra.mxu0 0.0
  %1541 = vmatprep.subr.mxu0 0.0
  %1542 = vmatpush2.msra.mxu0 0.0
  %1543 = vmatprep.subr.mxu0 0.0
  %1544 = vmatpush2.msra.mxu0 0.0
  %1545 = vmatprep.mubr.f32.mxu0 0.0
  %1546 = vmatmul.mubr.f32.gmra.mxu0 %v1408
  %v1547 = vpop.f32.mrf.mxu0
  %v1548 = vadd.f32 %v1405, %v1547
  %v1549 = vpop.f32.mrf.mxu0
  %v1550 = vadd.f32 %v1405, %v1549
  %1551 = vdwg.mxu0
  %v1552 = vmax.f32 %v1477, 0.0
  %v1553 = vmax.f32 %v1479, 0.0
  %v1554 = vmax.f32 %v1548, 0.0
  %v1555 = vmax.f32 %v1550, 0.0
  %1556 = vrot.lane.b32.xlu0 %v1552, 17
  %v1557 = vpop.permute.xlu0 %1556
  %1558 = vrot.lane.b32.xlu0 %v1553, 17
  %v1559 = vpop.permute.xlu0 %1558
  %1560 = vrot.lane.b32.xlu0 %v1554, 17
  %v1561 = vpop.permute.xlu0 %1560
  %1562 = vrot.lane.b32.xlu0 %v1555, 17
  %v1563 = vpop.permute.xlu0 %1562
  %v1564 = vsel %vm571, %v1561, %v1563
  %v1565 = vsel %vm571, %v1559, %v1561
  %v1566 = vsel %vm571, %v1557, %v1559
  %v1567 = vsel %vm571, %v1563, %v1557
  %v1568 = vmul.f32 %v1567, %v579
  %v1569 = vmul.f32 %v1566, %v583
  %v1570 = vmul.f32 %v1565, %v587
  %v1571 = vmul.f32 %v1564, %v591
  %1572 = vrot.lane.b32.xlu0 %v1552, 16
  %v1573 = vpop.permute.xlu0 %1572
  %1574 = vrot.lane.b32.xlu0 %v1553, 16
  %v1575 = vpop.permute.xlu0 %1574
  %1576 = vrot.lane.b32.xlu0 %v1554, 16
  %v1577 = vpop.permute.xlu0 %1576
  %1578 = vrot.lane.b32.xlu0 %v1555, 16
  %v1579 = vpop.permute.xlu0 %1578
  %v1580 = vsel %vm604, %v1577, %v1579
  %v1581 = vsel %vm604, %v1575, %v1577
  %v1582 = vsel %vm604, %v1573, %v1575
  %v1583 = vsel %vm604, %v1579, %v1573
  %v1584 = vmul.f32 %v1583, %v612
  %v1585 = vmul.f32 %v1582, %v616
  %v1586 = vmul.f32 %v1581, %v620
  %v1587 = vmul.f32 %v1580, %v624
  %1588 = vrot.lane.b32.xlu0 %v1552, 15
  %v1589 = vpop.permute.xlu0 %1588
  %1590 = vrot.lane.b32.xlu0 %v1553, 15
  %v1591 = vpop.permute.xlu0 %1590
  %1592 = vrot.lane.b32.xlu0 %v1554, 15
  %v1593 = vpop.permute.xlu0 %1592
  %1594 = vrot.lane.b32.xlu0 %v1555, 15
  %v1595 = vpop.permute.xlu0 %1594
  %v1596 = vsel %vm637, %v1593, %v1595
  %v1597 = vsel %vm637, %v1591, %v1593
  %v1598 = vsel %vm637, %v1589, %v1591
  %v1599 = vsel %vm637, %v1595, %v1589
  %v1600 = vmul.f32 %v1599, %v645
  %v1601 = vmul.f32 %v1598, %v649
  %v1602 = vmul.f32 %v1597, %v653
  %v1603 = vmul.f32 %v1596, %v657
  %1604 = vrot.lane.b32.xlu0 %v1552, 1
  %v1605 = vpop.permute.xlu0 %1604
  %1606 = vrot.lane.b32.xlu0 %v1553, 1
  %v1607 = vpop.permute.xlu0 %1606
  %1608 = vrot.lane.b32.xlu0 %v1554, 1
  %v1609 = vpop.permute.xlu0 %1608
  %1610 = vrot.lane.b32.xlu0 %v1555, 1
  %v1611 = vpop.permute.xlu0 %1610
  %v1612 = vsel %vm670, %v1609, %v1611
  %v1613 = vsel %vm670, %v1607, %v1609
  %v1614 = vsel %vm670, %v1605, %v1607
  %v1615 = vsel %vm670, %v1611, %v1605
  %v1616 = vmul.f32 %v1615, %v678
  %v1617 = vmul.f32 %v1614, %v682
  %v1618 = vmul.f32 %v1613, %v686
  %v1619 = vmul.f32 %v1612, %v690
  %1620 = vrot.lane.b32.xlu0 %v1552, 127
  %v1621 = vpop.permute.xlu0 %1620
  %1622 = vrot.lane.b32.xlu0 %v1553, 127
  %v1623 = vpop.permute.xlu0 %1622
  %1624 = vrot.lane.b32.xlu0 %v1554, 127
  %v1625 = vpop.permute.xlu0 %1624
  %1626 = vrot.lane.b32.xlu0 %v1555, 127
  %v1627 = vpop.permute.xlu0 %1626
  %v1628 = vsel %vm703, %v1625, %v1627
  %v1629 = vsel %vm703, %v1623, %v1625
  %v1630 = vsel %vm703, %v1621, %v1623
  %v1631 = vsel %vm703, %v1627, %v1621
  %v1632 = vmul.f32 %v1630, %v711
  %v1633 = vmul.f32 %v1629, %v715
  %v1634 = vmul.f32 %v1628, %v719
  %v1635 = vmul.f32 %v1631, %v723
  %1636 = vrot.lane.b32.xlu0 %v1552, 113
  %v1637 = vpop.permute.xlu0 %1636
  %1638 = vrot.lane.b32.xlu0 %v1553, 113
  %v1639 = vpop.permute.xlu0 %1638
  %1640 = vrot.lane.b32.xlu0 %v1554, 113
  %v1641 = vpop.permute.xlu0 %1640
  %1642 = vrot.lane.b32.xlu0 %v1555, 113
  %v1643 = vpop.permute.xlu0 %1642
  %v1644 = vsel %vm736, %v1641, %v1643
  %v1645 = vsel %vm736, %v1639, %v1641
  %v1646 = vsel %vm736, %v1637, %v1639
  %v1647 = vsel %vm736, %v1643, %v1637
  %v1648 = vmul.f32 %v1646, %v744
  %v1649 = vmul.f32 %v1645, %v748
  %v1650 = vmul.f32 %v1644, %v752
  %v1651 = vmul.f32 %v1647, %v756
  %1652 = vrot.lane.b32.xlu0 %v1552, 112
  %v1653 = vpop.permute.xlu0 %1652
  %1654 = vrot.lane.b32.xlu0 %v1553, 112
  %v1655 = vpop.permute.xlu0 %1654
  %1656 = vrot.lane.b32.xlu0 %v1554, 112
  %v1657 = vpop.permute.xlu0 %1656
  %1658 = vrot.lane.b32.xlu0 %v1555, 112
  %v1659 = vpop.permute.xlu0 %1658
  %v1660 = vsel %vm769, %v1657, %v1659
  %v1661 = vsel %vm769, %v1655, %v1657
  %v1662 = vsel %vm769, %v1653, %v1655
  %v1663 = vsel %vm769, %v1659, %v1653
  %v1664 = vmul.f32 %v1662, %v777
  %v1665 = vmul.f32 %v1661, %v781
  %v1666 = vmul.f32 %v1660, %v785
  %v1667 = vmul.f32 %v1663, %v789
  %1668 = vrot.lane.b32.xlu0 %v1552, 111
  %v1669 = vpop.permute.xlu0 %1668
  %1670 = vrot.lane.b32.xlu0 %v1553, 111
  %v1671 = vpop.permute.xlu0 %1670
  %1672 = vrot.lane.b32.xlu0 %v1554, 111
  %v1673 = vpop.permute.xlu0 %1672
  %1674 = vrot.lane.b32.xlu0 %v1555, 111
  %v1675 = vpop.permute.xlu0 %1674
  %v1676 = vsel %vm802, %v1673, %v1675
  %v1677 = vsel %vm802, %v1671, %v1673
  %v1678 = vsel %vm802, %v1669, %v1671
  %v1679 = vsel %vm802, %v1675, %v1669
  %v1680 = vmul.f32 %v1678, %v810
  %v1681 = vmul.f32 %v1677, %v814
  %v1682 = vmul.f32 %v1676, %v818
  %v1683 = vmul.f32 %v1679, %v822
  %s1684 = scalar_lea.vmem %s5, 24
  %v1685 = vld [vmem:[%s1684] sm:$0xff]
  %s1686 = scalar_lea.vmem %s6, 24
  %v1687 = vld [vmem:[%s1686] sm:$0xff]
  %1689 = vset.pattern.permute.xlu0 0
  %1690 = vperm.xlu0 %1689, %v1687
  %v1691 = vpop.permute.xlu0 %1690
  %v1694 = vsel %vm834, %v1685, 0
  %1696 = vmatprep.subr.mxu0 0.0
  %1697 = vmatpush1.msra.mxu0 0.0
  %1698 = vmatprep.subr.mxu0 0.0
  %1699 = vmatpush1.msra.mxu0 0.0
  %1700 = vmatprep.subr.mxu0 0.0
  %1701 = vmatpush1.msra.mxu0 0.0
  %1702 = vmatprep.subr.mxu0 0.0
  %1703 = vmatpush1.msra.mxu0 0.0
  %1704 = vmatprep.subr.mxu0 0.0
  %1705 = vmatpush1.msra.mxu0 0.0
  %1706 = vmatprep.subr.mxu0 0.0
  %1707 = vmatpush1.msra.mxu0 0.0
  %1708 = vmatprep.subr.mxu0 0.0
  %1709 = vmatpush1.msra.mxu0 0.0
  %1710 = vmatprep.subr.mxu0 %v1681
  %1711 = vmatpush1.msra.mxu0 %v1680
  %1712 = vmatprep.subr.mxu0 %v1665
  %1713 = vmatpush1.msra.mxu0 %v1664
  %1714 = vmatprep.subr.mxu0 %v1649
  %1715 = vmatpush1.msra.mxu0 %v1648
  %1716 = vmatprep.subr.mxu0 %v1633
  %1717 = vmatpush1.msra.mxu0 %v1632
  %1718 = vmatprep.subr.mxu0 %v1553
  %1719 = vmatpush1.msra.mxu0 %v1552
  %1720 = vmatprep.subr.mxu0 %v1617
  %1721 = vmatpush1.msra.mxu0 %v1616
  %1722 = vmatprep.subr.mxu0 %v1601
  %1723 = vmatpush1.msra.mxu0 %v1600
  %1724 = vmatprep.subr.mxu0 %v1585
  %1725 = vmatpush1.msra.mxu0 %v1584
  %1726 = vmatprep.subr.mxu0 %v1569
  %1727 = vmatpush1.msra.mxu0 %v1568
  %1728 = vmatprep.subr.mxu0 0.0
  %1729 = vmatpush2.msra.mxu0 0.0
  %1730 = vmatprep.subr.mxu0 0.0
  %1731 = vmatpush2.msra.mxu0 0.0
  %1732 = vmatprep.subr.mxu0 0.0
  %1733 = vmatpush2.msra.mxu0 0.0
  %1734 = vmatprep.subr.mxu0 0.0
  %1735 = vmatpush2.msra.mxu0 0.0
  %1736 = vmatprep.subr.mxu0 0.0
  %1737 = vmatpush2.msra.mxu0 0.0
  %1738 = vmatprep.subr.mxu0 0.0
  %1739 = vmatpush2.msra.mxu0 0.0
  %1740 = vmatprep.subr.mxu0 0.0
  %1741 = vmatpush2.msra.mxu0 0.0
  %1742 = vmatprep.subr.mxu0 0.0
  %1743 = vmatpush2.msra.mxu0 0.0
  %1744 = vmatprep.subr.mxu0 0.0
  %1745 = vmatpush2.msra.mxu0 0.0
  %1746 = vmatprep.subr.mxu0 0.0
  %1747 = vmatpush2.msra.mxu0 0.0
  %1748 = vmatprep.subr.mxu0 0.0
  %1749 = vmatpush2.msra.mxu0 0.0
  %1750 = vmatprep.subr.mxu0 0.0
  %1751 = vmatpush2.msra.mxu0 0.0
  %1752 = vmatprep.subr.mxu0 0.0
  %1753 = vmatpush2.msra.mxu0 0.0
  %1754 = vmatprep.subr.mxu0 0.0
  %1755 = vmatpush2.msra.mxu0 0.0
  %1756 = vmatprep.subr.mxu0 0.0
  %1757 = vmatpush2.msra.mxu0 0.0
  %1758 = vmatprep.subr.mxu0 0.0
  %1759 = vmatpush2.msra.mxu0 0.0
  %1760 = vmatprep.mubr.f32.mxu0 0.0
  %1761 = vmatmul.mubr.f32.gmra.mxu0 %v1694
  %v1762 = vpop.f32.mrf.mxu0
  %v1763 = vadd.f32 %v1691, %v1762
  %v1764 = vpop.f32.mrf.mxu0
  %v1765 = vadd.f32 %v1691, %v1764
  %1766 = vdwg.mxu0
  %1767 = vmatprep.subr.mxu0 0.0
  %1768 = vmatpush1.msra.mxu0 0.0
  %1769 = vmatprep.subr.mxu0 0.0
  %1770 = vmatpush1.msra.mxu0 0.0
  %1771 = vmatprep.subr.mxu0 0.0
  %1772 = vmatpush1.msra.mxu0 0.0
  %1773 = vmatprep.subr.mxu0 0.0
  %1774 = vmatpush1.msra.mxu0 0.0
  %1775 = vmatprep.subr.mxu0 0.0
  %1776 = vmatpush1.msra.mxu0 0.0
  %1777 = vmatprep.subr.mxu0 0.0
  %1778 = vmatpush1.msra.mxu0 0.0
  %1779 = vmatprep.subr.mxu0 0.0
  %1780 = vmatpush1.msra.mxu0 0.0
  %1781 = vmatprep.subr.mxu0 %v1683
  %1782 = vmatpush1.msra.mxu0 %v1682
  %1783 = vmatprep.subr.mxu0 %v1667
  %1784 = vmatpush1.msra.mxu0 %v1666
  %1785 = vmatprep.subr.mxu0 %v1651
  %1786 = vmatpush1.msra.mxu0 %v1650
  %1787 = vmatprep.subr.mxu0 %v1635
  %1788 = vmatpush1.msra.mxu0 %v1634
  %1789 = vmatprep.subr.mxu0 %v1555
  %1790 = vmatpush1.msra.mxu0 %v1554
  %1791 = vmatprep.subr.mxu0 %v1619
  %1792 = vmatpush1.msra.mxu0 %v1618
  %1793 = vmatprep.subr.mxu0 %v1603
  %1794 = vmatpush1.msra.mxu0 %v1602
  %1795 = vmatprep.subr.mxu0 %v1587
  %1796 = vmatpush1.msra.mxu0 %v1586
  %1797 = vmatprep.subr.mxu0 %v1571
  %1798 = vmatpush1.msra.mxu0 %v1570
  %1799 = vmatprep.subr.mxu0 0.0
  %1800 = vmatpush2.msra.mxu0 0.0
  %1801 = vmatprep.subr.mxu0 0.0
  %1802 = vmatpush2.msra.mxu0 0.0
  %1803 = vmatprep.subr.mxu0 0.0
  %1804 = vmatpush2.msra.mxu0 0.0
  %1805 = vmatprep.subr.mxu0 0.0
  %1806 = vmatpush2.msra.mxu0 0.0
  %1807 = vmatprep.subr.mxu0 0.0
  %1808 = vmatpush2.msra.mxu0 0.0
  %1809 = vmatprep.subr.mxu0 0.0
  %1810 = vmatpush2.msra.mxu0 0.0
  %1811 = vmatprep.subr.mxu0 0.0
  %1812 = vmatpush2.msra.mxu0 0.0
  %1813 = vmatprep.subr.mxu0 0.0
  %1814 = vmatpush2.msra.mxu0 0.0
  %1815 = vmatprep.subr.mxu0 0.0
  %1816 = vmatpush2.msra.mxu0 0.0
  %1817 = vmatprep.subr.mxu0 0.0
  %1818 = vmatpush2.msra.mxu0 0.0
  %1819 = vmatprep.subr.mxu0 0.0
  %1820 = vmatpush2.msra.mxu0 0.0
  %1821 = vmatprep.subr.mxu0 0.0
  %1822 = vmatpush2.msra.mxu0 0.0
  %1823 = vmatprep.subr.mxu0 0.0
  %1824 = vmatpush2.msra.mxu0 0.0
  %1825 = vmatprep.subr.mxu0 0.0
  %1826 = vmatpush2.msra.mxu0 0.0
  %1827 = vmatprep.subr.mxu0 0.0
  %1828 = vmatpush2.msra.mxu0 0.0
  %1829 = vmatprep.subr.mxu0 0.0
  %1830 = vmatpush2.msra.mxu0 0.0
  %1831 = vmatprep.mubr.f32.mxu0 0.0
  %1832 = vmatmul.mubr.f32.gmra.mxu0 %v1694
  %v1833 = vpop.f32.mrf.mxu0
  %v1834 = vadd.f32 %v1691, %v1833
  %v1835 = vpop.f32.mrf.mxu0
  %v1836 = vadd.f32 %v1691, %v1835
  %1837 = vdwg.mxu0
  %v1838 = vmax.f32 %v1763, 0.0
  %v1839 = vmax.f32 %v1765, 0.0
  %v1840 = vmax.f32 %v1834, 0.0
  %v1841 = vmax.f32 %v1836, 0.0
  %1842 = vrot.lane.b32.xlu0 %v1838, 17
  %v1843 = vpop.permute.xlu0 %1842
  %1844 = vrot.lane.b32.xlu0 %v1839, 17
  %v1845 = vpop.permute.xlu0 %1844
  %1846 = vrot.lane.b32.xlu0 %v1840, 17
  %v1847 = vpop.permute.xlu0 %1846
  %1848 = vrot.lane.b32.xlu0 %v1841, 17
  %v1849 = vpop.permute.xlu0 %1848
  %v1850 = vsel %vm571, %v1847, %v1849
  %v1851 = vsel %vm571, %v1845, %v1847
  %v1852 = vsel %vm571, %v1843, %v1845
  %v1853 = vsel %vm571, %v1849, %v1843
  %v1854 = vmul.f32 %v1853, %v579
  %v1855 = vmul.f32 %v1852, %v583
  %v1856 = vmul.f32 %v1851, %v587
  %v1857 = vmul.f32 %v1850, %v591
  %1858 = vrot.lane.b32.xlu0 %v1838, 16
  %v1859 = vpop.permute.xlu0 %1858
  %1860 = vrot.lane.b32.xlu0 %v1839, 16
  %v1861 = vpop.permute.xlu0 %1860
  %1862 = vrot.lane.b32.xlu0 %v1840, 16
  %v1863 = vpop.permute.xlu0 %1862
  %1864 = vrot.lane.b32.xlu0 %v1841, 16
  %v1865 = vpop.permute.xlu0 %1864
  %v1866 = vsel %vm604, %v1863, %v1865
  %v1867 = vsel %vm604, %v1861, %v1863
  %v1868 = vsel %vm604, %v1859, %v1861
  %v1869 = vsel %vm604, %v1865, %v1859
  %v1870 = vmul.f32 %v1869, %v612
  %v1871 = vmul.f32 %v1868, %v616
  %v1872 = vmul.f32 %v1867, %v620
  %v1873 = vmul.f32 %v1866, %v624
  %1874 = vrot.lane.b32.xlu0 %v1838, 15
  %v1875 = vpop.permute.xlu0 %1874
  %1876 = vrot.lane.b32.xlu0 %v1839, 15
  %v1877 = vpop.permute.xlu0 %1876
  %1878 = vrot.lane.b32.xlu0 %v1840, 15
  %v1879 = vpop.permute.xlu0 %1878
  %1880 = vrot.lane.b32.xlu0 %v1841, 15
  %v1881 = vpop.permute.xlu0 %1880
  %v1882 = vsel %vm637, %v1879, %v1881
  %v1883 = vsel %vm637, %v1877, %v1879
  %v1884 = vsel %vm637, %v1875, %v1877
  %v1885 = vsel %vm637, %v1881, %v1875
  %v1886 = vmul.f32 %v1885, %v645
  %v1887 = vmul.f32 %v1884, %v649
  %v1888 = vmul.f32 %v1883, %v653
  %v1889 = vmul.f32 %v1882, %v657
  %1890 = vrot.lane.b32.xlu0 %v1838, 1
  %v1891 = vpop.permute.xlu0 %1890
  %1892 = vrot.lane.b32.xlu0 %v1839, 1
  %v1893 = vpop.permute.xlu0 %1892
  %1894 = vrot.lane.b32.xlu0 %v1840, 1
  %v1895 = vpop.permute.xlu0 %1894
  %1896 = vrot.lane.b32.xlu0 %v1841, 1
  %v1897 = vpop.permute.xlu0 %1896
  %v1898 = vsel %vm670, %v1895, %v1897
  %v1899 = vsel %vm670, %v1893, %v1895
  %v1900 = vsel %vm670, %v1891, %v1893
  %v1901 = vsel %vm670, %v1897, %v1891
  %v1902 = vmul.f32 %v1901, %v678
  %v1903 = vmul.f32 %v1900, %v682
  %v1904 = vmul.f32 %v1899, %v686
  %v1905 = vmul.f32 %v1898, %v690
  %1906 = vrot.lane.b32.xlu0 %v1838, 127
  %v1907 = vpop.permute.xlu0 %1906
  %1908 = vrot.lane.b32.xlu0 %v1839, 127
  %v1909 = vpop.permute.xlu0 %1908
  %1910 = vrot.lane.b32.xlu0 %v1840, 127
  %v1911 = vpop.permute.xlu0 %1910
  %1912 = vrot.lane.b32.xlu0 %v1841, 127
  %v1913 = vpop.permute.xlu0 %1912
  %v1914 = vsel %vm703, %v1911, %v1913
  %v1915 = vsel %vm703, %v1909, %v1911
  %v1916 = vsel %vm703, %v1907, %v1909
  %v1917 = vsel %vm703, %v1913, %v1907
  %v1918 = vmul.f32 %v1916, %v711
  %v1919 = vmul.f32 %v1915, %v715
  %v1920 = vmul.f32 %v1914, %v719
  %v1921 = vmul.f32 %v1917, %v723
  %1922 = vrot.lane.b32.xlu0 %v1838, 113
  %v1923 = vpop.permute.xlu0 %1922
  %1924 = vrot.lane.b32.xlu0 %v1839, 113
  %v1925 = vpop.permute.xlu0 %1924
  %1926 = vrot.lane.b32.xlu0 %v1840, 113
  %v1927 = vpop.permute.xlu0 %1926
  %1928 = vrot.lane.b32.xlu0 %v1841, 113
  %v1929 = vpop.permute.xlu0 %1928
  %v1930 = vsel %vm736, %v1927, %v1929
  %v1931 = vsel %vm736, %v1925, %v1927
  %v1932 = vsel %vm736, %v1923, %v1925
  %v1933 = vsel %vm736, %v1929, %v1923
  %v1934 = vmul.f32 %v1932, %v744
  %v1935 = vmul.f32 %v1931, %v748
  %v1936 = vmul.f32 %v1930, %v752
  %v1937 = vmul.f32 %v1933, %v756
  %1938 = vrot.lane.b32.xlu0 %v1838, 112
  %v1939 = vpop.permute.xlu0 %1938
  %1940 = vrot.lane.b32.xlu0 %v1839, 112
  %v1941 = vpop.permute.xlu0 %1940
  %1942 = vrot.lane.b32.xlu0 %v1840, 112
  %v1943 = vpop.permute.xlu0 %1942
  %1944 = vrot.lane.b32.xlu0 %v1841, 112
  %v1945 = vpop.permute.xlu0 %1944
  %v1946 = vsel %vm769, %v1943, %v1945
  %v1947 = vsel %vm769, %v1941, %v1943
  %v1948 = vsel %vm769, %v1939, %v1941
  %v1949 = vsel %vm769, %v1945, %v1939
  %v1950 = vmul.f32 %v1948, %v777
  %v1951 = vmul.f32 %v1947, %v781
  %v1952 = vmul.f32 %v1946, %v785
  %v1953 = vmul.f32 %v1949, %v789
  %1954 = vrot.lane.b32.xlu0 %v1838, 111
  %v1955 = vpop.permute.xlu0 %1954
  %1956 = vrot.lane.b32.xlu0 %v1839, 111
  %v1957 = vpop.permute.xlu0 %1956
  %1958 = vrot.lane.b32.xlu0 %v1840, 111
  %v1959 = vpop.permute.xlu0 %1958
  %1960 = vrot.lane.b32.xlu0 %v1841, 111
  %v1961 = vpop.permute.xlu0 %1960
  %v1962 = vsel %vm802, %v1959, %v1961
  %v1963 = vsel %vm802, %v1957, %v1959
  %v1964 = vsel %vm802, %v1955, %v1957
  %v1965 = vsel %vm802, %v1961, %v1955
  %v1966 = vmul.f32 %v1964, %v810
  %v1967 = vmul.f32 %v1963, %v814
  %v1968 = vmul.f32 %v1962, %v818
  %v1969 = vmul.f32 %v1965, %v822
  %s1970 = scalar_lea.vmem %s5, 32
  %v1971 = vld [vmem:[%s1970] sm:$0xff]
  %s1972 = scalar_lea.vmem %s6, 32
  %v1973 = vld [vmem:[%s1972] sm:$0xff]
  %1975 = vset.pattern.permute.xlu0 0
  %1976 = vperm.xlu0 %1975, %v1973
  %v1977 = vpop.permute.xlu0 %1976
  %v1980 = vsel %vm834, %v1971, 0
  %1982 = vmatprep.subr.mxu0 0.0
  %1983 = vmatpush1.msra.mxu0 0.0
  %1984 = vmatprep.subr.mxu0 0.0
  %1985 = vmatpush1.msra.mxu0 0.0
  %1986 = vmatprep.subr.mxu0 0.0
  %1987 = vmatpush1.msra.mxu0 0.0
  %1988 = vmatprep.subr.mxu0 0.0
  %1989 = vmatpush1.msra.mxu0 0.0
  %1990 = vmatprep.subr.mxu0 0.0
  %1991 = vmatpush1.msra.mxu0 0.0
  %1992 = vmatprep.subr.mxu0 0.0
  %1993 = vmatpush1.msra.mxu0 0.0
  %1994 = vmatprep.subr.mxu0 0.0
  %1995 = vmatpush1.msra.mxu0 0.0
  %1996 = vmatprep.subr.mxu0 %v1967
  %1997 = vmatpush1.msra.mxu0 %v1966
  %1998 = vmatprep.subr.mxu0 %v1951
  %1999 = vmatpush1.msra.mxu0 %v1950
  %2000 = vmatprep.subr.mxu0 %v1935
  %2001 = vmatpush1.msra.mxu0 %v1934
  %2002 = vmatprep.subr.mxu0 %v1919
  %2003 = vmatpush1.msra.mxu0 %v1918
  %2004 = vmatprep.subr.mxu0 %v1839
  %2005 = vmatpush1.msra.mxu0 %v1838
  %2006 = vmatprep.subr.mxu0 %v1903
  %2007 = vmatpush1.msra.mxu0 %v1902
  %2008 = vmatprep.subr.mxu0 %v1887
  %2009 = vmatpush1.msra.mxu0 %v1886
  %2010 = vmatprep.subr.mxu0 %v1871
  %2011 = vmatpush1.msra.mxu0 %v1870
  %2012 = vmatprep.subr.mxu0 %v1855
  %2013 = vmatpush1.msra.mxu0 %v1854
  %2014 = vmatprep.subr.mxu0 0.0
  %2015 = vmatpush2.msra.mxu0 0.0
  %2016 = vmatprep.subr.mxu0 0.0
  %2017 = vmatpush2.msra.mxu0 0.0
  %2018 = vmatprep.subr.mxu0 0.0
  %2019 = vmatpush2.msra.mxu0 0.0
  %2020 = vmatprep.subr.mxu0 0.0
  %2021 = vmatpush2.msra.mxu0 0.0
  %2022 = vmatprep.subr.mxu0 0.0
  %2023 = vmatpush2.msra.mxu0 0.0
  %2024 = vmatprep.subr.mxu0 0.0
  %2025 = vmatpush2.msra.mxu0 0.0
  %2026 = vmatprep.subr.mxu0 0.0
  %2027 = vmatpush2.msra.mxu0 0.0
  %2028 = vmatprep.subr.mxu0 0.0
  %2029 = vmatpush2.msra.mxu0 0.0
  %2030 = vmatprep.subr.mxu0 0.0
  %2031 = vmatpush2.msra.mxu0 0.0
  %2032 = vmatprep.subr.mxu0 0.0
  %2033 = vmatpush2.msra.mxu0 0.0
  %2034 = vmatprep.subr.mxu0 0.0
  %2035 = vmatpush2.msra.mxu0 0.0
  %2036 = vmatprep.subr.mxu0 0.0
  %2037 = vmatpush2.msra.mxu0 0.0
  %2038 = vmatprep.subr.mxu0 0.0
  %2039 = vmatpush2.msra.mxu0 0.0
  %2040 = vmatprep.subr.mxu0 0.0
  %2041 = vmatpush2.msra.mxu0 0.0
  %2042 = vmatprep.subr.mxu0 0.0
  %2043 = vmatpush2.msra.mxu0 0.0
  %2044 = vmatprep.subr.mxu0 0.0
  %2045 = vmatpush2.msra.mxu0 0.0
  %2046 = vmatprep.mubr.f32.mxu0 0.0
  %2047 = vmatmul.mubr.f32.gmra.mxu0 %v1980
  %v2048 = vpop.f32.mrf.mxu0
  %v2049 = vadd.f32 %v1977, %v2048
  %v2050 = vpop.f32.mrf.mxu0
  %v2051 = vadd.f32 %v1977, %v2050
  %2052 = vdwg.mxu0
  %2053 = vmatprep.subr.mxu0 0.0
  %2054 = vmatpush1.msra.mxu0 0.0
  %2055 = vmatprep.subr.mxu0 0.0
  %2056 = vmatpush1.msra.mxu0 0.0
  %2057 = vmatprep.subr.mxu0 0.0
  %2058 = vmatpush1.msra.mxu0 0.0
  %2059 = vmatprep.subr.mxu0 0.0
  %2060 = vmatpush1.msra.mxu0 0.0
  %2061 = vmatprep.subr.mxu0 0.0
  %2062 = vmatpush1.msra.mxu0 0.0
  %2063 = vmatprep.subr.mxu0 0.0
  %2064 = vmatpush1.msra.mxu0 0.0
  %2065 = vmatprep.subr.mxu0 0.0
  %2066 = vmatpush1.msra.mxu0 0.0
  %2067 = vmatprep.subr.mxu0 %v1969
  %2068 = vmatpush1.msra.mxu0 %v1968
  %2069 = vmatprep.subr.mxu0 %v1953
  %2070 = vmatpush1.msra.mxu0 %v1952
  %2071 = vmatprep.subr.mxu0 %v1937
  %2072 = vmatpush1.msra.mxu0 %v1936
  %2073 = vmatprep.subr.mxu0 %v1921
  %2074 = vmatpush1.msra.mxu0 %v1920
  %2075 = vmatprep.subr.mxu0 %v1841
  %2076 = vmatpush1.msra.mxu0 %v1840
  %2077 = vmatprep.subr.mxu0 %v1905
  %2078 = vmatpush1.msra.mxu0 %v1904
  %2079 = vmatprep.subr.mxu0 %v1889
  %2080 = vmatpush1.msra.mxu0 %v1888
  %2081 = vmatprep.subr.mxu0 %v1873
  %2082 = vmatpush1.msra.mxu0 %v1872
  %2083 = vmatprep.subr.mxu0 %v1857
  %2084 = vmatpush1.msra.mxu0 %v1856
  %2085 = vmatprep.subr.mxu0 0.0
  %2086 = vmatpush2.msra.mxu0 0.0
  %2087 = vmatprep.subr.mxu0 0.0
  %2088 = vmatpush2.msra.mxu0 0.0
  %2089 = vmatprep.subr.mxu0 0.0
  %2090 = vmatpush2.msra.mxu0 0.0
  %2091 = vmatprep.subr.mxu0 0.0
  %2092 = vmatpush2.msra.mxu0 0.0
  %2093 = vmatprep.subr.mxu0 0.0
  %2094 = vmatpush2.msra.mxu0 0.0
  %2095 = vmatprep.subr.mxu0 0.0
  %2096 = vmatpush2.msra.mxu0 0.0
  %2097 = vmatprep.subr.mxu0 0.0
  %2098 = vmatpush2.msra.mxu0 0.0
  %2099 = vmatprep.subr.mxu0 0.0
  %2100 = vmatpush2.msra.mxu0 0.0
  %2101 = vmatprep.subr.mxu0 0.0
  %2102 = vmatpush2.msra.mxu0 0.0
  %2103 = vmatprep.subr.mxu0 0.0
  %2104 = vmatpush2.msra.mxu0 0.0
  %2105 = vmatprep.subr.mxu0 0.0
  %2106 = vmatpush2.msra.mxu0 0.0
  %2107 = vmatprep.subr.mxu0 0.0
  %2108 = vmatpush2.msra.mxu0 0.0
  %2109 = vmatprep.subr.mxu0 0.0
  %2110 = vmatpush2.msra.mxu0 0.0
  %2111 = vmatprep.subr.mxu0 0.0
  %2112 = vmatpush2.msra.mxu0 0.0
  %2113 = vmatprep.subr.mxu0 0.0
  %2114 = vmatpush2.msra.mxu0 0.0
  %2115 = vmatprep.subr.mxu0 0.0
  %2116 = vmatpush2.msra.mxu0 0.0
  %2117 = vmatprep.mubr.f32.mxu0 0.0
  %2118 = vmatmul.mubr.f32.gmra.mxu0 %v1980
  %v2119 = vpop.f32.mrf.mxu0
  %v2120 = vadd.f32 %v1977, %v2119
  %v2121 = vpop.f32.mrf.mxu0
  %v2122 = vadd.f32 %v1977, %v2121
  %2123 = vdwg.mxu0
  %v2124 = vadd.f32 %v28, %v2049
  %v2125 = vadd.f32 %v29, %v2051
  %v2126 = vadd.f32 %v30, %v2120
  %v2127 = vadd.f32 %v31, %v2122
  %v2130 = vrot.slane %v2124, 1
  %v2131 = vrot.slane %v2125, 1
  %v2134 = vlaneseq
  %v2135 = vshrl.u32 %v2134, 7
  %v2136 = vsub.s32 0, %v2135
  %v2137 = vrot.slane %v2124, %v2136
  %v2138 = vlaneseq
  %v2139 = vshrl.u32 %v2138, 7
  %v2140 = vsub.s32 0, %v2139
  %v2141 = vrot.slane %v2125, %v2140
  %v2142 = vlaneseq
  %v2143 = vshrl.u32 %v2142, 7
  %v2144 = vsub.s32 0, %v2143
  %v2145 = vrot.slane %v2130, %v2144
  %v2146 = vlaneseq
  %v2147 = vshrl.u32 %v2146, 7
  %v2148 = vsub.s32 0, %v2147
  %v2149 = vrot.slane %v2131, %v2148
  %v2150 = vmul.f32 %v557, %v2137
  %v2151 = vmul.f32 %v557, %v2141
  %v2152 = vmul.f32 %v557, %v2145
  %v2153 = vmul.f32 %v557, %v2149
  %v2156 = vrot.slane %v2126, 1
  %v2157 = vrot.slane %v2127, 1
  %v2160 = vlaneseq
  %v2161 = vshrl.u32 %v2160, 7
  %v2162 = vsub.s32 0, %v2161
  %v2163 = vrot.slane %v2126, %v2162
  %v2164 = vlaneseq
  %v2165 = vshrl.u32 %v2164, 7
  %v2166 = vsub.s32 0, %v2165
  %v2167 = vrot.slane %v2127, %v2166
  %v2168 = vlaneseq
  %v2169 = vshrl.u32 %v2168, 7
  %v2170 = vsub.s32 0, %v2169
  %v2171 = vrot.slane %v2156, %v2170
  %v2172 = vlaneseq
  %v2173 = vshrl.u32 %v2172, 7
  %v2174 = vsub.s32 0, %v2173
  %v2175 = vrot.slane %v2157, %v2174
  %v2176 = vmul.f32 %v560, %v2163
  %v2177 = vmul.f32 %v560, %v2167
  %v2178 = vmul.f32 %v560, %v2171
  %v2179 = vmul.f32 %v560, %v2175
  %v2180 = vadd.f32 %v2150, %v2176
  %v2181 = vadd.f32 %v2151, %v2177
  %v2182 = vadd.f32 %v2152, %v2178
  %v2183 = vadd.f32 %v2153, %v2179
  %v2184 = vmul.f32 %v2180, 0.05
  %v2185 = vmul.f32 %v2181, 0.05
  %v2186 = vmul.f32 %v2182, 0.05
  %v2187 = vmul.f32 %v2183, 0.05
  %v2192 = vcombine.low %v2184, %v2185
  %v2193 = vcombine.low %v2186, %v2187
  %v2195 = vunpack.c.l.s4 1983009808
  %v2196 = vunpack.c.0.s8 %v2195
  %v2197 = vlaneseq
  %v2198 = vshrl.u32 %v2197, 7
  %v2199 = vsub.s32 %v2196, %v2198
  %v2200 = vrot.slane %v2192, %v2199
  %v2202 = vunpack.c.l.s4 1983009808
  %v2203 = vunpack.c.0.s8 %v2202
  %v2204 = vlaneseq
  %v2205 = vshrl.u32 %v2204, 7
  %v2206 = vsub.s32 %v2203, %v2205
  %v2207 = vrot.slane %v2193, %v2206
  %v2208 = vcombine.low %v2200, %v2207
  %v2210 = vadd.f32 %v27, %v2208
  %v2212 = vcombine.high %v26, %v26
  %v2214 = vunpack.c.l.s4 1983009808
  %v2215 = vunpack.c.0.s8 %v2214
  %v2216 = vlaneseq
  %v2217 = vshrl.u32 %v2216, 7
  %v2218 = vsub.s32 %v2215, %v2217
  %v2219 = vrot.slane %v26, %v2218
  %v2221 = vunpack.c.l.s4 1983009808
  %v2222 = vunpack.c.0.s8 %v2221
  %v2223 = vlaneseq
  %v2224 = vshrl.u32 %v2223, 7
  %v2225 = vsub.s32 %v2222, %v2224
  %v2226 = vrot.slane %v2212, %v2225
  %v2227 = vcombine.high %v2219, %v2219
  %v2228 = vcombine.high %v2226, %v2226
  %2233 = vmatprep.subr.mxu0 %v101
  %2234 = vmatpush1.msra.mxu0 %v100
  %2235 = vmatprep.subr.mxu0 %v97
  %2236 = vmatpush1.msra.mxu0 %v96
  %2237 = vmatprep.subr.mxu0 %v93
  %2238 = vmatpush1.msra.mxu0 %v92
  %2239 = vmatprep.subr.mxu0 %v89
  %2240 = vmatpush1.msra.mxu0 %v88
  %2241 = vmatprep.subr.mxu0 %v85
  %2242 = vmatpush1.msra.mxu0 %v84
  %2243 = vmatprep.subr.mxu0 %v81
  %2244 = vmatpush1.msra.mxu0 %v80
  %2245 = vmatprep.subr.mxu0 %v77
  %2246 = vmatpush1.msra.mxu0 %v76
  %2247 = vmatprep.subr.mxu0 %v73
  %2248 = vmatpush1.msra.mxu0 %v72
  %2249 = vmatprep.subr.mxu0 %v69
  %2250 = vmatpush1.msra.mxu0 %v68
  %2251 = vmatprep.subr.mxu0 %v65
  %2252 = vmatpush1.msra.mxu0 %v64
  %2253 = vmatprep.subr.mxu0 %v61
  %2254 = vmatpush1.msra.mxu0 %v60
  %2255 = vmatprep.subr.mxu0 %v57
  %2256 = vmatpush1.msra.mxu0 %v56
  %2257 = vmatprep.subr.mxu0 %v53
  %2258 = vmatpush1.msra.mxu0 %v52
  %2259 = vmatprep.subr.mxu0 %v49
  %2260 = vmatpush1.msra.mxu0 %v48
  %2261 = vmatprep.subr.mxu0 %v45
  %2262 = vmatpush1.msra.mxu0 %v44
  %2263 = vmatprep.subr.mxu0 %v41
  %2264 = vmatpush1.msra.mxu0 %v40
  %2265 = vmatprep.subr.mxu0 %v165
  %2266 = vmatpush2.msra.mxu0 %v164
  %2267 = vmatprep.subr.mxu0 %v161
  %2268 = vmatpush2.msra.mxu0 %v160
  %2269 = vmatprep.subr.mxu0 %v157
  %2270 = vmatpush2.msra.mxu0 %v156
  %2271 = vmatprep.subr.mxu0 %v153
  %2272 = vmatpush2.msra.mxu0 %v152
  %2273 = vmatprep.subr.mxu0 %v149
  %2274 = vmatpush2.msra.mxu0 %v148
  %2275 = vmatprep.subr.mxu0 %v145
  %2276 = vmatpush2.msra.mxu0 %v144
  %2277 = vmatprep.subr.mxu0 %v141
  %2278 = vmatpush2.msra.mxu0 %v140
  %2279 = vmatprep.subr.mxu0 %v137
  %2280 = vmatpush2.msra.mxu0 %v136
  %2281 = vmatprep.subr.mxu0 %v133
  %2282 = vmatpush2.msra.mxu0 %v132
  %2283 = vmatprep.subr.mxu0 %v129
  %2284 = vmatpush2.msra.mxu0 %v128
  %2285 = vmatprep.subr.mxu0 %v125
  %2286 = vmatpush2.msra.mxu0 %v124
  %2287 = vmatprep.subr.mxu0 %v121
  %2288 = vmatpush2.msra.mxu0 %v120
  %2289 = vmatprep.subr.mxu0 %v117
  %2290 = vmatpush2.msra.mxu0 %v116
  %2291 = vmatprep.subr.mxu0 %v113
  %2292 = vmatpush2.msra.mxu0 %v112
  %2293 = vmatprep.subr.mxu0 %v109
  %2294 = vmatpush2.msra.mxu0 %v108
  %2295 = vmatprep.subr.mxu0 %v105
  %2296 = vmatpush2.msra.mxu0 %v104
  %2297 = vmatprep.mubr.f32.mxu0 %v2227
  %2298 = vmatmul.mubr.f32.gmra.mxu0 %v2219
  %v2299 = vpop.f32.mrf.mxu0
  %v2300 = vadd.f32 0.0, %v2299
  %v2301 = vpop.f32.mrf.mxu0
  %v2302 = vadd.f32 0.0, %v2301
  %2303 = vdwg.mxu0
  %2304 = vmatprep.subr.mxu0 %v229
  %2305 = vmatpush1.msra.mxu0 %v228
  %2306 = vmatprep.subr.mxu0 %v225
  %2307 = vmatpush1.msra.mxu0 %v224
  %2308 = vmatprep.subr.mxu0 %v221
  %2309 = vmatpush1.msra.mxu0 %v220
  %2310 = vmatprep.subr.mxu0 %v217
  %2311 = vmatpush1.msra.mxu0 %v216
  %2312 = vmatprep.subr.mxu0 %v213
  %2313 = vmatpush1.msra.mxu0 %v212
  %2314 = vmatprep.subr.mxu0 %v209
  %2315 = vmatpush1.msra.mxu0 %v208
  %2316 = vmatprep.subr.mxu0 %v205
  %2317 = vmatpush1.msra.mxu0 %v204
  %2318 = vmatprep.subr.mxu0 %v201
  %2319 = vmatpush1.msra.mxu0 %v200
  %2320 = vmatprep.subr.mxu0 %v197
  %2321 = vmatpush1.msra.mxu0 %v196
  %2322 = vmatprep.subr.mxu0 %v193
  %2323 = vmatpush1.msra.mxu0 %v192
  %2324 = vmatprep.subr.mxu0 %v189
  %2325 = vmatpush1.msra.mxu0 %v188
  %2326 = vmatprep.subr.mxu0 %v185
  %2327 = vmatpush1.msra.mxu0 %v184
  %2328 = vmatprep.subr.mxu0 %v181
  %2329 = vmatpush1.msra.mxu0 %v180
  %2330 = vmatprep.subr.mxu0 %v177
  %2331 = vmatpush1.msra.mxu0 %v176
  %2332 = vmatprep.subr.mxu0 %v173
  %2333 = vmatpush1.msra.mxu0 %v172
  %2334 = vmatprep.subr.mxu0 %v169
  %2335 = vmatpush1.msra.mxu0 %v168
  %2336 = vmatprep.subr.mxu0 %v293
  %2337 = vmatpush2.msra.mxu0 %v292
  %2338 = vmatprep.subr.mxu0 %v289
  %2339 = vmatpush2.msra.mxu0 %v288
  %2340 = vmatprep.subr.mxu0 %v285
  %2341 = vmatpush2.msra.mxu0 %v284
  %2342 = vmatprep.subr.mxu0 %v281
  %2343 = vmatpush2.msra.mxu0 %v280
  %2344 = vmatprep.subr.mxu0 %v277
  %2345 = vmatpush2.msra.mxu0 %v276
  %2346 = vmatprep.subr.mxu0 %v273
  %2347 = vmatpush2.msra.mxu0 %v272
  %2348 = vmatprep.subr.mxu0 %v269
  %2349 = vmatpush2.msra.mxu0 %v268
  %2350 = vmatprep.subr.mxu0 %v265
  %2351 = vmatpush2.msra.mxu0 %v264
  %2352 = vmatprep.subr.mxu0 %v261
  %2353 = vmatpush2.msra.mxu0 %v260
  %2354 = vmatprep.subr.mxu0 %v257
  %2355 = vmatpush2.msra.mxu0 %v256
  %2356 = vmatprep.subr.mxu0 %v253
  %2357 = vmatpush2.msra.mxu0 %v252
  %2358 = vmatprep.subr.mxu0 %v249
  %2359 = vmatpush2.msra.mxu0 %v248
  %2360 = vmatprep.subr.mxu0 %v245
  %2361 = vmatpush2.msra.mxu0 %v244
  %2362 = vmatprep.subr.mxu0 %v241
  %2363 = vmatpush2.msra.mxu0 %v240
  %2364 = vmatprep.subr.mxu0 %v237
  %2365 = vmatpush2.msra.mxu0 %v236
  %2366 = vmatprep.subr.mxu0 %v233
  %2367 = vmatpush2.msra.mxu0 %v232
  %2368 = vmatprep.mubr.f32.mxu0 %v2228
  %2369 = vmatmul.mubr.f32.gmra.mxu0 %v2226
  %v2370 = vpop.f32.mrf.mxu0
  %v2371 = vadd.f32 %v2300, %v2370
  %v2372 = vpop.f32.mrf.mxu0
  %v2373 = vadd.f32 %v2302, %v2372
  %2374 = vdwg.mxu0
  %2375 = vmatprep.subr.mxu0 %v103
  %2376 = vmatpush1.msra.mxu0 %v102
  %2377 = vmatprep.subr.mxu0 %v99
  %2378 = vmatpush1.msra.mxu0 %v98
  %2379 = vmatprep.subr.mxu0 %v95
  %2380 = vmatpush1.msra.mxu0 %v94
  %2381 = vmatprep.subr.mxu0 %v91
  %2382 = vmatpush1.msra.mxu0 %v90
  %2383 = vmatprep.subr.mxu0 %v87
  %2384 = vmatpush1.msra.mxu0 %v86
  %2385 = vmatprep.subr.mxu0 %v83
  %2386 = vmatpush1.msra.mxu0 %v82
  %2387 = vmatprep.subr.mxu0 %v79
  %2388 = vmatpush1.msra.mxu0 %v78
  %2389 = vmatprep.subr.mxu0 %v75
  %2390 = vmatpush1.msra.mxu0 %v74
  %2391 = vmatprep.subr.mxu0 %v71
  %2392 = vmatpush1.msra.mxu0 %v70
  %2393 = vmatprep.subr.mxu0 %v67
  %2394 = vmatpush1.msra.mxu0 %v66
  %2395 = vmatprep.subr.mxu0 %v63
  %2396 = vmatpush1.msra.mxu0 %v62
  %2397 = vmatprep.subr.mxu0 %v59
  %2398 = vmatpush1.msra.mxu0 %v58
  %2399 = vmatprep.subr.mxu0 %v55
  %2400 = vmatpush1.msra.mxu0 %v54
  %2401 = vmatprep.subr.mxu0 %v51
  %2402 = vmatpush1.msra.mxu0 %v50
  %2403 = vmatprep.subr.mxu0 %v47
  %2404 = vmatpush1.msra.mxu0 %v46
  %2405 = vmatprep.subr.mxu0 %v43
  %2406 = vmatpush1.msra.mxu0 %v42
  %2407 = vmatprep.subr.mxu0 %v167
  %2408 = vmatpush2.msra.mxu0 %v166
  %2409 = vmatprep.subr.mxu0 %v163
  %2410 = vmatpush2.msra.mxu0 %v162
  %2411 = vmatprep.subr.mxu0 %v159
  %2412 = vmatpush2.msra.mxu0 %v158
  %2413 = vmatprep.subr.mxu0 %v155
  %2414 = vmatpush2.msra.mxu0 %v154
  %2415 = vmatprep.subr.mxu0 %v151
  %2416 = vmatpush2.msra.mxu0 %v150
  %2417 = vmatprep.subr.mxu0 %v147
  %2418 = vmatpush2.msra.mxu0 %v146
  %2419 = vmatprep.subr.mxu0 %v143
  %2420 = vmatpush2.msra.mxu0 %v142
  %2421 = vmatprep.subr.mxu0 %v139
  %2422 = vmatpush2.msra.mxu0 %v138
  %2423 = vmatprep.subr.mxu0 %v135
  %2424 = vmatpush2.msra.mxu0 %v134
  %2425 = vmatprep.subr.mxu0 %v131
  %2426 = vmatpush2.msra.mxu0 %v130
  %2427 = vmatprep.subr.mxu0 %v127
  %2428 = vmatpush2.msra.mxu0 %v126
  %2429 = vmatprep.subr.mxu0 %v123
  %2430 = vmatpush2.msra.mxu0 %v122
  %2431 = vmatprep.subr.mxu0 %v119
  %2432 = vmatpush2.msra.mxu0 %v118
  %2433 = vmatprep.subr.mxu0 %v115
  %2434 = vmatpush2.msra.mxu0 %v114
  %2435 = vmatprep.subr.mxu0 %v111
  %2436 = vmatpush2.msra.mxu0 %v110
  %2437 = vmatprep.subr.mxu0 %v107
  %2438 = vmatpush2.msra.mxu0 %v106
  %2439 = vmatprep.mubr.f32.mxu0 %v2227
  %2440 = vmatmul.mubr.f32.gmra.mxu0 %v2219
  %v2441 = vpop.f32.mrf.mxu0
  %v2442 = vadd.f32 0.0, %v2441
  %v2443 = vpop.f32.mrf.mxu0
  %v2444 = vadd.f32 0.0, %v2443
  %2445 = vdwg.mxu0
  %2446 = vmatprep.subr.mxu0 %v231
  %2447 = vmatpush1.msra.mxu0 %v230
  %2448 = vmatprep.subr.mxu0 %v227
  %2449 = vmatpush1.msra.mxu0 %v226
  %2450 = vmatprep.subr.mxu0 %v223
  %2451 = vmatpush1.msra.mxu0 %v222
  %2452 = vmatprep.subr.mxu0 %v219
  %2453 = vmatpush1.msra.mxu0 %v218
  %2454 = vmatprep.subr.mxu0 %v215
  %2455 = vmatpush1.msra.mxu0 %v214
  %2456 = vmatprep.subr.mxu0 %v211
  %2457 = vmatpush1.msra.mxu0 %v210
  %2458 = vmatprep.subr.mxu0 %v207
  %2459 = vmatpush1.msra.mxu0 %v206
  %2460 = vmatprep.subr.mxu0 %v203
  %2461 = vmatpush1.msra.mxu0 %v202
  %2462 = vmatprep.subr.mxu0 %v199
  %2463 = vmatpush1.msra.mxu0 %v198
  %2464 = vmatprep.subr.mxu0 %v195
  %2465 = vmatpush1.msra.mxu0 %v194
  %2466 = vmatprep.subr.mxu0 %v191
  %2467 = vmatpush1.msra.mxu0 %v190
  %2468 = vmatprep.subr.mxu0 %v187
  %2469 = vmatpush1.msra.mxu0 %v186
  %2470 = vmatprep.subr.mxu0 %v183
  %2471 = vmatpush1.msra.mxu0 %v182
  %2472 = vmatprep.subr.mxu0 %v179
  %2473 = vmatpush1.msra.mxu0 %v178
  %2474 = vmatprep.subr.mxu0 %v175
  %2475 = vmatpush1.msra.mxu0 %v174
  %2476 = vmatprep.subr.mxu0 %v171
  %2477 = vmatpush1.msra.mxu0 %v170
  %2478 = vmatprep.subr.mxu0 %v295
  %2479 = vmatpush2.msra.mxu0 %v294
  %2480 = vmatprep.subr.mxu0 %v291
  %2481 = vmatpush2.msra.mxu0 %v290
  %2482 = vmatprep.subr.mxu0 %v287
  %2483 = vmatpush2.msra.mxu0 %v286
  %2484 = vmatprep.subr.mxu0 %v283
  %2485 = vmatpush2.msra.mxu0 %v282
  %2486 = vmatprep.subr.mxu0 %v279
  %2487 = vmatpush2.msra.mxu0 %v278
  %2488 = vmatprep.subr.mxu0 %v275
  %2489 = vmatpush2.msra.mxu0 %v274
  %2490 = vmatprep.subr.mxu0 %v271
  %2491 = vmatpush2.msra.mxu0 %v270
  %2492 = vmatprep.subr.mxu0 %v267
  %2493 = vmatpush2.msra.mxu0 %v266
  %2494 = vmatprep.subr.mxu0 %v263
  %2495 = vmatpush2.msra.mxu0 %v262
  %2496 = vmatprep.subr.mxu0 %v259
  %2497 = vmatpush2.msra.mxu0 %v258
  %2498 = vmatprep.subr.mxu0 %v255
  %2499 = vmatpush2.msra.mxu0 %v254
  %2500 = vmatprep.subr.mxu0 %v251
  %2501 = vmatpush2.msra.mxu0 %v250
  %2502 = vmatprep.subr.mxu0 %v247
  %2503 = vmatpush2.msra.mxu0 %v246
  %2504 = vmatprep.subr.mxu0 %v243
  %2505 = vmatpush2.msra.mxu0 %v242
  %2506 = vmatprep.subr.mxu0 %v239
  %2507 = vmatpush2.msra.mxu0 %v238
  %2508 = vmatprep.subr.mxu0 %v235
  %2509 = vmatpush2.msra.mxu0 %v234
  %2510 = vmatprep.mubr.f32.mxu0 %v2228
  %2511 = vmatmul.mubr.f32.gmra.mxu0 %v2226
  %v2512 = vpop.f32.mrf.mxu0
  %v2513 = vadd.f32 %v2442, %v2512
  %v2514 = vpop.f32.mrf.mxu0
  %v2515 = vadd.f32 %v2444, %v2514
  %2516 = vdwg.mxu0
  %v2517 = vmul.f32 %v557, %v2371
  %v2518 = vmul.f32 %v557, %v2373
  %v2519 = vmul.f32 %v557, %v2513
  %v2520 = vmul.f32 %v557, %v2515
  %2521 = vmatprep.subr.mxu0 %v358
  %2522 = vmatpush1.msra.mxu0 %v357
  %2523 = vmatprep.subr.mxu0 %v354
  %2524 = vmatpush1.msra.mxu0 %v353
  %2525 = vmatprep.subr.mxu0 %v350
  %2526 = vmatpush1.msra.mxu0 %v349
  %2527 = vmatprep.subr.mxu0 %v346
  %2528 = vmatpush1.msra.mxu0 %v345
  %2529 = vmatprep.subr.mxu0 %v342
  %2530 = vmatpush1.msra.mxu0 %v341
  %2531 = vmatprep.subr.mxu0 %v338
  %2532 = vmatpush1.msra.mxu0 %v337
  %2533 = vmatprep.subr.mxu0 %v334
  %2534 = vmatpush1.msra.mxu0 %v333
  %2535 = vmatprep.subr.mxu0 %v330
  %2536 = vmatpush1.msra.mxu0 %v329
  %2537 = vmatprep.subr.mxu0 %v326
  %2538 = vmatpush1.msra.mxu0 %v325
  %2539 = vmatprep.subr.mxu0 %v322
  %2540 = vmatpush1.msra.mxu0 %v321
  %2541 = vmatprep.subr.mxu0 %v318
  %2542 = vmatpush1.msra.mxu0 %v317
  %2543 = vmatprep.subr.mxu0 %v314
  %2544 = vmatpush1.msra.mxu0 %v313
  %2545 = vmatprep.subr.mxu0 %v310
  %2546 = vmatpush1.msra.mxu0 %v309
  %2547 = vmatprep.subr.mxu0 %v306
  %2548 = vmatpush1.msra.mxu0 %v305
  %2549 = vmatprep.subr.mxu0 %v302
  %2550 = vmatpush1.msra.mxu0 %v301
  %2551 = vmatprep.subr.mxu0 %v298
  %2552 = vmatpush1.msra.mxu0 %v297
  %2553 = vmatprep.subr.mxu0 %v422
  %2554 = vmatpush2.msra.mxu0 %v421
  %2555 = vmatprep.subr.mxu0 %v418
  %2556 = vmatpush2.msra.mxu0 %v417
  %2557 = vmatprep.subr.mxu0 %v414
  %2558 = vmatpush2.msra.mxu0 %v413
  %2559 = vmatprep.subr.mxu0 %v410
  %2560 = vmatpush2.msra.mxu0 %v409
  %2561 = vmatprep.subr.mxu0 %v406
  %2562 = vmatpush2.msra.mxu0 %v405
  %2563 = vmatprep.subr.mxu0 %v402
  %2564 = vmatpush2.msra.mxu0 %v401
  %2565 = vmatprep.subr.mxu0 %v398
  %2566 = vmatpush2.msra.mxu0 %v397
  %2567 = vmatprep.subr.mxu0 %v394
  %2568 = vmatpush2.msra.mxu0 %v393
  %2569 = vmatprep.subr.mxu0 %v390
  %2570 = vmatpush2.msra.mxu0 %v389
  %2571 = vmatprep.subr.mxu0 %v386
  %2572 = vmatpush2.msra.mxu0 %v385
  %2573 = vmatprep.subr.mxu0 %v382
  %2574 = vmatpush2.msra.mxu0 %v381
  %2575 = vmatprep.subr.mxu0 %v378
  %2576 = vmatpush2.msra.mxu0 %v377
  %2577 = vmatprep.subr.mxu0 %v374
  %2578 = vmatpush2.msra.mxu0 %v373
  %2579 = vmatprep.subr.mxu0 %v370
  %2580 = vmatpush2.msra.mxu0 %v369
  %2581 = vmatprep.subr.mxu0 %v366
  %2582 = vmatpush2.msra.mxu0 %v365
  %2583 = vmatprep.subr.mxu0 %v362
  %2584 = vmatpush2.msra.mxu0 %v361
  %2585 = vmatprep.mubr.f32.mxu0 %v2227
  %2586 = vmatmul.mubr.f32.gmra.mxu0 %v2219
  %v2587 = vpop.f32.mrf.mxu0
  %v2588 = vadd.f32 0.0, %v2587
  %v2589 = vpop.f32.mrf.mxu0
  %v2590 = vadd.f32 0.0, %v2589
  %2591 = vdwg.mxu0
  %2592 = vmatprep.subr.mxu0 %v486
  %2593 = vmatpush1.msra.mxu0 %v485
  %2594 = vmatprep.subr.mxu0 %v482
  %2595 = vmatpush1.msra.mxu0 %v481
  %2596 = vmatprep.subr.mxu0 %v478
  %2597 = vmatpush1.msra.mxu0 %v477
  %2598 = vmatprep.subr.mxu0 %v474
  %2599 = vmatpush1.msra.mxu0 %v473
  %2600 = vmatprep.subr.mxu0 %v470
  %2601 = vmatpush1.msra.mxu0 %v469
  %2602 = vmatprep.subr.mxu0 %v466
  %2603 = vmatpush1.msra.mxu0 %v465
  %2604 = vmatprep.subr.mxu0 %v462
  %2605 = vmatpush1.msra.mxu0 %v461
  %2606 = vmatprep.subr.mxu0 %v458
  %2607 = vmatpush1.msra.mxu0 %v457
  %2608 = vmatprep.subr.mxu0 %v454
  %2609 = vmatpush1.msra.mxu0 %v453
  %2610 = vmatprep.subr.mxu0 %v450
  %2611 = vmatpush1.msra.mxu0 %v449
  %2612 = vmatprep.subr.mxu0 %v446
  %2613 = vmatpush1.msra.mxu0 %v445
  %2614 = vmatprep.subr.mxu0 %v442
  %2615 = vmatpush1.msra.mxu0 %v441
  %2616 = vmatprep.subr.mxu0 %v438
  %2617 = vmatpush1.msra.mxu0 %v437
  %2618 = vmatprep.subr.mxu0 %v434
  %2619 = vmatpush1.msra.mxu0 %v433
  %2620 = vmatprep.subr.mxu0 %v430
  %2621 = vmatpush1.msra.mxu0 %v429
  %2622 = vmatprep.subr.mxu0 %v426
  %2623 = vmatpush1.msra.mxu0 %v425
  %2624 = vmatprep.subr.mxu0 %v550
  %2625 = vmatpush2.msra.mxu0 %v549
  %2626 = vmatprep.subr.mxu0 %v546
  %2627 = vmatpush2.msra.mxu0 %v545
  %2628 = vmatprep.subr.mxu0 %v542
  %2629 = vmatpush2.msra.mxu0 %v541
  %2630 = vmatprep.subr.mxu0 %v538
  %2631 = vmatpush2.msra.mxu0 %v537
  %2632 = vmatprep.subr.mxu0 %v534
  %2633 = vmatpush2.msra.mxu0 %v533
  %2634 = vmatprep.subr.mxu0 %v530
  %2635 = vmatpush2.msra.mxu0 %v529
  %2636 = vmatprep.subr.mxu0 %v526
  %2637 = vmatpush2.msra.mxu0 %v525
  %2638 = vmatprep.subr.mxu0 %v522
  %2639 = vmatpush2.msra.mxu0 %v521
  %2640 = vmatprep.subr.mxu0 %v518
  %2641 = vmatpush2.msra.mxu0 %v517
  %2642 = vmatprep.subr.mxu0 %v514
  %2643 = vmatpush2.msra.mxu0 %v513
  %2644 = vmatprep.subr.mxu0 %v510
  %2645 = vmatpush2.msra.mxu0 %v509
  %2646 = vmatprep.subr.mxu0 %v506
  %2647 = vmatpush2.msra.mxu0 %v505
  %2648 = vmatprep.subr.mxu0 %v502
  %2649 = vmatpush2.msra.mxu0 %v501
  %2650 = vmatprep.subr.mxu0 %v498
  %2651 = vmatpush2.msra.mxu0 %v497
  %2652 = vmatprep.subr.mxu0 %v494
  %2653 = vmatpush2.msra.mxu0 %v493
  %2654 = vmatprep.subr.mxu0 %v490
  %2655 = vmatpush2.msra.mxu0 %v489
  %2656 = vmatprep.mubr.f32.mxu0 %v2228
  %2657 = vmatmul.mubr.f32.gmra.mxu0 %v2226
  %v2658 = vpop.f32.mrf.mxu0
  %v2659 = vadd.f32 %v2588, %v2658
  %v2660 = vpop.f32.mrf.mxu0
  %v2661 = vadd.f32 %v2590, %v2660
  %2662 = vdwg.mxu0
  %2663 = vmatprep.subr.mxu0 %v360
  %2664 = vmatpush1.msra.mxu0 %v359
  %2665 = vmatprep.subr.mxu0 %v356
  %2666 = vmatpush1.msra.mxu0 %v355
  %2667 = vmatprep.subr.mxu0 %v352
  %2668 = vmatpush1.msra.mxu0 %v351
  %2669 = vmatprep.subr.mxu0 %v348
  %2670 = vmatpush1.msra.mxu0 %v347
  %2671 = vmatprep.subr.mxu0 %v344
  %2672 = vmatpush1.msra.mxu0 %v343
  %2673 = vmatprep.subr.mxu0 %v340
  %2674 = vmatpush1.msra.mxu0 %v339
  %2675 = vmatprep.subr.mxu0 %v336
  %2676 = vmatpush1.msra.mxu0 %v335
  %2677 = vmatprep.subr.mxu0 %v332
  %2678 = vmatpush1.msra.mxu0 %v331
  %2679 = vmatprep.subr.mxu0 %v328
  %2680 = vmatpush1.msra.mxu0 %v327
  %2681 = vmatprep.subr.mxu0 %v324
  %2682 = vmatpush1.msra.mxu0 %v323
  %2683 = vmatprep.subr.mxu0 %v320
  %2684 = vmatpush1.msra.mxu0 %v319
  %2685 = vmatprep.subr.mxu0 %v316
  %2686 = vmatpush1.msra.mxu0 %v315
  %2687 = vmatprep.subr.mxu0 %v312
  %2688 = vmatpush1.msra.mxu0 %v311
  %2689 = vmatprep.subr.mxu0 %v308
  %2690 = vmatpush1.msra.mxu0 %v307
  %2691 = vmatprep.subr.mxu0 %v304
  %2692 = vmatpush1.msra.mxu0 %v303
  %2693 = vmatprep.subr.mxu0 %v300
  %2694 = vmatpush1.msra.mxu0 %v299
  %2695 = vmatprep.subr.mxu0 %v424
  %2696 = vmatpush2.msra.mxu0 %v423
  %2697 = vmatprep.subr.mxu0 %v420
  %2698 = vmatpush2.msra.mxu0 %v419
  %2699 = vmatprep.subr.mxu0 %v416
  %2700 = vmatpush2.msra.mxu0 %v415
  %2701 = vmatprep.subr.mxu0 %v412
  %2702 = vmatpush2.msra.mxu0 %v411
  %2703 = vmatprep.subr.mxu0 %v408
  %2704 = vmatpush2.msra.mxu0 %v407
  %2705 = vmatprep.subr.mxu0 %v404
  %2706 = vmatpush2.msra.mxu0 %v403
  %2707 = vmatprep.subr.mxu0 %v400
  %2708 = vmatpush2.msra.mxu0 %v399
  %2709 = vmatprep.subr.mxu0 %v396
  %2710 = vmatpush2.msra.mxu0 %v395
  %2711 = vmatprep.subr.mxu0 %v392
  %2712 = vmatpush2.msra.mxu0 %v391
  %2713 = vmatprep.subr.mxu0 %v388
  %2714 = vmatpush2.msra.mxu0 %v387
  %2715 = vmatprep.subr.mxu0 %v384
  %2716 = vmatpush2.msra.mxu0 %v383
  %2717 = vmatprep.subr.mxu0 %v380
  %2718 = vmatpush2.msra.mxu0 %v379
  %2719 = vmatprep.subr.mxu0 %v376
  %2720 = vmatpush2.msra.mxu0 %v375
  %2721 = vmatprep.subr.mxu0 %v372
  %2722 = vmatpush2.msra.mxu0 %v371
  %2723 = vmatprep.subr.mxu0 %v368
  %2724 = vmatpush2.msra.mxu0 %v367
  %2725 = vmatprep.subr.mxu0 %v364
  %2726 = vmatpush2.msra.mxu0 %v363
  %2727 = vmatprep.mubr.f32.mxu0 %v2227
  %2728 = vmatmul.mubr.f32.gmra.mxu0 %v2219
  %v2729 = vpop.f32.mrf.mxu0
  %v2730 = vadd.f32 0.0, %v2729
  %v2731 = vpop.f32.mrf.mxu0
  %v2732 = vadd.f32 0.0, %v2731
  %2733 = vdwg.mxu0
  %2734 = vmatprep.subr.mxu0 %v488
  %2735 = vmatpush1.msra.mxu0 %v487
  %2736 = vmatprep.subr.mxu0 %v484
  %2737 = vmatpush1.msra.mxu0 %v483
  %2738 = vmatprep.subr.mxu0 %v480
  %2739 = vmatpush1.msra.mxu0 %v479
  %2740 = vmatprep.subr.mxu0 %v476
  %2741 = vmatpush1.msra.mxu0 %v475
  %2742 = vmatprep.subr.mxu0 %v472
  %2743 = vmatpush1.msra.mxu0 %v471
  %2744 = vmatprep.subr.mxu0 %v468
  %2745 = vmatpush1.msra.mxu0 %v467
  %2746 = vmatprep.subr.mxu0 %v464
  %2747 = vmatpush1.msra.mxu0 %v463
  %2748 = vmatprep.subr.mxu0 %v460
  %2749 = vmatpush1.msra.mxu0 %v459
  %2750 = vmatprep.subr.mxu0 %v456
  %2751 = vmatpush1.msra.mxu0 %v455
  %2752 = vmatprep.subr.mxu0 %v452
  %2753 = vmatpush1.msra.mxu0 %v451
  %2754 = vmatprep.subr.mxu0 %v448
  %2755 = vmatpush1.msra.mxu0 %v447
  %2756 = vmatprep.subr.mxu0 %v444
  %2757 = vmatpush1.msra.mxu0 %v443
  %2758 = vmatprep.subr.mxu0 %v440
  %2759 = vmatpush1.msra.mxu0 %v439
  %2760 = vmatprep.subr.mxu0 %v436
  %2761 = vmatpush1.msra.mxu0 %v435
  %2762 = vmatprep.subr.mxu0 %v432
  %2763 = vmatpush1.msra.mxu0 %v431
  %2764 = vmatprep.subr.mxu0 %v428
  %2765 = vmatpush1.msra.mxu0 %v427
  %2766 = vmatprep.subr.mxu0 %v552
  %2767 = vmatpush2.msra.mxu0 %v551
  %2768 = vmatprep.subr.mxu0 %v548
  %2769 = vmatpush2.msra.mxu0 %v547
  %2770 = vmatprep.subr.mxu0 %v544
  %2771 = vmatpush2.msra.mxu0 %v543
  %2772 = vmatprep.subr.mxu0 %v540
  %2773 = vmatpush2.msra.mxu0 %v539
  %2774 = vmatprep.subr.mxu0 %v536
  %2775 = vmatpush2.msra.mxu0 %v535
  %2776 = vmatprep.subr.mxu0 %v532
  %2777 = vmatpush2.msra.mxu0 %v531
  %2778 = vmatprep.subr.mxu0 %v528
  %2779 = vmatpush2.msra.mxu0 %v527
  %2780 = vmatprep.subr.mxu0 %v524
  %2781 = vmatpush2.msra.mxu0 %v523
  %2782 = vmatprep.subr.mxu0 %v520
  %2783 = vmatpush2.msra.mxu0 %v519
  %2784 = vmatprep.subr.mxu0 %v516
  %2785 = vmatpush2.msra.mxu0 %v515
  %2786 = vmatprep.subr.mxu0 %v512
  %2787 = vmatpush2.msra.mxu0 %v511
  %2788 = vmatprep.subr.mxu0 %v508
  %2789 = vmatpush2.msra.mxu0 %v507
  %2790 = vmatprep.subr.mxu0 %v504
  %2791 = vmatpush2.msra.mxu0 %v503
  %2792 = vmatprep.subr.mxu0 %v500
  %2793 = vmatpush2.msra.mxu0 %v499
  %2794 = vmatprep.subr.mxu0 %v496
  %2795 = vmatpush2.msra.mxu0 %v495
  %2796 = vmatprep.subr.mxu0 %v492
  %2797 = vmatpush2.msra.mxu0 %v491
  %2798 = vmatprep.mubr.f32.mxu0 %v2228
  %2799 = vmatmul.mubr.f32.gmra.mxu0 %v2226
  %v2800 = vpop.f32.mrf.mxu0
  %v2801 = vadd.f32 %v2730, %v2800
  %v2802 = vpop.f32.mrf.mxu0
  %v2803 = vadd.f32 %v2732, %v2802
  %2804 = vdwg.mxu0
  %v2805 = vmul.f32 %v560, %v2659
  %v2806 = vmul.f32 %v560, %v2661
  %v2807 = vmul.f32 %v560, %v2801
  %v2808 = vmul.f32 %v560, %v2803
  %v2809 = vadd.f32 %v2517, %v2805
  %v2810 = vadd.f32 %v2518, %v2806
  %v2811 = vadd.f32 %v2519, %v2807
  %v2812 = vadd.f32 %v2520, %v2808
  %v2817 = vcombine.low %v2809, %v2810
  %v2818 = vcombine.low %v2811, %v2812
  %v2820 = vunpack.c.l.s4 1983009808
  %v2821 = vunpack.c.0.s8 %v2820
  %v2822 = vlaneseq
  %v2823 = vshrl.u32 %v2822, 7
  %v2824 = vsub.s32 %v2821, %v2823
  %v2825 = vrot.slane %v2817, %v2824
  %v2827 = vunpack.c.l.s4 1983009808
  %v2828 = vunpack.c.0.s8 %v2827
  %v2829 = vlaneseq
  %v2830 = vshrl.u32 %v2829, 7
  %v2831 = vsub.s32 %v2828, %v2830
  %v2832 = vrot.slane %v2818, %v2831
  %v2833 = vcombine.low %v2825, %v2832
  %v2835 = vsub.f32 %v2210, %v2833
  %v2836 = vmul.f32 %v2835, %v2835
  %v2838 = vcombine.high %v2836, %v2836
  %v2840 = vunpack.c.l.s4 1983009808
  %v2841 = vunpack.c.0.s8 %v2840
  %v2842 = vlaneseq
  %v2843 = vshrl.u32 %v2842, 7
  %v2844 = vsub.s32 %v2841, %v2843
  %v2845 = vrot.slane %v2836, %v2844
  %v2847 = vunpack.c.l.s4 1983009808
  %v2848 = vunpack.c.0.s8 %v2847
  %v2849 = vlaneseq
  %v2850 = vshrl.u32 %v2849, 7
  %v2851 = vsub.s32 %v2848, %v2850
  %v2852 = vrot.slane %v2838, %v2851
  %v2853 = vcombine.high %v2845, %v2845
  %v2854 = vcombine.high %v2852, %v2852
  %vm2859 = vcmask 1041408
  %v2860 = vsel %vm2859, %v2845, 0.0
  %v2861 = vsel %vm2859, %v2853, 0.0
  %v2862 = vadd.f32 %v2860, %v2861
  %v2863 = vsel %vm2859, %v2852, 0.0
  %v2864 = vadd.f32 %v2862, %v2863
  %v2865 = vsel %vm2859, %v2854, 0.0
  %v2866 = vadd.f32 %v2864, %v2865
  %2867 = vadd.xlane.f32.xlu0 %v2866
  %v2868 = vpop.xlane.xlu0 %2867
  %v2869 = vsel %vm2859, %v2868, -inf
  %v2870 = vrot.slane %v2869, 4
  %v2871 = vmax.f32 %v2869, %v2870
  %v2872 = vrot.slane %v2871, 2
  %v2873 = vmax.f32 %v2871, %v2872
  %v2874 = vrot.slane %v2873, 1
  %v2875 = vmax.f32 %v2873, %v2874
  %s2876 = vtos %v2875
  %v2877 = vstv %s2876
  %vm2878 = vcmp.ge.f32.partialorder %v2877, 1e-10
  %v2880 = vcombine.high %v2835, %v2835
  %v2882 = vunpack.c.l.s4 1983009808
  %v2883 = vunpack.c.0.s8 %v2882
  %v2884 = vlaneseq
  %v2885 = vshrl.u32 %v2884, 7
  %v2886 = vsub.s32 %v2883, %v2885
  %v2887 = vrot.slane %v2835, %v2886
  %v2889 = vunpack.c.l.s4 1983009808
  %v2890 = vunpack.c.0.s8 %v2889
  %v2891 = vlaneseq
  %v2892 = vshrl.u32 %v2891, 7
  %v2893 = vsub.s32 %v2890, %v2892
  %v2894 = vrot.slane %v2880, %v2893
  %v2895 = vcombine.high %v2887, %v2887
  %v2896 = vcombine.high %v2894, %v2894
  %2901 = vmatprep.subr.mxu0 %v101
  %2902 = vmatpush1.msra.mxu0 %v100
  %2903 = vmatprep.subr.mxu0 %v97
  %2904 = vmatpush1.msra.mxu0 %v96
  %2905 = vmatprep.subr.mxu0 %v93
  %2906 = vmatpush1.msra.mxu0 %v92
  %2907 = vmatprep.subr.mxu0 %v89
  %2908 = vmatpush1.msra.mxu0 %v88
  %2909 = vmatprep.subr.mxu0 %v85
  %2910 = vmatpush1.msra.mxu0 %v84
  %2911 = vmatprep.subr.mxu0 %v81
  %2912 = vmatpush1.msra.mxu0 %v80
  %2913 = vmatprep.subr.mxu0 %v77
  %2914 = vmatpush1.msra.mxu0 %v76
  %2915 = vmatprep.subr.mxu0 %v73
  %2916 = vmatpush1.msra.mxu0 %v72
  %2917 = vmatprep.subr.mxu0 %v69
  %2918 = vmatpush1.msra.mxu0 %v68
  %2919 = vmatprep.subr.mxu0 %v65
  %2920 = vmatpush1.msra.mxu0 %v64
  %2921 = vmatprep.subr.mxu0 %v61
  %2922 = vmatpush1.msra.mxu0 %v60
  %2923 = vmatprep.subr.mxu0 %v57
  %2924 = vmatpush1.msra.mxu0 %v56
  %2925 = vmatprep.subr.mxu0 %v53
  %2926 = vmatpush1.msra.mxu0 %v52
  %2927 = vmatprep.subr.mxu0 %v49
  %2928 = vmatpush1.msra.mxu0 %v48
  %2929 = vmatprep.subr.mxu0 %v45
  %2930 = vmatpush1.msra.mxu0 %v44
  %2931 = vmatprep.subr.mxu0 %v41
  %2932 = vmatpush1.msra.mxu0 %v40
  %2933 = vmatprep.subr.mxu0 %v165
  %2934 = vmatpush2.msra.mxu0 %v164
  %2935 = vmatprep.subr.mxu0 %v161
  %2936 = vmatpush2.msra.mxu0 %v160
  %2937 = vmatprep.subr.mxu0 %v157
  %2938 = vmatpush2.msra.mxu0 %v156
  %2939 = vmatprep.subr.mxu0 %v153
  %2940 = vmatpush2.msra.mxu0 %v152
  %2941 = vmatprep.subr.mxu0 %v149
  %2942 = vmatpush2.msra.mxu0 %v148
  %2943 = vmatprep.subr.mxu0 %v145
  %2944 = vmatpush2.msra.mxu0 %v144
  %2945 = vmatprep.subr.mxu0 %v141
  %2946 = vmatpush2.msra.mxu0 %v140
  %2947 = vmatprep.subr.mxu0 %v137
  %2948 = vmatpush2.msra.mxu0 %v136
  %2949 = vmatprep.subr.mxu0 %v133
  %2950 = vmatpush2.msra.mxu0 %v132
  %2951 = vmatprep.subr.mxu0 %v129
  %2952 = vmatpush2.msra.mxu0 %v128
  %2953 = vmatprep.subr.mxu0 %v125
  %2954 = vmatpush2.msra.mxu0 %v124
  %2955 = vmatprep.subr.mxu0 %v121
  %2956 = vmatpush2.msra.mxu0 %v120
  %2957 = vmatprep.subr.mxu0 %v117
  %2958 = vmatpush2.msra.mxu0 %v116
  %2959 = vmatprep.subr.mxu0 %v113
  %2960 = vmatpush2.msra.mxu0 %v112
  %2961 = vmatprep.subr.mxu0 %v109
  %2962 = vmatpush2.msra.mxu0 %v108
  %2963 = vmatprep.subr.mxu0 %v105
  %2964 = vmatpush2.msra.mxu0 %v104
  %2965 = vmatprep.mubr.f32.mxu0 %v2895
  %2966 = vmatmul.mubr.f32.gmra.mxu0 %v2887
  %v2967 = vpop.f32.mrf.mxu0
  %v2968 = vadd.f32 0.0, %v2967
  %v2969 = vpop.f32.mrf.mxu0
  %v2970 = vadd.f32 0.0, %v2969
  %2971 = vdwg.mxu0
  %2972 = vmatprep.subr.mxu0 %v229
  %2973 = vmatpush1.msra.mxu0 %v228
  %2974 = vmatprep.subr.mxu0 %v225
  %2975 = vmatpush1.msra.mxu0 %v224
  %2976 = vmatprep.subr.mxu0 %v221
  %2977 = vmatpush1.msra.mxu0 %v220
  %2978 = vmatprep.subr.mxu0 %v217
  %2979 = vmatpush1.msra.mxu0 %v216
  %2980 = vmatprep.subr.mxu0 %v213
  %2981 = vmatpush1.msra.mxu0 %v212
  %2982 = vmatprep.subr.mxu0 %v209
  %2983 = vmatpush1.msra.mxu0 %v208
  %2984 = vmatprep.subr.mxu0 %v205
  %2985 = vmatpush1.msra.mxu0 %v204
  %2986 = vmatprep.subr.mxu0 %v201
  %2987 = vmatpush1.msra.mxu0 %v200
  %2988 = vmatprep.subr.mxu0 %v197
  %2989 = vmatpush1.msra.mxu0 %v196
  %2990 = vmatprep.subr.mxu0 %v193
  %2991 = vmatpush1.msra.mxu0 %v192
  %2992 = vmatprep.subr.mxu0 %v189
  %2993 = vmatpush1.msra.mxu0 %v188
  %2994 = vmatprep.subr.mxu0 %v185
  %2995 = vmatpush1.msra.mxu0 %v184
  %2996 = vmatprep.subr.mxu0 %v181
  %2997 = vmatpush1.msra.mxu0 %v180
  %2998 = vmatprep.subr.mxu0 %v177
  %2999 = vmatpush1.msra.mxu0 %v176
  %3000 = vmatprep.subr.mxu0 %v173
  %3001 = vmatpush1.msra.mxu0 %v172
  %3002 = vmatprep.subr.mxu0 %v169
  %3003 = vmatpush1.msra.mxu0 %v168
  %3004 = vmatprep.subr.mxu0 %v293
  %3005 = vmatpush2.msra.mxu0 %v292
  %3006 = vmatprep.subr.mxu0 %v289
  %3007 = vmatpush2.msra.mxu0 %v288
  %3008 = vmatprep.subr.mxu0 %v285
  %3009 = vmatpush2.msra.mxu0 %v284
  %3010 = vmatprep.subr.mxu0 %v281
  %3011 = vmatpush2.msra.mxu0 %v280
  %3012 = vmatprep.subr.mxu0 %v277
  %3013 = vmatpush2.msra.mxu0 %v276
  %3014 = vmatprep.subr.mxu0 %v273
  %3015 = vmatpush2.msra.mxu0 %v272
  %3016 = vmatprep.subr.mxu0 %v269
  %3017 = vmatpush2.msra.mxu0 %v268
  %3018 = vmatprep.subr.mxu0 %v265
  %3019 = vmatpush2.msra.mxu0 %v264
  %3020 = vmatprep.subr.mxu0 %v261
  %3021 = vmatpush2.msra.mxu0 %v260
  %3022 = vmatprep.subr.mxu0 %v257
  %3023 = vmatpush2.msra.mxu0 %v256
  %3024 = vmatprep.subr.mxu0 %v253
  %3025 = vmatpush2.msra.mxu0 %v252
  %3026 = vmatprep.subr.mxu0 %v249
  %3027 = vmatpush2.msra.mxu0 %v248
  %3028 = vmatprep.subr.mxu0 %v245
  %3029 = vmatpush2.msra.mxu0 %v244
  %3030 = vmatprep.subr.mxu0 %v241
  %3031 = vmatpush2.msra.mxu0 %v240
  %3032 = vmatprep.subr.mxu0 %v237
  %3033 = vmatpush2.msra.mxu0 %v236
  %3034 = vmatprep.subr.mxu0 %v233
  %3035 = vmatpush2.msra.mxu0 %v232
  %3036 = vmatprep.mubr.f32.mxu0 %v2896
  %3037 = vmatmul.mubr.f32.gmra.mxu0 %v2894
  %v3038 = vpop.f32.mrf.mxu0
  %v3039 = vadd.f32 %v2968, %v3038
  %v3040 = vpop.f32.mrf.mxu0
  %v3041 = vadd.f32 %v2970, %v3040
  %3042 = vdwg.mxu0
  %3043 = vmatprep.subr.mxu0 %v103
  %3044 = vmatpush1.msra.mxu0 %v102
  %3045 = vmatprep.subr.mxu0 %v99
  %3046 = vmatpush1.msra.mxu0 %v98
  %3047 = vmatprep.subr.mxu0 %v95
  %3048 = vmatpush1.msra.mxu0 %v94
  %3049 = vmatprep.subr.mxu0 %v91
  %3050 = vmatpush1.msra.mxu0 %v90
  %3051 = vmatprep.subr.mxu0 %v87
  %3052 = vmatpush1.msra.mxu0 %v86
  %3053 = vmatprep.subr.mxu0 %v83
  %3054 = vmatpush1.msra.mxu0 %v82
  %3055 = vmatprep.subr.mxu0 %v79
  %3056 = vmatpush1.msra.mxu0 %v78
  %3057 = vmatprep.subr.mxu0 %v75
  %3058 = vmatpush1.msra.mxu0 %v74
  %3059 = vmatprep.subr.mxu0 %v71
  %3060 = vmatpush1.msra.mxu0 %v70
  %3061 = vmatprep.subr.mxu0 %v67
  %3062 = vmatpush1.msra.mxu0 %v66
  %3063 = vmatprep.subr.mxu0 %v63
  %3064 = vmatpush1.msra.mxu0 %v62
  %3065 = vmatprep.subr.mxu0 %v59
  %3066 = vmatpush1.msra.mxu0 %v58
  %3067 = vmatprep.subr.mxu0 %v55
  %3068 = vmatpush1.msra.mxu0 %v54
  %3069 = vmatprep.subr.mxu0 %v51
  %3070 = vmatpush1.msra.mxu0 %v50
  %3071 = vmatprep.subr.mxu0 %v47
  %3072 = vmatpush1.msra.mxu0 %v46
  %3073 = vmatprep.subr.mxu0 %v43
  %3074 = vmatpush1.msra.mxu0 %v42
  %3075 = vmatprep.subr.mxu0 %v167
  %3076 = vmatpush2.msra.mxu0 %v166
  %3077 = vmatprep.subr.mxu0 %v163
  %3078 = vmatpush2.msra.mxu0 %v162
  %3079 = vmatprep.subr.mxu0 %v159
  %3080 = vmatpush2.msra.mxu0 %v158
  %3081 = vmatprep.subr.mxu0 %v155
  %3082 = vmatpush2.msra.mxu0 %v154
  %3083 = vmatprep.subr.mxu0 %v151
  %3084 = vmatpush2.msra.mxu0 %v150
  %3085 = vmatprep.subr.mxu0 %v147
  %3086 = vmatpush2.msra.mxu0 %v146
  %3087 = vmatprep.subr.mxu0 %v143
  %3088 = vmatpush2.msra.mxu0 %v142
  %3089 = vmatprep.subr.mxu0 %v139
  %3090 = vmatpush2.msra.mxu0 %v138
  %3091 = vmatprep.subr.mxu0 %v135
  %3092 = vmatpush2.msra.mxu0 %v134
  %3093 = vmatprep.subr.mxu0 %v131
  %3094 = vmatpush2.msra.mxu0 %v130
  %3095 = vmatprep.subr.mxu0 %v127
  %3096 = vmatpush2.msra.mxu0 %v126
  %3097 = vmatprep.subr.mxu0 %v123
  %3098 = vmatpush2.msra.mxu0 %v122
  %3099 = vmatprep.subr.mxu0 %v119
  %3100 = vmatpush2.msra.mxu0 %v118
  %3101 = vmatprep.subr.mxu0 %v115
  %3102 = vmatpush2.msra.mxu0 %v114
  %3103 = vmatprep.subr.mxu0 %v111
  %3104 = vmatpush2.msra.mxu0 %v110
  %3105 = vmatprep.subr.mxu0 %v107
  %3106 = vmatpush2.msra.mxu0 %v106
  %3107 = vmatprep.mubr.f32.mxu0 %v2895
  %3108 = vmatmul.mubr.f32.gmra.mxu0 %v2887
  %v3109 = vpop.f32.mrf.mxu0
  %v3110 = vadd.f32 0.0, %v3109
  %v3111 = vpop.f32.mrf.mxu0
  %v3112 = vadd.f32 0.0, %v3111
  %3113 = vdwg.mxu0
  %3114 = vmatprep.subr.mxu0 %v231
  %3115 = vmatpush1.msra.mxu0 %v230
  %3116 = vmatprep.subr.mxu0 %v227
  %3117 = vmatpush1.msra.mxu0 %v226
  %3118 = vmatprep.subr.mxu0 %v223
  %3119 = vmatpush1.msra.mxu0 %v222
  %3120 = vmatprep.subr.mxu0 %v219
  %3121 = vmatpush1.msra.mxu0 %v218
  %3122 = vmatprep.subr.mxu0 %v215
  %3123 = vmatpush1.msra.mxu0 %v214
  %3124 = vmatprep.subr.mxu0 %v211
  %3125 = vmatpush1.msra.mxu0 %v210
  %3126 = vmatprep.subr.mxu0 %v207
  %3127 = vmatpush1.msra.mxu0 %v206
  %3128 = vmatprep.subr.mxu0 %v203
  %3129 = vmatpush1.msra.mxu0 %v202
  %3130 = vmatprep.subr.mxu0 %v199
  %3131 = vmatpush1.msra.mxu0 %v198
  %3132 = vmatprep.subr.mxu0 %v195
  %3133 = vmatpush1.msra.mxu0 %v194
  %3134 = vmatprep.subr.mxu0 %v191
  %3135 = vmatpush1.msra.mxu0 %v190
  %3136 = vmatprep.subr.mxu0 %v187
  %3137 = vmatpush1.msra.mxu0 %v186
  %3138 = vmatprep.subr.mxu0 %v183
  %3139 = vmatpush1.msra.mxu0 %v182
  %3140 = vmatprep.subr.mxu0 %v179
  %3141 = vmatpush1.msra.mxu0 %v178
  %3142 = vmatprep.subr.mxu0 %v175
  %3143 = vmatpush1.msra.mxu0 %v174
  %3144 = vmatprep.subr.mxu0 %v171
  %3145 = vmatpush1.msra.mxu0 %v170
  %3146 = vmatprep.subr.mxu0 %v295
  %3147 = vmatpush2.msra.mxu0 %v294
  %3148 = vmatprep.subr.mxu0 %v291
  %3149 = vmatpush2.msra.mxu0 %v290
  %3150 = vmatprep.subr.mxu0 %v287
  %3151 = vmatpush2.msra.mxu0 %v286
  %3152 = vmatprep.subr.mxu0 %v283
  %3153 = vmatpush2.msra.mxu0 %v282
  %3154 = vmatprep.subr.mxu0 %v279
  %3155 = vmatpush2.msra.mxu0 %v278
  %3156 = vmatprep.subr.mxu0 %v275
  %3157 = vmatpush2.msra.mxu0 %v274
  %3158 = vmatprep.subr.mxu0 %v271
  %3159 = vmatpush2.msra.mxu0 %v270
  %3160 = vmatprep.subr.mxu0 %v267
  %3161 = vmatpush2.msra.mxu0 %v266
  %3162 = vmatprep.subr.mxu0 %v263
  %3163 = vmatpush2.msra.mxu0 %v262
  %3164 = vmatprep.subr.mxu0 %v259
  %3165 = vmatpush2.msra.mxu0 %v258
  %3166 = vmatprep.subr.mxu0 %v255
  %3167 = vmatpush2.msra.mxu0 %v254
  %3168 = vmatprep.subr.mxu0 %v251
  %3169 = vmatpush2.msra.mxu0 %v250
  %3170 = vmatprep.subr.mxu0 %v247
  %3171 = vmatpush2.msra.mxu0 %v246
  %3172 = vmatprep.subr.mxu0 %v243
  %3173 = vmatpush2.msra.mxu0 %v242
  %3174 = vmatprep.subr.mxu0 %v239
  %3175 = vmatpush2.msra.mxu0 %v238
  %3176 = vmatprep.subr.mxu0 %v235
  %3177 = vmatpush2.msra.mxu0 %v234
  %3178 = vmatprep.mubr.f32.mxu0 %v2896
  %3179 = vmatmul.mubr.f32.gmra.mxu0 %v2894
  %v3180 = vpop.f32.mrf.mxu0
  %v3181 = vadd.f32 %v3110, %v3180
  %v3182 = vpop.f32.mrf.mxu0
  %v3183 = vadd.f32 %v3112, %v3182
  %3184 = vdwg.mxu0
  %v3185 = vmul.f32 %v557, %v3039
  %v3186 = vmul.f32 %v557, %v3041
  %v3187 = vmul.f32 %v557, %v3181
  %v3188 = vmul.f32 %v557, %v3183
  %3189 = vmatprep.subr.mxu0 %v358
  %3190 = vmatpush1.msra.mxu0 %v357
  %3191 = vmatprep.subr.mxu0 %v354
  %3192 = vmatpush1.msra.mxu0 %v353
  %3193 = vmatprep.subr.mxu0 %v350
  %3194 = vmatpush1.msra.mxu0 %v349
  %3195 = vmatprep.subr.mxu0 %v346
  %3196 = vmatpush1.msra.mxu0 %v345
  %3197 = vmatprep.subr.mxu0 %v342
  %3198 = vmatpush1.msra.mxu0 %v341
  %3199 = vmatprep.subr.mxu0 %v338
  %3200 = vmatpush1.msra.mxu0 %v337
  %3201 = vmatprep.subr.mxu0 %v334
  %3202 = vmatpush1.msra.mxu0 %v333
  %3203 = vmatprep.subr.mxu0 %v330
  %3204 = vmatpush1.msra.mxu0 %v329
  %3205 = vmatprep.subr.mxu0 %v326
  %3206 = vmatpush1.msra.mxu0 %v325
  %3207 = vmatprep.subr.mxu0 %v322
  %3208 = vmatpush1.msra.mxu0 %v321
  %3209 = vmatprep.subr.mxu0 %v318
  %3210 = vmatpush1.msra.mxu0 %v317
  %3211 = vmatprep.subr.mxu0 %v314
  %3212 = vmatpush1.msra.mxu0 %v313
  %3213 = vmatprep.subr.mxu0 %v310
  %3214 = vmatpush1.msra.mxu0 %v309
  %3215 = vmatprep.subr.mxu0 %v306
  %3216 = vmatpush1.msra.mxu0 %v305
  %3217 = vmatprep.subr.mxu0 %v302
  %3218 = vmatpush1.msra.mxu0 %v301
  %3219 = vmatprep.subr.mxu0 %v298
  %3220 = vmatpush1.msra.mxu0 %v297
  %3221 = vmatprep.subr.mxu0 %v422
  %3222 = vmatpush2.msra.mxu0 %v421
  %3223 = vmatprep.subr.mxu0 %v418
  %3224 = vmatpush2.msra.mxu0 %v417
  %3225 = vmatprep.subr.mxu0 %v414
  %3226 = vmatpush2.msra.mxu0 %v413
  %3227 = vmatprep.subr.mxu0 %v410
  %3228 = vmatpush2.msra.mxu0 %v409
  %3229 = vmatprep.subr.mxu0 %v406
  %3230 = vmatpush2.msra.mxu0 %v405
  %3231 = vmatprep.subr.mxu0 %v402
  %3232 = vmatpush2.msra.mxu0 %v401
  %3233 = vmatprep.subr.mxu0 %v398
  %3234 = vmatpush2.msra.mxu0 %v397
  %3235 = vmatprep.subr.mxu0 %v394
  %3236 = vmatpush2.msra.mxu0 %v393
  %3237 = vmatprep.subr.mxu0 %v390
  %3238 = vmatpush2.msra.mxu0 %v389
  %3239 = vmatprep.subr.mxu0 %v386
  %3240 = vmatpush2.msra.mxu0 %v385
  %3241 = vmatprep.subr.mxu0 %v382
  %3242 = vmatpush2.msra.mxu0 %v381
  %3243 = vmatprep.subr.mxu0 %v378
  %3244 = vmatpush2.msra.mxu0 %v377
  %3245 = vmatprep.subr.mxu0 %v374
  %3246 = vmatpush2.msra.mxu0 %v373
  %3247 = vmatprep.subr.mxu0 %v370
  %3248 = vmatpush2.msra.mxu0 %v369
  %3249 = vmatprep.subr.mxu0 %v366
  %3250 = vmatpush2.msra.mxu0 %v365
  %3251 = vmatprep.subr.mxu0 %v362
  %3252 = vmatpush2.msra.mxu0 %v361
  %3253 = vmatprep.mubr.f32.mxu0 %v2895
  %3254 = vmatmul.mubr.f32.gmra.mxu0 %v2887
  %v3255 = vpop.f32.mrf.mxu0
  %v3256 = vadd.f32 0.0, %v3255
  %v3257 = vpop.f32.mrf.mxu0
  %v3258 = vadd.f32 0.0, %v3257
  %3259 = vdwg.mxu0
  %3260 = vmatprep.subr.mxu0 %v486
  %3261 = vmatpush1.msra.mxu0 %v485
  %3262 = vmatprep.subr.mxu0 %v482
  %3263 = vmatpush1.msra.mxu0 %v481
  %3264 = vmatprep.subr.mxu0 %v478
  %3265 = vmatpush1.msra.mxu0 %v477
  %3266 = vmatprep.subr.mxu0 %v474
  %3267 = vmatpush1.msra.mxu0 %v473
  %3268 = vmatprep.subr.mxu0 %v470
  %3269 = vmatpush1.msra.mxu0 %v469
  %3270 = vmatprep.subr.mxu0 %v466
  %3271 = vmatpush1.msra.mxu0 %v465
  %3272 = vmatprep.subr.mxu0 %v462
  %3273 = vmatpush1.msra.mxu0 %v461
  %3274 = vmatprep.subr.mxu0 %v458
  %3275 = vmatpush1.msra.mxu0 %v457
  %3276 = vmatprep.subr.mxu0 %v454
  %3277 = vmatpush1.msra.mxu0 %v453
  %3278 = vmatprep.subr.mxu0 %v450
  %3279 = vmatpush1.msra.mxu0 %v449
  %3280 = vmatprep.subr.mxu0 %v446
  %3281 = vmatpush1.msra.mxu0 %v445
  %3282 = vmatprep.subr.mxu0 %v442
  %3283 = vmatpush1.msra.mxu0 %v441
  %3284 = vmatprep.subr.mxu0 %v438
  %3285 = vmatpush1.msra.mxu0 %v437
  %3286 = vmatprep.subr.mxu0 %v434
  %3287 = vmatpush1.msra.mxu0 %v433
  %3288 = vmatprep.subr.mxu0 %v430
  %3289 = vmatpush1.msra.mxu0 %v429
  %3290 = vmatprep.subr.mxu0 %v426
  %3291 = vmatpush1.msra.mxu0 %v425
  %3292 = vmatprep.subr.mxu0 %v550
  %3293 = vmatpush2.msra.mxu0 %v549
  %3294 = vmatprep.subr.mxu0 %v546
  %3295 = vmatpush2.msra.mxu0 %v545
  %3296 = vmatprep.subr.mxu0 %v542
  %3297 = vmatpush2.msra.mxu0 %v541
  %3298 = vmatprep.subr.mxu0 %v538
  %3299 = vmatpush2.msra.mxu0 %v537
  %3300 = vmatprep.subr.mxu0 %v534
  %3301 = vmatpush2.msra.mxu0 %v533
  %3302 = vmatprep.subr.mxu0 %v530
  %3303 = vmatpush2.msra.mxu0 %v529
  %3304 = vmatprep.subr.mxu0 %v526
  %3305 = vmatpush2.msra.mxu0 %v525
  %3306 = vmatprep.subr.mxu0 %v522
  %3307 = vmatpush2.msra.mxu0 %v521
  %3308 = vmatprep.subr.mxu0 %v518
  %3309 = vmatpush2.msra.mxu0 %v517
  %3310 = vmatprep.subr.mxu0 %v514
  %3311 = vmatpush2.msra.mxu0 %v513
  %3312 = vmatprep.subr.mxu0 %v510
  %3313 = vmatpush2.msra.mxu0 %v509
  %3314 = vmatprep.subr.mxu0 %v506
  %3315 = vmatpush2.msra.mxu0 %v505
  %3316 = vmatprep.subr.mxu0 %v502
  %3317 = vmatpush2.msra.mxu0 %v501
  %3318 = vmatprep.subr.mxu0 %v498
  %3319 = vmatpush2.msra.mxu0 %v497
  %3320 = vmatprep.subr.mxu0 %v494
  %3321 = vmatpush2.msra.mxu0 %v493
  %3322 = vmatprep.subr.mxu0 %v490
  %3323 = vmatpush2.msra.mxu0 %v489
  %3324 = vmatprep.mubr.f32.mxu0 %v2896
  %3325 = vmatmul.mubr.f32.gmra.mxu0 %v2894
  %v3326 = vpop.f32.mrf.mxu0
  %v3327 = vadd.f32 %v3256, %v3326
  %v3328 = vpop.f32.mrf.mxu0
  %v3329 = vadd.f32 %v3258, %v3328
  %3330 = vdwg.mxu0
  %3331 = vmatprep.subr.mxu0 %v360
  %3332 = vmatpush1.msra.mxu0 %v359
  %3333 = vmatprep.subr.mxu0 %v356
  %3334 = vmatpush1.msra.mxu0 %v355
  %3335 = vmatprep.subr.mxu0 %v352
  %3336 = vmatpush1.msra.mxu0 %v351
  %3337 = vmatprep.subr.mxu0 %v348
  %3338 = vmatpush1.msra.mxu0 %v347
  %3339 = vmatprep.subr.mxu0 %v344
  %3340 = vmatpush1.msra.mxu0 %v343
  %3341 = vmatprep.subr.mxu0 %v340
  %3342 = vmatpush1.msra.mxu0 %v339
  %3343 = vmatprep.subr.mxu0 %v336
  %3344 = vmatpush1.msra.mxu0 %v335
  %3345 = vmatprep.subr.mxu0 %v332
  %3346 = vmatpush1.msra.mxu0 %v331
  %3347 = vmatprep.subr.mxu0 %v328
  %3348 = vmatpush1.msra.mxu0 %v327
  %3349 = vmatprep.subr.mxu0 %v324
  %3350 = vmatpush1.msra.mxu0 %v323
  %3351 = vmatprep.subr.mxu0 %v320
  %3352 = vmatpush1.msra.mxu0 %v319
  %3353 = vmatprep.subr.mxu0 %v316
  %3354 = vmatpush1.msra.mxu0 %v315
  %3355 = vmatprep.subr.mxu0 %v312
  %3356 = vmatpush1.msra.mxu0 %v311
  %3357 = vmatprep.subr.mxu0 %v308
  %3358 = vmatpush1.msra.mxu0 %v307
  %3359 = vmatprep.subr.mxu0 %v304
  %3360 = vmatpush1.msra.mxu0 %v303
  %3361 = vmatprep.subr.mxu0 %v300
  %3362 = vmatpush1.msra.mxu0 %v299
  %3363 = vmatprep.subr.mxu0 %v424
  %3364 = vmatpush2.msra.mxu0 %v423
  %3365 = vmatprep.subr.mxu0 %v420
  %3366 = vmatpush2.msra.mxu0 %v419
  %3367 = vmatprep.subr.mxu0 %v416
  %3368 = vmatpush2.msra.mxu0 %v415
  %3369 = vmatprep.subr.mxu0 %v412
  %3370 = vmatpush2.msra.mxu0 %v411
  %3371 = vmatprep.subr.mxu0 %v408
  %3372 = vmatpush2.msra.mxu0 %v407
  %3373 = vmatprep.subr.mxu0 %v404
  %3374 = vmatpush2.msra.mxu0 %v403
  %3375 = vmatprep.subr.mxu0 %v400
  %3376 = vmatpush2.msra.mxu0 %v399
  %3377 = vmatprep.subr.mxu0 %v396
  %3378 = vmatpush2.msra.mxu0 %v395
  %3379 = vmatprep.subr.mxu0 %v392
  %3380 = vmatpush2.msra.mxu0 %v391
  %3381 = vmatprep.subr.mxu0 %v388
  %3382 = vmatpush2.msra.mxu0 %v387
  %3383 = vmatprep.subr.mxu0 %v384
  %3384 = vmatpush2.msra.mxu0 %v383
  %3385 = vmatprep.subr.mxu0 %v380
  %3386 = vmatpush2.msra.mxu0 %v379
  %3387 = vmatprep.subr.mxu0 %v376
  %3388 = vmatpush2.msra.mxu0 %v375
  %3389 = vmatprep.subr.mxu0 %v372
  %3390 = vmatpush2.msra.mxu0 %v371
  %3391 = vmatprep.subr.mxu0 %v368
  %3392 = vmatpush2.msra.mxu0 %v367
  %3393 = vmatprep.subr.mxu0 %v364
  %3394 = vmatpush2.msra.mxu0 %v363
  %3395 = vmatprep.mubr.f32.mxu0 %v2895
  %3396 = vmatmul.mubr.f32.gmra.mxu0 %v2887
  %v3397 = vpop.f32.mrf.mxu0
  %v3398 = vadd.f32 0.0, %v3397
  %v3399 = vpop.f32.mrf.mxu0
  %v3400 = vadd.f32 0.0, %v3399
  %3401 = vdwg.mxu0
  %3402 = vmatprep.subr.mxu0 %v488
  %3403 = vmatpush1.msra.mxu0 %v487
  %3404 = vmatprep.subr.mxu0 %v484
  %3405 = vmatpush1.msra.mxu0 %v483
  %3406 = vmatprep.subr.mxu0 %v480
  %3407 = vmatpush1.msra.mxu0 %v479
  %3408 = vmatprep.subr.mxu0 %v476
  %3409 = vmatpush1.msra.mxu0 %v475
  %3410 = vmatprep.subr.mxu0 %v472
  %3411 = vmatpush1.msra.mxu0 %v471
  %3412 = vmatprep.subr.mxu0 %v468
  %3413 = vmatpush1.msra.mxu0 %v467
  %3414 = vmatprep.subr.mxu0 %v464
  %3415 = vmatpush1.msra.mxu0 %v463
  %3416 = vmatprep.subr.mxu0 %v460
  %3417 = vmatpush1.msra.mxu0 %v459
  %3418 = vmatprep.subr.mxu0 %v456
  %3419 = vmatpush1.msra.mxu0 %v455
  %3420 = vmatprep.subr.mxu0 %v452
  %3421 = vmatpush1.msra.mxu0 %v451
  %3422 = vmatprep.subr.mxu0 %v448
  %3423 = vmatpush1.msra.mxu0 %v447
  %3424 = vmatprep.subr.mxu0 %v444
  %3425 = vmatpush1.msra.mxu0 %v443
  %3426 = vmatprep.subr.mxu0 %v440
  %3427 = vmatpush1.msra.mxu0 %v439
  %3428 = vmatprep.subr.mxu0 %v436
  %3429 = vmatpush1.msra.mxu0 %v435
  %3430 = vmatprep.subr.mxu0 %v432
  %3431 = vmatpush1.msra.mxu0 %v431
  %3432 = vmatprep.subr.mxu0 %v428
  %3433 = vmatpush1.msra.mxu0 %v427
  %3434 = vmatprep.subr.mxu0 %v552
  %3435 = vmatpush2.msra.mxu0 %v551
  %3436 = vmatprep.subr.mxu0 %v548
  %3437 = vmatpush2.msra.mxu0 %v547
  %3438 = vmatprep.subr.mxu0 %v544
  %3439 = vmatpush2.msra.mxu0 %v543
  %3440 = vmatprep.subr.mxu0 %v540
  %3441 = vmatpush2.msra.mxu0 %v539
  %3442 = vmatprep.subr.mxu0 %v536
  %3443 = vmatpush2.msra.mxu0 %v535
  %3444 = vmatprep.subr.mxu0 %v532
  %3445 = vmatpush2.msra.mxu0 %v531
  %3446 = vmatprep.subr.mxu0 %v528
  %3447 = vmatpush2.msra.mxu0 %v527
  %3448 = vmatprep.subr.mxu0 %v524
  %3449 = vmatpush2.msra.mxu0 %v523
  %3450 = vmatprep.subr.mxu0 %v520
  %3451 = vmatpush2.msra.mxu0 %v519
  %3452 = vmatprep.subr.mxu0 %v516
  %3453 = vmatpush2.msra.mxu0 %v515
  %3454 = vmatprep.subr.mxu0 %v512
  %3455 = vmatpush2.msra.mxu0 %v511
  %3456 = vmatprep.subr.mxu0 %v508
  %3457 = vmatpush2.msra.mxu0 %v507
  %3458 = vmatprep.subr.mxu0 %v504
  %3459 = vmatpush2.msra.mxu0 %v503
  %3460 = vmatprep.subr.mxu0 %v500
  %3461 = vmatpush2.msra.mxu0 %v499
  %3462 = vmatprep.subr.mxu0 %v496
  %3463 = vmatpush2.msra.mxu0 %v495
  %3464 = vmatprep.subr.mxu0 %v492
  %3465 = vmatpush2.msra.mxu0 %v491
  %3466 = vmatprep.mubr.f32.mxu0 %v2896
  %3467 = vmatmul.mubr.f32.gmra.mxu0 %v2894
  %v3468 = vpop.f32.mrf.mxu0
  %v3469 = vadd.f32 %v3398, %v3468
  %v3470 = vpop.f32.mrf.mxu0
  %v3471 = vadd.f32 %v3400, %v3470
  %3472 = vdwg.mxu0
  %v3473 = vmul.f32 %v560, %v3327
  %v3474 = vmul.f32 %v560, %v3329
  %v3475 = vmul.f32 %v560, %v3469
  %v3476 = vmul.f32 %v560, %v3471
  %v3477 = vadd.f32 %v3185, %v3473
  %v3478 = vadd.f32 %v3186, %v3474
  %v3479 = vadd.f32 %v3187, %v3475
  %v3480 = vadd.f32 %v3188, %v3476
  %v3485 = vcombine.low %v3477, %v3478
  %v3486 = vcombine.low %v3479, %v3480
  %v3488 = vunpack.c.l.s4 1983009808
  %v3489 = vunpack.c.0.s8 %v3488
  %v3490 = vlaneseq
  %v3491 = vshrl.u32 %v3490, 7
  %v3492 = vsub.s32 %v3489, %v3491
  %v3493 = vrot.slane %v3485, %v3492
  %v3495 = vunpack.c.l.s4 1983009808
  %v3496 = vunpack.c.0.s8 %v3495
  %v3497 = vlaneseq
  %v3498 = vshrl.u32 %v3497, 7
  %v3499 = vsub.s32 %v3496, %v3498
  %v3500 = vrot.slane %v3486, %v3499
  %v3501 = vcombine.low %v3493, %v3500
  %v3503 = vmul.f32 %v2835, %v3501
  %v3505 = vcombine.high %v3503, %v3503
  %v3507 = vunpack.c.l.s4 1983009808
  %v3508 = vunpack.c.0.s8 %v3507
  %v3509 = vlaneseq
  %v3510 = vshrl.u32 %v3509, 7
  %v3511 = vsub.s32 %v3508, %v3510
  %v3512 = vrot.slane %v3503, %v3511
  %v3514 = vunpack.c.l.s4 1983009808
  %v3515 = vunpack.c.0.s8 %v3514
  %v3516 = vlaneseq
  %v3517 = vshrl.u32 %v3516, 7
  %v3518 = vsub.s32 %v3515, %v3517
  %v3519 = vrot.slane %v3505, %v3518
  %v3520 = vcombine.high %v3512, %v3512
  %v3521 = vcombine.high %v3519, %v3519
  %v3526 = vsel %vm2859, %v3512, 0.0
  %v3527 = vsel %vm2859, %v3520, 0.0
  %v3528 = vadd.f32 %v3526, %v3527
  %v3529 = vsel %vm2859, %v3519, 0.0
  %v3530 = vadd.f32 %v3528, %v3529
  %v3531 = vsel %vm2859, %v3521, 0.0
  %v3532 = vadd.f32 %v3530, %v3531
  %3533 = vadd.xlane.f32.xlu0 %v3532
  %v3534 = vpop.xlane.xlu0 %3533
  %v3535 = vsel %vm2878, 1, 0
  %vm3536 = vcmp.eq.s32.totalorder %v3535, 1
  %v3537 = vsel %vm3536, %v3534, 1.0
  %v3538 = vrcp.pop %v3537
  %v3539 = vmul.f32 %v2868, %v3538
  %v3540 = vmul.f32 %v3539, %v2887
  %v3541 = vmul.f32 %v3539, %v2895
  %v3542 = vmul.f32 %v3539, %v2894
  %v3543 = vmul.f32 %v3539, %v2896
  %v3548 = vcombine.low %v3540, %v3541
  %v3549 = vcombine.low %v3542, %v3543
  %v3551 = vunpack.c.l.s4 1983009808
  %v3552 = vunpack.c.0.s8 %v3551
  %v3553 = vlaneseq
  %v3554 = vshrl.u32 %v3553, 7
  %v3555 = vsub.s32 %v3552, %v3554
  %v3556 = vrot.slane %v3548, %v3555
  %v3558 = vunpack.c.l.s4 1983009808
  %v3559 = vunpack.c.0.s8 %v3558
  %v3560 = vlaneseq
  %v3561 = vshrl.u32 %v3560, 7
  %v3562 = vsub.s32 %v3559, %v3561
  %v3563 = vrot.slane %v3549, %v3562
  %v3564 = vcombine.low %v3556, %v3563
  %v3566 = vadd.f32 %v26, %v3564
  %v3567 = vmul.f32 %v3539, %v3477
  %v3568 = vmul.f32 %v3539, %v3478
  %v3569 = vmul.f32 %v3539, %v3479
  %v3570 = vmul.f32 %v3539, %v3480
  %v3575 = vcombine.low %v3567, %v3568
  %v3576 = vcombine.low %v3569, %v3570
  %v3578 = vunpack.c.l.s4 1983009808
  %v3579 = vunpack.c.0.s8 %v3578
  %v3580 = vlaneseq
  %v3581 = vshrl.u32 %v3580, 7
  %v3582 = vsub.s32 %v3579, %v3581
  %v3583 = vrot.slane %v3575, %v3582
  %v3585 = vunpack.c.l.s4 1983009808
  %v3586 = vunpack.c.0.s8 %v3585
  %v3587 = vlaneseq
  %v3588 = vshrl.u32 %v3587, 7
  %v3589 = vsub.s32 %v3586, %v3588
  %v3590 = vrot.slane %v3576, %v3589
  %v3591 = vcombine.low %v3583, %v3590
  %v3593 = vsub.f32 %v2835, %v3591
  %v3594 = vmul.f32 %v3593, %v3593
  %v3596 = vcombine.high %v3594, %v3594
  %v3598 = vunpack.c.l.s4 1983009808
  %v3599 = vunpack.c.0.s8 %v3598
  %v3600 = vlaneseq
  %v3601 = vshrl.u32 %v3600, 7
  %v3602 = vsub.s32 %v3599, %v3601
  %v3603 = vrot.slane %v3594, %v3602
  %v3605 = vunpack.c.l.s4 1983009808
  %v3606 = vunpack.c.0.s8 %v3605
  %v3607 = vlaneseq
  %v3608 = vshrl.u32 %v3607, 7
  %v3609 = vsub.s32 %v3606, %v3608
  %v3610 = vrot.slane %v3596, %v3609
  %v3611 = vcombine.high %v3603, %v3603
  %v3612 = vcombine.high %v3610, %v3610
  %v3617 = vsel %vm2859, %v3603, 0.0
  %v3618 = vsel %vm2859, %v3611, 0.0
  %v3619 = vadd.f32 %v3617, %v3618
  %v3620 = vsel %vm2859, %v3610, 0.0
  %v3621 = vadd.f32 %v3619, %v3620
  %v3622 = vsel %vm2859, %v3612, 0.0
  %v3623 = vadd.f32 %v3621, %v3622
  %3624 = vadd.xlane.f32.xlu0 %v3623
  %v3625 = vpop.xlane.xlu0 %3624
  %v3626 = vsel %vm3536, %v2868, 1.0
  %v3627 = vrcp.pop %v3626
  %v3628 = vmul.f32 %v3625, %v3627
  %v3629 = vmul.f32 %v3628, %v2887
  %v3630 = vmul.f32 %v3628, %v2895
  %v3631 = vmul.f32 %v3628, %v2894
  %v3632 = vmul.f32 %v3628, %v2896
  %v3634 = vcombine.high %v3593, %v3593
  %v3636 = vunpack.c.l.s4 1983009808
  %v3637 = vunpack.c.0.s8 %v3636
  %v3638 = vlaneseq
  %v3639 = vshrl.u32 %v3638, 7
  %v3640 = vsub.s32 %v3637, %v3639
  %v3641 = vrot.slane %v3593, %v3640
  %v3643 = vunpack.c.l.s4 1983009808
  %v3644 = vunpack.c.0.s8 %v3643
  %v3645 = vlaneseq
  %v3646 = vshrl.u32 %v3645, 7
  %v3647 = vsub.s32 %v3644, %v3646
  %v3648 = vrot.slane %v3634, %v3647
  %v3649 = vcombine.high %v3641, %v3641
  %v3650 = vcombine.high %v3648, %v3648
  %v3655 = vadd.f32 %v3629, %v3641
  %v3656 = vadd.f32 %v3630, %v3649
  %v3657 = vadd.f32 %v3631, %v3648
  %v3658 = vadd.f32 %v3632, %v3650
  %v3659 = vsel %vm3536, %v3566, %v26
  %v3660 = vsel %vm3536, %v3593, %v2835
  %v3661 = vsel %vm3536, %v3655, %v2887
  %v3662 = vsel %vm3536, %v3656, %v2895
  %v3663 = vsel %vm3536, %v3657, %v2894
  %v3664 = vsel %vm3536, %v3658, %v2896
  %v3665 = vsel %vm3536, %v3625, %v2868
  %v3666 = vsel %vm2859, %v3665, -inf
  %v3667 = vrot.slane %v3666, 4
  %v3668 = vmax.f32 %v3666, %v3667
  %v3669 = vrot.slane %v3668, 2
  %v3670 = vmax.f32 %v3668, %v3669
  %v3671 = vrot.slane %v3670, 1
  %v3672 = vmax.f32 %v3670, %v3671
  %s3673 = vtos %v3672
  %v3674 = vstv %s3673
  %vm3675 = vcmp.ge.f32.partialorder %v3674, 1e-10
  %3676 = vmatprep.subr.mxu0 %v101
  %3677 = vmatpush1.msra.mxu0 %v100
  %3678 = vmatprep.subr.mxu0 %v97
  %3679 = vmatpush1.msra.mxu0 %v96
  %3680 = vmatprep.subr.mxu0 %v93
  %3681 = vmatpush1.msra.mxu0 %v92
  %3682 = vmatprep.subr.mxu0 %v89
  %3683 = vmatpush1.msra.mxu0 %v88
  %3684 = vmatprep.subr.mxu0 %v85
  %3685 = vmatpush1.msra.mxu0 %v84
  %3686 = vmatprep.subr.mxu0 %v81
  %3687 = vmatpush1.msra.mxu0 %v80
  %3688 = vmatprep.subr.mxu0 %v77
  %3689 = vmatpush1.msra.mxu0 %v76
  %3690 = vmatprep.subr.mxu0 %v73
  %3691 = vmatpush1.msra.mxu0 %v72
  %3692 = vmatprep.subr.mxu0 %v69
  %3693 = vmatpush1.msra.mxu0 %v68
  %3694 = vmatprep.subr.mxu0 %v65
  %3695 = vmatpush1.msra.mxu0 %v64
  %3696 = vmatprep.subr.mxu0 %v61
  %3697 = vmatpush1.msra.mxu0 %v60
  %3698 = vmatprep.subr.mxu0 %v57
  %3699 = vmatpush1.msra.mxu0 %v56
  %3700 = vmatprep.subr.mxu0 %v53
  %3701 = vmatpush1.msra.mxu0 %v52
  %3702 = vmatprep.subr.mxu0 %v49
  %3703 = vmatpush1.msra.mxu0 %v48
  %3704 = vmatprep.subr.mxu0 %v45
  %3705 = vmatpush1.msra.mxu0 %v44
  %3706 = vmatprep.subr.mxu0 %v41
  %3707 = vmatpush1.msra.mxu0 %v40
  %3708 = vmatprep.subr.mxu0 %v165
  %3709 = vmatpush2.msra.mxu0 %v164
  %3710 = vmatprep.subr.mxu0 %v161
  %3711 = vmatpush2.msra.mxu0 %v160
  %3712 = vmatprep.subr.mxu0 %v157
  %3713 = vmatpush2.msra.mxu0 %v156
  %3714 = vmatprep.subr.mxu0 %v153
  %3715 = vmatpush2.msra.mxu0 %v152
  %3716 = vmatprep.subr.mxu0 %v149
  %3717 = vmatpush2.msra.mxu0 %v148
  %3718 = vmatprep.subr.mxu0 %v145
  %3719 = vmatpush2.msra.mxu0 %v144
  %3720 = vmatprep.subr.mxu0 %v141
  %3721 = vmatpush2.msra.mxu0 %v140
  %3722 = vmatprep.subr.mxu0 %v137
  %3723 = vmatpush2.msra.mxu0 %v136
  %3724 = vmatprep.subr.mxu0 %v133
  %3725 = vmatpush2.msra.mxu0 %v132
  %3726 = vmatprep.subr.mxu0 %v129
  %3727 = vmatpush2.msra.mxu0 %v128
  %3728 = vmatprep.subr.mxu0 %v125
  %3729 = vmatpush2.msra.mxu0 %v124
  %3730 = vmatprep.subr.mxu0 %v121
  %3731 = vmatpush2.msra.mxu0 %v120
  %3732 = vmatprep.subr.mxu0 %v117
  %3733 = vmatpush2.msra.mxu0 %v116
  %3734 = vmatprep.subr.mxu0 %v113
  %3735 = vmatpush2.msra.mxu0 %v112
  %3736 = vmatprep.subr.mxu0 %v109
  %3737 = vmatpush2.msra.mxu0 %v108
  %3738 = vmatprep.subr.mxu0 %v105
  %3739 = vmatpush2.msra.mxu0 %v104
  %3740 = vmatprep.mubr.f32.mxu0 %v3662
  %3741 = vmatmul.mubr.f32.gmra.mxu0 %v3661
  %v3742 = vpop.f32.mrf.mxu0
  %v3743 = vadd.f32 0.0, %v3742
  %v3744 = vpop.f32.mrf.mxu0
  %v3745 = vadd.f32 0.0, %v3744
  %3746 = vdwg.mxu0
  %3747 = vmatprep.subr.mxu0 %v229
  %3748 = vmatpush1.msra.mxu0 %v228
  %3749 = vmatprep.subr.mxu0 %v225
  %3750 = vmatpush1.msra.mxu0 %v224
  %3751 = vmatprep.subr.mxu0 %v221
  %3752 = vmatpush1.msra.mxu0 %v220
  %3753 = vmatprep.subr.mxu0 %v217
  %3754 = vmatpush1.msra.mxu0 %v216
  %3755 = vmatprep.subr.mxu0 %v213
  %3756 = vmatpush1.msra.mxu0 %v212
  %3757 = vmatprep.subr.mxu0 %v209
  %3758 = vmatpush1.msra.mxu0 %v208
  %3759 = vmatprep.subr.mxu0 %v205
  %3760 = vmatpush1.msra.mxu0 %v204
  %3761 = vmatprep.subr.mxu0 %v201
  %3762 = vmatpush1.msra.mxu0 %v200
  %3763 = vmatprep.subr.mxu0 %v197
  %3764 = vmatpush1.msra.mxu0 %v196
  %3765 = vmatprep.subr.mxu0 %v193
  %3766 = vmatpush1.msra.mxu0 %v192
  %3767 = vmatprep.subr.mxu0 %v189
  %3768 = vmatpush1.msra.mxu0 %v188
  %3769 = vmatprep.subr.mxu0 %v185
  %3770 = vmatpush1.msra.mxu0 %v184
  %3771 = vmatprep.subr.mxu0 %v181
  %3772 = vmatpush1.msra.mxu0 %v180
  %3773 = vmatprep.subr.mxu0 %v177
  %3774 = vmatpush1.msra.mxu0 %v176
  %3775 = vmatprep.subr.mxu0 %v173
  %3776 = vmatpush1.msra.mxu0 %v172
  %3777 = vmatprep.subr.mxu0 %v169
  %3778 = vmatpush1.msra.mxu0 %v168
  %3779 = vmatprep.subr.mxu0 %v293
  %3780 = vmatpush2.msra.mxu0 %v292
  %3781 = vmatprep.subr.mxu0 %v289
  %3782 = vmatpush2.msra.mxu0 %v288
  %3783 = vmatprep.subr.mxu0 %v285
  %3784 = vmatpush2.msra.mxu0 %v284
  %3785 = vmatprep.subr.mxu0 %v281
  %3786 = vmatpush2.msra.mxu0 %v280
  %3787 = vmatprep.subr.mxu0 %v277
  %3788 = vmatpush2.msra.mxu0 %v276
  %3789 = vmatprep.subr.mxu0 %v273
  %3790 = vmatpush2.msra.mxu0 %v272
  %3791 = vmatprep.subr.mxu0 %v269
  %3792 = vmatpush2.msra.mxu0 %v268
  %3793 = vmatprep.subr.mxu0 %v265
  %3794 = vmatpush2.msra.mxu0 %v264
  %3795 = vmatprep.subr.mxu0 %v261
  %3796 = vmatpush2.msra.mxu0 %v260
  %3797 = vmatprep.subr.mxu0 %v257
  %3798 = vmatpush2.msra.mxu0 %v256
  %3799 = vmatprep.subr.mxu0 %v253
  %3800 = vmatpush2.msra.mxu0 %v252
  %3801 = vmatprep.subr.mxu0 %v249
  %3802 = vmatpush2.msra.mxu0 %v248
  %3803 = vmatprep.subr.mxu0 %v245
  %3804 = vmatpush2.msra.mxu0 %v244
  %3805 = vmatprep.subr.mxu0 %v241
  %3806 = vmatpush2.msra.mxu0 %v240
  %3807 = vmatprep.subr.mxu0 %v237
  %3808 = vmatpush2.msra.mxu0 %v236
  %3809 = vmatprep.subr.mxu0 %v233
  %3810 = vmatpush2.msra.mxu0 %v232
  %3811 = vmatprep.mubr.f32.mxu0 %v3664
  %3812 = vmatmul.mubr.f32.gmra.mxu0 %v3663
  %v3813 = vpop.f32.mrf.mxu0
  %v3814 = vadd.f32 %v3743, %v3813
  %v3815 = vpop.f32.mrf.mxu0
  %v3816 = vadd.f32 %v3745, %v3815
  %3817 = vdwg.mxu0
  %3818 = vmatprep.subr.mxu0 %v103
  %3819 = vmatpush1.msra.mxu0 %v102
  %3820 = vmatprep.subr.mxu0 %v99
  %3821 = vmatpush1.msra.mxu0 %v98
  %3822 = vmatprep.subr.mxu0 %v95
  %3823 = vmatpush1.msra.mxu0 %v94
  %3824 = vmatprep.subr.mxu0 %v91
  %3825 = vmatpush1.msra.mxu0 %v90
  %3826 = vmatprep.subr.mxu0 %v87
  %3827 = vmatpush1.msra.mxu0 %v86
  %3828 = vmatprep.subr.mxu0 %v83
  %3829 = vmatpush1.msra.mxu0 %v82
  %3830 = vmatprep.subr.mxu0 %v79
  %3831 = vmatpush1.msra.mxu0 %v78
  %3832 = vmatprep.subr.mxu0 %v75
  %3833 = vmatpush1.msra.mxu0 %v74
  %3834 = vmatprep.subr.mxu0 %v71
  %3835 = vmatpush1.msra.mxu0 %v70
  %3836 = vmatprep.subr.mxu0 %v67
  %3837 = vmatpush1.msra.mxu0 %v66
  %3838 = vmatprep.subr.mxu0 %v63
  %3839 = vmatpush1.msra.mxu0 %v62
  %3840 = vmatprep.subr.mxu0 %v59
  %3841 = vmatpush1.msra.mxu0 %v58
  %3842 = vmatprep.subr.mxu0 %v55
  %3843 = vmatpush1.msra.mxu0 %v54
  %3844 = vmatprep.subr.mxu0 %v51
  %3845 = vmatpush1.msra.mxu0 %v50
  %3846 = vmatprep.subr.mxu0 %v47
  %3847 = vmatpush1.msra.mxu0 %v46
  %3848 = vmatprep.subr.mxu0 %v43
  %3849 = vmatpush1.msra.mxu0 %v42
  %3850 = vmatprep.subr.mxu0 %v167
  %3851 = vmatpush2.msra.mxu0 %v166
  %3852 = vmatprep.subr.mxu0 %v163
  %3853 = vmatpush2.msra.mxu0 %v162
  %3854 = vmatprep.subr.mxu0 %v159
  %3855 = vmatpush2.msra.mxu0 %v158
  %3856 = vmatprep.subr.mxu0 %v155
  %3857 = vmatpush2.msra.mxu0 %v154
  %3858 = vmatprep.subr.mxu0 %v151
  %3859 = vmatpush2.msra.mxu0 %v150
  %3860 = vmatprep.subr.mxu0 %v147
  %3861 = vmatpush2.msra.mxu0 %v146
  %3862 = vmatprep.subr.mxu0 %v143
  %3863 = vmatpush2.msra.mxu0 %v142
  %3864 = vmatprep.subr.mxu0 %v139
  %3865 = vmatpush2.msra.mxu0 %v138
  %3866 = vmatprep.subr.mxu0 %v135
  %3867 = vmatpush2.msra.mxu0 %v134
  %3868 = vmatprep.subr.mxu0 %v131
  %3869 = vmatpush2.msra.mxu0 %v130
  %3870 = vmatprep.subr.mxu0 %v127
  %3871 = vmatpush2.msra.mxu0 %v126
  %3872 = vmatprep.subr.mxu0 %v123
  %3873 = vmatpush2.msra.mxu0 %v122
  %3874 = vmatprep.subr.mxu0 %v119
  %3875 = vmatpush2.msra.mxu0 %v118
  %3876 = vmatprep.subr.mxu0 %v115
  %3877 = vmatpush2.msra.mxu0 %v114
  %3878 = vmatprep.subr.mxu0 %v111
  %3879 = vmatpush2.msra.mxu0 %v110
  %3880 = vmatprep.subr.mxu0 %v107
  %3881 = vmatpush2.msra.mxu0 %v106
  %3882 = vmatprep.mubr.f32.mxu0 %v3662
  %3883 = vmatmul.mubr.f32.gmra.mxu0 %v3661
  %v3884 = vpop.f32.mrf.mxu0
  %v3885 = vadd.f32 0.0, %v3884
  %v3886 = vpop.f32.mrf.mxu0
  %v3887 = vadd.f32 0.0, %v3886
  %3888 = vdwg.mxu0
  %3889 = vmatprep.subr.mxu0 %v231
  %3890 = vmatpush1.msra.mxu0 %v230
  %3891 = vmatprep.subr.mxu0 %v227
  %3892 = vmatpush1.msra.mxu0 %v226
  %3893 = vmatprep.subr.mxu0 %v223
  %3894 = vmatpush1.msra.mxu0 %v222
  %3895 = vmatprep.subr.mxu0 %v219
  %3896 = vmatpush1.msra.mxu0 %v218
  %3897 = vmatprep.subr.mxu0 %v215
  %3898 = vmatpush1.msra.mxu0 %v214
  %3899 = vmatprep.subr.mxu0 %v211
  %3900 = vmatpush1.msra.mxu0 %v210
  %3901 = vmatprep.subr.mxu0 %v207
  %3902 = vmatpush1.msra.mxu0 %v206
  %3903 = vmatprep.subr.mxu0 %v203
  %3904 = vmatpush1.msra.mxu0 %v202
  %3905 = vmatprep.subr.mxu0 %v199
  %3906 = vmatpush1.msra.mxu0 %v198
  %3907 = vmatprep.subr.mxu0 %v195
  %3908 = vmatpush1.msra.mxu0 %v194
  %3909 = vmatprep.subr.mxu0 %v191
  %3910 = vmatpush1.msra.mxu0 %v190
  %3911 = vmatprep.subr.mxu0 %v187
  %3912 = vmatpush1.msra.mxu0 %v186
  %3913 = vmatprep.subr.mxu0 %v183
  %3914 = vmatpush1.msra.mxu0 %v182
  %3915 = vmatprep.subr.mxu0 %v179
  %3916 = vmatpush1.msra.mxu0 %v178
  %3917 = vmatprep.subr.mxu0 %v175
  %3918 = vmatpush1.msra.mxu0 %v174
  %3919 = vmatprep.subr.mxu0 %v171
  %3920 = vmatpush1.msra.mxu0 %v170
  %3921 = vmatprep.subr.mxu0 %v295
  %3922 = vmatpush2.msra.mxu0 %v294
  %3923 = vmatprep.subr.mxu0 %v291
  %3924 = vmatpush2.msra.mxu0 %v290
  %3925 = vmatprep.subr.mxu0 %v287
  %3926 = vmatpush2.msra.mxu0 %v286
  %3927 = vmatprep.subr.mxu0 %v283
  %3928 = vmatpush2.msra.mxu0 %v282
  %3929 = vmatprep.subr.mxu0 %v279
  %3930 = vmatpush2.msra.mxu0 %v278
  %3931 = vmatprep.subr.mxu0 %v275
  %3932 = vmatpush2.msra.mxu0 %v274
  %3933 = vmatprep.subr.mxu0 %v271
  %3934 = vmatpush2.msra.mxu0 %v270
  %3935 = vmatprep.subr.mxu0 %v267
  %3936 = vmatpush2.msra.mxu0 %v266
  %3937 = vmatprep.subr.mxu0 %v263
  %3938 = vmatpush2.msra.mxu0 %v262
  %3939 = vmatprep.subr.mxu0 %v259
  %3940 = vmatpush2.msra.mxu0 %v258
  %3941 = vmatprep.subr.mxu0 %v255
  %3942 = vmatpush2.msra.mxu0 %v254
  %3943 = vmatprep.subr.mxu0 %v251
  %3944 = vmatpush2.msra.mxu0 %v250
  %3945 = vmatprep.subr.mxu0 %v247
  %3946 = vmatpush2.msra.mxu0 %v246
  %3947 = vmatprep.subr.mxu0 %v243
  %3948 = vmatpush2.msra.mxu0 %v242
  %3949 = vmatprep.subr.mxu0 %v239
  %3950 = vmatpush2.msra.mxu0 %v238
  %3951 = vmatprep.subr.mxu0 %v235
  %3952 = vmatpush2.msra.mxu0 %v234
  %3953 = vmatprep.mubr.f32.mxu0 %v3664
  %3954 = vmatmul.mubr.f32.gmra.mxu0 %v3663
  %v3955 = vpop.f32.mrf.mxu0
  %v3956 = vadd.f32 %v3885, %v3955
  %v3957 = vpop.f32.mrf.mxu0
  %v3958 = vadd.f32 %v3887, %v3957
  %3959 = vdwg.mxu0
  %v3960 = vmul.f32 %v557, %v3814
  %v3961 = vmul.f32 %v557, %v3816
  %v3962 = vmul.f32 %v557, %v3956
  %v3963 = vmul.f32 %v557, %v3958
  %3964 = vmatprep.subr.mxu0 %v358
  %3965 = vmatpush1.msra.mxu0 %v357
  %3966 = vmatprep.subr.mxu0 %v354
  %3967 = vmatpush1.msra.mxu0 %v353
  %3968 = vmatprep.subr.mxu0 %v350
  %3969 = vmatpush1.msra.mxu0 %v349
  %3970 = vmatprep.subr.mxu0 %v346
  %3971 = vmatpush1.msra.mxu0 %v345
  %3972 = vmatprep.subr.mxu0 %v342
  %3973 = vmatpush1.msra.mxu0 %v341
  %3974 = vmatprep.subr.mxu0 %v338
  %3975 = vmatpush1.msra.mxu0 %v337
  %3976 = vmatprep.subr.mxu0 %v334
  %3977 = vmatpush1.msra.mxu0 %v333
  %3978 = vmatprep.subr.mxu0 %v330
  %3979 = vmatpush1.msra.mxu0 %v329
  %3980 = vmatprep.subr.mxu0 %v326
  %3981 = vmatpush1.msra.mxu0 %v325
  %3982 = vmatprep.subr.mxu0 %v322
  %3983 = vmatpush1.msra.mxu0 %v321
  %3984 = vmatprep.subr.mxu0 %v318
  %3985 = vmatpush1.msra.mxu0 %v317
  %3986 = vmatprep.subr.mxu0 %v314
  %3987 = vmatpush1.msra.mxu0 %v313
  %3988 = vmatprep.subr.mxu0 %v310
  %3989 = vmatpush1.msra.mxu0 %v309
  %3990 = vmatprep.subr.mxu0 %v306
  %3991 = vmatpush1.msra.mxu0 %v305
  %3992 = vmatprep.subr.mxu0 %v302
  %3993 = vmatpush1.msra.mxu0 %v301
  %3994 = vmatprep.subr.mxu0 %v298
  %3995 = vmatpush1.msra.mxu0 %v297
  %3996 = vmatprep.subr.mxu0 %v422
  %3997 = vmatpush2.msra.mxu0 %v421
  %3998 = vmatprep.subr.mxu0 %v418
  %3999 = vmatpush2.msra.mxu0 %v417
  %4000 = vmatprep.subr.mxu0 %v414
  %4001 = vmatpush2.msra.mxu0 %v413
  %4002 = vmatprep.subr.mxu0 %v410
  %4003 = vmatpush2.msra.mxu0 %v409
  %4004 = vmatprep.subr.mxu0 %v406
  %4005 = vmatpush2.msra.mxu0 %v405
  %4006 = vmatprep.subr.mxu0 %v402
  %4007 = vmatpush2.msra.mxu0 %v401
  %4008 = vmatprep.subr.mxu0 %v398
  %4009 = vmatpush2.msra.mxu0 %v397
  %4010 = vmatprep.subr.mxu0 %v394
  %4011 = vmatpush2.msra.mxu0 %v393
  %4012 = vmatprep.subr.mxu0 %v390
  %4013 = vmatpush2.msra.mxu0 %v389
  %4014 = vmatprep.subr.mxu0 %v386
  %4015 = vmatpush2.msra.mxu0 %v385
  %4016 = vmatprep.subr.mxu0 %v382
  %4017 = vmatpush2.msra.mxu0 %v381
  %4018 = vmatprep.subr.mxu0 %v378
  %4019 = vmatpush2.msra.mxu0 %v377
  %4020 = vmatprep.subr.mxu0 %v374
  %4021 = vmatpush2.msra.mxu0 %v373
  %4022 = vmatprep.subr.mxu0 %v370
  %4023 = vmatpush2.msra.mxu0 %v369
  %4024 = vmatprep.subr.mxu0 %v366
  %4025 = vmatpush2.msra.mxu0 %v365
  %4026 = vmatprep.subr.mxu0 %v362
  %4027 = vmatpush2.msra.mxu0 %v361
  %4028 = vmatprep.mubr.f32.mxu0 %v3662
  %4029 = vmatmul.mubr.f32.gmra.mxu0 %v3661
  %v4030 = vpop.f32.mrf.mxu0
  %v4031 = vadd.f32 0.0, %v4030
  %v4032 = vpop.f32.mrf.mxu0
  %v4033 = vadd.f32 0.0, %v4032
  %4034 = vdwg.mxu0
  %4035 = vmatprep.subr.mxu0 %v486
  %4036 = vmatpush1.msra.mxu0 %v485
  %4037 = vmatprep.subr.mxu0 %v482
  %4038 = vmatpush1.msra.mxu0 %v481
  %4039 = vmatprep.subr.mxu0 %v478
  %4040 = vmatpush1.msra.mxu0 %v477
  %4041 = vmatprep.subr.mxu0 %v474
  %4042 = vmatpush1.msra.mxu0 %v473
  %4043 = vmatprep.subr.mxu0 %v470
  %4044 = vmatpush1.msra.mxu0 %v469
  %4045 = vmatprep.subr.mxu0 %v466
  %4046 = vmatpush1.msra.mxu0 %v465
  %4047 = vmatprep.subr.mxu0 %v462
  %4048 = vmatpush1.msra.mxu0 %v461
  %4049 = vmatprep.subr.mxu0 %v458
  %4050 = vmatpush1.msra.mxu0 %v457
  %4051 = vmatprep.subr.mxu0 %v454
  %4052 = vmatpush1.msra.mxu0 %v453
  %4053 = vmatprep.subr.mxu0 %v450
  %4054 = vmatpush1.msra.mxu0 %v449
  %4055 = vmatprep.subr.mxu0 %v446
  %4056 = vmatpush1.msra.mxu0 %v445
  %4057 = vmatprep.subr.mxu0 %v442
  %4058 = vmatpush1.msra.mxu0 %v441
  %4059 = vmatprep.subr.mxu0 %v438
  %4060 = vmatpush1.msra.mxu0 %v437
  %4061 = vmatprep.subr.mxu0 %v434
  %4062 = vmatpush1.msra.mxu0 %v433
  %4063 = vmatprep.subr.mxu0 %v430
  %4064 = vmatpush1.msra.mxu0 %v429
  %4065 = vmatprep.subr.mxu0 %v426
  %4066 = vmatpush1.msra.mxu0 %v425
  %4067 = vmatprep.subr.mxu0 %v550
  %4068 = vmatpush2.msra.mxu0 %v549
  %4069 = vmatprep.subr.mxu0 %v546
  %4070 = vmatpush2.msra.mxu0 %v545
  %4071 = vmatprep.subr.mxu0 %v542
  %4072 = vmatpush2.msra.mxu0 %v541
  %4073 = vmatprep.subr.mxu0 %v538
  %4074 = vmatpush2.msra.mxu0 %v537
  %4075 = vmatprep.subr.mxu0 %v534
  %4076 = vmatpush2.msra.mxu0 %v533
  %4077 = vmatprep.subr.mxu0 %v530
  %4078 = vmatpush2.msra.mxu0 %v529
  %4079 = vmatprep.subr.mxu0 %v526
  %4080 = vmatpush2.msra.mxu0 %v525
  %4081 = vmatprep.subr.mxu0 %v522
  %4082 = vmatpush2.msra.mxu0 %v521
  %4083 = vmatprep.subr.mxu0 %v518
  %4084 = vmatpush2.msra.mxu0 %v517
  %4085 = vmatprep.subr.mxu0 %v514
  %4086 = vmatpush2.msra.mxu0 %v513
  %4087 = vmatprep.subr.mxu0 %v510
  %4088 = vmatpush2.msra.mxu0 %v509
  %4089 = vmatprep.subr.mxu0 %v506
  %4090 = vmatpush2.msra.mxu0 %v505
  %4091 = vmatprep.subr.mxu0 %v502
  %4092 = vmatpush2.msra.mxu0 %v501
  %4093 = vmatprep.subr.mxu0 %v498
  %4094 = vmatpush2.msra.mxu0 %v497
  %4095 = vmatprep.subr.mxu0 %v494
  %4096 = vmatpush2.msra.mxu0 %v493
  %4097 = vmatprep.subr.mxu0 %v490
  %4098 = vmatpush2.msra.mxu0 %v489
  %4099 = vmatprep.mubr.f32.mxu0 %v3664
  %4100 = vmatmul.mubr.f32.gmra.mxu0 %v3663
  %v4101 = vpop.f32.mrf.mxu0
  %v4102 = vadd.f32 %v4031, %v4101
  %v4103 = vpop.f32.mrf.mxu0
  %v4104 = vadd.f32 %v4033, %v4103
  %4105 = vdwg.mxu0
  %4106 = vmatprep.subr.mxu0 %v360
  %4107 = vmatpush1.msra.mxu0 %v359
  %4108 = vmatprep.subr.mxu0 %v356
  %4109 = vmatpush1.msra.mxu0 %v355
  %4110 = vmatprep.subr.mxu0 %v352
  %4111 = vmatpush1.msra.mxu0 %v351
  %4112 = vmatprep.subr.mxu0 %v348
  %4113 = vmatpush1.msra.mxu0 %v347
  %4114 = vmatprep.subr.mxu0 %v344
  %4115 = vmatpush1.msra.mxu0 %v343
  %4116 = vmatprep.subr.mxu0 %v340
  %4117 = vmatpush1.msra.mxu0 %v339
  %4118 = vmatprep.subr.mxu0 %v336
  %4119 = vmatpush1.msra.mxu0 %v335
  %4120 = vmatprep.subr.mxu0 %v332
  %4121 = vmatpush1.msra.mxu0 %v331
  %4122 = vmatprep.subr.mxu0 %v328
  %4123 = vmatpush1.msra.mxu0 %v327
  %4124 = vmatprep.subr.mxu0 %v324
  %4125 = vmatpush1.msra.mxu0 %v323
  %4126 = vmatprep.subr.mxu0 %v320
  %4127 = vmatpush1.msra.mxu0 %v319
  %4128 = vmatprep.subr.mxu0 %v316
  %4129 = vmatpush1.msra.mxu0 %v315
  %4130 = vmatprep.subr.mxu0 %v312
  %4131 = vmatpush1.msra.mxu0 %v311
  %4132 = vmatprep.subr.mxu0 %v308
  %4133 = vmatpush1.msra.mxu0 %v307
  %4134 = vmatprep.subr.mxu0 %v304
  %4135 = vmatpush1.msra.mxu0 %v303
  %4136 = vmatprep.subr.mxu0 %v300
  %4137 = vmatpush1.msra.mxu0 %v299
  %4138 = vmatprep.subr.mxu0 %v424
  %4139 = vmatpush2.msra.mxu0 %v423
  %4140 = vmatprep.subr.mxu0 %v420
  %4141 = vmatpush2.msra.mxu0 %v419
  %4142 = vmatprep.subr.mxu0 %v416
  %4143 = vmatpush2.msra.mxu0 %v415
  %4144 = vmatprep.subr.mxu0 %v412
  %4145 = vmatpush2.msra.mxu0 %v411
  %4146 = vmatprep.subr.mxu0 %v408
  %4147 = vmatpush2.msra.mxu0 %v407
  %4148 = vmatprep.subr.mxu0 %v404
  %4149 = vmatpush2.msra.mxu0 %v403
  %4150 = vmatprep.subr.mxu0 %v400
  %4151 = vmatpush2.msra.mxu0 %v399
  %4152 = vmatprep.subr.mxu0 %v396
  %4153 = vmatpush2.msra.mxu0 %v395
  %4154 = vmatprep.subr.mxu0 %v392
  %4155 = vmatpush2.msra.mxu0 %v391
  %4156 = vmatprep.subr.mxu0 %v388
  %4157 = vmatpush2.msra.mxu0 %v387
  %4158 = vmatprep.subr.mxu0 %v384
  %4159 = vmatpush2.msra.mxu0 %v383
  %4160 = vmatprep.subr.mxu0 %v380
  %4161 = vmatpush2.msra.mxu0 %v379
  %4162 = vmatprep.subr.mxu0 %v376
  %4163 = vmatpush2.msra.mxu0 %v375
  %4164 = vmatprep.subr.mxu0 %v372
  %4165 = vmatpush2.msra.mxu0 %v371
  %4166 = vmatprep.subr.mxu0 %v368
  %4167 = vmatpush2.msra.mxu0 %v367
  %4168 = vmatprep.subr.mxu0 %v364
  %4169 = vmatpush2.msra.mxu0 %v363
  %4170 = vmatprep.mubr.f32.mxu0 %v3662
  %4171 = vmatmul.mubr.f32.gmra.mxu0 %v3661
  %v4172 = vpop.f32.mrf.mxu0
  %v4173 = vadd.f32 0.0, %v4172
  %v4174 = vpop.f32.mrf.mxu0
  %v4175 = vadd.f32 0.0, %v4174
  %4176 = vdwg.mxu0
  %4177 = vmatprep.subr.mxu0 %v488
  %4178 = vmatpush1.msra.mxu0 %v487
  %4179 = vmatprep.subr.mxu0 %v484
  %4180 = vmatpush1.msra.mxu0 %v483
  %4181 = vmatprep.subr.mxu0 %v480
  %4182 = vmatpush1.msra.mxu0 %v479
  %4183 = vmatprep.subr.mxu0 %v476
  %4184 = vmatpush1.msra.mxu0 %v475
  %4185 = vmatprep.subr.mxu0 %v472
  %4186 = vmatpush1.msra.mxu0 %v471
  %4187 = vmatprep.subr.mxu0 %v468
  %4188 = vmatpush1.msra.mxu0 %v467
  %4189 = vmatprep.subr.mxu0 %v464
  %4190 = vmatpush1.msra.mxu0 %v463
  %4191 = vmatprep.subr.mxu0 %v460
  %4192 = vmatpush1.msra.mxu0 %v459
  %4193 = vmatprep.subr.mxu0 %v456
  %4194 = vmatpush1.msra.mxu0 %v455
  %4195 = vmatprep.subr.mxu0 %v452
  %4196 = vmatpush1.msra.mxu0 %v451
  %4197 = vmatprep.subr.mxu0 %v448
  %4198 = vmatpush1.msra.mxu0 %v447
  %4199 = vmatprep.subr.mxu0 %v444
  %4200 = vmatpush1.msra.mxu0 %v443
  %4201 = vmatprep.subr.mxu0 %v440
  %4202 = vmatpush1.msra.mxu0 %v439
  %4203 = vmatprep.subr.mxu0 %v436
  %4204 = vmatpush1.msra.mxu0 %v435
  %4205 = vmatprep.subr.mxu0 %v432
  %4206 = vmatpush1.msra.mxu0 %v431
  %4207 = vmatprep.subr.mxu0 %v428
  %4208 = vmatpush1.msra.mxu0 %v427
  %4209 = vmatprep.subr.mxu0 %v552
  %4210 = vmatpush2.msra.mxu0 %v551
  %4211 = vmatprep.subr.mxu0 %v548
  %4212 = vmatpush2.msra.mxu0 %v547
  %4213 = vmatprep.subr.mxu0 %v544
  %4214 = vmatpush2.msra.mxu0 %v543
  %4215 = vmatprep.subr.mxu0 %v540
  %4216 = vmatpush2.msra.mxu0 %v539
  %4217 = vmatprep.subr.mxu0 %v536
  %4218 = vmatpush2.msra.mxu0 %v535
  %4219 = vmatprep.subr.mxu0 %v532
  %4220 = vmatpush2.msra.mxu0 %v531
  %4221 = vmatprep.subr.mxu0 %v528
  %4222 = vmatpush2.msra.mxu0 %v527
  %4223 = vmatprep.subr.mxu0 %v524
  %4224 = vmatpush2.msra.mxu0 %v523
  %4225 = vmatprep.subr.mxu0 %v520
  %4226 = vmatpush2.msra.mxu0 %v519
  %4227 = vmatprep.subr.mxu0 %v516
  %4228 = vmatpush2.msra.mxu0 %v515
  %4229 = vmatprep.subr.mxu0 %v512
  %4230 = vmatpush2.msra.mxu0 %v511
  %4231 = vmatprep.subr.mxu0 %v508
  %4232 = vmatpush2.msra.mxu0 %v507
  %4233 = vmatprep.subr.mxu0 %v504
  %4234 = vmatpush2.msra.mxu0 %v503
  %4235 = vmatprep.subr.mxu0 %v500
  %4236 = vmatpush2.msra.mxu0 %v499
  %4237 = vmatprep.subr.mxu0 %v496
  %4238 = vmatpush2.msra.mxu0 %v495
  %4239 = vmatprep.subr.mxu0 %v492
  %4240 = vmatpush2.msra.mxu0 %v491
  %4241 = vmatprep.mubr.f32.mxu0 %v3664
  %4242 = vmatmul.mubr.f32.gmra.mxu0 %v3663
  %v4243 = vpop.f32.mrf.mxu0
  %v4244 = vadd.f32 %v4173, %v4243
  %v4245 = vpop.f32.mrf.mxu0
  %v4246 = vadd.f32 %v4175, %v4245
  %4247 = vdwg.mxu0
  %v4248 = vmul.f32 %v560, %v4102
  %v4249 = vmul.f32 %v560, %v4104
  %v4250 = vmul.f32 %v560, %v4244
  %v4251 = vmul.f32 %v560, %v4246
  %v4252 = vadd.f32 %v3960, %v4248
  %v4253 = vadd.f32 %v3961, %v4249
  %v4254 = vadd.f32 %v3962, %v4250
  %v4255 = vadd.f32 %v3963, %v4251
  %v4256 = vmul.f32 %v3661, %v4252
  %v4257 = vmul.f32 %v3662, %v4253
  %v4258 = vmul.f32 %v3663, %v4254
  %v4259 = vmul.f32 %v3664, %v4255
  %v4260 = vsel %vm2859, %v4256, 0.0
  %v4261 = vsel %vm2859, %v4257, 0.0
  %v4262 = vadd.f32 %v4260, %v4261
  %v4263 = vsel %vm2859, %v4258, 0.0
  %v4264 = vadd.f32 %v4262, %v4263
  %v4265 = vsel %vm2859, %v4259, 0.0
  %v4266 = vadd.f32 %v4264, %v4265
  %4267 = vadd.xlane.f32.xlu0 %v4266
  %v4268 = vpop.xlane.xlu0 %4267
  %v4269 = vsel %vm3675, 1, 0
  %vm4270 = vcmp.eq.s32.totalorder %v4269, 1
  %v4271 = vsel %vm4270, %v4268, 1.0
  %v4272 = vrcp.pop %v4271
  %v4273 = vmul.f32 %v3665, %v4272
  %v4274 = vmul.f32 %v4273, %v3661
  %v4275 = vmul.f32 %v4273, %v3662
  %v4276 = vmul.f32 %v4273, %v3663
  %v4277 = vmul.f32 %v4273, %v3664
  %v4282 = vcombine.low %v4274, %v4275
  %v4283 = vcombine.low %v4276, %v4277
  %v4285 = vunpack.c.l.s4 1983009808
  %v4286 = vunpack.c.0.s8 %v4285
  %v4287 = vlaneseq
  %v4288 = vshrl.u32 %v4287, 7
  %v4289 = vsub.s32 %v4286, %v4288
  %v4290 = vrot.slane %v4282, %v4289
  %v4292 = vunpack.c.l.s4 1983009808
  %v4293 = vunpack.c.0.s8 %v4292
  %v4294 = vlaneseq
  %v4295 = vshrl.u32 %v4294, 7
  %v4296 = vsub.s32 %v4293, %v4295
  %v4297 = vrot.slane %v4283, %v4296
  %v4298 = vcombine.low %v4290, %v4297
  %v4300 = vadd.f32 %v3659, %v4298
  %v4301 = vmul.f32 %v4273, %v4252
  %v4302 = vmul.f32 %v4273, %v4253
  %v4303 = vmul.f32 %v4273, %v4254
  %v4304 = vmul.f32 %v4273, %v4255
  %v4309 = vcombine.low %v4301, %v4302
  %v4310 = vcombine.low %v4303, %v4304
  %v4312 = vunpack.c.l.s4 1983009808
  %v4313 = vunpack.c.0.s8 %v4312
  %v4314 = vlaneseq
  %v4315 = vshrl.u32 %v4314, 7
  %v4316 = vsub.s32 %v4313, %v4315
  %v4317 = vrot.slane %v4309, %v4316
  %v4319 = vunpack.c.l.s4 1983009808
  %v4320 = vunpack.c.0.s8 %v4319
  %v4321 = vlaneseq
  %v4322 = vshrl.u32 %v4321, 7
  %v4323 = vsub.s32 %v4320, %v4322
  %v4324 = vrot.slane %v4310, %v4323
  %v4325 = vcombine.low %v4317, %v4324
  %v4327 = vsub.f32 %v3660, %v4325
  %v4328 = vmul.f32 %v4327, %v4327
  %v4330 = vcombine.high %v4328, %v4328
  %v4332 = vunpack.c.l.s4 1983009808
  %v4333 = vunpack.c.0.s8 %v4332
  %v4334 = vlaneseq
  %v4335 = vshrl.u32 %v4334, 7
  %v4336 = vsub.s32 %v4333, %v4335
  %v4337 = vrot.slane %v4328, %v4336
  %v4339 = vunpack.c.l.s4 1983009808
  %v4340 = vunpack.c.0.s8 %v4339
  %v4341 = vlaneseq
  %v4342 = vshrl.u32 %v4341, 7
  %v4343 = vsub.s32 %v4340, %v4342
  %v4344 = vrot.slane %v4330, %v4343
  %v4345 = vcombine.high %v4337, %v4337
  %v4346 = vcombine.high %v4344, %v4344
  %v4351 = vsel %vm2859, %v4337, 0.0
  %v4352 = vsel %vm2859, %v4345, 0.0
  %v4353 = vadd.f32 %v4351, %v4352
  %v4354 = vsel %vm2859, %v4344, 0.0
  %v4355 = vadd.f32 %v4353, %v4354
  %v4356 = vsel %vm2859, %v4346, 0.0
  %v4357 = vadd.f32 %v4355, %v4356
  %4358 = vadd.xlane.f32.xlu0 %v4357
  %v4359 = vpop.xlane.xlu0 %4358
  %v4360 = vsel %vm4270, %v3665, 1.0
  %v4361 = vrcp.pop %v4360
  %v4362 = vmul.f32 %v4359, %v4361
  %v4363 = vmul.f32 %v4362, %v3661
  %v4364 = vmul.f32 %v4362, %v3662
  %v4365 = vmul.f32 %v4362, %v3663
  %v4366 = vmul.f32 %v4362, %v3664
  %v4368 = vcombine.high %v4327, %v4327
  %v4370 = vunpack.c.l.s4 1983009808
  %v4371 = vunpack.c.0.s8 %v4370
  %v4372 = vlaneseq
  %v4373 = vshrl.u32 %v4372, 7
  %v4374 = vsub.s32 %v4371, %v4373
  %v4375 = vrot.slane %v4327, %v4374
  %v4377 = vunpack.c.l.s4 1983009808
  %v4378 = vunpack.c.0.s8 %v4377
  %v4379 = vlaneseq
  %v4380 = vshrl.u32 %v4379, 7
  %v4381 = vsub.s32 %v4378, %v4380
  %v4382 = vrot.slane %v4368, %v4381
  %v4383 = vcombine.high %v4375, %v4375
  %v4384 = vcombine.high %v4382, %v4382
  %v4389 = vadd.f32 %v4363, %v4375
  %v4390 = vadd.f32 %v4364, %v4383
  %v4391 = vadd.f32 %v4365, %v4382
  %v4392 = vadd.f32 %v4366, %v4384
  %v4393 = vsel %vm4270, %v4300, %v3659
  %v4394 = vsel %vm4270, %v4327, %v3660
  %v4395 = vsel %vm4270, %v4389, %v3661
  %v4396 = vsel %vm4270, %v4390, %v3662
  %v4397 = vsel %vm4270, %v4391, %v3663
  %v4398 = vsel %vm4270, %v4392, %v3664
  %v4399 = vsel %vm4270, %v4359, %v3665
  %v4400 = vsel %vm2859, %v4399, -inf
  %v4401 = vrot.slane %v4400, 4
  %v4402 = vmax.f32 %v4400, %v4401
  %v4403 = vrot.slane %v4402, 2
  %v4404 = vmax.f32 %v4402, %v4403
  %v4405 = vrot.slane %v4404, 1
  %v4406 = vmax.f32 %v4404, %v4405
  %s4407 = vtos %v4406
  %v4408 = vstv %s4407
  %vm4409 = vcmp.ge.f32.partialorder %v4408, 1e-10
  %4410 = vmatprep.subr.mxu0 %v101
  %4411 = vmatpush1.msra.mxu0 %v100
  %4412 = vmatprep.subr.mxu0 %v97
  %4413 = vmatpush1.msra.mxu0 %v96
  %4414 = vmatprep.subr.mxu0 %v93
  %4415 = vmatpush1.msra.mxu0 %v92
  %4416 = vmatprep.subr.mxu0 %v89
  %4417 = vmatpush1.msra.mxu0 %v88
  %4418 = vmatprep.subr.mxu0 %v85
  %4419 = vmatpush1.msra.mxu0 %v84
  %4420 = vmatprep.subr.mxu0 %v81
  %4421 = vmatpush1.msra.mxu0 %v80
  %4422 = vmatprep.subr.mxu0 %v77
  %4423 = vmatpush1.msra.mxu0 %v76
  %4424 = vmatprep.subr.mxu0 %v73
  %4425 = vmatpush1.msra.mxu0 %v72
  %4426 = vmatprep.subr.mxu0 %v69
  %4427 = vmatpush1.msra.mxu0 %v68
  %4428 = vmatprep.subr.mxu0 %v65
  %4429 = vmatpush1.msra.mxu0 %v64
  %4430 = vmatprep.subr.mxu0 %v61
  %4431 = vmatpush1.msra.mxu0 %v60
  %4432 = vmatprep.subr.mxu0 %v57
  %4433 = vmatpush1.msra.mxu0 %v56
  %4434 = vmatprep.subr.mxu0 %v53
  %4435 = vmatpush1.msra.mxu0 %v52
  %4436 = vmatprep.subr.mxu0 %v49
  %4437 = vmatpush1.msra.mxu0 %v48
  %4438 = vmatprep.subr.mxu0 %v45
  %4439 = vmatpush1.msra.mxu0 %v44
  %4440 = vmatprep.subr.mxu0 %v41
  %4441 = vmatpush1.msra.mxu0 %v40
  %4442 = vmatprep.subr.mxu0 %v165
  %4443 = vmatpush2.msra.mxu0 %v164
  %4444 = vmatprep.subr.mxu0 %v161
  %4445 = vmatpush2.msra.mxu0 %v160
  %4446 = vmatprep.subr.mxu0 %v157
  %4447 = vmatpush2.msra.mxu0 %v156
  %4448 = vmatprep.subr.mxu0 %v153
  %4449 = vmatpush2.msra.mxu0 %v152
  %4450 = vmatprep.subr.mxu0 %v149
  %4451 = vmatpush2.msra.mxu0 %v148
  %4452 = vmatprep.subr.mxu0 %v145
  %4453 = vmatpush2.msra.mxu0 %v144
  %4454 = vmatprep.subr.mxu0 %v141
  %4455 = vmatpush2.msra.mxu0 %v140
  %4456 = vmatprep.subr.mxu0 %v137
  %4457 = vmatpush2.msra.mxu0 %v136
  %4458 = vmatprep.subr.mxu0 %v133
  %4459 = vmatpush2.msra.mxu0 %v132
  %4460 = vmatprep.subr.mxu0 %v129
  %4461 = vmatpush2.msra.mxu0 %v128
  %4462 = vmatprep.subr.mxu0 %v125
  %4463 = vmatpush2.msra.mxu0 %v124
  %4464 = vmatprep.subr.mxu0 %v121
  %4465 = vmatpush2.msra.mxu0 %v120
  %4466 = vmatprep.subr.mxu0 %v117
  %4467 = vmatpush2.msra.mxu0 %v116
  %4468 = vmatprep.subr.mxu0 %v113
  %4469 = vmatpush2.msra.mxu0 %v112
  %4470 = vmatprep.subr.mxu0 %v109
  %4471 = vmatpush2.msra.mxu0 %v108
  %4472 = vmatprep.subr.mxu0 %v105
  %4473 = vmatpush2.msra.mxu0 %v104
  %4474 = vmatprep.mubr.f32.mxu0 %v4396
  %4475 = vmatmul.mubr.f32.gmra.mxu0 %v4395
  %v4476 = vpop.f32.mrf.mxu0
  %v4477 = vadd.f32 0.0, %v4476
  %v4478 = vpop.f32.mrf.mxu0
  %v4479 = vadd.f32 0.0, %v4478
  %4480 = vdwg.mxu0
  %4481 = vmatprep.subr.mxu0 %v229
  %4482 = vmatpush1.msra.mxu0 %v228
  %4483 = vmatprep.subr.mxu0 %v225
  %4484 = vmatpush1.msra.mxu0 %v224
  %4485 = vmatprep.subr.mxu0 %v221
  %4486 = vmatpush1.msra.mxu0 %v220
  %4487 = vmatprep.subr.mxu0 %v217
  %4488 = vmatpush1.msra.mxu0 %v216
  %4489 = vmatprep.subr.mxu0 %v213
  %4490 = vmatpush1.msra.mxu0 %v212
  %4491 = vmatprep.subr.mxu0 %v209
  %4492 = vmatpush1.msra.mxu0 %v208
  %4493 = vmatprep.subr.mxu0 %v205
  %4494 = vmatpush1.msra.mxu0 %v204
  %4495 = vmatprep.subr.mxu0 %v201
  %4496 = vmatpush1.msra.mxu0 %v200
  %4497 = vmatprep.subr.mxu0 %v197
  %4498 = vmatpush1.msra.mxu0 %v196
  %4499 = vmatprep.subr.mxu0 %v193
  %4500 = vmatpush1.msra.mxu0 %v192
  %4501 = vmatprep.subr.mxu0 %v189
  %4502 = vmatpush1.msra.mxu0 %v188
  %4503 = vmatprep.subr.mxu0 %v185
  %4504 = vmatpush1.msra.mxu0 %v184
  %4505 = vmatprep.subr.mxu0 %v181
  %4506 = vmatpush1.msra.mxu0 %v180
  %4507 = vmatprep.subr.mxu0 %v177
  %4508 = vmatpush1.msra.mxu0 %v176
  %4509 = vmatprep.subr.mxu0 %v173
  %4510 = vmatpush1.msra.mxu0 %v172
  %4511 = vmatprep.subr.mxu0 %v169
  %4512 = vmatpush1.msra.mxu0 %v168
  %4513 = vmatprep.subr.mxu0 %v293
  %4514 = vmatpush2.msra.mxu0 %v292
  %4515 = vmatprep.subr.mxu0 %v289
  %4516 = vmatpush2.msra.mxu0 %v288
  %4517 = vmatprep.subr.mxu0 %v285
  %4518 = vmatpush2.msra.mxu0 %v284
  %4519 = vmatprep.subr.mxu0 %v281
  %4520 = vmatpush2.msra.mxu0 %v280
  %4521 = vmatprep.subr.mxu0 %v277
  %4522 = vmatpush2.msra.mxu0 %v276
  %4523 = vmatprep.subr.mxu0 %v273
  %4524 = vmatpush2.msra.mxu0 %v272
  %4525 = vmatprep.subr.mxu0 %v269
  %4526 = vmatpush2.msra.mxu0 %v268
  %4527 = vmatprep.subr.mxu0 %v265
  %4528 = vmatpush2.msra.mxu0 %v264
  %4529 = vmatprep.subr.mxu0 %v261
  %4530 = vmatpush2.msra.mxu0 %v260
  %4531 = vmatprep.subr.mxu0 %v257
  %4532 = vmatpush2.msra.mxu0 %v256
  %4533 = vmatprep.subr.mxu0 %v253
  %4534 = vmatpush2.msra.mxu0 %v252
  %4535 = vmatprep.subr.mxu0 %v249
  %4536 = vmatpush2.msra.mxu0 %v248
  %4537 = vmatprep.subr.mxu0 %v245
  %4538 = vmatpush2.msra.mxu0 %v244
  %4539 = vmatprep.subr.mxu0 %v241
  %4540 = vmatpush2.msra.mxu0 %v240
  %4541 = vmatprep.subr.mxu0 %v237
  %4542 = vmatpush2.msra.mxu0 %v236
  %4543 = vmatprep.subr.mxu0 %v233
  %4544 = vmatpush2.msra.mxu0 %v232
  %4545 = vmatprep.mubr.f32.mxu0 %v4398
  %4546 = vmatmul.mubr.f32.gmra.mxu0 %v4397
  %v4547 = vpop.f32.mrf.mxu0
  %v4548 = vadd.f32 %v4477, %v4547
  %v4549 = vpop.f32.mrf.mxu0
  %v4550 = vadd.f32 %v4479, %v4549
  %4551 = vdwg.mxu0
  %4552 = vmatprep.subr.mxu0 %v103
  %4553 = vmatpush1.msra.mxu0 %v102
  %4554 = vmatprep.subr.mxu0 %v99
  %4555 = vmatpush1.msra.mxu0 %v98
  %4556 = vmatprep.subr.mxu0 %v95
  %4557 = vmatpush1.msra.mxu0 %v94
  %4558 = vmatprep.subr.mxu0 %v91
  %4559 = vmatpush1.msra.mxu0 %v90
  %4560 = vmatprep.subr.mxu0 %v87
  %4561 = vmatpush1.msra.mxu0 %v86
  %4562 = vmatprep.subr.mxu0 %v83
  %4563 = vmatpush1.msra.mxu0 %v82
  %4564 = vmatprep.subr.mxu0 %v79
  %4565 = vmatpush1.msra.mxu0 %v78
  %4566 = vmatprep.subr.mxu0 %v75
  %4567 = vmatpush1.msra.mxu0 %v74
  %4568 = vmatprep.subr.mxu0 %v71
  %4569 = vmatpush1.msra.mxu0 %v70
  %4570 = vmatprep.subr.mxu0 %v67
  %4571 = vmatpush1.msra.mxu0 %v66
  %4572 = vmatprep.subr.mxu0 %v63
  %4573 = vmatpush1.msra.mxu0 %v62
  %4574 = vmatprep.subr.mxu0 %v59
  %4575 = vmatpush1.msra.mxu0 %v58
  %4576 = vmatprep.subr.mxu0 %v55
  %4577 = vmatpush1.msra.mxu0 %v54
  %4578 = vmatprep.subr.mxu0 %v51
  %4579 = vmatpush1.msra.mxu0 %v50
  %4580 = vmatprep.subr.mxu0 %v47
  %4581 = vmatpush1.msra.mxu0 %v46
  %4582 = vmatprep.subr.mxu0 %v43
  %4583 = vmatpush1.msra.mxu0 %v42
  %4584 = vmatprep.subr.mxu0 %v167
  %4585 = vmatpush2.msra.mxu0 %v166
  %4586 = vmatprep.subr.mxu0 %v163
  %4587 = vmatpush2.msra.mxu0 %v162
  %4588 = vmatprep.subr.mxu0 %v159
  %4589 = vmatpush2.msra.mxu0 %v158
  %4590 = vmatprep.subr.mxu0 %v155
  %4591 = vmatpush2.msra.mxu0 %v154
  %4592 = vmatprep.subr.mxu0 %v151
  %4593 = vmatpush2.msra.mxu0 %v150
  %4594 = vmatprep.subr.mxu0 %v147
  %4595 = vmatpush2.msra.mxu0 %v146
  %4596 = vmatprep.subr.mxu0 %v143
  %4597 = vmatpush2.msra.mxu0 %v142
  %4598 = vmatprep.subr.mxu0 %v139
  %4599 = vmatpush2.msra.mxu0 %v138
  %4600 = vmatprep.subr.mxu0 %v135
  %4601 = vmatpush2.msra.mxu0 %v134
  %4602 = vmatprep.subr.mxu0 %v131
  %4603 = vmatpush2.msra.mxu0 %v130
  %4604 = vmatprep.subr.mxu0 %v127
  %4605 = vmatpush2.msra.mxu0 %v126
  %4606 = vmatprep.subr.mxu0 %v123
  %4607 = vmatpush2.msra.mxu0 %v122
  %4608 = vmatprep.subr.mxu0 %v119
  %4609 = vmatpush2.msra.mxu0 %v118
  %4610 = vmatprep.subr.mxu0 %v115
  %4611 = vmatpush2.msra.mxu0 %v114
  %4612 = vmatprep.subr.mxu0 %v111
  %4613 = vmatpush2.msra.mxu0 %v110
  %4614 = vmatprep.subr.mxu0 %v107
  %4615 = vmatpush2.msra.mxu0 %v106
  %4616 = vmatprep.mubr.f32.mxu0 %v4396
  %4617 = vmatmul.mubr.f32.gmra.mxu0 %v4395
  %v4618 = vpop.f32.mrf.mxu0
  %v4619 = vadd.f32 0.0, %v4618
  %v4620 = vpop.f32.mrf.mxu0
  %v4621 = vadd.f32 0.0, %v4620
  %4622 = vdwg.mxu0
  %4623 = vmatprep.subr.mxu0 %v231
  %4624 = vmatpush1.msra.mxu0 %v230
  %4625 = vmatprep.subr.mxu0 %v227
  %4626 = vmatpush1.msra.mxu0 %v226
  %4627 = vmatprep.subr.mxu0 %v223
  %4628 = vmatpush1.msra.mxu0 %v222
  %4629 = vmatprep.subr.mxu0 %v219
  %4630 = vmatpush1.msra.mxu0 %v218
  %4631 = vmatprep.subr.mxu0 %v215
  %4632 = vmatpush1.msra.mxu0 %v214
  %4633 = vmatprep.subr.mxu0 %v211
  %4634 = vmatpush1.msra.mxu0 %v210
  %4635 = vmatprep.subr.mxu0 %v207
  %4636 = vmatpush1.msra.mxu0 %v206
  %4637 = vmatprep.subr.mxu0 %v203
  %4638 = vmatpush1.msra.mxu0 %v202
  %4639 = vmatprep.subr.mxu0 %v199
  %4640 = vmatpush1.msra.mxu0 %v198
  %4641 = vmatprep.subr.mxu0 %v195
  %4642 = vmatpush1.msra.mxu0 %v194
  %4643 = vmatprep.subr.mxu0 %v191
  %4644 = vmatpush1.msra.mxu0 %v190
  %4645 = vmatprep.subr.mxu0 %v187
  %4646 = vmatpush1.msra.mxu0 %v186
  %4647 = vmatprep.subr.mxu0 %v183
  %4648 = vmatpush1.msra.mxu0 %v182
  %4649 = vmatprep.subr.mxu0 %v179
  %4650 = vmatpush1.msra.mxu0 %v178
  %4651 = vmatprep.subr.mxu0 %v175
  %4652 = vmatpush1.msra.mxu0 %v174
  %4653 = vmatprep.subr.mxu0 %v171
  %4654 = vmatpush1.msra.mxu0 %v170
  %4655 = vmatprep.subr.mxu0 %v295
  %4656 = vmatpush2.msra.mxu0 %v294
  %4657 = vmatprep.subr.mxu0 %v291
  %4658 = vmatpush2.msra.mxu0 %v290
  %4659 = vmatprep.subr.mxu0 %v287
  %4660 = vmatpush2.msra.mxu0 %v286
  %4661 = vmatprep.subr.mxu0 %v283
  %4662 = vmatpush2.msra.mxu0 %v282
  %4663 = vmatprep.subr.mxu0 %v279
  %4664 = vmatpush2.msra.mxu0 %v278
  %4665 = vmatprep.subr.mxu0 %v275
  %4666 = vmatpush2.msra.mxu0 %v274
  %4667 = vmatprep.subr.mxu0 %v271
  %4668 = vmatpush2.msra.mxu0 %v270
  %4669 = vmatprep.subr.mxu0 %v267
  %4670 = vmatpush2.msra.mxu0 %v266
  %4671 = vmatprep.subr.mxu0 %v263
  %4672 = vmatpush2.msra.mxu0 %v262
  %4673 = vmatprep.subr.mxu0 %v259
  %4674 = vmatpush2.msra.mxu0 %v258
  %4675 = vmatprep.subr.mxu0 %v255
  %4676 = vmatpush2.msra.mxu0 %v254
  %4677 = vmatprep.subr.mxu0 %v251
  %4678 = vmatpush2.msra.mxu0 %v250
  %4679 = vmatprep.subr.mxu0 %v247
  %4680 = vmatpush2.msra.mxu0 %v246
  %4681 = vmatprep.subr.mxu0 %v243
  %4682 = vmatpush2.msra.mxu0 %v242
  %4683 = vmatprep.subr.mxu0 %v239
  %4684 = vmatpush2.msra.mxu0 %v238
  %4685 = vmatprep.subr.mxu0 %v235
  %4686 = vmatpush2.msra.mxu0 %v234
  %4687 = vmatprep.mubr.f32.mxu0 %v4398
  %4688 = vmatmul.mubr.f32.gmra.mxu0 %v4397
  %v4689 = vpop.f32.mrf.mxu0
  %v4690 = vadd.f32 %v4619, %v4689
  %v4691 = vpop.f32.mrf.mxu0
  %v4692 = vadd.f32 %v4621, %v4691
  %4693 = vdwg.mxu0
  %v4694 = vmul.f32 %v557, %v4548
  %v4695 = vmul.f32 %v557, %v4550
  %v4696 = vmul.f32 %v557, %v4690
  %v4697 = vmul.f32 %v557, %v4692
  %4698 = vmatprep.subr.mxu0 %v358
  %4699 = vmatpush1.msra.mxu0 %v357
  %4700 = vmatprep.subr.mxu0 %v354
  %4701 = vmatpush1.msra.mxu0 %v353
  %4702 = vmatprep.subr.mxu0 %v350
  %4703 = vmatpush1.msra.mxu0 %v349
  %4704 = vmatprep.subr.mxu0 %v346
  %4705 = vmatpush1.msra.mxu0 %v345
  %4706 = vmatprep.subr.mxu0 %v342
  %4707 = vmatpush1.msra.mxu0 %v341
  %4708 = vmatprep.subr.mxu0 %v338
  %4709 = vmatpush1.msra.mxu0 %v337
  %4710 = vmatprep.subr.mxu0 %v334
  %4711 = vmatpush1.msra.mxu0 %v333
  %4712 = vmatprep.subr.mxu0 %v330
  %4713 = vmatpush1.msra.mxu0 %v329
  %4714 = vmatprep.subr.mxu0 %v326
  %4715 = vmatpush1.msra.mxu0 %v325
  %4716 = vmatprep.subr.mxu0 %v322
  %4717 = vmatpush1.msra.mxu0 %v321
  %4718 = vmatprep.subr.mxu0 %v318
  %4719 = vmatpush1.msra.mxu0 %v317
  %4720 = vmatprep.subr.mxu0 %v314
  %4721 = vmatpush1.msra.mxu0 %v313
  %4722 = vmatprep.subr.mxu0 %v310
  %4723 = vmatpush1.msra.mxu0 %v309
  %4724 = vmatprep.subr.mxu0 %v306
  %4725 = vmatpush1.msra.mxu0 %v305
  %4726 = vmatprep.subr.mxu0 %v302
  %4727 = vmatpush1.msra.mxu0 %v301
  %4728 = vmatprep.subr.mxu0 %v298
  %4729 = vmatpush1.msra.mxu0 %v297
  %4730 = vmatprep.subr.mxu0 %v422
  %4731 = vmatpush2.msra.mxu0 %v421
  %4732 = vmatprep.subr.mxu0 %v418
  %4733 = vmatpush2.msra.mxu0 %v417
  %4734 = vmatprep.subr.mxu0 %v414
  %4735 = vmatpush2.msra.mxu0 %v413
  %4736 = vmatprep.subr.mxu0 %v410
  %4737 = vmatpush2.msra.mxu0 %v409
  %4738 = vmatprep.subr.mxu0 %v406
  %4739 = vmatpush2.msra.mxu0 %v405
  %4740 = vmatprep.subr.mxu0 %v402
  %4741 = vmatpush2.msra.mxu0 %v401
  %4742 = vmatprep.subr.mxu0 %v398
  %4743 = vmatpush2.msra.mxu0 %v397
  %4744 = vmatprep.subr.mxu0 %v394
  %4745 = vmatpush2.msra.mxu0 %v393
  %4746 = vmatprep.subr.mxu0 %v390
  %4747 = vmatpush2.msra.mxu0 %v389
  %4748 = vmatprep.subr.mxu0 %v386
  %4749 = vmatpush2.msra.mxu0 %v385
  %4750 = vmatprep.subr.mxu0 %v382
  %4751 = vmatpush2.msra.mxu0 %v381
  %4752 = vmatprep.subr.mxu0 %v378
  %4753 = vmatpush2.msra.mxu0 %v377
  %4754 = vmatprep.subr.mxu0 %v374
  %4755 = vmatpush2.msra.mxu0 %v373
  %4756 = vmatprep.subr.mxu0 %v370
  %4757 = vmatpush2.msra.mxu0 %v369
  %4758 = vmatprep.subr.mxu0 %v366
  %4759 = vmatpush2.msra.mxu0 %v365
  %4760 = vmatprep.subr.mxu0 %v362
  %4761 = vmatpush2.msra.mxu0 %v361
  %4762 = vmatprep.mubr.f32.mxu0 %v4396
  %4763 = vmatmul.mubr.f32.gmra.mxu0 %v4395
  %v4764 = vpop.f32.mrf.mxu0
  %v4765 = vadd.f32 0.0, %v4764
  %v4766 = vpop.f32.mrf.mxu0
  %v4767 = vadd.f32 0.0, %v4766
  %4768 = vdwg.mxu0
  %4769 = vmatprep.subr.mxu0 %v486
  %4770 = vmatpush1.msra.mxu0 %v485
  %4771 = vmatprep.subr.mxu0 %v482
  %4772 = vmatpush1.msra.mxu0 %v481
  %4773 = vmatprep.subr.mxu0 %v478
  %4774 = vmatpush1.msra.mxu0 %v477
  %4775 = vmatprep.subr.mxu0 %v474
  %4776 = vmatpush1.msra.mxu0 %v473
  %4777 = vmatprep.subr.mxu0 %v470
  %4778 = vmatpush1.msra.mxu0 %v469
  %4779 = vmatprep.subr.mxu0 %v466
  %4780 = vmatpush1.msra.mxu0 %v465
  %4781 = vmatprep.subr.mxu0 %v462
  %4782 = vmatpush1.msra.mxu0 %v461
  %4783 = vmatprep.subr.mxu0 %v458
  %4784 = vmatpush1.msra.mxu0 %v457
  %4785 = vmatprep.subr.mxu0 %v454
  %4786 = vmatpush1.msra.mxu0 %v453
  %4787 = vmatprep.subr.mxu0 %v450
  %4788 = vmatpush1.msra.mxu0 %v449
  %4789 = vmatprep.subr.mxu0 %v446
  %4790 = vmatpush1.msra.mxu0 %v445
  %4791 = vmatprep.subr.mxu0 %v442
  %4792 = vmatpush1.msra.mxu0 %v441
  %4793 = vmatprep.subr.mxu0 %v438
  %4794 = vmatpush1.msra.mxu0 %v437
  %4795 = vmatprep.subr.mxu0 %v434
  %4796 = vmatpush1.msra.mxu0 %v433
  %4797 = vmatprep.subr.mxu0 %v430
  %4798 = vmatpush1.msra.mxu0 %v429
  %4799 = vmatprep.subr.mxu0 %v426
  %4800 = vmatpush1.msra.mxu0 %v425
  %4801 = vmatprep.subr.mxu0 %v550
  %4802 = vmatpush2.msra.mxu0 %v549
  %4803 = vmatprep.subr.mxu0 %v546
  %4804 = vmatpush2.msra.mxu0 %v545
  %4805 = vmatprep.subr.mxu0 %v542
  %4806 = vmatpush2.msra.mxu0 %v541
  %4807 = vmatprep.subr.mxu0 %v538
  %4808 = vmatpush2.msra.mxu0 %v537
  %4809 = vmatprep.subr.mxu0 %v534
  %4810 = vmatpush2.msra.mxu0 %v533
  %4811 = vmatprep.subr.mxu0 %v530
  %4812 = vmatpush2.msra.mxu0 %v529
  %4813 = vmatprep.subr.mxu0 %v526
  %4814 = vmatpush2.msra.mxu0 %v525
  %4815 = vmatprep.subr.mxu0 %v522
  %4816 = vmatpush2.msra.mxu0 %v521
  %4817 = vmatprep.subr.mxu0 %v518
  %4818 = vmatpush2.msra.mxu0 %v517
  %4819 = vmatprep.subr.mxu0 %v514
  %4820 = vmatpush2.msra.mxu0 %v513
  %4821 = vmatprep.subr.mxu0 %v510
  %4822 = vmatpush2.msra.mxu0 %v509
  %4823 = vmatprep.subr.mxu0 %v506
  %4824 = vmatpush2.msra.mxu0 %v505
  %4825 = vmatprep.subr.mxu0 %v502
  %4826 = vmatpush2.msra.mxu0 %v501
  %4827 = vmatprep.subr.mxu0 %v498
  %4828 = vmatpush2.msra.mxu0 %v497
  %4829 = vmatprep.subr.mxu0 %v494
  %4830 = vmatpush2.msra.mxu0 %v493
  %4831 = vmatprep.subr.mxu0 %v490
  %4832 = vmatpush2.msra.mxu0 %v489
  %4833 = vmatprep.mubr.f32.mxu0 %v4398
  %4834 = vmatmul.mubr.f32.gmra.mxu0 %v4397
  %v4835 = vpop.f32.mrf.mxu0
  %v4836 = vadd.f32 %v4765, %v4835
  %v4837 = vpop.f32.mrf.mxu0
  %v4838 = vadd.f32 %v4767, %v4837
  %4839 = vdwg.mxu0
  %4840 = vmatprep.subr.mxu0 %v360
  %4841 = vmatpush1.msra.mxu0 %v359
  %4842 = vmatprep.subr.mxu0 %v356
  %4843 = vmatpush1.msra.mxu0 %v355
  %4844 = vmatprep.subr.mxu0 %v352
  %4845 = vmatpush1.msra.mxu0 %v351
  %4846 = vmatprep.subr.mxu0 %v348
  %4847 = vmatpush1.msra.mxu0 %v347
  %4848 = vmatprep.subr.mxu0 %v344
  %4849 = vmatpush1.msra.mxu0 %v343
  %4850 = vmatprep.subr.mxu0 %v340
  %4851 = vmatpush1.msra.mxu0 %v339
  %4852 = vmatprep.subr.mxu0 %v336
  %4853 = vmatpush1.msra.mxu0 %v335
  %4854 = vmatprep.subr.mxu0 %v332
  %4855 = vmatpush1.msra.mxu0 %v331
  %4856 = vmatprep.subr.mxu0 %v328
  %4857 = vmatpush1.msra.mxu0 %v327
  %4858 = vmatprep.subr.mxu0 %v324
  %4859 = vmatpush1.msra.mxu0 %v323
  %4860 = vmatprep.subr.mxu0 %v320
  %4861 = vmatpush1.msra.mxu0 %v319
  %4862 = vmatprep.subr.mxu0 %v316
  %4863 = vmatpush1.msra.mxu0 %v315
  %4864 = vmatprep.subr.mxu0 %v312
  %4865 = vmatpush1.msra.mxu0 %v311
  %4866 = vmatprep.subr.mxu0 %v308
  %4867 = vmatpush1.msra.mxu0 %v307
  %4868 = vmatprep.subr.mxu0 %v304
  %4869 = vmatpush1.msra.mxu0 %v303
  %4870 = vmatprep.subr.mxu0 %v300
  %4871 = vmatpush1.msra.mxu0 %v299
  %4872 = vmatprep.subr.mxu0 %v424
  %4873 = vmatpush2.msra.mxu0 %v423
  %4874 = vmatprep.subr.mxu0 %v420
  %4875 = vmatpush2.msra.mxu0 %v419
  %4876 = vmatprep.subr.mxu0 %v416
  %4877 = vmatpush2.msra.mxu0 %v415
  %4878 = vmatprep.subr.mxu0 %v412
  %4879 = vmatpush2.msra.mxu0 %v411
  %4880 = vmatprep.subr.mxu0 %v408
  %4881 = vmatpush2.msra.mxu0 %v407
  %4882 = vmatprep.subr.mxu0 %v404
  %4883 = vmatpush2.msra.mxu0 %v403
  %4884 = vmatprep.subr.mxu0 %v400
  %4885 = vmatpush2.msra.mxu0 %v399
  %4886 = vmatprep.subr.mxu0 %v396
  %4887 = vmatpush2.msra.mxu0 %v395
  %4888 = vmatprep.subr.mxu0 %v392
  %4889 = vmatpush2.msra.mxu0 %v391
  %4890 = vmatprep.subr.mxu0 %v388
  %4891 = vmatpush2.msra.mxu0 %v387
  %4892 = vmatprep.subr.mxu0 %v384
  %4893 = vmatpush2.msra.mxu0 %v383
  %4894 = vmatprep.subr.mxu0 %v380
  %4895 = vmatpush2.msra.mxu0 %v379
  %4896 = vmatprep.subr.mxu0 %v376
  %4897 = vmatpush2.msra.mxu0 %v375
  %4898 = vmatprep.subr.mxu0 %v372
  %4899 = vmatpush2.msra.mxu0 %v371
  %4900 = vmatprep.subr.mxu0 %v368
  %4901 = vmatpush2.msra.mxu0 %v367
  %4902 = vmatprep.subr.mxu0 %v364
  %4903 = vmatpush2.msra.mxu0 %v363
  %4904 = vmatprep.mubr.f32.mxu0 %v4396
  %4905 = vmatmul.mubr.f32.gmra.mxu0 %v4395
  %v4906 = vpop.f32.mrf.mxu0
  %v4907 = vadd.f32 0.0, %v4906
  %v4908 = vpop.f32.mrf.mxu0
  %v4909 = vadd.f32 0.0, %v4908
  %4910 = vdwg.mxu0
  %4911 = vmatprep.subr.mxu0 %v488
  %4912 = vmatpush1.msra.mxu0 %v487
  %4913 = vmatprep.subr.mxu0 %v484
  %4914 = vmatpush1.msra.mxu0 %v483
  %4915 = vmatprep.subr.mxu0 %v480
  %4916 = vmatpush1.msra.mxu0 %v479
  %4917 = vmatprep.subr.mxu0 %v476
  %4918 = vmatpush1.msra.mxu0 %v475
  %4919 = vmatprep.subr.mxu0 %v472
  %4920 = vmatpush1.msra.mxu0 %v471
  %4921 = vmatprep.subr.mxu0 %v468
  %4922 = vmatpush1.msra.mxu0 %v467
  %4923 = vmatprep.subr.mxu0 %v464
  %4924 = vmatpush1.msra.mxu0 %v463
  %4925 = vmatprep.subr.mxu0 %v460
  %4926 = vmatpush1.msra.mxu0 %v459
  %4927 = vmatprep.subr.mxu0 %v456
  %4928 = vmatpush1.msra.mxu0 %v455
  %4929 = vmatprep.subr.mxu0 %v452
  %4930 = vmatpush1.msra.mxu0 %v451
  %4931 = vmatprep.subr.mxu0 %v448
  %4932 = vmatpush1.msra.mxu0 %v447
  %4933 = vmatprep.subr.mxu0 %v444
  %4934 = vmatpush1.msra.mxu0 %v443
  %4935 = vmatprep.subr.mxu0 %v440
  %4936 = vmatpush1.msra.mxu0 %v439
  %4937 = vmatprep.subr.mxu0 %v436
  %4938 = vmatpush1.msra.mxu0 %v435
  %4939 = vmatprep.subr.mxu0 %v432
  %4940 = vmatpush1.msra.mxu0 %v431
  %4941 = vmatprep.subr.mxu0 %v428
  %4942 = vmatpush1.msra.mxu0 %v427
  %4943 = vmatprep.subr.mxu0 %v552
  %4944 = vmatpush2.msra.mxu0 %v551
  %4945 = vmatprep.subr.mxu0 %v548
  %4946 = vmatpush2.msra.mxu0 %v547
  %4947 = vmatprep.subr.mxu0 %v544
  %4948 = vmatpush2.msra.mxu0 %v543
  %4949 = vmatprep.subr.mxu0 %v540
  %4950 = vmatpush2.msra.mxu0 %v539
  %4951 = vmatprep.subr.mxu0 %v536
  %4952 = vmatpush2.msra.mxu0 %v535
  %4953 = vmatprep.subr.mxu0 %v532
  %4954 = vmatpush2.msra.mxu0 %v531
  %4955 = vmatprep.subr.mxu0 %v528
  %4956 = vmatpush2.msra.mxu0 %v527
  %4957 = vmatprep.subr.mxu0 %v524
  %4958 = vmatpush2.msra.mxu0 %v523
  %4959 = vmatprep.subr.mxu0 %v520
  %4960 = vmatpush2.msra.mxu0 %v519
  %4961 = vmatprep.subr.mxu0 %v516
  %4962 = vmatpush2.msra.mxu0 %v515
  %4963 = vmatprep.subr.mxu0 %v512
  %4964 = vmatpush2.msra.mxu0 %v511
  %4965 = vmatprep.subr.mxu0 %v508
  %4966 = vmatpush2.msra.mxu0 %v507
  %4967 = vmatprep.subr.mxu0 %v504
  %4968 = vmatpush2.msra.mxu0 %v503
  %4969 = vmatprep.subr.mxu0 %v500
  %4970 = vmatpush2.msra.mxu0 %v499
  %4971 = vmatprep.subr.mxu0 %v496
  %4972 = vmatpush2.msra.mxu0 %v495
  %4973 = vmatprep.subr.mxu0 %v492
  %4974 = vmatpush2.msra.mxu0 %v491
  %4975 = vmatprep.mubr.f32.mxu0 %v4398
  %4976 = vmatmul.mubr.f32.gmra.mxu0 %v4397
  %v4977 = vpop.f32.mrf.mxu0
  %v4978 = vadd.f32 %v4907, %v4977
  %v4979 = vpop.f32.mrf.mxu0
  %v4980 = vadd.f32 %v4909, %v4979
  %4981 = vdwg.mxu0
  %v4982 = vmul.f32 %v560, %v4836
  %v4983 = vmul.f32 %v560, %v4838
  %v4984 = vmul.f32 %v560, %v4978
  %v4985 = vmul.f32 %v560, %v4980
  %v4986 = vadd.f32 %v4694, %v4982
  %v4987 = vadd.f32 %v4695, %v4983
  %v4988 = vadd.f32 %v4696, %v4984
  %v4989 = vadd.f32 %v4697, %v4985
  %v4990 = vmul.f32 %v4395, %v4986
  %v4991 = vmul.f32 %v4396, %v4987
  %v4992 = vmul.f32 %v4397, %v4988
  %v4993 = vmul.f32 %v4398, %v4989
  %v4994 = vsel %vm2859, %v4990, 0.0
  %v4995 = vsel %vm2859, %v4991, 0.0
  %v4996 = vadd.f32 %v4994, %v4995
  %v4997 = vsel %vm2859, %v4992, 0.0
  %v4998 = vadd.f32 %v4996, %v4997
  %v4999 = vsel %vm2859, %v4993, 0.0
  %v5000 = vadd.f32 %v4998, %v4999
  %5001 = vadd.xlane.f32.xlu0 %v5000
  %v5002 = vpop.xlane.xlu0 %5001
  %v5003 = vsel %vm4409, 1, 0
  %vm5004 = vcmp.eq.s32.totalorder %v5003, 1
  %v5005 = vsel %vm5004, %v5002, 1.0
  %v5006 = vrcp.pop %v5005
  %v5007 = vmul.f32 %v4399, %v5006
  %v5008 = vmul.f32 %v5007, %v4395
  %v5009 = vmul.f32 %v5007, %v4396
  %v5010 = vmul.f32 %v5007, %v4397
  %v5011 = vmul.f32 %v5007, %v4398
  %v5016 = vcombine.low %v5008, %v5009
  %v5017 = vcombine.low %v5010, %v5011
  %v5019 = vunpack.c.l.s4 1983009808
  %v5020 = vunpack.c.0.s8 %v5019
  %v5021 = vlaneseq
  %v5022 = vshrl.u32 %v5021, 7
  %v5023 = vsub.s32 %v5020, %v5022
  %v5024 = vrot.slane %v5016, %v5023
  %v5026 = vunpack.c.l.s4 1983009808
  %v5027 = vunpack.c.0.s8 %v5026
  %v5028 = vlaneseq
  %v5029 = vshrl.u32 %v5028, 7
  %v5030 = vsub.s32 %v5027, %v5029
  %v5031 = vrot.slane %v5017, %v5030
  %v5032 = vcombine.low %v5024, %v5031
  %v5034 = vadd.f32 %v4393, %v5032
  %v5035 = vmul.f32 %v5007, %v4986
  %v5036 = vmul.f32 %v5007, %v4987
  %v5037 = vmul.f32 %v5007, %v4988
  %v5038 = vmul.f32 %v5007, %v4989
  %v5043 = vcombine.low %v5035, %v5036
  %v5044 = vcombine.low %v5037, %v5038
  %v5046 = vunpack.c.l.s4 1983009808
  %v5047 = vunpack.c.0.s8 %v5046
  %v5048 = vlaneseq
  %v5049 = vshrl.u32 %v5048, 7
  %v5050 = vsub.s32 %v5047, %v5049
  %v5051 = vrot.slane %v5043, %v5050
  %v5053 = vunpack.c.l.s4 1983009808
  %v5054 = vunpack.c.0.s8 %v5053
  %v5055 = vlaneseq
  %v5056 = vshrl.u32 %v5055, 7
  %v5057 = vsub.s32 %v5054, %v5056
  %v5058 = vrot.slane %v5044, %v5057
  %v5059 = vcombine.low %v5051, %v5058
  %v5061 = vsub.f32 %v4394, %v5059
  %v5062 = vmul.f32 %v5061, %v5061
  %v5064 = vcombine.high %v5062, %v5062
  %v5066 = vunpack.c.l.s4 1983009808
  %v5067 = vunpack.c.0.s8 %v5066
  %v5068 = vlaneseq
  %v5069 = vshrl.u32 %v5068, 7
  %v5070 = vsub.s32 %v5067, %v5069
  %v5071 = vrot.slane %v5062, %v5070
  %v5073 = vunpack.c.l.s4 1983009808
  %v5074 = vunpack.c.0.s8 %v5073
  %v5075 = vlaneseq
  %v5076 = vshrl.u32 %v5075, 7
  %v5077 = vsub.s32 %v5074, %v5076
  %v5078 = vrot.slane %v5064, %v5077
  %v5079 = vcombine.high %v5071, %v5071
  %v5080 = vcombine.high %v5078, %v5078
  %v5085 = vsel %vm2859, %v5071, 0.0
  %v5086 = vsel %vm2859, %v5079, 0.0
  %v5087 = vadd.f32 %v5085, %v5086
  %v5088 = vsel %vm2859, %v5078, 0.0
  %v5089 = vadd.f32 %v5087, %v5088
  %v5090 = vsel %vm2859, %v5080, 0.0
  %v5091 = vadd.f32 %v5089, %v5090
  %5092 = vadd.xlane.f32.xlu0 %v5091
  %v5093 = vpop.xlane.xlu0 %5092
  %v5094 = vsel %vm5004, %v4399, 1.0
  %v5095 = vrcp.pop %v5094
  %v5096 = vmul.f32 %v5093, %v5095
  %v5097 = vmul.f32 %v5096, %v4395
  %v5098 = vmul.f32 %v5096, %v4396
  %v5099 = vmul.f32 %v5096, %v4397
  %v5100 = vmul.f32 %v5096, %v4398
  %v5102 = vcombine.high %v5061, %v5061
  %v5104 = vunpack.c.l.s4 1983009808
  %v5105 = vunpack.c.0.s8 %v5104
  %v5106 = vlaneseq
  %v5107 = vshrl.u32 %v5106, 7
  %v5108 = vsub.s32 %v5105, %v5107
  %v5109 = vrot.slane %v5061, %v5108
  %v5111 = vunpack.c.l.s4 1983009808
  %v5112 = vunpack.c.0.s8 %v5111
  %v5113 = vlaneseq
  %v5114 = vshrl.u32 %v5113, 7
  %v5115 = vsub.s32 %v5112, %v5114
  %v5116 = vrot.slane %v5102, %v5115
  %v5117 = vcombine.high %v5109, %v5109
  %v5118 = vcombine.high %v5116, %v5116
  %v5123 = vadd.f32 %v5097, %v5109
  %v5124 = vadd.f32 %v5098, %v5117
  %v5125 = vadd.f32 %v5099, %v5116
  %v5126 = vadd.f32 %v5100, %v5118
  %v5127 = vsel %vm5004, %v5034, %v4393
  %v5128 = vsel %vm5004, %v5061, %v4394
  %v5129 = vsel %vm5004, %v5123, %v4395
  %v5130 = vsel %vm5004, %v5124, %v4396
  %v5131 = vsel %vm5004, %v5125, %v4397
  %v5132 = vsel %vm5004, %v5126, %v4398
  %v5133 = vsel %vm5004, %v5093, %v4399
  %v5134 = vsel %vm2859, %v5133, -inf
  %v5135 = vrot.slane %v5134, 4
  %v5136 = vmax.f32 %v5134, %v5135
  %v5137 = vrot.slane %v5136, 2
  %v5138 = vmax.f32 %v5136, %v5137
  %v5139 = vrot.slane %v5138, 1
  %v5140 = vmax.f32 %v5138, %v5139
  %s5141 = vtos %v5140
  %v5142 = vstv %s5141
  %vm5143 = vcmp.ge.f32.partialorder %v5142, 1e-10
  %5144 = vmatprep.subr.mxu0 %v101
  %5145 = vmatpush1.msra.mxu0 %v100
  %5146 = vmatprep.subr.mxu0 %v97
  %5147 = vmatpush1.msra.mxu0 %v96
  %5148 = vmatprep.subr.mxu0 %v93
  %5149 = vmatpush1.msra.mxu0 %v92
  %5150 = vmatprep.subr.mxu0 %v89
  %5151 = vmatpush1.msra.mxu0 %v88
  %5152 = vmatprep.subr.mxu0 %v85
  %5153 = vmatpush1.msra.mxu0 %v84
  %5154 = vmatprep.subr.mxu0 %v81
  %5155 = vmatpush1.msra.mxu0 %v80
  %5156 = vmatprep.subr.mxu0 %v77
  %5157 = vmatpush1.msra.mxu0 %v76
  %5158 = vmatprep.subr.mxu0 %v73
  %5159 = vmatpush1.msra.mxu0 %v72
  %5160 = vmatprep.subr.mxu0 %v69
  %5161 = vmatpush1.msra.mxu0 %v68
  %5162 = vmatprep.subr.mxu0 %v65
  %5163 = vmatpush1.msra.mxu0 %v64
  %5164 = vmatprep.subr.mxu0 %v61
  %5165 = vmatpush1.msra.mxu0 %v60
  %5166 = vmatprep.subr.mxu0 %v57
  %5167 = vmatpush1.msra.mxu0 %v56
  %5168 = vmatprep.subr.mxu0 %v53
  %5169 = vmatpush1.msra.mxu0 %v52
  %5170 = vmatprep.subr.mxu0 %v49
  %5171 = vmatpush1.msra.mxu0 %v48
  %5172 = vmatprep.subr.mxu0 %v45
  %5173 = vmatpush1.msra.mxu0 %v44
  %5174 = vmatprep.subr.mxu0 %v41
  %5175 = vmatpush1.msra.mxu0 %v40
  %5176 = vmatprep.subr.mxu0 %v165
  %5177 = vmatpush2.msra.mxu0 %v164
  %5178 = vmatprep.subr.mxu0 %v161
  %5179 = vmatpush2.msra.mxu0 %v160
  %5180 = vmatprep.subr.mxu0 %v157
  %5181 = vmatpush2.msra.mxu0 %v156
  %5182 = vmatprep.subr.mxu0 %v153
  %5183 = vmatpush2.msra.mxu0 %v152
  %5184 = vmatprep.subr.mxu0 %v149
  %5185 = vmatpush2.msra.mxu0 %v148
  %5186 = vmatprep.subr.mxu0 %v145
  %5187 = vmatpush2.msra.mxu0 %v144
  %5188 = vmatprep.subr.mxu0 %v141
  %5189 = vmatpush2.msra.mxu0 %v140
  %5190 = vmatprep.subr.mxu0 %v137
  %5191 = vmatpush2.msra.mxu0 %v136
  %5192 = vmatprep.subr.mxu0 %v133
  %5193 = vmatpush2.msra.mxu0 %v132
  %5194 = vmatprep.subr.mxu0 %v129
  %5195 = vmatpush2.msra.mxu0 %v128
  %5196 = vmatprep.subr.mxu0 %v125
  %5197 = vmatpush2.msra.mxu0 %v124
  %5198 = vmatprep.subr.mxu0 %v121
  %5199 = vmatpush2.msra.mxu0 %v120
  %5200 = vmatprep.subr.mxu0 %v117
  %5201 = vmatpush2.msra.mxu0 %v116
  %5202 = vmatprep.subr.mxu0 %v113
  %5203 = vmatpush2.msra.mxu0 %v112
  %5204 = vmatprep.subr.mxu0 %v109
  %5205 = vmatpush2.msra.mxu0 %v108
  %5206 = vmatprep.subr.mxu0 %v105
  %5207 = vmatpush2.msra.mxu0 %v104
  %5208 = vmatprep.mubr.f32.mxu0 %v5130
  %5209 = vmatmul.mubr.f32.gmra.mxu0 %v5129
  %v5210 = vpop.f32.mrf.mxu0
  %v5211 = vadd.f32 0.0, %v5210
  %v5212 = vpop.f32.mrf.mxu0
  %v5213 = vadd.f32 0.0, %v5212
  %5214 = vdwg.mxu0
  %5215 = vmatprep.subr.mxu0 %v229
  %5216 = vmatpush1.msra.mxu0 %v228
  %5217 = vmatprep.subr.mxu0 %v225
  %5218 = vmatpush1.msra.mxu0 %v224
  %5219 = vmatprep.subr.mxu0 %v221
  %5220 = vmatpush1.msra.mxu0 %v220
  %5221 = vmatprep.subr.mxu0 %v217
  %5222 = vmatpush1.msra.mxu0 %v216
  %5223 = vmatprep.subr.mxu0 %v213
  %5224 = vmatpush1.msra.mxu0 %v212
  %5225 = vmatprep.subr.mxu0 %v209
  %5226 = vmatpush1.msra.mxu0 %v208
  %5227 = vmatprep.subr.mxu0 %v205
  %5228 = vmatpush1.msra.mxu0 %v204
  %5229 = vmatprep.subr.mxu0 %v201
  %5230 = vmatpush1.msra.mxu0 %v200
  %5231 = vmatprep.subr.mxu0 %v197
  %5232 = vmatpush1.msra.mxu0 %v196
  %5233 = vmatprep.subr.mxu0 %v193
  %5234 = vmatpush1.msra.mxu0 %v192
  %5235 = vmatprep.subr.mxu0 %v189
  %5236 = vmatpush1.msra.mxu0 %v188
  %5237 = vmatprep.subr.mxu0 %v185
  %5238 = vmatpush1.msra.mxu0 %v184
  %5239 = vmatprep.subr.mxu0 %v181
  %5240 = vmatpush1.msra.mxu0 %v180
  %5241 = vmatprep.subr.mxu0 %v177
  %5242 = vmatpush1.msra.mxu0 %v176
  %5243 = vmatprep.subr.mxu0 %v173
  %5244 = vmatpush1.msra.mxu0 %v172
  %5245 = vmatprep.subr.mxu0 %v169
  %5246 = vmatpush1.msra.mxu0 %v168
  %5247 = vmatprep.subr.mxu0 %v293
  %5248 = vmatpush2.msra.mxu0 %v292
  %5249 = vmatprep.subr.mxu0 %v289
  %5250 = vmatpush2.msra.mxu0 %v288
  %5251 = vmatprep.subr.mxu0 %v285
  %5252 = vmatpush2.msra.mxu0 %v284
  %5253 = vmatprep.subr.mxu0 %v281
  %5254 = vmatpush2.msra.mxu0 %v280
  %5255 = vmatprep.subr.mxu0 %v277
  %5256 = vmatpush2.msra.mxu0 %v276
  %5257 = vmatprep.subr.mxu0 %v273
  %5258 = vmatpush2.msra.mxu0 %v272
  %5259 = vmatprep.subr.mxu0 %v269
  %5260 = vmatpush2.msra.mxu0 %v268
  %5261 = vmatprep.subr.mxu0 %v265
  %5262 = vmatpush2.msra.mxu0 %v264
  %5263 = vmatprep.subr.mxu0 %v261
  %5264 = vmatpush2.msra.mxu0 %v260
  %5265 = vmatprep.subr.mxu0 %v257
  %5266 = vmatpush2.msra.mxu0 %v256
  %5267 = vmatprep.subr.mxu0 %v253
  %5268 = vmatpush2.msra.mxu0 %v252
  %5269 = vmatprep.subr.mxu0 %v249
  %5270 = vmatpush2.msra.mxu0 %v248
  %5271 = vmatprep.subr.mxu0 %v245
  %5272 = vmatpush2.msra.mxu0 %v244
  %5273 = vmatprep.subr.mxu0 %v241
  %5274 = vmatpush2.msra.mxu0 %v240
  %5275 = vmatprep.subr.mxu0 %v237
  %5276 = vmatpush2.msra.mxu0 %v236
  %5277 = vmatprep.subr.mxu0 %v233
  %5278 = vmatpush2.msra.mxu0 %v232
  %5279 = vmatprep.mubr.f32.mxu0 %v5132
  %5280 = vmatmul.mubr.f32.gmra.mxu0 %v5131
  %v5281 = vpop.f32.mrf.mxu0
  %v5282 = vadd.f32 %v5211, %v5281
  %v5283 = vpop.f32.mrf.mxu0
  %v5284 = vadd.f32 %v5213, %v5283
  %5285 = vdwg.mxu0
  %5286 = vmatprep.subr.mxu0 %v103
  %5287 = vmatpush1.msra.mxu0 %v102
  %5288 = vmatprep.subr.mxu0 %v99
  %5289 = vmatpush1.msra.mxu0 %v98
  %5290 = vmatprep.subr.mxu0 %v95
  %5291 = vmatpush1.msra.mxu0 %v94
  %5292 = vmatprep.subr.mxu0 %v91
  %5293 = vmatpush1.msra.mxu0 %v90
  %5294 = vmatprep.subr.mxu0 %v87
  %5295 = vmatpush1.msra.mxu0 %v86
  %5296 = vmatprep.subr.mxu0 %v83
  %5297 = vmatpush1.msra.mxu0 %v82
  %5298 = vmatprep.subr.mxu0 %v79
  %5299 = vmatpush1.msra.mxu0 %v78
  %5300 = vmatprep.subr.mxu0 %v75
  %5301 = vmatpush1.msra.mxu0 %v74
  %5302 = vmatprep.subr.mxu0 %v71
  %5303 = vmatpush1.msra.mxu0 %v70
  %5304 = vmatprep.subr.mxu0 %v67
  %5305 = vmatpush1.msra.mxu0 %v66
  %5306 = vmatprep.subr.mxu0 %v63
  %5307 = vmatpush1.msra.mxu0 %v62
  %5308 = vmatprep.subr.mxu0 %v59
  %5309 = vmatpush1.msra.mxu0 %v58
  %5310 = vmatprep.subr.mxu0 %v55
  %5311 = vmatpush1.msra.mxu0 %v54
  %5312 = vmatprep.subr.mxu0 %v51
  %5313 = vmatpush1.msra.mxu0 %v50
  %5314 = vmatprep.subr.mxu0 %v47
  %5315 = vmatpush1.msra.mxu0 %v46
  %5316 = vmatprep.subr.mxu0 %v43
  %5317 = vmatpush1.msra.mxu0 %v42
  %5318 = vmatprep.subr.mxu0 %v167
  %5319 = vmatpush2.msra.mxu0 %v166
  %5320 = vmatprep.subr.mxu0 %v163
  %5321 = vmatpush2.msra.mxu0 %v162
  %5322 = vmatprep.subr.mxu0 %v159
  %5323 = vmatpush2.msra.mxu0 %v158
  %5324 = vmatprep.subr.mxu0 %v155
  %5325 = vmatpush2.msra.mxu0 %v154
  %5326 = vmatprep.subr.mxu0 %v151
  %5327 = vmatpush2.msra.mxu0 %v150
  %5328 = vmatprep.subr.mxu0 %v147
  %5329 = vmatpush2.msra.mxu0 %v146
  %5330 = vmatprep.subr.mxu0 %v143
  %5331 = vmatpush2.msra.mxu0 %v142
  %5332 = vmatprep.subr.mxu0 %v139
  %5333 = vmatpush2.msra.mxu0 %v138
  %5334 = vmatprep.subr.mxu0 %v135
  %5335 = vmatpush2.msra.mxu0 %v134
  %5336 = vmatprep.subr.mxu0 %v131
  %5337 = vmatpush2.msra.mxu0 %v130
  %5338 = vmatprep.subr.mxu0 %v127
  %5339 = vmatpush2.msra.mxu0 %v126
  %5340 = vmatprep.subr.mxu0 %v123
  %5341 = vmatpush2.msra.mxu0 %v122
  %5342 = vmatprep.subr.mxu0 %v119
  %5343 = vmatpush2.msra.mxu0 %v118
  %5344 = vmatprep.subr.mxu0 %v115
  %5345 = vmatpush2.msra.mxu0 %v114
  %5346 = vmatprep.subr.mxu0 %v111
  %5347 = vmatpush2.msra.mxu0 %v110
  %5348 = vmatprep.subr.mxu0 %v107
  %5349 = vmatpush2.msra.mxu0 %v106
  %5350 = vmatprep.mubr.f32.mxu0 %v5130
  %5351 = vmatmul.mubr.f32.gmra.mxu0 %v5129
  %v5352 = vpop.f32.mrf.mxu0
  %v5353 = vadd.f32 0.0, %v5352
  %v5354 = vpop.f32.mrf.mxu0
  %v5355 = vadd.f32 0.0, %v5354
  %5356 = vdwg.mxu0
  %5357 = vmatprep.subr.mxu0 %v231
  %5358 = vmatpush1.msra.mxu0 %v230
  %5359 = vmatprep.subr.mxu0 %v227
  %5360 = vmatpush1.msra.mxu0 %v226
  %5361 = vmatprep.subr.mxu0 %v223
  %5362 = vmatpush1.msra.mxu0 %v222
  %5363 = vmatprep.subr.mxu0 %v219
  %5364 = vmatpush1.msra.mxu0 %v218
  %5365 = vmatprep.subr.mxu0 %v215
  %5366 = vmatpush1.msra.mxu0 %v214
  %5367 = vmatprep.subr.mxu0 %v211
  %5368 = vmatpush1.msra.mxu0 %v210
  %5369 = vmatprep.subr.mxu0 %v207
  %5370 = vmatpush1.msra.mxu0 %v206
  %5371 = vmatprep.subr.mxu0 %v203
  %5372 = vmatpush1.msra.mxu0 %v202
  %5373 = vmatprep.subr.mxu0 %v199
  %5374 = vmatpush1.msra.mxu0 %v198
  %5375 = vmatprep.subr.mxu0 %v195
  %5376 = vmatpush1.msra.mxu0 %v194
  %5377 = vmatprep.subr.mxu0 %v191
  %5378 = vmatpush1.msra.mxu0 %v190
  %5379 = vmatprep.subr.mxu0 %v187
  %5380 = vmatpush1.msra.mxu0 %v186
  %5381 = vmatprep.subr.mxu0 %v183
  %5382 = vmatpush1.msra.mxu0 %v182
  %5383 = vmatprep.subr.mxu0 %v179
  %5384 = vmatpush1.msra.mxu0 %v178
  %5385 = vmatprep.subr.mxu0 %v175
  %5386 = vmatpush1.msra.mxu0 %v174
  %5387 = vmatprep.subr.mxu0 %v171
  %5388 = vmatpush1.msra.mxu0 %v170
  %5389 = vmatprep.subr.mxu0 %v295
  %5390 = vmatpush2.msra.mxu0 %v294
  %5391 = vmatprep.subr.mxu0 %v291
  %5392 = vmatpush2.msra.mxu0 %v290
  %5393 = vmatprep.subr.mxu0 %v287
  %5394 = vmatpush2.msra.mxu0 %v286
  %5395 = vmatprep.subr.mxu0 %v283
  %5396 = vmatpush2.msra.mxu0 %v282
  %5397 = vmatprep.subr.mxu0 %v279
  %5398 = vmatpush2.msra.mxu0 %v278
  %5399 = vmatprep.subr.mxu0 %v275
  %5400 = vmatpush2.msra.mxu0 %v274
  %5401 = vmatprep.subr.mxu0 %v271
  %5402 = vmatpush2.msra.mxu0 %v270
  %5403 = vmatprep.subr.mxu0 %v267
  %5404 = vmatpush2.msra.mxu0 %v266
  %5405 = vmatprep.subr.mxu0 %v263
  %5406 = vmatpush2.msra.mxu0 %v262
  %5407 = vmatprep.subr.mxu0 %v259
  %5408 = vmatpush2.msra.mxu0 %v258
  %5409 = vmatprep.subr.mxu0 %v255
  %5410 = vmatpush2.msra.mxu0 %v254
  %5411 = vmatprep.subr.mxu0 %v251
  %5412 = vmatpush2.msra.mxu0 %v250
  %5413 = vmatprep.subr.mxu0 %v247
  %5414 = vmatpush2.msra.mxu0 %v246
  %5415 = vmatprep.subr.mxu0 %v243
  %5416 = vmatpush2.msra.mxu0 %v242
  %5417 = vmatprep.subr.mxu0 %v239
  %5418 = vmatpush2.msra.mxu0 %v238
  %5419 = vmatprep.subr.mxu0 %v235
  %5420 = vmatpush2.msra.mxu0 %v234
  %5421 = vmatprep.mubr.f32.mxu0 %v5132
  %5422 = vmatmul.mubr.f32.gmra.mxu0 %v5131
  %v5423 = vpop.f32.mrf.mxu0
  %v5424 = vadd.f32 %v5353, %v5423
  %v5425 = vpop.f32.mrf.mxu0
  %v5426 = vadd.f32 %v5355, %v5425
  %5427 = vdwg.mxu0
  %v5428 = vmul.f32 %v557, %v5282
  %v5429 = vmul.f32 %v557, %v5284
  %v5430 = vmul.f32 %v557, %v5424
  %v5431 = vmul.f32 %v557, %v5426
  %5432 = vmatprep.subr.mxu0 %v358
  %5433 = vmatpush1.msra.mxu0 %v357
  %5434 = vmatprep.subr.mxu0 %v354
  %5435 = vmatpush1.msra.mxu0 %v353
  %5436 = vmatprep.subr.mxu0 %v350
  %5437 = vmatpush1.msra.mxu0 %v349
  %5438 = vmatprep.subr.mxu0 %v346
  %5439 = vmatpush1.msra.mxu0 %v345
  %5440 = vmatprep.subr.mxu0 %v342
  %5441 = vmatpush1.msra.mxu0 %v341
  %5442 = vmatprep.subr.mxu0 %v338
  %5443 = vmatpush1.msra.mxu0 %v337
  %5444 = vmatprep.subr.mxu0 %v334
  %5445 = vmatpush1.msra.mxu0 %v333
  %5446 = vmatprep.subr.mxu0 %v330
  %5447 = vmatpush1.msra.mxu0 %v329
  %5448 = vmatprep.subr.mxu0 %v326
  %5449 = vmatpush1.msra.mxu0 %v325
  %5450 = vmatprep.subr.mxu0 %v322
  %5451 = vmatpush1.msra.mxu0 %v321
  %5452 = vmatprep.subr.mxu0 %v318
  %5453 = vmatpush1.msra.mxu0 %v317
  %5454 = vmatprep.subr.mxu0 %v314
  %5455 = vmatpush1.msra.mxu0 %v313
  %5456 = vmatprep.subr.mxu0 %v310
  %5457 = vmatpush1.msra.mxu0 %v309
  %5458 = vmatprep.subr.mxu0 %v306
  %5459 = vmatpush1.msra.mxu0 %v305
  %5460 = vmatprep.subr.mxu0 %v302
  %5461 = vmatpush1.msra.mxu0 %v301
  %5462 = vmatprep.subr.mxu0 %v298
  %5463 = vmatpush1.msra.mxu0 %v297
  %5464 = vmatprep.subr.mxu0 %v422
  %5465 = vmatpush2.msra.mxu0 %v421
  %5466 = vmatprep.subr.mxu0 %v418
  %5467 = vmatpush2.msra.mxu0 %v417
  %5468 = vmatprep.subr.mxu0 %v414
  %5469 = vmatpush2.msra.mxu0 %v413
  %5470 = vmatprep.subr.mxu0 %v410
  %5471 = vmatpush2.msra.mxu0 %v409
  %5472 = vmatprep.subr.mxu0 %v406
  %5473 = vmatpush2.msra.mxu0 %v405
  %5474 = vmatprep.subr.mxu0 %v402
  %5475 = vmatpush2.msra.mxu0 %v401
  %5476 = vmatprep.subr.mxu0 %v398
  %5477 = vmatpush2.msra.mxu0 %v397
  %5478 = vmatprep.subr.mxu0 %v394
  %5479 = vmatpush2.msra.mxu0 %v393
  %5480 = vmatprep.subr.mxu0 %v390
  %5481 = vmatpush2.msra.mxu0 %v389
  %5482 = vmatprep.subr.mxu0 %v386
  %5483 = vmatpush2.msra.mxu0 %v385
  %5484 = vmatprep.subr.mxu0 %v382
  %5485 = vmatpush2.msra.mxu0 %v381
  %5486 = vmatprep.subr.mxu0 %v378
  %5487 = vmatpush2.msra.mxu0 %v377
  %5488 = vmatprep.subr.mxu0 %v374
  %5489 = vmatpush2.msra.mxu0 %v373
  %5490 = vmatprep.subr.mxu0 %v370
  %5491 = vmatpush2.msra.mxu0 %v369
  %5492 = vmatprep.subr.mxu0 %v366
  %5493 = vmatpush2.msra.mxu0 %v365
  %5494 = vmatprep.subr.mxu0 %v362
  %5495 = vmatpush2.msra.mxu0 %v361
  %5496 = vmatprep.mubr.f32.mxu0 %v5130
  %5497 = vmatmul.mubr.f32.gmra.mxu0 %v5129
  %v5498 = vpop.f32.mrf.mxu0
  %v5499 = vadd.f32 0.0, %v5498
  %v5500 = vpop.f32.mrf.mxu0
  %v5501 = vadd.f32 0.0, %v5500
  %5502 = vdwg.mxu0
  %5503 = vmatprep.subr.mxu0 %v486
  %5504 = vmatpush1.msra.mxu0 %v485
  %5505 = vmatprep.subr.mxu0 %v482
  %5506 = vmatpush1.msra.mxu0 %v481
  %5507 = vmatprep.subr.mxu0 %v478
  %5508 = vmatpush1.msra.mxu0 %v477
  %5509 = vmatprep.subr.mxu0 %v474
  %5510 = vmatpush1.msra.mxu0 %v473
  %5511 = vmatprep.subr.mxu0 %v470
  %5512 = vmatpush1.msra.mxu0 %v469
  %5513 = vmatprep.subr.mxu0 %v466
  %5514 = vmatpush1.msra.mxu0 %v465
  %5515 = vmatprep.subr.mxu0 %v462
  %5516 = vmatpush1.msra.mxu0 %v461
  %5517 = vmatprep.subr.mxu0 %v458
  %5518 = vmatpush1.msra.mxu0 %v457
  %5519 = vmatprep.subr.mxu0 %v454
  %5520 = vmatpush1.msra.mxu0 %v453
  %5521 = vmatprep.subr.mxu0 %v450
  %5522 = vmatpush1.msra.mxu0 %v449
  %5523 = vmatprep.subr.mxu0 %v446
  %5524 = vmatpush1.msra.mxu0 %v445
  %5525 = vmatprep.subr.mxu0 %v442
  %5526 = vmatpush1.msra.mxu0 %v441
  %5527 = vmatprep.subr.mxu0 %v438
  %5528 = vmatpush1.msra.mxu0 %v437
  %5529 = vmatprep.subr.mxu0 %v434
  %5530 = vmatpush1.msra.mxu0 %v433
  %5531 = vmatprep.subr.mxu0 %v430
  %5532 = vmatpush1.msra.mxu0 %v429
  %5533 = vmatprep.subr.mxu0 %v426
  %5534 = vmatpush1.msra.mxu0 %v425
  %5535 = vmatprep.subr.mxu0 %v550
  %5536 = vmatpush2.msra.mxu0 %v549
  %5537 = vmatprep.subr.mxu0 %v546
  %5538 = vmatpush2.msra.mxu0 %v545
  %5539 = vmatprep.subr.mxu0 %v542
  %5540 = vmatpush2.msra.mxu0 %v541
  %5541 = vmatprep.subr.mxu0 %v538
  %5542 = vmatpush2.msra.mxu0 %v537
  %5543 = vmatprep.subr.mxu0 %v534
  %5544 = vmatpush2.msra.mxu0 %v533
  %5545 = vmatprep.subr.mxu0 %v530
  %5546 = vmatpush2.msra.mxu0 %v529
  %5547 = vmatprep.subr.mxu0 %v526
  %5548 = vmatpush2.msra.mxu0 %v525
  %5549 = vmatprep.subr.mxu0 %v522
  %5550 = vmatpush2.msra.mxu0 %v521
  %5551 = vmatprep.subr.mxu0 %v518
  %5552 = vmatpush2.msra.mxu0 %v517
  %5553 = vmatprep.subr.mxu0 %v514
  %5554 = vmatpush2.msra.mxu0 %v513
  %5555 = vmatprep.subr.mxu0 %v510
  %5556 = vmatpush2.msra.mxu0 %v509
  %5557 = vmatprep.subr.mxu0 %v506
  %5558 = vmatpush2.msra.mxu0 %v505
  %5559 = vmatprep.subr.mxu0 %v502
  %5560 = vmatpush2.msra.mxu0 %v501
  %5561 = vmatprep.subr.mxu0 %v498
  %5562 = vmatpush2.msra.mxu0 %v497
  %5563 = vmatprep.subr.mxu0 %v494
  %5564 = vmatpush2.msra.mxu0 %v493
  %5565 = vmatprep.subr.mxu0 %v490
  %5566 = vmatpush2.msra.mxu0 %v489
  %5567 = vmatprep.mubr.f32.mxu0 %v5132
  %5568 = vmatmul.mubr.f32.gmra.mxu0 %v5131
  %v5569 = vpop.f32.mrf.mxu0
  %v5570 = vadd.f32 %v5499, %v5569
  %v5571 = vpop.f32.mrf.mxu0
  %v5572 = vadd.f32 %v5501, %v5571
  %5573 = vdwg.mxu0
  %5574 = vmatprep.subr.mxu0 %v360
  %5575 = vmatpush1.msra.mxu0 %v359
  %5576 = vmatprep.subr.mxu0 %v356
  %5577 = vmatpush1.msra.mxu0 %v355
  %5578 = vmatprep.subr.mxu0 %v352
  %5579 = vmatpush1.msra.mxu0 %v351
  %5580 = vmatprep.subr.mxu0 %v348
  %5581 = vmatpush1.msra.mxu0 %v347
  %5582 = vmatprep.subr.mxu0 %v344
  %5583 = vmatpush1.msra.mxu0 %v343
  %5584 = vmatprep.subr.mxu0 %v340
  %5585 = vmatpush1.msra.mxu0 %v339
  %5586 = vmatprep.subr.mxu0 %v336
  %5587 = vmatpush1.msra.mxu0 %v335
  %5588 = vmatprep.subr.mxu0 %v332
  %5589 = vmatpush1.msra.mxu0 %v331
  %5590 = vmatprep.subr.mxu0 %v328
  %5591 = vmatpush1.msra.mxu0 %v327
  %5592 = vmatprep.subr.mxu0 %v324
  %5593 = vmatpush1.msra.mxu0 %v323
  %5594 = vmatprep.subr.mxu0 %v320
  %5595 = vmatpush1.msra.mxu0 %v319
  %5596 = vmatprep.subr.mxu0 %v316
  %5597 = vmatpush1.msra.mxu0 %v315
  %5598 = vmatprep.subr.mxu0 %v312
  %5599 = vmatpush1.msra.mxu0 %v311
  %5600 = vmatprep.subr.mxu0 %v308
  %5601 = vmatpush1.msra.mxu0 %v307
  %5602 = vmatprep.subr.mxu0 %v304
  %5603 = vmatpush1.msra.mxu0 %v303
  %5604 = vmatprep.subr.mxu0 %v300
  %5605 = vmatpush1.msra.mxu0 %v299
  %5606 = vmatprep.subr.mxu0 %v424
  %5607 = vmatpush2.msra.mxu0 %v423
  %5608 = vmatprep.subr.mxu0 %v420
  %5609 = vmatpush2.msra.mxu0 %v419
  %5610 = vmatprep.subr.mxu0 %v416
  %5611 = vmatpush2.msra.mxu0 %v415
  %5612 = vmatprep.subr.mxu0 %v412
  %5613 = vmatpush2.msra.mxu0 %v411
  %5614 = vmatprep.subr.mxu0 %v408
  %5615 = vmatpush2.msra.mxu0 %v407
  %5616 = vmatprep.subr.mxu0 %v404
  %5617 = vmatpush2.msra.mxu0 %v403
  %5618 = vmatprep.subr.mxu0 %v400
  %5619 = vmatpush2.msra.mxu0 %v399
  %5620 = vmatprep.subr.mxu0 %v396
  %5621 = vmatpush2.msra.mxu0 %v395
  %5622 = vmatprep.subr.mxu0 %v392
  %5623 = vmatpush2.msra.mxu0 %v391
  %5624 = vmatprep.subr.mxu0 %v388
  %5625 = vmatpush2.msra.mxu0 %v387
  %5626 = vmatprep.subr.mxu0 %v384
  %5627 = vmatpush2.msra.mxu0 %v383
  %5628 = vmatprep.subr.mxu0 %v380
  %5629 = vmatpush2.msra.mxu0 %v379
  %5630 = vmatprep.subr.mxu0 %v376
  %5631 = vmatpush2.msra.mxu0 %v375
  %5632 = vmatprep.subr.mxu0 %v372
  %5633 = vmatpush2.msra.mxu0 %v371
  %5634 = vmatprep.subr.mxu0 %v368
  %5635 = vmatpush2.msra.mxu0 %v367
  %5636 = vmatprep.subr.mxu0 %v364
  %5637 = vmatpush2.msra.mxu0 %v363
  %5638 = vmatprep.mubr.f32.mxu0 %v5130
  %5639 = vmatmul.mubr.f32.gmra.mxu0 %v5129
  %v5640 = vpop.f32.mrf.mxu0
  %v5641 = vadd.f32 0.0, %v5640
  %v5642 = vpop.f32.mrf.mxu0
  %v5643 = vadd.f32 0.0, %v5642
  %5644 = vdwg.mxu0
  %5645 = vmatprep.subr.mxu0 %v488
  %5646 = vmatpush1.msra.mxu0 %v487
  %5647 = vmatprep.subr.mxu0 %v484
  %5648 = vmatpush1.msra.mxu0 %v483
  %5649 = vmatprep.subr.mxu0 %v480
  %5650 = vmatpush1.msra.mxu0 %v479
  %5651 = vmatprep.subr.mxu0 %v476
  %5652 = vmatpush1.msra.mxu0 %v475
  %5653 = vmatprep.subr.mxu0 %v472
  %5654 = vmatpush1.msra.mxu0 %v471
  %5655 = vmatprep.subr.mxu0 %v468
  %5656 = vmatpush1.msra.mxu0 %v467
  %5657 = vmatprep.subr.mxu0 %v464
  %5658 = vmatpush1.msra.mxu0 %v463
  %5659 = vmatprep.subr.mxu0 %v460
  %5660 = vmatpush1.msra.mxu0 %v459
  %5661 = vmatprep.subr.mxu0 %v456
  %5662 = vmatpush1.msra.mxu0 %v455
  %5663 = vmatprep.subr.mxu0 %v452
  %5664 = vmatpush1.msra.mxu0 %v451
  %5665 = vmatprep.subr.mxu0 %v448
  %5666 = vmatpush1.msra.mxu0 %v447
  %5667 = vmatprep.subr.mxu0 %v444
  %5668 = vmatpush1.msra.mxu0 %v443
  %5669 = vmatprep.subr.mxu0 %v440
  %5670 = vmatpush1.msra.mxu0 %v439
  %5671 = vmatprep.subr.mxu0 %v436
  %5672 = vmatpush1.msra.mxu0 %v435
  %5673 = vmatprep.subr.mxu0 %v432
  %5674 = vmatpush1.msra.mxu0 %v431
  %5675 = vmatprep.subr.mxu0 %v428
  %5676 = vmatpush1.msra.mxu0 %v427
  %5677 = vmatprep.subr.mxu0 %v552
  %5678 = vmatpush2.msra.mxu0 %v551
  %5679 = vmatprep.subr.mxu0 %v548
  %5680 = vmatpush2.msra.mxu0 %v547
  %5681 = vmatprep.subr.mxu0 %v544
  %5682 = vmatpush2.msra.mxu0 %v543
  %5683 = vmatprep.subr.mxu0 %v540
  %5684 = vmatpush2.msra.mxu0 %v539
  %5685 = vmatprep.subr.mxu0 %v536
  %5686 = vmatpush2.msra.mxu0 %v535
  %5687 = vmatprep.subr.mxu0 %v532
  %5688 = vmatpush2.msra.mxu0 %v531
  %5689 = vmatprep.subr.mxu0 %v528
  %5690 = vmatpush2.msra.mxu0 %v527
  %5691 = vmatprep.subr.mxu0 %v524
  %5692 = vmatpush2.msra.mxu0 %v523
  %5693 = vmatprep.subr.mxu0 %v520
  %5694 = vmatpush2.msra.mxu0 %v519
  %5695 = vmatprep.subr.mxu0 %v516
  %5696 = vmatpush2.msra.mxu0 %v515
  %5697 = vmatprep.subr.mxu0 %v512
  %5698 = vmatpush2.msra.mxu0 %v511
  %5699 = vmatprep.subr.mxu0 %v508
  %5700 = vmatpush2.msra.mxu0 %v507
  %5701 = vmatprep.subr.mxu0 %v504
  %5702 = vmatpush2.msra.mxu0 %v503
  %5703 = vmatprep.subr.mxu0 %v500
  %5704 = vmatpush2.msra.mxu0 %v499
  %5705 = vmatprep.subr.mxu0 %v496
  %5706 = vmatpush2.msra.mxu0 %v495
  %5707 = vmatprep.subr.mxu0 %v492
  %5708 = vmatpush2.msra.mxu0 %v491
  %5709 = vmatprep.mubr.f32.mxu0 %v5132
  %5710 = vmatmul.mubr.f32.gmra.mxu0 %v5131
  %v5711 = vpop.f32.mrf.mxu0
  %v5712 = vadd.f32 %v5641, %v5711
  %v5713 = vpop.f32.mrf.mxu0
  %v5714 = vadd.f32 %v5643, %v5713
  %5715 = vdwg.mxu0
  %v5716 = vmul.f32 %v560, %v5570
  %v5717 = vmul.f32 %v560, %v5572
  %v5718 = vmul.f32 %v560, %v5712
  %v5719 = vmul.f32 %v560, %v5714
  %v5720 = vadd.f32 %v5428, %v5716
  %v5721 = vadd.f32 %v5429, %v5717
  %v5722 = vadd.f32 %v5430, %v5718
  %v5723 = vadd.f32 %v5431, %v5719
  %v5724 = vmul.f32 %v5129, %v5720
  %v5725 = vmul.f32 %v5130, %v5721
  %v5726 = vmul.f32 %v5131, %v5722
  %v5727 = vmul.f32 %v5132, %v5723
  %v5728 = vsel %vm2859, %v5724, 0.0
  %v5729 = vsel %vm2859, %v5725, 0.0
  %v5730 = vadd.f32 %v5728, %v5729
  %v5731 = vsel %vm2859, %v5726, 0.0
  %v5732 = vadd.f32 %v5730, %v5731
  %v5733 = vsel %vm2859, %v5727, 0.0
  %v5734 = vadd.f32 %v5732, %v5733
  %5735 = vadd.xlane.f32.xlu0 %v5734
  %v5736 = vpop.xlane.xlu0 %5735
  %v5737 = vsel %vm5143, 1, 0
  %vm5738 = vcmp.eq.s32.totalorder %v5737, 1
  %v5739 = vsel %vm5738, %v5736, 1.0
  %v5740 = vrcp.pop %v5739
  %v5741 = vmul.f32 %v5133, %v5740
  %v5742 = vmul.f32 %v5741, %v5129
  %v5743 = vmul.f32 %v5741, %v5130
  %v5744 = vmul.f32 %v5741, %v5131
  %v5745 = vmul.f32 %v5741, %v5132
  %v5750 = vcombine.low %v5742, %v5743
  %v5751 = vcombine.low %v5744, %v5745
  %v5753 = vunpack.c.l.s4 1983009808
  %v5754 = vunpack.c.0.s8 %v5753
  %v5755 = vlaneseq
  %v5756 = vshrl.u32 %v5755, 7
  %v5757 = vsub.s32 %v5754, %v5756
  %v5758 = vrot.slane %v5750, %v5757
  %v5760 = vunpack.c.l.s4 1983009808
  %v5761 = vunpack.c.0.s8 %v5760
  %v5762 = vlaneseq
  %v5763 = vshrl.u32 %v5762, 7
  %v5764 = vsub.s32 %v5761, %v5763
  %v5765 = vrot.slane %v5751, %v5764
  %v5766 = vcombine.low %v5758, %v5765
  %v5768 = vadd.f32 %v5127, %v5766
  %v5769 = vmul.f32 %v5741, %v5720
  %v5770 = vmul.f32 %v5741, %v5721
  %v5771 = vmul.f32 %v5741, %v5722
  %v5772 = vmul.f32 %v5741, %v5723
  %v5777 = vcombine.low %v5769, %v5770
  %v5778 = vcombine.low %v5771, %v5772
  %v5780 = vunpack.c.l.s4 1983009808
  %v5781 = vunpack.c.0.s8 %v5780
  %v5782 = vlaneseq
  %v5783 = vshrl.u32 %v5782, 7
  %v5784 = vsub.s32 %v5781, %v5783
  %v5785 = vrot.slane %v5777, %v5784
  %v5787 = vunpack.c.l.s4 1983009808
  %v5788 = vunpack.c.0.s8 %v5787
  %v5789 = vlaneseq
  %v5790 = vshrl.u32 %v5789, 7
  %v5791 = vsub.s32 %v5788, %v5790
  %v5792 = vrot.slane %v5778, %v5791
  %v5793 = vcombine.low %v5785, %v5792
  %v5795 = vsub.f32 %v5128, %v5793
  %v5796 = vmul.f32 %v5795, %v5795
  %v5798 = vcombine.high %v5796, %v5796
  %v5800 = vunpack.c.l.s4 1983009808
  %v5801 = vunpack.c.0.s8 %v5800
  %v5802 = vlaneseq
  %v5803 = vshrl.u32 %v5802, 7
  %v5804 = vsub.s32 %v5801, %v5803
  %v5805 = vrot.slane %v5796, %v5804
  %v5807 = vunpack.c.l.s4 1983009808
  %v5808 = vunpack.c.0.s8 %v5807
  %v5809 = vlaneseq
  %v5810 = vshrl.u32 %v5809, 7
  %v5811 = vsub.s32 %v5808, %v5810
  %v5812 = vrot.slane %v5798, %v5811
  %v5813 = vcombine.high %v5805, %v5805
  %v5814 = vcombine.high %v5812, %v5812
  %v5819 = vsel %vm2859, %v5805, 0.0
  %v5820 = vsel %vm2859, %v5813, 0.0
  %v5821 = vadd.f32 %v5819, %v5820
  %v5822 = vsel %vm2859, %v5812, 0.0
  %v5823 = vadd.f32 %v5821, %v5822
  %v5824 = vsel %vm2859, %v5814, 0.0
  %v5825 = vadd.f32 %v5823, %v5824
  %5826 = vadd.xlane.f32.xlu0 %v5825
  %v5827 = vpop.xlane.xlu0 %5826
  %v5828 = vsel %vm5738, %v5133, 1.0
  %v5829 = vrcp.pop %v5828
  %v5830 = vmul.f32 %v5827, %v5829
  %v5831 = vmul.f32 %v5830, %v5129
  %v5832 = vmul.f32 %v5830, %v5130
  %v5833 = vmul.f32 %v5830, %v5131
  %v5834 = vmul.f32 %v5830, %v5132
  %v5836 = vcombine.high %v5795, %v5795
  %v5838 = vunpack.c.l.s4 1983009808
  %v5839 = vunpack.c.0.s8 %v5838
  %v5840 = vlaneseq
  %v5841 = vshrl.u32 %v5840, 7
  %v5842 = vsub.s32 %v5839, %v5841
  %v5843 = vrot.slane %v5795, %v5842
  %v5845 = vunpack.c.l.s4 1983009808
  %v5846 = vunpack.c.0.s8 %v5845
  %v5847 = vlaneseq
  %v5848 = vshrl.u32 %v5847, 7
  %v5849 = vsub.s32 %v5846, %v5848
  %v5850 = vrot.slane %v5836, %v5849
  %v5851 = vcombine.high %v5843, %v5843
  %v5852 = vcombine.high %v5850, %v5850
  %v5857 = vadd.f32 %v5831, %v5843
  %v5858 = vadd.f32 %v5832, %v5851
  %v5859 = vadd.f32 %v5833, %v5850
  %v5860 = vadd.f32 %v5834, %v5852
  %v5861 = vsel %vm5738, %v5768, %v5127
  %v5862 = vsel %vm5738, %v5795, %v5128
  %v5863 = vsel %vm5738, %v5857, %v5129
  %v5864 = vsel %vm5738, %v5858, %v5130
  %v5865 = vsel %vm5738, %v5859, %v5131
  %v5866 = vsel %vm5738, %v5860, %v5132
  %v5867 = vsel %vm5738, %v5827, %v5133
  %v5868 = vsel %vm2859, %v5867, -inf
  %v5869 = vrot.slane %v5868, 4
  %v5870 = vmax.f32 %v5868, %v5869
  %v5871 = vrot.slane %v5870, 2
  %v5872 = vmax.f32 %v5870, %v5871
  %v5873 = vrot.slane %v5872, 1
  %v5874 = vmax.f32 %v5872, %v5873
  %s5875 = vtos %v5874
  %v5876 = vstv %s5875
  %vm5877 = vcmp.ge.f32.partialorder %v5876, 1e-10
  %5878 = vmatprep.subr.mxu0 %v101
  %5879 = vmatpush1.msra.mxu0 %v100
  %5880 = vmatprep.subr.mxu0 %v97
  %5881 = vmatpush1.msra.mxu0 %v96
  %5882 = vmatprep.subr.mxu0 %v93
  %5883 = vmatpush1.msra.mxu0 %v92
  %5884 = vmatprep.subr.mxu0 %v89
  %5885 = vmatpush1.msra.mxu0 %v88
  %5886 = vmatprep.subr.mxu0 %v85
  %5887 = vmatpush1.msra.mxu0 %v84
  %5888 = vmatprep.subr.mxu0 %v81
  %5889 = vmatpush1.msra.mxu0 %v80
  %5890 = vmatprep.subr.mxu0 %v77
  %5891 = vmatpush1.msra.mxu0 %v76
  %5892 = vmatprep.subr.mxu0 %v73
  %5893 = vmatpush1.msra.mxu0 %v72
  %5894 = vmatprep.subr.mxu0 %v69
  %5895 = vmatpush1.msra.mxu0 %v68
  %5896 = vmatprep.subr.mxu0 %v65
  %5897 = vmatpush1.msra.mxu0 %v64
  %5898 = vmatprep.subr.mxu0 %v61
  %5899 = vmatpush1.msra.mxu0 %v60
  %5900 = vmatprep.subr.mxu0 %v57
  %5901 = vmatpush1.msra.mxu0 %v56
  %5902 = vmatprep.subr.mxu0 %v53
  %5903 = vmatpush1.msra.mxu0 %v52
  %5904 = vmatprep.subr.mxu0 %v49
  %5905 = vmatpush1.msra.mxu0 %v48
  %5906 = vmatprep.subr.mxu0 %v45
  %5907 = vmatpush1.msra.mxu0 %v44
  %5908 = vmatprep.subr.mxu0 %v41
  %5909 = vmatpush1.msra.mxu0 %v40
  %5910 = vmatprep.subr.mxu0 %v165
  %5911 = vmatpush2.msra.mxu0 %v164
  %5912 = vmatprep.subr.mxu0 %v161
  %5913 = vmatpush2.msra.mxu0 %v160
  %5914 = vmatprep.subr.mxu0 %v157
  %5915 = vmatpush2.msra.mxu0 %v156
  %5916 = vmatprep.subr.mxu0 %v153
  %5917 = vmatpush2.msra.mxu0 %v152
  %5918 = vmatprep.subr.mxu0 %v149
  %5919 = vmatpush2.msra.mxu0 %v148
  %5920 = vmatprep.subr.mxu0 %v145
  %5921 = vmatpush2.msra.mxu0 %v144
  %5922 = vmatprep.subr.mxu0 %v141
  %5923 = vmatpush2.msra.mxu0 %v140
  %5924 = vmatprep.subr.mxu0 %v137
  %5925 = vmatpush2.msra.mxu0 %v136
  %5926 = vmatprep.subr.mxu0 %v133
  %5927 = vmatpush2.msra.mxu0 %v132
  %5928 = vmatprep.subr.mxu0 %v129
  %5929 = vmatpush2.msra.mxu0 %v128
  %5930 = vmatprep.subr.mxu0 %v125
  %5931 = vmatpush2.msra.mxu0 %v124
  %5932 = vmatprep.subr.mxu0 %v121
  %5933 = vmatpush2.msra.mxu0 %v120
  %5934 = vmatprep.subr.mxu0 %v117
  %5935 = vmatpush2.msra.mxu0 %v116
  %5936 = vmatprep.subr.mxu0 %v113
  %5937 = vmatpush2.msra.mxu0 %v112
  %5938 = vmatprep.subr.mxu0 %v109
  %5939 = vmatpush2.msra.mxu0 %v108
  %5940 = vmatprep.subr.mxu0 %v105
  %5941 = vmatpush2.msra.mxu0 %v104
  %5942 = vmatprep.mubr.f32.mxu0 %v5864
  %5943 = vmatmul.mubr.f32.gmra.mxu0 %v5863
  %v5944 = vpop.f32.mrf.mxu0
  %v5945 = vadd.f32 0.0, %v5944
  %v5946 = vpop.f32.mrf.mxu0
  %v5947 = vadd.f32 0.0, %v5946
  %5948 = vdwg.mxu0
  %5949 = vmatprep.subr.mxu0 %v229
  %5950 = vmatpush1.msra.mxu0 %v228
  %5951 = vmatprep.subr.mxu0 %v225
  %5952 = vmatpush1.msra.mxu0 %v224
  %5953 = vmatprep.subr.mxu0 %v221
  %5954 = vmatpush1.msra.mxu0 %v220
  %5955 = vmatprep.subr.mxu0 %v217
  %5956 = vmatpush1.msra.mxu0 %v216
  %5957 = vmatprep.subr.mxu0 %v213
  %5958 = vmatpush1.msra.mxu0 %v212
  %5959 = vmatprep.subr.mxu0 %v209
  %5960 = vmatpush1.msra.mxu0 %v208
  %5961 = vmatprep.subr.mxu0 %v205
  %5962 = vmatpush1.msra.mxu0 %v204
  %5963 = vmatprep.subr.mxu0 %v201
  %5964 = vmatpush1.msra.mxu0 %v200
  %5965 = vmatprep.subr.mxu0 %v197
  %5966 = vmatpush1.msra.mxu0 %v196
  %5967 = vmatprep.subr.mxu0 %v193
  %5968 = vmatpush1.msra.mxu0 %v192
  %5969 = vmatprep.subr.mxu0 %v189
  %5970 = vmatpush1.msra.mxu0 %v188
  %5971 = vmatprep.subr.mxu0 %v185
  %5972 = vmatpush1.msra.mxu0 %v184
  %5973 = vmatprep.subr.mxu0 %v181
  %5974 = vmatpush1.msra.mxu0 %v180
  %5975 = vmatprep.subr.mxu0 %v177
  %5976 = vmatpush1.msra.mxu0 %v176
  %5977 = vmatprep.subr.mxu0 %v173
  %5978 = vmatpush1.msra.mxu0 %v172
  %5979 = vmatprep.subr.mxu0 %v169
  %5980 = vmatpush1.msra.mxu0 %v168
  %5981 = vmatprep.subr.mxu0 %v293
  %5982 = vmatpush2.msra.mxu0 %v292
  %5983 = vmatprep.subr.mxu0 %v289
  %5984 = vmatpush2.msra.mxu0 %v288
  %5985 = vmatprep.subr.mxu0 %v285
  %5986 = vmatpush2.msra.mxu0 %v284
  %5987 = vmatprep.subr.mxu0 %v281
  %5988 = vmatpush2.msra.mxu0 %v280
  %5989 = vmatprep.subr.mxu0 %v277
  %5990 = vmatpush2.msra.mxu0 %v276
  %5991 = vmatprep.subr.mxu0 %v273
  %5992 = vmatpush2.msra.mxu0 %v272
  %5993 = vmatprep.subr.mxu0 %v269
  %5994 = vmatpush2.msra.mxu0 %v268
  %5995 = vmatprep.subr.mxu0 %v265
  %5996 = vmatpush2.msra.mxu0 %v264
  %5997 = vmatprep.subr.mxu0 %v261
  %5998 = vmatpush2.msra.mxu0 %v260
  %5999 = vmatprep.subr.mxu0 %v257
  %6000 = vmatpush2.msra.mxu0 %v256
  %6001 = vmatprep.subr.mxu0 %v253
  %6002 = vmatpush2.msra.mxu0 %v252
  %6003 = vmatprep.subr.mxu0 %v249
  %6004 = vmatpush2.msra.mxu0 %v248
  %6005 = vmatprep.subr.mxu0 %v245
  %6006 = vmatpush2.msra.mxu0 %v244
  %6007 = vmatprep.subr.mxu0 %v241
  %6008 = vmatpush2.msra.mxu0 %v240
  %6009 = vmatprep.subr.mxu0 %v237
  %6010 = vmatpush2.msra.mxu0 %v236
  %6011 = vmatprep.subr.mxu0 %v233
  %6012 = vmatpush2.msra.mxu0 %v232
  %6013 = vmatprep.mubr.f32.mxu0 %v5866
  %6014 = vmatmul.mubr.f32.gmra.mxu0 %v5865
  %v6015 = vpop.f32.mrf.mxu0
  %v6016 = vadd.f32 %v5945, %v6015
  %v6017 = vpop.f32.mrf.mxu0
  %v6018 = vadd.f32 %v5947, %v6017
  %6019 = vdwg.mxu0
  %6020 = vmatprep.subr.mxu0 %v103
  %6021 = vmatpush1.msra.mxu0 %v102
  %6022 = vmatprep.subr.mxu0 %v99
  %6023 = vmatpush1.msra.mxu0 %v98
  %6024 = vmatprep.subr.mxu0 %v95
  %6025 = vmatpush1.msra.mxu0 %v94
  %6026 = vmatprep.subr.mxu0 %v91
  %6027 = vmatpush1.msra.mxu0 %v90
  %6028 = vmatprep.subr.mxu0 %v87
  %6029 = vmatpush1.msra.mxu0 %v86
  %6030 = vmatprep.subr.mxu0 %v83
  %6031 = vmatpush1.msra.mxu0 %v82
  %6032 = vmatprep.subr.mxu0 %v79
  %6033 = vmatpush1.msra.mxu0 %v78
  %6034 = vmatprep.subr.mxu0 %v75
  %6035 = vmatpush1.msra.mxu0 %v74
  %6036 = vmatprep.subr.mxu0 %v71
  %6037 = vmatpush1.msra.mxu0 %v70
  %6038 = vmatprep.subr.mxu0 %v67
  %6039 = vmatpush1.msra.mxu0 %v66
  %6040 = vmatprep.subr.mxu0 %v63
  %6041 = vmatpush1.msra.mxu0 %v62
  %6042 = vmatprep.subr.mxu0 %v59
  %6043 = vmatpush1.msra.mxu0 %v58
  %6044 = vmatprep.subr.mxu0 %v55
  %6045 = vmatpush1.msra.mxu0 %v54
  %6046 = vmatprep.subr.mxu0 %v51
  %6047 = vmatpush1.msra.mxu0 %v50
  %6048 = vmatprep.subr.mxu0 %v47
  %6049 = vmatpush1.msra.mxu0 %v46
  %6050 = vmatprep.subr.mxu0 %v43
  %6051 = vmatpush1.msra.mxu0 %v42
  %6052 = vmatprep.subr.mxu0 %v167
  %6053 = vmatpush2.msra.mxu0 %v166
  %6054 = vmatprep.subr.mxu0 %v163
  %6055 = vmatpush2.msra.mxu0 %v162
  %6056 = vmatprep.subr.mxu0 %v159
  %6057 = vmatpush2.msra.mxu0 %v158
  %6058 = vmatprep.subr.mxu0 %v155
  %6059 = vmatpush2.msra.mxu0 %v154
  %6060 = vmatprep.subr.mxu0 %v151
  %6061 = vmatpush2.msra.mxu0 %v150
  %6062 = vmatprep.subr.mxu0 %v147
  %6063 = vmatpush2.msra.mxu0 %v146
  %6064 = vmatprep.subr.mxu0 %v143
  %6065 = vmatpush2.msra.mxu0 %v142
  %6066 = vmatprep.subr.mxu0 %v139
  %6067 = vmatpush2.msra.mxu0 %v138
  %6068 = vmatprep.subr.mxu0 %v135
  %6069 = vmatpush2.msra.mxu0 %v134
  %6070 = vmatprep.subr.mxu0 %v131
  %6071 = vmatpush2.msra.mxu0 %v130
  %6072 = vmatprep.subr.mxu0 %v127
  %6073 = vmatpush2.msra.mxu0 %v126
  %6074 = vmatprep.subr.mxu0 %v123
  %6075 = vmatpush2.msra.mxu0 %v122
  %6076 = vmatprep.subr.mxu0 %v119
  %6077 = vmatpush2.msra.mxu0 %v118
  %6078 = vmatprep.subr.mxu0 %v115
  %6079 = vmatpush2.msra.mxu0 %v114
  %6080 = vmatprep.subr.mxu0 %v111
  %6081 = vmatpush2.msra.mxu0 %v110
  %6082 = vmatprep.subr.mxu0 %v107
  %6083 = vmatpush2.msra.mxu0 %v106
  %6084 = vmatprep.mubr.f32.mxu0 %v5864
  %6085 = vmatmul.mubr.f32.gmra.mxu0 %v5863
  %v6086 = vpop.f32.mrf.mxu0
  %v6087 = vadd.f32 0.0, %v6086
  %v6088 = vpop.f32.mrf.mxu0
  %v6089 = vadd.f32 0.0, %v6088
  %6090 = vdwg.mxu0
  %6091 = vmatprep.subr.mxu0 %v231
  %6092 = vmatpush1.msra.mxu0 %v230
  %6093 = vmatprep.subr.mxu0 %v227
  %6094 = vmatpush1.msra.mxu0 %v226
  %6095 = vmatprep.subr.mxu0 %v223
  %6096 = vmatpush1.msra.mxu0 %v222
  %6097 = vmatprep.subr.mxu0 %v219
  %6098 = vmatpush1.msra.mxu0 %v218
  %6099 = vmatprep.subr.mxu0 %v215
  %6100 = vmatpush1.msra.mxu0 %v214
  %6101 = vmatprep.subr.mxu0 %v211
  %6102 = vmatpush1.msra.mxu0 %v210
  %6103 = vmatprep.subr.mxu0 %v207
  %6104 = vmatpush1.msra.mxu0 %v206
  %6105 = vmatprep.subr.mxu0 %v203
  %6106 = vmatpush1.msra.mxu0 %v202
  %6107 = vmatprep.subr.mxu0 %v199
  %6108 = vmatpush1.msra.mxu0 %v198
  %6109 = vmatprep.subr.mxu0 %v195
  %6110 = vmatpush1.msra.mxu0 %v194
  %6111 = vmatprep.subr.mxu0 %v191
  %6112 = vmatpush1.msra.mxu0 %v190
  %6113 = vmatprep.subr.mxu0 %v187
  %6114 = vmatpush1.msra.mxu0 %v186
  %6115 = vmatprep.subr.mxu0 %v183
  %6116 = vmatpush1.msra.mxu0 %v182
  %6117 = vmatprep.subr.mxu0 %v179
  %6118 = vmatpush1.msra.mxu0 %v178
  %6119 = vmatprep.subr.mxu0 %v175
  %6120 = vmatpush1.msra.mxu0 %v174
  %6121 = vmatprep.subr.mxu0 %v171
  %6122 = vmatpush1.msra.mxu0 %v170
  %6123 = vmatprep.subr.mxu0 %v295
  %6124 = vmatpush2.msra.mxu0 %v294
  %6125 = vmatprep.subr.mxu0 %v291
  %6126 = vmatpush2.msra.mxu0 %v290
  %6127 = vmatprep.subr.mxu0 %v287
  %6128 = vmatpush2.msra.mxu0 %v286
  %6129 = vmatprep.subr.mxu0 %v283
  %6130 = vmatpush2.msra.mxu0 %v282
  %6131 = vmatprep.subr.mxu0 %v279
  %6132 = vmatpush2.msra.mxu0 %v278
  %6133 = vmatprep.subr.mxu0 %v275
  %6134 = vmatpush2.msra.mxu0 %v274
  %6135 = vmatprep.subr.mxu0 %v271
  %6136 = vmatpush2.msra.mxu0 %v270
  %6137 = vmatprep.subr.mxu0 %v267
  %6138 = vmatpush2.msra.mxu0 %v266
  %6139 = vmatprep.subr.mxu0 %v263
  %6140 = vmatpush2.msra.mxu0 %v262
  %6141 = vmatprep.subr.mxu0 %v259
  %6142 = vmatpush2.msra.mxu0 %v258
  %6143 = vmatprep.subr.mxu0 %v255
  %6144 = vmatpush2.msra.mxu0 %v254
  %6145 = vmatprep.subr.mxu0 %v251
  %6146 = vmatpush2.msra.mxu0 %v250
  %6147 = vmatprep.subr.mxu0 %v247
  %6148 = vmatpush2.msra.mxu0 %v246
  %6149 = vmatprep.subr.mxu0 %v243
  %6150 = vmatpush2.msra.mxu0 %v242
  %6151 = vmatprep.subr.mxu0 %v239
  %6152 = vmatpush2.msra.mxu0 %v238
  %6153 = vmatprep.subr.mxu0 %v235
  %6154 = vmatpush2.msra.mxu0 %v234
  %6155 = vmatprep.mubr.f32.mxu0 %v5866
  %6156 = vmatmul.mubr.f32.gmra.mxu0 %v5865
  %v6157 = vpop.f32.mrf.mxu0
  %v6158 = vadd.f32 %v6087, %v6157
  %v6159 = vpop.f32.mrf.mxu0
  %v6160 = vadd.f32 %v6089, %v6159
  %6161 = vdwg.mxu0
  %v6162 = vmul.f32 %v557, %v6016
  %v6163 = vmul.f32 %v557, %v6018
  %v6164 = vmul.f32 %v557, %v6158
  %v6165 = vmul.f32 %v557, %v6160
  %6166 = vmatprep.subr.mxu0 %v358
  %6167 = vmatpush1.msra.mxu0 %v357
  %6168 = vmatprep.subr.mxu0 %v354
  %6169 = vmatpush1.msra.mxu0 %v353
  %6170 = vmatprep.subr.mxu0 %v350
  %6171 = vmatpush1.msra.mxu0 %v349
  %6172 = vmatprep.subr.mxu0 %v346
  %6173 = vmatpush1.msra.mxu0 %v345
  %6174 = vmatprep.subr.mxu0 %v342
  %6175 = vmatpush1.msra.mxu0 %v341
  %6176 = vmatprep.subr.mxu0 %v338
  %6177 = vmatpush1.msra.mxu0 %v337
  %6178 = vmatprep.subr.mxu0 %v334
  %6179 = vmatpush1.msra.mxu0 %v333
  %6180 = vmatprep.subr.mxu0 %v330
  %6181 = vmatpush1.msra.mxu0 %v329
  %6182 = vmatprep.subr.mxu0 %v326
  %6183 = vmatpush1.msra.mxu0 %v325
  %6184 = vmatprep.subr.mxu0 %v322
  %6185 = vmatpush1.msra.mxu0 %v321
  %6186 = vmatprep.subr.mxu0 %v318
  %6187 = vmatpush1.msra.mxu0 %v317
  %6188 = vmatprep.subr.mxu0 %v314
  %6189 = vmatpush1.msra.mxu0 %v313
  %6190 = vmatprep.subr.mxu0 %v310
  %6191 = vmatpush1.msra.mxu0 %v309
  %6192 = vmatprep.subr.mxu0 %v306
  %6193 = vmatpush1.msra.mxu0 %v305
  %6194 = vmatprep.subr.mxu0 %v302
  %6195 = vmatpush1.msra.mxu0 %v301
  %6196 = vmatprep.subr.mxu0 %v298
  %6197 = vmatpush1.msra.mxu0 %v297
  %6198 = vmatprep.subr.mxu0 %v422
  %6199 = vmatpush2.msra.mxu0 %v421
  %6200 = vmatprep.subr.mxu0 %v418
  %6201 = vmatpush2.msra.mxu0 %v417
  %6202 = vmatprep.subr.mxu0 %v414
  %6203 = vmatpush2.msra.mxu0 %v413
  %6204 = vmatprep.subr.mxu0 %v410
  %6205 = vmatpush2.msra.mxu0 %v409
  %6206 = vmatprep.subr.mxu0 %v406
  %6207 = vmatpush2.msra.mxu0 %v405
  %6208 = vmatprep.subr.mxu0 %v402
  %6209 = vmatpush2.msra.mxu0 %v401
  %6210 = vmatprep.subr.mxu0 %v398
  %6211 = vmatpush2.msra.mxu0 %v397
  %6212 = vmatprep.subr.mxu0 %v394
  %6213 = vmatpush2.msra.mxu0 %v393
  %6214 = vmatprep.subr.mxu0 %v390
  %6215 = vmatpush2.msra.mxu0 %v389
  %6216 = vmatprep.subr.mxu0 %v386
  %6217 = vmatpush2.msra.mxu0 %v385
  %6218 = vmatprep.subr.mxu0 %v382
  %6219 = vmatpush2.msra.mxu0 %v381
  %6220 = vmatprep.subr.mxu0 %v378
  %6221 = vmatpush2.msra.mxu0 %v377
  %6222 = vmatprep.subr.mxu0 %v374
  %6223 = vmatpush2.msra.mxu0 %v373
  %6224 = vmatprep.subr.mxu0 %v370
  %6225 = vmatpush2.msra.mxu0 %v369
  %6226 = vmatprep.subr.mxu0 %v366
  %6227 = vmatpush2.msra.mxu0 %v365
  %6228 = vmatprep.subr.mxu0 %v362
  %6229 = vmatpush2.msra.mxu0 %v361
  %6230 = vmatprep.mubr.f32.mxu0 %v5864
  %6231 = vmatmul.mubr.f32.gmra.mxu0 %v5863
  %v6232 = vpop.f32.mrf.mxu0
  %v6233 = vadd.f32 0.0, %v6232
  %v6234 = vpop.f32.mrf.mxu0
  %v6235 = vadd.f32 0.0, %v6234
  %6236 = vdwg.mxu0
  %6237 = vmatprep.subr.mxu0 %v486
  %6238 = vmatpush1.msra.mxu0 %v485
  %6239 = vmatprep.subr.mxu0 %v482
  %6240 = vmatpush1.msra.mxu0 %v481
  %6241 = vmatprep.subr.mxu0 %v478
  %6242 = vmatpush1.msra.mxu0 %v477
  %6243 = vmatprep.subr.mxu0 %v474
  %6244 = vmatpush1.msra.mxu0 %v473
  %6245 = vmatprep.subr.mxu0 %v470
  %6246 = vmatpush1.msra.mxu0 %v469
  %6247 = vmatprep.subr.mxu0 %v466
  %6248 = vmatpush1.msra.mxu0 %v465
  %6249 = vmatprep.subr.mxu0 %v462
  %6250 = vmatpush1.msra.mxu0 %v461
  %6251 = vmatprep.subr.mxu0 %v458
  %6252 = vmatpush1.msra.mxu0 %v457
  %6253 = vmatprep.subr.mxu0 %v454
  %6254 = vmatpush1.msra.mxu0 %v453
  %6255 = vmatprep.subr.mxu0 %v450
  %6256 = vmatpush1.msra.mxu0 %v449
  %6257 = vmatprep.subr.mxu0 %v446
  %6258 = vmatpush1.msra.mxu0 %v445
  %6259 = vmatprep.subr.mxu0 %v442
  %6260 = vmatpush1.msra.mxu0 %v441
  %6261 = vmatprep.subr.mxu0 %v438
  %6262 = vmatpush1.msra.mxu0 %v437
  %6263 = vmatprep.subr.mxu0 %v434
  %6264 = vmatpush1.msra.mxu0 %v433
  %6265 = vmatprep.subr.mxu0 %v430
  %6266 = vmatpush1.msra.mxu0 %v429
  %6267 = vmatprep.subr.mxu0 %v426
  %6268 = vmatpush1.msra.mxu0 %v425
  %6269 = vmatprep.subr.mxu0 %v550
  %6270 = vmatpush2.msra.mxu0 %v549
  %6271 = vmatprep.subr.mxu0 %v546
  %6272 = vmatpush2.msra.mxu0 %v545
  %6273 = vmatprep.subr.mxu0 %v542
  %6274 = vmatpush2.msra.mxu0 %v541
  %6275 = vmatprep.subr.mxu0 %v538
  %6276 = vmatpush2.msra.mxu0 %v537
  %6277 = vmatprep.subr.mxu0 %v534
  %6278 = vmatpush2.msra.mxu0 %v533
  %6279 = vmatprep.subr.mxu0 %v530
  %6280 = vmatpush2.msra.mxu0 %v529
  %6281 = vmatprep.subr.mxu0 %v526
  %6282 = vmatpush2.msra.mxu0 %v525
  %6283 = vmatprep.subr.mxu0 %v522
  %6284 = vmatpush2.msra.mxu0 %v521
  %6285 = vmatprep.subr.mxu0 %v518
  %6286 = vmatpush2.msra.mxu0 %v517
  %6287 = vmatprep.subr.mxu0 %v514
  %6288 = vmatpush2.msra.mxu0 %v513
  %6289 = vmatprep.subr.mxu0 %v510
  %6290 = vmatpush2.msra.mxu0 %v509
  %6291 = vmatprep.subr.mxu0 %v506
  %6292 = vmatpush2.msra.mxu0 %v505
  %6293 = vmatprep.subr.mxu0 %v502
  %6294 = vmatpush2.msra.mxu0 %v501
  %6295 = vmatprep.subr.mxu0 %v498
  %6296 = vmatpush2.msra.mxu0 %v497
  %6297 = vmatprep.subr.mxu0 %v494
  %6298 = vmatpush2.msra.mxu0 %v493
  %6299 = vmatprep.subr.mxu0 %v490
  %6300 = vmatpush2.msra.mxu0 %v489
  %6301 = vmatprep.mubr.f32.mxu0 %v5866
  %6302 = vmatmul.mubr.f32.gmra.mxu0 %v5865
  %v6303 = vpop.f32.mrf.mxu0
  %v6304 = vadd.f32 %v6233, %v6303
  %v6305 = vpop.f32.mrf.mxu0
  %v6306 = vadd.f32 %v6235, %v6305
  %6307 = vdwg.mxu0
  %6308 = vmatprep.subr.mxu0 %v360
  %6309 = vmatpush1.msra.mxu0 %v359
  %6310 = vmatprep.subr.mxu0 %v356
  %6311 = vmatpush1.msra.mxu0 %v355
  %6312 = vmatprep.subr.mxu0 %v352
  %6313 = vmatpush1.msra.mxu0 %v351
  %6314 = vmatprep.subr.mxu0 %v348
  %6315 = vmatpush1.msra.mxu0 %v347
  %6316 = vmatprep.subr.mxu0 %v344
  %6317 = vmatpush1.msra.mxu0 %v343
  %6318 = vmatprep.subr.mxu0 %v340
  %6319 = vmatpush1.msra.mxu0 %v339
  %6320 = vmatprep.subr.mxu0 %v336
  %6321 = vmatpush1.msra.mxu0 %v335
  %6322 = vmatprep.subr.mxu0 %v332
  %6323 = vmatpush1.msra.mxu0 %v331
  %6324 = vmatprep.subr.mxu0 %v328
  %6325 = vmatpush1.msra.mxu0 %v327
  %6326 = vmatprep.subr.mxu0 %v324
  %6327 = vmatpush1.msra.mxu0 %v323
  %6328 = vmatprep.subr.mxu0 %v320
  %6329 = vmatpush1.msra.mxu0 %v319
  %6330 = vmatprep.subr.mxu0 %v316
  %6331 = vmatpush1.msra.mxu0 %v315
  %6332 = vmatprep.subr.mxu0 %v312
  %6333 = vmatpush1.msra.mxu0 %v311
  %6334 = vmatprep.subr.mxu0 %v308
  %6335 = vmatpush1.msra.mxu0 %v307
  %6336 = vmatprep.subr.mxu0 %v304
  %6337 = vmatpush1.msra.mxu0 %v303
  %6338 = vmatprep.subr.mxu0 %v300
  %6339 = vmatpush1.msra.mxu0 %v299
  %6340 = vmatprep.subr.mxu0 %v424
  %6341 = vmatpush2.msra.mxu0 %v423
  %6342 = vmatprep.subr.mxu0 %v420
  %6343 = vmatpush2.msra.mxu0 %v419
  %6344 = vmatprep.subr.mxu0 %v416
  %6345 = vmatpush2.msra.mxu0 %v415
  %6346 = vmatprep.subr.mxu0 %v412
  %6347 = vmatpush2.msra.mxu0 %v411
  %6348 = vmatprep.subr.mxu0 %v408
  %6349 = vmatpush2.msra.mxu0 %v407
  %6350 = vmatprep.subr.mxu0 %v404
  %6351 = vmatpush2.msra.mxu0 %v403
  %6352 = vmatprep.subr.mxu0 %v400
  %6353 = vmatpush2.msra.mxu0 %v399
  %6354 = vmatprep.subr.mxu0 %v396
  %6355 = vmatpush2.msra.mxu0 %v395
  %6356 = vmatprep.subr.mxu0 %v392
  %6357 = vmatpush2.msra.mxu0 %v391
  %6358 = vmatprep.subr.mxu0 %v388
  %6359 = vmatpush2.msra.mxu0 %v387
  %6360 = vmatprep.subr.mxu0 %v384
  %6361 = vmatpush2.msra.mxu0 %v383
  %6362 = vmatprep.subr.mxu0 %v380
  %6363 = vmatpush2.msra.mxu0 %v379
  %6364 = vmatprep.subr.mxu0 %v376
  %6365 = vmatpush2.msra.mxu0 %v375
  %6366 = vmatprep.subr.mxu0 %v372
  %6367 = vmatpush2.msra.mxu0 %v371
  %6368 = vmatprep.subr.mxu0 %v368
  %6369 = vmatpush2.msra.mxu0 %v367
  %6370 = vmatprep.subr.mxu0 %v364
  %6371 = vmatpush2.msra.mxu0 %v363
  %6372 = vmatprep.mubr.f32.mxu0 %v5864
  %6373 = vmatmul.mubr.f32.gmra.mxu0 %v5863
  %v6374 = vpop.f32.mrf.mxu0
  %v6375 = vadd.f32 0.0, %v6374
  %v6376 = vpop.f32.mrf.mxu0
  %v6377 = vadd.f32 0.0, %v6376
  %6378 = vdwg.mxu0
  %6379 = vmatprep.subr.mxu0 %v488
  %6380 = vmatpush1.msra.mxu0 %v487
  %6381 = vmatprep.subr.mxu0 %v484
  %6382 = vmatpush1.msra.mxu0 %v483
  %6383 = vmatprep.subr.mxu0 %v480
  %6384 = vmatpush1.msra.mxu0 %v479
  %6385 = vmatprep.subr.mxu0 %v476
  %6386 = vmatpush1.msra.mxu0 %v475
  %6387 = vmatprep.subr.mxu0 %v472
  %6388 = vmatpush1.msra.mxu0 %v471
  %6389 = vmatprep.subr.mxu0 %v468
  %6390 = vmatpush1.msra.mxu0 %v467
  %6391 = vmatprep.subr.mxu0 %v464
  %6392 = vmatpush1.msra.mxu0 %v463
  %6393 = vmatprep.subr.mxu0 %v460
  %6394 = vmatpush1.msra.mxu0 %v459
  %6395 = vmatprep.subr.mxu0 %v456
  %6396 = vmatpush1.msra.mxu0 %v455
  %6397 = vmatprep.subr.mxu0 %v452
  %6398 = vmatpush1.msra.mxu0 %v451
  %6399 = vmatprep.subr.mxu0 %v448
  %6400 = vmatpush1.msra.mxu0 %v447
  %6401 = vmatprep.subr.mxu0 %v444
  %6402 = vmatpush1.msra.mxu0 %v443
  %6403 = vmatprep.subr.mxu0 %v440
  %6404 = vmatpush1.msra.mxu0 %v439
  %6405 = vmatprep.subr.mxu0 %v436
  %6406 = vmatpush1.msra.mxu0 %v435
  %6407 = vmatprep.subr.mxu0 %v432
  %6408 = vmatpush1.msra.mxu0 %v431
  %6409 = vmatprep.subr.mxu0 %v428
  %6410 = vmatpush1.msra.mxu0 %v427
  %6411 = vmatprep.subr.mxu0 %v552
  %6412 = vmatpush2.msra.mxu0 %v551
  %6413 = vmatprep.subr.mxu0 %v548
  %6414 = vmatpush2.msra.mxu0 %v547
  %6415 = vmatprep.subr.mxu0 %v544
  %6416 = vmatpush2.msra.mxu0 %v543
  %6417 = vmatprep.subr.mxu0 %v540
  %6418 = vmatpush2.msra.mxu0 %v539
  %6419 = vmatprep.subr.mxu0 %v536
  %6420 = vmatpush2.msra.mxu0 %v535
  %6421 = vmatprep.subr.mxu0 %v532
  %6422 = vmatpush2.msra.mxu0 %v531
  %6423 = vmatprep.subr.mxu0 %v528
  %6424 = vmatpush2.msra.mxu0 %v527
  %6425 = vmatprep.subr.mxu0 %v524
  %6426 = vmatpush2.msra.mxu0 %v523
  %6427 = vmatprep.subr.mxu0 %v520
  %6428 = vmatpush2.msra.mxu0 %v519
  %6429 = vmatprep.subr.mxu0 %v516
  %6430 = vmatpush2.msra.mxu0 %v515
  %6431 = vmatprep.subr.mxu0 %v512
  %6432 = vmatpush2.msra.mxu0 %v511
  %6433 = vmatprep.subr.mxu0 %v508
  %6434 = vmatpush2.msra.mxu0 %v507
  %6435 = vmatprep.subr.mxu0 %v504
  %6436 = vmatpush2.msra.mxu0 %v503
  %6437 = vmatprep.subr.mxu0 %v500
  %6438 = vmatpush2.msra.mxu0 %v499
  %6439 = vmatprep.subr.mxu0 %v496
  %6440 = vmatpush2.msra.mxu0 %v495
  %6441 = vmatprep.subr.mxu0 %v492
  %6442 = vmatpush2.msra.mxu0 %v491
  %6443 = vmatprep.mubr.f32.mxu0 %v5866
  %6444 = vmatmul.mubr.f32.gmra.mxu0 %v5865
  %v6445 = vpop.f32.mrf.mxu0
  %v6446 = vadd.f32 %v6375, %v6445
  %v6447 = vpop.f32.mrf.mxu0
  %v6448 = vadd.f32 %v6377, %v6447
  %6449 = vdwg.mxu0
  %v6450 = vmul.f32 %v560, %v6304
  %v6451 = vmul.f32 %v560, %v6306
  %v6452 = vmul.f32 %v560, %v6446
  %v6453 = vmul.f32 %v560, %v6448
  %v6454 = vadd.f32 %v6162, %v6450
  %v6455 = vadd.f32 %v6163, %v6451
  %v6456 = vadd.f32 %v6164, %v6452
  %v6457 = vadd.f32 %v6165, %v6453
  %v6458 = vmul.f32 %v5863, %v6454
  %v6459 = vmul.f32 %v5864, %v6455
  %v6460 = vmul.f32 %v5865, %v6456
  %v6461 = vmul.f32 %v5866, %v6457
  %v6462 = vsel %vm2859, %v6458, 0.0
  %v6463 = vsel %vm2859, %v6459, 0.0
  %v6464 = vadd.f32 %v6462, %v6463
  %v6465 = vsel %vm2859, %v6460, 0.0
  %v6466 = vadd.f32 %v6464, %v6465
  %v6467 = vsel %vm2859, %v6461, 0.0
  %v6468 = vadd.f32 %v6466, %v6467
  %6469 = vadd.xlane.f32.xlu0 %v6468
  %v6470 = vpop.xlane.xlu0 %6469
  %v6471 = vsel %vm5877, 1, 0
  %vm6472 = vcmp.eq.s32.totalorder %v6471, 1
  %v6473 = vsel %vm6472, %v6470, 1.0
  %v6474 = vrcp.pop %v6473
  %v6475 = vmul.f32 %v5867, %v6474
  %v6476 = vmul.f32 %v6475, %v5863
  %v6477 = vmul.f32 %v6475, %v5864
  %v6478 = vmul.f32 %v6475, %v5865
  %v6479 = vmul.f32 %v6475, %v5866
  %v6484 = vcombine.low %v6476, %v6477
  %v6485 = vcombine.low %v6478, %v6479
  %v6487 = vunpack.c.l.s4 1983009808
  %v6488 = vunpack.c.0.s8 %v6487
  %v6489 = vlaneseq
  %v6490 = vshrl.u32 %v6489, 7
  %v6491 = vsub.s32 %v6488, %v6490
  %v6492 = vrot.slane %v6484, %v6491
  %v6494 = vunpack.c.l.s4 1983009808
  %v6495 = vunpack.c.0.s8 %v6494
  %v6496 = vlaneseq
  %v6497 = vshrl.u32 %v6496, 7
  %v6498 = vsub.s32 %v6495, %v6497
  %v6499 = vrot.slane %v6485, %v6498
  %v6500 = vcombine.low %v6492, %v6499
  %v6502 = vadd.f32 %v5861, %v6500
  %v6503 = vmul.f32 %v6475, %v6454
  %v6504 = vmul.f32 %v6475, %v6455
  %v6505 = vmul.f32 %v6475, %v6456
  %v6506 = vmul.f32 %v6475, %v6457
  %v6511 = vcombine.low %v6503, %v6504
  %v6512 = vcombine.low %v6505, %v6506
  %v6514 = vunpack.c.l.s4 1983009808
  %v6515 = vunpack.c.0.s8 %v6514
  %v6516 = vlaneseq
  %v6517 = vshrl.u32 %v6516, 7
  %v6518 = vsub.s32 %v6515, %v6517
  %v6519 = vrot.slane %v6511, %v6518
  %v6521 = vunpack.c.l.s4 1983009808
  %v6522 = vunpack.c.0.s8 %v6521
  %v6523 = vlaneseq
  %v6524 = vshrl.u32 %v6523, 7
  %v6525 = vsub.s32 %v6522, %v6524
  %v6526 = vrot.slane %v6512, %v6525
  %v6527 = vcombine.low %v6519, %v6526
  %v6529 = vsub.f32 %v5862, %v6527
  %v6530 = vmul.f32 %v6529, %v6529
  %v6532 = vcombine.high %v6530, %v6530
  %v6534 = vunpack.c.l.s4 1983009808
  %v6535 = vunpack.c.0.s8 %v6534
  %v6536 = vlaneseq
  %v6537 = vshrl.u32 %v6536, 7
  %v6538 = vsub.s32 %v6535, %v6537
  %v6539 = vrot.slane %v6530, %v6538
  %v6541 = vunpack.c.l.s4 1983009808
  %v6542 = vunpack.c.0.s8 %v6541
  %v6543 = vlaneseq
  %v6544 = vshrl.u32 %v6543, 7
  %v6545 = vsub.s32 %v6542, %v6544
  %v6546 = vrot.slane %v6532, %v6545
  %v6547 = vcombine.high %v6539, %v6539
  %v6548 = vcombine.high %v6546, %v6546
  %v6553 = vsel %vm2859, %v6539, 0.0
  %v6554 = vsel %vm2859, %v6547, 0.0
  %v6555 = vadd.f32 %v6553, %v6554
  %v6556 = vsel %vm2859, %v6546, 0.0
  %v6557 = vadd.f32 %v6555, %v6556
  %v6558 = vsel %vm2859, %v6548, 0.0
  %v6559 = vadd.f32 %v6557, %v6558
  %6560 = vadd.xlane.f32.xlu0 %v6559
  %v6561 = vpop.xlane.xlu0 %6560
  %v6562 = vsel %vm6472, %v5867, 1.0
  %v6563 = vrcp.pop %v6562
  %v6564 = vmul.f32 %v6561, %v6563
  %v6565 = vmul.f32 %v6564, %v5863
  %v6566 = vmul.f32 %v6564, %v5864
  %v6567 = vmul.f32 %v6564, %v5865
  %v6568 = vmul.f32 %v6564, %v5866
  %v6570 = vcombine.high %v6529, %v6529
  %v6572 = vunpack.c.l.s4 1983009808
  %v6573 = vunpack.c.0.s8 %v6572
  %v6574 = vlaneseq
  %v6575 = vshrl.u32 %v6574, 7
  %v6576 = vsub.s32 %v6573, %v6575
  %v6577 = vrot.slane %v6529, %v6576
  %v6579 = vunpack.c.l.s4 1983009808
  %v6580 = vunpack.c.0.s8 %v6579
  %v6581 = vlaneseq
  %v6582 = vshrl.u32 %v6581, 7
  %v6583 = vsub.s32 %v6580, %v6582
  %v6584 = vrot.slane %v6570, %v6583
  %v6585 = vcombine.high %v6577, %v6577
  %v6586 = vcombine.high %v6584, %v6584
  %v6591 = vadd.f32 %v6565, %v6577
  %v6592 = vadd.f32 %v6566, %v6585
  %v6593 = vadd.f32 %v6567, %v6584
  %v6594 = vadd.f32 %v6568, %v6586
  %v6595 = vsel %vm6472, %v6502, %v5861
  %v6596 = vsel %vm6472, %v6591, %v5863
  %v6597 = vsel %vm6472, %v6592, %v5864
  %v6598 = vsel %vm6472, %v6593, %v5865
  %v6599 = vsel %vm6472, %v6594, %v5866
  %v6600 = vsel %vm6472, %v6561, %v5867
  %v6601 = vsel %vm2859, %v6600, -inf
  %v6602 = vrot.slane %v6601, 4
  %v6603 = vmax.f32 %v6601, %v6602
  %v6604 = vrot.slane %v6603, 2
  %v6605 = vmax.f32 %v6603, %v6604
  %v6606 = vrot.slane %v6605, 1
  %v6607 = vmax.f32 %v6605, %v6606
  %s6608 = vtos %v6607
  %v6609 = vstv %s6608
  %vm6610 = vcmp.ge.f32.partialorder %v6609, 1e-10
  %6611 = vmatprep.subr.mxu0 %v101
  %6612 = vmatpush1.msra.mxu0 %v100
  %6613 = vmatprep.subr.mxu0 %v97
  %6614 = vmatpush1.msra.mxu0 %v96
  %6615 = vmatprep.subr.mxu0 %v93
  %6616 = vmatpush1.msra.mxu0 %v92
  %6617 = vmatprep.subr.mxu0 %v89
  %6618 = vmatpush1.msra.mxu0 %v88
  %6619 = vmatprep.subr.mxu0 %v85
  %6620 = vmatpush1.msra.mxu0 %v84
  %6621 = vmatprep.subr.mxu0 %v81
  %6622 = vmatpush1.msra.mxu0 %v80
  %6623 = vmatprep.subr.mxu0 %v77
  %6624 = vmatpush1.msra.mxu0 %v76
  %6625 = vmatprep.subr.mxu0 %v73
  %6626 = vmatpush1.msra.mxu0 %v72
  %6627 = vmatprep.subr.mxu0 %v69
  %6628 = vmatpush1.msra.mxu0 %v68
  %6629 = vmatprep.subr.mxu0 %v65
  %6630 = vmatpush1.msra.mxu0 %v64
  %6631 = vmatprep.subr.mxu0 %v61
  %6632 = vmatpush1.msra.mxu0 %v60
  %6633 = vmatprep.subr.mxu0 %v57
  %6634 = vmatpush1.msra.mxu0 %v56
  %6635 = vmatprep.subr.mxu0 %v53
  %6636 = vmatpush1.msra.mxu0 %v52
  %6637 = vmatprep.subr.mxu0 %v49
  %6638 = vmatpush1.msra.mxu0 %v48
  %6639 = vmatprep.subr.mxu0 %v45
  %6640 = vmatpush1.msra.mxu0 %v44
  %6641 = vmatprep.subr.mxu0 %v41
  %6642 = vmatpush1.msra.mxu0 %v40
  %6643 = vmatprep.subr.mxu0 %v165
  %6644 = vmatpush2.msra.mxu0 %v164
  %6645 = vmatprep.subr.mxu0 %v161
  %6646 = vmatpush2.msra.mxu0 %v160
  %6647 = vmatprep.subr.mxu0 %v157
  %6648 = vmatpush2.msra.mxu0 %v156
  %6649 = vmatprep.subr.mxu0 %v153
  %6650 = vmatpush2.msra.mxu0 %v152
  %6651 = vmatprep.subr.mxu0 %v149
  %6652 = vmatpush2.msra.mxu0 %v148
  %6653 = vmatprep.subr.mxu0 %v145
  %6654 = vmatpush2.msra.mxu0 %v144
  %6655 = vmatprep.subr.mxu0 %v141
  %6656 = vmatpush2.msra.mxu0 %v140
  %6657 = vmatprep.subr.mxu0 %v137
  %6658 = vmatpush2.msra.mxu0 %v136
  %6659 = vmatprep.subr.mxu0 %v133
  %6660 = vmatpush2.msra.mxu0 %v132
  %6661 = vmatprep.subr.mxu0 %v129
  %6662 = vmatpush2.msra.mxu0 %v128
  %6663 = vmatprep.subr.mxu0 %v125
  %6664 = vmatpush2.msra.mxu0 %v124
  %6665 = vmatprep.subr.mxu0 %v121
  %6666 = vmatpush2.msra.mxu0 %v120
  %6667 = vmatprep.subr.mxu0 %v117
  %6668 = vmatpush2.msra.mxu0 %v116
  %6669 = vmatprep.subr.mxu0 %v113
  %6670 = vmatpush2.msra.mxu0 %v112
  %6671 = vmatprep.subr.mxu0 %v109
  %6672 = vmatpush2.msra.mxu0 %v108
  %6673 = vmatprep.subr.mxu0 %v105
  %6674 = vmatpush2.msra.mxu0 %v104
  %6675 = vmatprep.mubr.f32.mxu0 %v6597
  %6676 = vmatmul.mubr.f32.gmra.mxu0 %v6596
  %v6677 = vpop.f32.mrf.mxu0
  %v6678 = vadd.f32 0.0, %v6677
  %v6679 = vpop.f32.mrf.mxu0
  %v6680 = vadd.f32 0.0, %v6679
  %6681 = vdwg.mxu0
  %6682 = vmatprep.subr.mxu0 %v229
  %6683 = vmatpush1.msra.mxu0 %v228
  %6684 = vmatprep.subr.mxu0 %v225
  %6685 = vmatpush1.msra.mxu0 %v224
  %6686 = vmatprep.subr.mxu0 %v221
  %6687 = vmatpush1.msra.mxu0 %v220
  %6688 = vmatprep.subr.mxu0 %v217
  %6689 = vmatpush1.msra.mxu0 %v216
  %6690 = vmatprep.subr.mxu0 %v213
  %6691 = vmatpush1.msra.mxu0 %v212
  %6692 = vmatprep.subr.mxu0 %v209
  %6693 = vmatpush1.msra.mxu0 %v208
  %6694 = vmatprep.subr.mxu0 %v205
  %6695 = vmatpush1.msra.mxu0 %v204
  %6696 = vmatprep.subr.mxu0 %v201
  %6697 = vmatpush1.msra.mxu0 %v200
  %6698 = vmatprep.subr.mxu0 %v197
  %6699 = vmatpush1.msra.mxu0 %v196
  %6700 = vmatprep.subr.mxu0 %v193
  %6701 = vmatpush1.msra.mxu0 %v192
  %6702 = vmatprep.subr.mxu0 %v189
  %6703 = vmatpush1.msra.mxu0 %v188
  %6704 = vmatprep.subr.mxu0 %v185
  %6705 = vmatpush1.msra.mxu0 %v184
  %6706 = vmatprep.subr.mxu0 %v181
  %6707 = vmatpush1.msra.mxu0 %v180
  %6708 = vmatprep.subr.mxu0 %v177
  %6709 = vmatpush1.msra.mxu0 %v176
  %6710 = vmatprep.subr.mxu0 %v173
  %6711 = vmatpush1.msra.mxu0 %v172
  %6712 = vmatprep.subr.mxu0 %v169
  %6713 = vmatpush1.msra.mxu0 %v168
  %6714 = vmatprep.subr.mxu0 %v293
  %6715 = vmatpush2.msra.mxu0 %v292
  %6716 = vmatprep.subr.mxu0 %v289
  %6717 = vmatpush2.msra.mxu0 %v288
  %6718 = vmatprep.subr.mxu0 %v285
  %6719 = vmatpush2.msra.mxu0 %v284
  %6720 = vmatprep.subr.mxu0 %v281
  %6721 = vmatpush2.msra.mxu0 %v280
  %6722 = vmatprep.subr.mxu0 %v277
  %6723 = vmatpush2.msra.mxu0 %v276
  %6724 = vmatprep.subr.mxu0 %v273
  %6725 = vmatpush2.msra.mxu0 %v272
  %6726 = vmatprep.subr.mxu0 %v269
  %6727 = vmatpush2.msra.mxu0 %v268
  %6728 = vmatprep.subr.mxu0 %v265
  %6729 = vmatpush2.msra.mxu0 %v264
  %6730 = vmatprep.subr.mxu0 %v261
  %6731 = vmatpush2.msra.mxu0 %v260
  %6732 = vmatprep.subr.mxu0 %v257
  %6733 = vmatpush2.msra.mxu0 %v256
  %6734 = vmatprep.subr.mxu0 %v253
  %6735 = vmatpush2.msra.mxu0 %v252
  %6736 = vmatprep.subr.mxu0 %v249
  %6737 = vmatpush2.msra.mxu0 %v248
  %6738 = vmatprep.subr.mxu0 %v245
  %6739 = vmatpush2.msra.mxu0 %v244
  %6740 = vmatprep.subr.mxu0 %v241
  %6741 = vmatpush2.msra.mxu0 %v240
  %6742 = vmatprep.subr.mxu0 %v237
  %6743 = vmatpush2.msra.mxu0 %v236
  %6744 = vmatprep.subr.mxu0 %v233
  %6745 = vmatpush2.msra.mxu0 %v232
  %6746 = vmatprep.mubr.f32.mxu0 %v6599
  %6747 = vmatmul.mubr.f32.gmra.mxu0 %v6598
  %v6748 = vpop.f32.mrf.mxu0
  %v6749 = vadd.f32 %v6678, %v6748
  %v6750 = vpop.f32.mrf.mxu0
  %v6751 = vadd.f32 %v6680, %v6750
  %6752 = vdwg.mxu0
  %6753 = vmatprep.subr.mxu0 %v103
  %6754 = vmatpush1.msra.mxu0 %v102
  %6755 = vmatprep.subr.mxu0 %v99
  %6756 = vmatpush1.msra.mxu0 %v98
  %6757 = vmatprep.subr.mxu0 %v95
  %6758 = vmatpush1.msra.mxu0 %v94
  %6759 = vmatprep.subr.mxu0 %v91
  %6760 = vmatpush1.msra.mxu0 %v90
  %6761 = vmatprep.subr.mxu0 %v87
  %6762 = vmatpush1.msra.mxu0 %v86
  %6763 = vmatprep.subr.mxu0 %v83
  %6764 = vmatpush1.msra.mxu0 %v82
  %6765 = vmatprep.subr.mxu0 %v79
  %6766 = vmatpush1.msra.mxu0 %v78
  %6767 = vmatprep.subr.mxu0 %v75
  %6768 = vmatpush1.msra.mxu0 %v74
  %6769 = vmatprep.subr.mxu0 %v71
  %6770 = vmatpush1.msra.mxu0 %v70
  %6771 = vmatprep.subr.mxu0 %v67
  %6772 = vmatpush1.msra.mxu0 %v66
  %6773 = vmatprep.subr.mxu0 %v63
  %6774 = vmatpush1.msra.mxu0 %v62
  %6775 = vmatprep.subr.mxu0 %v59
  %6776 = vmatpush1.msra.mxu0 %v58
  %6777 = vmatprep.subr.mxu0 %v55
  %6778 = vmatpush1.msra.mxu0 %v54
  %6779 = vmatprep.subr.mxu0 %v51
  %6780 = vmatpush1.msra.mxu0 %v50
  %6781 = vmatprep.subr.mxu0 %v47
  %6782 = vmatpush1.msra.mxu0 %v46
  %6783 = vmatprep.subr.mxu0 %v43
  %6784 = vmatpush1.msra.mxu0 %v42
  %6785 = vmatprep.subr.mxu0 %v167
  %6786 = vmatpush2.msra.mxu0 %v166
  %6787 = vmatprep.subr.mxu0 %v163
  %6788 = vmatpush2.msra.mxu0 %v162
  %6789 = vmatprep.subr.mxu0 %v159
  %6790 = vmatpush2.msra.mxu0 %v158
  %6791 = vmatprep.subr.mxu0 %v155
  %6792 = vmatpush2.msra.mxu0 %v154
  %6793 = vmatprep.subr.mxu0 %v151
  %6794 = vmatpush2.msra.mxu0 %v150
  %6795 = vmatprep.subr.mxu0 %v147
  %6796 = vmatpush2.msra.mxu0 %v146
  %6797 = vmatprep.subr.mxu0 %v143
  %6798 = vmatpush2.msra.mxu0 %v142
  %6799 = vmatprep.subr.mxu0 %v139
  %6800 = vmatpush2.msra.mxu0 %v138
  %6801 = vmatprep.subr.mxu0 %v135
  %6802 = vmatpush2.msra.mxu0 %v134
  %6803 = vmatprep.subr.mxu0 %v131
  %6804 = vmatpush2.msra.mxu0 %v130
  %6805 = vmatprep.subr.mxu0 %v127
  %6806 = vmatpush2.msra.mxu0 %v126
  %6807 = vmatprep.subr.mxu0 %v123
  %6808 = vmatpush2.msra.mxu0 %v122
  %6809 = vmatprep.subr.mxu0 %v119
  %6810 = vmatpush2.msra.mxu0 %v118
  %6811 = vmatprep.subr.mxu0 %v115
  %6812 = vmatpush2.msra.mxu0 %v114
  %6813 = vmatprep.subr.mxu0 %v111
  %6814 = vmatpush2.msra.mxu0 %v110
  %6815 = vmatprep.subr.mxu0 %v107
  %6816 = vmatpush2.msra.mxu0 %v106
  %6817 = vmatprep.mubr.f32.mxu0 %v6597
  %6818 = vmatmul.mubr.f32.gmra.mxu0 %v6596
  %v6819 = vpop.f32.mrf.mxu0
  %v6820 = vadd.f32 0.0, %v6819
  %v6821 = vpop.f32.mrf.mxu0
  %v6822 = vadd.f32 0.0, %v6821
  %6823 = vdwg.mxu0
  %6824 = vmatprep.subr.mxu0 %v231
  %6825 = vmatpush1.msra.mxu0 %v230
  %6826 = vmatprep.subr.mxu0 %v227
  %6827 = vmatpush1.msra.mxu0 %v226
  %6828 = vmatprep.subr.mxu0 %v223
  %6829 = vmatpush1.msra.mxu0 %v222
  %6830 = vmatprep.subr.mxu0 %v219
  %6831 = vmatpush1.msra.mxu0 %v218
  %6832 = vmatprep.subr.mxu0 %v215
  %6833 = vmatpush1.msra.mxu0 %v214
  %6834 = vmatprep.subr.mxu0 %v211
  %6835 = vmatpush1.msra.mxu0 %v210
  %6836 = vmatprep.subr.mxu0 %v207
  %6837 = vmatpush1.msra.mxu0 %v206
  %6838 = vmatprep.subr.mxu0 %v203
  %6839 = vmatpush1.msra.mxu0 %v202
  %6840 = vmatprep.subr.mxu0 %v199
  %6841 = vmatpush1.msra.mxu0 %v198
  %6842 = vmatprep.subr.mxu0 %v195
  %6843 = vmatpush1.msra.mxu0 %v194
  %6844 = vmatprep.subr.mxu0 %v191
  %6845 = vmatpush1.msra.mxu0 %v190
  %6846 = vmatprep.subr.mxu0 %v187
  %6847 = vmatpush1.msra.mxu0 %v186
  %6848 = vmatprep.subr.mxu0 %v183
  %6849 = vmatpush1.msra.mxu0 %v182
  %6850 = vmatprep.subr.mxu0 %v179
  %6851 = vmatpush1.msra.mxu0 %v178
  %6852 = vmatprep.subr.mxu0 %v175
  %6853 = vmatpush1.msra.mxu0 %v174
  %6854 = vmatprep.subr.mxu0 %v171
  %6855 = vmatpush1.msra.mxu0 %v170
  %6856 = vmatprep.subr.mxu0 %v295
  %6857 = vmatpush2.msra.mxu0 %v294
  %6858 = vmatprep.subr.mxu0 %v291
  %6859 = vmatpush2.msra.mxu0 %v290
  %6860 = vmatprep.subr.mxu0 %v287
  %6861 = vmatpush2.msra.mxu0 %v286
  %6862 = vmatprep.subr.mxu0 %v283
  %6863 = vmatpush2.msra.mxu0 %v282
  %6864 = vmatprep.subr.mxu0 %v279
  %6865 = vmatpush2.msra.mxu0 %v278
  %6866 = vmatprep.subr.mxu0 %v275
  %6867 = vmatpush2.msra.mxu0 %v274
  %6868 = vmatprep.subr.mxu0 %v271
  %6869 = vmatpush2.msra.mxu0 %v270
  %6870 = vmatprep.subr.mxu0 %v267
  %6871 = vmatpush2.msra.mxu0 %v266
  %6872 = vmatprep.subr.mxu0 %v263
  %6873 = vmatpush2.msra.mxu0 %v262
  %6874 = vmatprep.subr.mxu0 %v259
  %6875 = vmatpush2.msra.mxu0 %v258
  %6876 = vmatprep.subr.mxu0 %v255
  %6877 = vmatpush2.msra.mxu0 %v254
  %6878 = vmatprep.subr.mxu0 %v251
  %6879 = vmatpush2.msra.mxu0 %v250
  %6880 = vmatprep.subr.mxu0 %v247
  %6881 = vmatpush2.msra.mxu0 %v246
  %6882 = vmatprep.subr.mxu0 %v243
  %6883 = vmatpush2.msra.mxu0 %v242
  %6884 = vmatprep.subr.mxu0 %v239
  %6885 = vmatpush2.msra.mxu0 %v238
  %6886 = vmatprep.subr.mxu0 %v235
  %6887 = vmatpush2.msra.mxu0 %v234
  %6888 = vmatprep.mubr.f32.mxu0 %v6599
  %6889 = vmatmul.mubr.f32.gmra.mxu0 %v6598
  %v6890 = vpop.f32.mrf.mxu0
  %v6891 = vadd.f32 %v6820, %v6890
  %v6892 = vpop.f32.mrf.mxu0
  %v6893 = vadd.f32 %v6822, %v6892
  %6894 = vdwg.mxu0
  %v6895 = vmul.f32 %v557, %v6749
  %v6896 = vmul.f32 %v557, %v6751
  %v6897 = vmul.f32 %v557, %v6891
  %v6898 = vmul.f32 %v557, %v6893
  %6899 = vmatprep.subr.mxu0 %v358
  %6900 = vmatpush1.msra.mxu0 %v357
  %6901 = vmatprep.subr.mxu0 %v354
  %6902 = vmatpush1.msra.mxu0 %v353
  %6903 = vmatprep.subr.mxu0 %v350
  %6904 = vmatpush1.msra.mxu0 %v349
  %6905 = vmatprep.subr.mxu0 %v346
  %6906 = vmatpush1.msra.mxu0 %v345
  %6907 = vmatprep.subr.mxu0 %v342
  %6908 = vmatpush1.msra.mxu0 %v341
  %6909 = vmatprep.subr.mxu0 %v338
  %6910 = vmatpush1.msra.mxu0 %v337
  %6911 = vmatprep.subr.mxu0 %v334
  %6912 = vmatpush1.msra.mxu0 %v333
  %6913 = vmatprep.subr.mxu0 %v330
  %6914 = vmatpush1.msra.mxu0 %v329
  %6915 = vmatprep.subr.mxu0 %v326
  %6916 = vmatpush1.msra.mxu0 %v325
  %6917 = vmatprep.subr.mxu0 %v322
  %6918 = vmatpush1.msra.mxu0 %v321
  %6919 = vmatprep.subr.mxu0 %v318
  %6920 = vmatpush1.msra.mxu0 %v317
  %6921 = vmatprep.subr.mxu0 %v314
  %6922 = vmatpush1.msra.mxu0 %v313
  %6923 = vmatprep.subr.mxu0 %v310
  %6924 = vmatpush1.msra.mxu0 %v309
  %6925 = vmatprep.subr.mxu0 %v306
  %6926 = vmatpush1.msra.mxu0 %v305
  %6927 = vmatprep.subr.mxu0 %v302
  %6928 = vmatpush1.msra.mxu0 %v301
  %6929 = vmatprep.subr.mxu0 %v298
  %6930 = vmatpush1.msra.mxu0 %v297
  %6931 = vmatprep.subr.mxu0 %v422
  %6932 = vmatpush2.msra.mxu0 %v421
  %6933 = vmatprep.subr.mxu0 %v418
  %6934 = vmatpush2.msra.mxu0 %v417
  %6935 = vmatprep.subr.mxu0 %v414
  %6936 = vmatpush2.msra.mxu0 %v413
  %6937 = vmatprep.subr.mxu0 %v410
  %6938 = vmatpush2.msra.mxu0 %v409
  %6939 = vmatprep.subr.mxu0 %v406
  %6940 = vmatpush2.msra.mxu0 %v405
  %6941 = vmatprep.subr.mxu0 %v402
  %6942 = vmatpush2.msra.mxu0 %v401
  %6943 = vmatprep.subr.mxu0 %v398
  %6944 = vmatpush2.msra.mxu0 %v397
  %6945 = vmatprep.subr.mxu0 %v394
  %6946 = vmatpush2.msra.mxu0 %v393
  %6947 = vmatprep.subr.mxu0 %v390
  %6948 = vmatpush2.msra.mxu0 %v389
  %6949 = vmatprep.subr.mxu0 %v386
  %6950 = vmatpush2.msra.mxu0 %v385
  %6951 = vmatprep.subr.mxu0 %v382
  %6952 = vmatpush2.msra.mxu0 %v381
  %6953 = vmatprep.subr.mxu0 %v378
  %6954 = vmatpush2.msra.mxu0 %v377
  %6955 = vmatprep.subr.mxu0 %v374
  %6956 = vmatpush2.msra.mxu0 %v373
  %6957 = vmatprep.subr.mxu0 %v370
  %6958 = vmatpush2.msra.mxu0 %v369
  %6959 = vmatprep.subr.mxu0 %v366
  %6960 = vmatpush2.msra.mxu0 %v365
  %6961 = vmatprep.subr.mxu0 %v362
  %6962 = vmatpush2.msra.mxu0 %v361
  %6963 = vmatprep.mubr.f32.mxu0 %v6597
  %6964 = vmatmul.mubr.f32.gmra.mxu0 %v6596
  %v6965 = vpop.f32.mrf.mxu0
  %v6966 = vadd.f32 0.0, %v6965
  %v6967 = vpop.f32.mrf.mxu0
  %v6968 = vadd.f32 0.0, %v6967
  %6969 = vdwg.mxu0
  %6970 = vmatprep.subr.mxu0 %v486
  %6971 = vmatpush1.msra.mxu0 %v485
  %6972 = vmatprep.subr.mxu0 %v482
  %6973 = vmatpush1.msra.mxu0 %v481
  %6974 = vmatprep.subr.mxu0 %v478
  %6975 = vmatpush1.msra.mxu0 %v477
  %6976 = vmatprep.subr.mxu0 %v474
  %6977 = vmatpush1.msra.mxu0 %v473
  %6978 = vmatprep.subr.mxu0 %v470
  %6979 = vmatpush1.msra.mxu0 %v469
  %6980 = vmatprep.subr.mxu0 %v466
  %6981 = vmatpush1.msra.mxu0 %v465
  %6982 = vmatprep.subr.mxu0 %v462
  %6983 = vmatpush1.msra.mxu0 %v461
  %6984 = vmatprep.subr.mxu0 %v458
  %6985 = vmatpush1.msra.mxu0 %v457
  %6986 = vmatprep.subr.mxu0 %v454
  %6987 = vmatpush1.msra.mxu0 %v453
  %6988 = vmatprep.subr.mxu0 %v450
  %6989 = vmatpush1.msra.mxu0 %v449
  %6990 = vmatprep.subr.mxu0 %v446
  %6991 = vmatpush1.msra.mxu0 %v445
  %6992 = vmatprep.subr.mxu0 %v442
  %6993 = vmatpush1.msra.mxu0 %v441
  %6994 = vmatprep.subr.mxu0 %v438
  %6995 = vmatpush1.msra.mxu0 %v437
  %6996 = vmatprep.subr.mxu0 %v434
  %6997 = vmatpush1.msra.mxu0 %v433
  %6998 = vmatprep.subr.mxu0 %v430
  %6999 = vmatpush1.msra.mxu0 %v429
  %7000 = vmatprep.subr.mxu0 %v426
  %7001 = vmatpush1.msra.mxu0 %v425
  %7002 = vmatprep.subr.mxu0 %v550
  %7003 = vmatpush2.msra.mxu0 %v549
  %7004 = vmatprep.subr.mxu0 %v546
  %7005 = vmatpush2.msra.mxu0 %v545
  %7006 = vmatprep.subr.mxu0 %v542
  %7007 = vmatpush2.msra.mxu0 %v541
  %7008 = vmatprep.subr.mxu0 %v538
  %7009 = vmatpush2.msra.mxu0 %v537
  %7010 = vmatprep.subr.mxu0 %v534
  %7011 = vmatpush2.msra.mxu0 %v533
  %7012 = vmatprep.subr.mxu0 %v530
  %7013 = vmatpush2.msra.mxu0 %v529
  %7014 = vmatprep.subr.mxu0 %v526
  %7015 = vmatpush2.msra.mxu0 %v525
  %7016 = vmatprep.subr.mxu0 %v522
  %7017 = vmatpush2.msra.mxu0 %v521
  %7018 = vmatprep.subr.mxu0 %v518
  %7019 = vmatpush2.msra.mxu0 %v517
  %7020 = vmatprep.subr.mxu0 %v514
  %7021 = vmatpush2.msra.mxu0 %v513
  %7022 = vmatprep.subr.mxu0 %v510
  %7023 = vmatpush2.msra.mxu0 %v509
  %7024 = vmatprep.subr.mxu0 %v506
  %7025 = vmatpush2.msra.mxu0 %v505
  %7026 = vmatprep.subr.mxu0 %v502
  %7027 = vmatpush2.msra.mxu0 %v501
  %7028 = vmatprep.subr.mxu0 %v498
  %7029 = vmatpush2.msra.mxu0 %v497
  %7030 = vmatprep.subr.mxu0 %v494
  %7031 = vmatpush2.msra.mxu0 %v493
  %7032 = vmatprep.subr.mxu0 %v490
  %7033 = vmatpush2.msra.mxu0 %v489
  %7034 = vmatprep.mubr.f32.mxu0 %v6599
  %7035 = vmatmul.mubr.f32.gmra.mxu0 %v6598
  %v7036 = vpop.f32.mrf.mxu0
  %v7037 = vadd.f32 %v6966, %v7036
  %v7038 = vpop.f32.mrf.mxu0
  %v7039 = vadd.f32 %v6968, %v7038
  %7040 = vdwg.mxu0
  %7041 = vmatprep.subr.mxu0 %v360
  %7042 = vmatpush1.msra.mxu0 %v359
  %7043 = vmatprep.subr.mxu0 %v356
  %7044 = vmatpush1.msra.mxu0 %v355
  %7045 = vmatprep.subr.mxu0 %v352
  %7046 = vmatpush1.msra.mxu0 %v351
  %7047 = vmatprep.subr.mxu0 %v348
  %7048 = vmatpush1.msra.mxu0 %v347
  %7049 = vmatprep.subr.mxu0 %v344
  %7050 = vmatpush1.msra.mxu0 %v343
  %7051 = vmatprep.subr.mxu0 %v340
  %7052 = vmatpush1.msra.mxu0 %v339
  %7053 = vmatprep.subr.mxu0 %v336
  %7054 = vmatpush1.msra.mxu0 %v335
  %7055 = vmatprep.subr.mxu0 %v332
  %7056 = vmatpush1.msra.mxu0 %v331
  %7057 = vmatprep.subr.mxu0 %v328
  %7058 = vmatpush1.msra.mxu0 %v327
  %7059 = vmatprep.subr.mxu0 %v324
  %7060 = vmatpush1.msra.mxu0 %v323
  %7061 = vmatprep.subr.mxu0 %v320
  %7062 = vmatpush1.msra.mxu0 %v319
  %7063 = vmatprep.subr.mxu0 %v316
  %7064 = vmatpush1.msra.mxu0 %v315
  %7065 = vmatprep.subr.mxu0 %v312
  %7066 = vmatpush1.msra.mxu0 %v311
  %7067 = vmatprep.subr.mxu0 %v308
  %7068 = vmatpush1.msra.mxu0 %v307
  %7069 = vmatprep.subr.mxu0 %v304
  %7070 = vmatpush1.msra.mxu0 %v303
  %7071 = vmatprep.subr.mxu0 %v300
  %7072 = vmatpush1.msra.mxu0 %v299
  %7073 = vmatprep.subr.mxu0 %v424
  %7074 = vmatpush2.msra.mxu0 %v423
  %7075 = vmatprep.subr.mxu0 %v420
  %7076 = vmatpush2.msra.mxu0 %v419
  %7077 = vmatprep.subr.mxu0 %v416
  %7078 = vmatpush2.msra.mxu0 %v415
  %7079 = vmatprep.subr.mxu0 %v412
  %7080 = vmatpush2.msra.mxu0 %v411
  %7081 = vmatprep.subr.mxu0 %v408
  %7082 = vmatpush2.msra.mxu0 %v407
  %7083 = vmatprep.subr.mxu0 %v404
  %7084 = vmatpush2.msra.mxu0 %v403
  %7085 = vmatprep.subr.mxu0 %v400
  %7086 = vmatpush2.msra.mxu0 %v399
  %7087 = vmatprep.subr.mxu0 %v396
  %7088 = vmatpush2.msra.mxu0 %v395
  %7089 = vmatprep.subr.mxu0 %v392
  %7090 = vmatpush2.msra.mxu0 %v391
  %7091 = vmatprep.subr.mxu0 %v388
  %7092 = vmatpush2.msra.mxu0 %v387
  %7093 = vmatprep.subr.mxu0 %v384
  %7094 = vmatpush2.msra.mxu0 %v383
  %7095 = vmatprep.subr.mxu0 %v380
  %7096 = vmatpush2.msra.mxu0 %v379
  %7097 = vmatprep.subr.mxu0 %v376
  %7098 = vmatpush2.msra.mxu0 %v375
  %7099 = vmatprep.subr.mxu0 %v372
  %7100 = vmatpush2.msra.mxu0 %v371
  %7101 = vmatprep.subr.mxu0 %v368
  %7102 = vmatpush2.msra.mxu0 %v367
  %7103 = vmatprep.subr.mxu0 %v364
  %7104 = vmatpush2.msra.mxu0 %v363
  %7105 = vmatprep.mubr.f32.mxu0 %v6597
  %7106 = vmatmul.mubr.f32.gmra.mxu0 %v6596
  %v7107 = vpop.f32.mrf.mxu0
  %v7108 = vadd.f32 0.0, %v7107
  %v7109 = vpop.f32.mrf.mxu0
  %v7110 = vadd.f32 0.0, %v7109
  %7111 = vdwg.mxu0
  %7112 = vmatprep.subr.mxu0 %v488
  %7113 = vmatpush1.msra.mxu0 %v487
  %7114 = vmatprep.subr.mxu0 %v484
  %7115 = vmatpush1.msra.mxu0 %v483
  %7116 = vmatprep.subr.mxu0 %v480
  %7117 = vmatpush1.msra.mxu0 %v479
  %7118 = vmatprep.subr.mxu0 %v476
  %7119 = vmatpush1.msra.mxu0 %v475
  %7120 = vmatprep.subr.mxu0 %v472
  %7121 = vmatpush1.msra.mxu0 %v471
  %7122 = vmatprep.subr.mxu0 %v468
  %7123 = vmatpush1.msra.mxu0 %v467
  %7124 = vmatprep.subr.mxu0 %v464
  %7125 = vmatpush1.msra.mxu0 %v463
  %7126 = vmatprep.subr.mxu0 %v460
  %7127 = vmatpush1.msra.mxu0 %v459
  %7128 = vmatprep.subr.mxu0 %v456
  %7129 = vmatpush1.msra.mxu0 %v455
  %7130 = vmatprep.subr.mxu0 %v452
  %7131 = vmatpush1.msra.mxu0 %v451
  %7132 = vmatprep.subr.mxu0 %v448
  %7133 = vmatpush1.msra.mxu0 %v447
  %7134 = vmatprep.subr.mxu0 %v444
  %7135 = vmatpush1.msra.mxu0 %v443
  %7136 = vmatprep.subr.mxu0 %v440
  %7137 = vmatpush1.msra.mxu0 %v439
  %7138 = vmatprep.subr.mxu0 %v436
  %7139 = vmatpush1.msra.mxu0 %v435
  %7140 = vmatprep.subr.mxu0 %v432
  %7141 = vmatpush1.msra.mxu0 %v431
  %7142 = vmatprep.subr.mxu0 %v428
  %7143 = vmatpush1.msra.mxu0 %v427
  %7144 = vmatprep.subr.mxu0 %v552
  %7145 = vmatpush2.msra.mxu0 %v551
  %7146 = vmatprep.subr.mxu0 %v548
  %7147 = vmatpush2.msra.mxu0 %v547
  %7148 = vmatprep.subr.mxu0 %v544
  %7149 = vmatpush2.msra.mxu0 %v543
  %7150 = vmatprep.subr.mxu0 %v540
  %7151 = vmatpush2.msra.mxu0 %v539
  %7152 = vmatprep.subr.mxu0 %v536
  %7153 = vmatpush2.msra.mxu0 %v535
  %7154 = vmatprep.subr.mxu0 %v532
  %7155 = vmatpush2.msra.mxu0 %v531
  %7156 = vmatprep.subr.mxu0 %v528
  %7157 = vmatpush2.msra.mxu0 %v527
  %7158 = vmatprep.subr.mxu0 %v524
  %7159 = vmatpush2.msra.mxu0 %v523
  %7160 = vmatprep.subr.mxu0 %v520
  %7161 = vmatpush2.msra.mxu0 %v519
  %7162 = vmatprep.subr.mxu0 %v516
  %7163 = vmatpush2.msra.mxu0 %v515
  %7164 = vmatprep.subr.mxu0 %v512
  %7165 = vmatpush2.msra.mxu0 %v511
  %7166 = vmatprep.subr.mxu0 %v508
  %7167 = vmatpush2.msra.mxu0 %v507
  %7168 = vmatprep.subr.mxu0 %v504
  %7169 = vmatpush2.msra.mxu0 %v503
  %7170 = vmatprep.subr.mxu0 %v500
  %7171 = vmatpush2.msra.mxu0 %v499
  %7172 = vmatprep.subr.mxu0 %v496
  %7173 = vmatpush2.msra.mxu0 %v495
  %7174 = vmatprep.subr.mxu0 %v492
  %7175 = vmatpush2.msra.mxu0 %v491
  %7176 = vmatprep.mubr.f32.mxu0 %v6599
  %7177 = vmatmul.mubr.f32.gmra.mxu0 %v6598
  %v7178 = vpop.f32.mrf.mxu0
  %v7179 = vadd.f32 %v7108, %v7178
  %v7180 = vpop.f32.mrf.mxu0
  %v7181 = vadd.f32 %v7110, %v7180
  %7182 = vdwg.mxu0
  %v7183 = vmul.f32 %v560, %v7037
  %v7184 = vmul.f32 %v560, %v7039
  %v7185 = vmul.f32 %v560, %v7179
  %v7186 = vmul.f32 %v560, %v7181
  %v7187 = vadd.f32 %v6895, %v7183
  %v7188 = vadd.f32 %v6896, %v7184
  %v7189 = vadd.f32 %v6897, %v7185
  %v7190 = vadd.f32 %v6898, %v7186
  %v7191 = vmul.f32 %v6596, %v7187
  %v7192 = vmul.f32 %v6597, %v7188
  %v7193 = vmul.f32 %v6598, %v7189
  %v7194 = vmul.f32 %v6599, %v7190
  %v7195 = vsel %vm2859, %v7191, 0.0
  %v7196 = vsel %vm2859, %v7192, 0.0
  %v7197 = vadd.f32 %v7195, %v7196
  %v7198 = vsel %vm2859, %v7193, 0.0
  %v7199 = vadd.f32 %v7197, %v7198
  %v7200 = vsel %vm2859, %v7194, 0.0
  %v7201 = vadd.f32 %v7199, %v7200
  %7202 = vadd.xlane.f32.xlu0 %v7201
  %v7203 = vpop.xlane.xlu0 %7202
  %v7204 = vsel %vm6610, 1, 0
  %vm7205 = vcmp.eq.s32.totalorder %v7204, 1
  %v7206 = vsel %vm7205, %v7203, 1.0
  %v7207 = vrcp.pop %v7206
  %v7208 = vmul.f32 %v6600, %v7207
  %v7209 = vmul.f32 %v7208, %v6596
  %v7210 = vmul.f32 %v7208, %v6597
  %v7211 = vmul.f32 %v7208, %v6598
  %v7212 = vmul.f32 %v7208, %v6599
  %v7217 = vcombine.low %v7209, %v7210
  %v7218 = vcombine.low %v7211, %v7212
  %v7220 = vunpack.c.l.s4 1983009808
  %v7221 = vunpack.c.0.s8 %v7220
  %v7222 = vlaneseq
  %v7223 = vshrl.u32 %v7222, 7
  %v7224 = vsub.s32 %v7221, %v7223
  %v7225 = vrot.slane %v7217, %v7224
  %v7227 = vunpack.c.l.s4 1983009808
  %v7228 = vunpack.c.0.s8 %v7227
  %v7229 = vlaneseq
  %v7230 = vshrl.u32 %v7229, 7
  %v7231 = vsub.s32 %v7228, %v7230
  %v7232 = vrot.slane %v7218, %v7231
  %v7233 = vcombine.low %v7225, %v7232
  %v7235 = vadd.f32 %v6595, %v7233
  %v7236 = vsel %vm7205, %v7235, %v6595
  %7237 = vst [vmem:[%s7] sm:$0xff] %v7236
  // Predicated region
  $region30: #{modl_recon_one_unroll.1} parent=0 // pred_check
    _
  $region31: #{modl_recon_one_unroll.1} parent=0 // pred_check_branch
    %7239 = sbr.rel (0) target = $region33
  $region32: #{modl_recon_one_unroll.1} parent=0 // pred_region
    _
  $region33: #{modl_recon_one_unroll.1} parent=0 // pred_fallthru
    _
  // Predicated region
  $region34: #{modl_recon_one_unroll.1} parent=0 // pred_check
    _
  $region35: #{modl_recon_one_unroll.1} parent=0 // pred_check_branch
    %7241 = sbr.rel (0) target = $region37
  $region36: #{modl_recon_one_unroll.1} parent=0 // pred_region
    _
  $region37: #{modl_recon_one_unroll.1} parent=0 // pred_fallthru
    _

</llo_original>
